<compile_context>
chip_gen: v7x
topology: tpu7x:2x2x1
jax: 0.10.0
libtpu: 0.0.40
codegen_flags: <defaults>
</compile_context>

<pallas_src>
import functools

import jax
import jax.numpy as jnp
from jax.experimental import pallas as pl
from jax.experimental.pallas import tpu as pltpu

# ----------------------------- configuration --------------------------------
B = 2            # batch
FEAT = 8         # input_shape[0]  (spectral feature dim)
T = 16           # input time steps (multiple of resolution=8)
HIDDEN = 16      # config.hidden
CLASSNUM = 32    # len(cmap.encodemap) stand-in
SOS_ID = 1       # cmap.encode('<sos>') stand-in
MAX_LEN_Y = 4    # unused (broken decode loop skipped)


# ------------------------------ fused Pallas kernel --------------------------
def _las_fused_kernel(x_ref,
                      wf1_ref, wb1_ref, bc1_ref, whh1_ref,
                      wf2_ref, wb2_ref, bc2_ref, whh2_ref,
                      wf3_ref, wb3_ref, bc3_ref, whh3_ref,
                      w1_ref, b1_ref, w2_ref, b2_ref, wcd_ref, bcd_ref,
                      s_ref, y_ref):
    """Entire LAS forward in VMEM.

    x_ref:   (T, B, FEAT)        time-major input
    wfX/wbX: (2*Fin_X, 8H)       input->gates, gate-grouped, fwd/bwd column pad
    bcX:     (1, 8H)             fused b_ih+b_hh for both directions (grouped)
    whhX:    (2H, 8H)            block-diag recurrent weight (grouped)
    speller: w1 (2H,4H), b1 (1,4H) (sos row folded in), w2 (H,4H), b2 (1,4H),
             wcd (H,C) (attention half dropped: att==0), bcd (1,C)
    s_ref:   (B, (T//8)*2H)      listener output, lane-dense (reshaped outside)
    y_ref:   (B, C)              CharacterDistribution output
    """
    f32 = jnp.float32
    n_t = x_ref.shape[0]
    bsz = x_ref.shape[1]
    two_h = whh1_ref.shape[0]          # 2 * HIDDEN
    hh = two_h // 2
    # lanes [0:H) carry the forward direction, [H:2H) the backward direction
    fwd_mask = jax.lax.broadcasted_iota(jnp.int32, (bsz, two_h), 1) < hh

    def bilstm(seq, wf, wb, bc, whh):
        """seq: python list of per-time (B, Fin) values -> per-time (B, 2H)."""
        din = seq[0].shape[-1]
        tp = len(seq) // 2             # pyramid: pool time by 2

        # ---- hoisted input->gate projections (independent of the recurrence,
        #      so they sit off the serial critical path).  The pooled feature
        #      [x(2t) | x(2t+1)] is handled by splitting the weight rows, so no
        #      in-kernel concatenation is needed.
        wf_top, wf_bot = wf[:din], wf[din:]
        wb_top, wb_bot = wb[:din], wb[din:]
        pre_f = [jnp.dot(seq[2 * t], wf_top, preferred_element_type=f32)
                 + jnp.dot(seq[2 * t + 1], wf_bot, preferred_element_type=f32)
                 + bc
                 for t in range(tp)]
        pre_b = [jnp.dot(seq[2 * t], wb_top, preferred_element_type=f32)
                 + jnp.dot(seq[2 * t + 1], wb_bot, preferred_element_type=f32)
                 for t in range(tp)]

        # ---- fused fwd+bwd recurrence, fully unrolled (tp = 8 / 4 / 2) ------
        h = jnp.zeros((bsz, two_h), f32)
        c = jnp.zeros((bsz, two_h), f32)
        hs = []
        for t in range(tp):
            gates = (pre_f[t] + pre_b[tp - 1 - t]
                     + jnp.dot(h, whh, preferred_element_type=f32))   # (B, 8H)
            i = jax.nn.sigmoid(gates[:, 0:two_h])
            f = jax.nn.sigmoid(gates[:, two_h:2 * two_h])
            g = jnp.tanh(gates[:, 2 * two_h:3 * two_h])
            o = jax.nn.sigmoid(gates[:, 3 * two_h:4 * two_h])
            c = f * c + i * g
            h = o * jnp.tanh(c)
            hs.append(h)

        # undo the backward direction's time reversal:
        # output(t) = [ fwd half of hs[t] | bwd half of hs[tp-1-t] ]
        return [jnp.where(fwd_mask, hs[t], hs[tp - 1 - t]) for t in range(tp)]

    # ------------------------------ Listener ---------------------------------
    seq0 = [x_ref[t] for t in range(n_t)]                  # T x (B, FEAT)
    out1 = bilstm(seq0, wf1_ref[...], wb1_ref[...], bc1_ref[...], whh1_ref[...])
    out2 = bilstm(out1, wf2_ref[...], wb2_ref[...], bc2_ref[...], whh2_ref[...])
    out3 = bilstm(out2, wf3_ref[...], wb3_ref[...], bc3_ref[...], whh3_ref[...])

    for t, o_t in enumerate(out3):                         # lane-dense store
        s_ref[:, t * two_h:(t + 1) * two_h] = o_t

    # --------------------- Speller (first, well-defined step) ----------------
    # 2-layer LSTM with zero initial state + Linear head.  Dead terms dropped
    # exactly: h0@Whh == 0, f-gate*c0 == 0, att(=0)@Wcd[H:2H] == 0; the <sos>
    # one-hot row of Wih1 was folded into b1 by the wrapper.
    s0 = out3[0]                                           # (B, 2H) == s[:, 0]
    g1 = jnp.dot(s0, w1_ref[...], preferred_element_type=f32) + b1_ref[...]
    c1 = jax.nn.sigmoid(g1[:, 0:hh]) * jnp.tanh(g1[:, 2 * hh:3 * hh])
    h1 = jax.nn.sigmoid(g1[:, 3 * hh:4 * hh]) * jnp.tanh(c1)
    g2 = jnp.dot(h1, w2_ref[...], preferred_element_type=f32) + b2_ref[...]
    c2 = jax.nn.sigmoid(g2[:, 0:hh]) * jnp.tanh(g2[:, 2 * hh:3 * hh])
    h2 = jax.nn.sigmoid(g2[:, 3 * hh:4 * hh]) * jnp.tanh(c2)
    y_ref[...] = (jnp.dot(h2, wcd_ref[...], preferred_element_type=f32)
                  + bcd_ref[...])


# ------------------------------ model wrapper ---------------------------------
def las_forward(x, kernel_params):
    """x: (B, FEAT, T) -> (s: (B, T//8, 2H), y: (B, CLASSNUM))."""
    bsz, _, t_in = x.shape
    resolution = 8                                         # 2 ** (num pBLSTMs)
    t_keep = t_in // resolution * resolution
    x_tm = jnp.transpose(x[:, :, :t_keep], (2, 0, 1))      # (T, B, FEAT)
    tp3 = t_keep // resolution

    vmem = pl.BlockSpec(memory_space=pltpu.MemorySpace.VMEM)
    s2, y = pl.pallas_call(
        _las_fused_kernel,
        out_shape=(jax.ShapeDtypeStruct((bsz, tp3 * 2 * HIDDEN), jnp.float32),
                   jax.ShapeDtypeStruct((bsz, CLASSNUM), jnp.float32)),
        in_specs=[vmem] * (1 + len(kernel_params)),
        out_specs=(vmem, vmem),
    )(x_tm, *kernel_params)

    s = s2.reshape(bsz, tp3, 2 * HIDDEN)                   # free row-major reshape
    return s, y


# ------------------------------ parameter init --------------------------------
def _uniform(key, shape, scale):
    return jax.random.uniform(key, shape, jnp.float32, -scale, scale)


def init_lstm_dir(key, din, h):
    k1, k2, k3 = jax.random.split(key, 3)
    scale = 1.0 / jnp.sqrt(h)
    return {"wih": _uniform(k1, (din, 4 * h), scale),      # input -> gates (i,f,g,o)
            "whh": _uniform(k2, (h, 4 * h), scale),        # hidden -> gates
            "b": _uniform(k3, (1, 4 * h), scale)}          # fused b_ih + b_hh


def init_params(key):
    keys = jax.random.split(key, 16)
    # Listener: 3 pBLSTM layers (input dims after the x2 time pooling)
    lstm_in_dims = [FEAT * 2, (HIDDEN * 2) * 2, (HIDDEN * 2) * 2]
    listener_params = []
    ki = 0
    for din in lstm_in_dims:
        listener_params.append({
            "fwd": init_lstm_dir(keys[ki], din, HIDDEN),
            "bwd": init_lstm_dir(keys[ki + 1], din, HIDDEN),
        })
        ki += 2
    # Speller: 2-layer LSTM (in = 2H + classnum, then H) + Linear(2H, classnum)
    scale = 1.0 / jnp.sqrt(HIDDEN)
    l1 = init_lstm_dir(keys[ki], HIDDEN * 2 + CLASSNUM, HIDDEN)
    l2 = init_lstm_dir(keys[ki + 1], HIDDEN, HIDDEN)
    speller_params = {
        "wih1": l1["wih"], "whh1": l1["whh"], "b1": l1["b"],
        "wih2": l2["wih"], "whh2": l2["whh"], "b2": l2["b"],
        "wcd": _uniform(keys[ki + 2], (HIDDEN * 2, CLASSNUM), scale),
        "bcd": _uniform(keys[ki + 3], (1, CLASSNUM), scale),
    }
    return listener_params, speller_params


def _grouped_cols(w, direction, h):
    """Place (rows, 4H) gate-ordered [i,f,g,o] columns into the (rows, 8H)
    gate-grouped layout [i_f,i_b | f_f,f_b | g_f,g_b | o_f,o_b]."""
    rows = w.shape[0]
    out = jnp.zeros((rows, 8 * h), w.dtype)
    for k in range(4):
        col = 2 * h * k + direction * h
        out = out.at[:, col:col + h].set(w[:, k * h:(k + 1) * h])
    return out


def prepare_kernel_params(listener_params, speller_params):
    """One-time (trace-time) repack of parameters into kernel-ready form."""
    h = HIDDEN
    flat = []
    for lp in listener_params:
        wf = _grouped_cols(lp["fwd"]["wih"], 0, h)          # (2*Fin, 8H), bwd cols zero
        wb = _grouped_cols(lp["bwd"]["wih"], 1, h)          # (2*Fin, 8H), fwd cols zero
        bc = (_grouped_cols(lp["fwd"]["b"], 0, h)
              + _grouped_cols(lp["bwd"]["b"], 1, h))        # (1, 8H)
        whh = jnp.concatenate([_grouped_cols(lp["fwd"]["whh"], 0, h),
                               _grouped_cols(lp["bwd"]["whh"], 1, h)],
                              axis=0)                        # (2H, 8H) block-diag
        flat += [wf, wb, bc, whh]
    sp = speller_params
    flat += [
        sp["wih1"][:2 * h],                                  # (2H, 4H) acts on s[:,0]
        sp["b1"] + sp["wih1"][2 * h + SOS_ID][None, :],      # <sos> one-hot folded in
        sp["wih2"], sp["b2"],                                # layer-2 cell
        sp["wcd"][:h], sp["bcd"],                            # att(=0) half dropped
    ]
    return flat


# ----------------------------------- main -------------------------------------
if __name__ == "__main__":
    key = jax.random.PRNGKey(0)
    k_x, k_p = jax.random.split(key)
    x = jax.random.normal(k_x, (B, FEAT, T), jnp.float32)   # (B, feat, time)
    listener_params, speller_params = init_params(k_p)
    kernel_params = prepare_kernel_params(listener_params, speller_params)

    fwd = jax.jit(functools.partial(las_forward, kernel_params=kernel_params))
    s_out, y_out = fwd(x)
    jax.block_until_ready((s_out, y_out))

    assert s_out.shape == (B, T // 8, 2 * HIDDEN)
    assert y_out.shape == (B, CLASSNUM)
    print("KERNEL_OK")
</pallas_src>

<mosaic_0001>
module attributes {stable_mosaic.version = 11 : i64} {
  func.func @_las_fused_kernel(%arg0: memref<16x2x8xf32, #tpu.memory_space<vmem>>, %arg1: memref<16x128xf32, #tpu.memory_space<vmem>>, %arg2: memref<16x128xf32, #tpu.memory_space<vmem>>, %arg3: memref<1x128xf32, #tpu.memory_space<vmem>>, %arg4: memref<32x128xf32, #tpu.memory_space<vmem>>, %arg5: memref<64x128xf32, #tpu.memory_space<vmem>>, %arg6: memref<64x128xf32, #tpu.memory_space<vmem>>, %arg7: memref<1x128xf32, #tpu.memory_space<vmem>>, %arg8: memref<32x128xf32, #tpu.memory_space<vmem>>, %arg9: memref<64x128xf32, #tpu.memory_space<vmem>>, %arg10: memref<64x128xf32, #tpu.memory_space<vmem>>, %arg11: memref<1x128xf32, #tpu.memory_space<vmem>>, %arg12: memref<32x128xf32, #tpu.memory_space<vmem>>, %arg13: memref<32x64xf32, #tpu.memory_space<vmem>>, %arg14: memref<1x64xf32, #tpu.memory_space<vmem>>, %arg15: memref<16x64xf32, #tpu.memory_space<vmem>>, %arg16: memref<1x64xf32, #tpu.memory_space<vmem>>, %arg17: memref<16x32xf32, #tpu.memory_space<vmem>>, %arg18: memref<1x32xf32, #tpu.memory_space<vmem>>, %arg19: memref<2x64xf32, #tpu.memory_space<vmem>>, %arg20: memref<2x32xf32, #tpu.memory_space<vmem>>) attributes {dimension_semantics = [], scalar_prefetch = 0 : i64, scratch_operands = 0 : i64, tpu.core_type = #tpu.core_type<tc>} {
    %0 = tpu.iota {dimensions = array<i32: 1>} : vector<2x32xi32>
    %c16_i32 = arith.constant 16 : i32
    %1 = vector.broadcast %c16_i32 : i32 to vector<2x32xi32>
    %2 = arith.cmpi slt, %0, %1 : vector<2x32xi32>
    %c0 = arith.constant 0 : index
    %c0_0 = arith.constant 0 : index
    %c0_1 = arith.constant 0 : index
    %3 = vector.load %arg0[%c0, %c0_0, %c0_1] : memref<16x2x8xf32, #tpu.memory_space<vmem>>, vector<1x2x8xf32>
    %4 = vector.shape_cast %3 : vector<1x2x8xf32> to vector<2x8xf32>
    %c1 = arith.constant 1 : index
    %c0_2 = arith.constant 0 : index
    %c0_3 = arith.constant 0 : index
    %5 = vector.load %arg0[%c1, %c0_2, %c0_3] : memref<16x2x8xf32, #tpu.memory_space<vmem>>, vector<1x2x8xf32>
    %6 = vector.shape_cast %5 : vector<1x2x8xf32> to vector<2x8xf32>
    %c2 = arith.constant 2 : index
    %c0_4 = arith.constant 0 : index
    %c0_5 = arith.constant 0 : index
    %7 = vector.load %arg0[%c2, %c0_4, %c0_5] : memref<16x2x8xf32, #tpu.memory_space<vmem>>, vector<1x2x8xf32>
    %8 = vector.shape_cast %7 : vector<1x2x8xf32> to vector<2x8xf32>
    %c3 = arith.constant 3 : index
    %c0_6 = arith.constant 0 : index
    %c0_7 = arith.constant 0 : index
    %9 = vector.load %arg0[%c3, %c0_6, %c0_7] : memref<16x2x8xf32, #tpu.memory_space<vmem>>, vector<1x2x8xf32>
    %10 = vector.shape_cast %9 : vector<1x2x8xf32> to vector<2x8xf32>
    %c4 = arith.constant 4 : index
    %c0_8 = arith.constant 0 : index
    %c0_9 = arith.constant 0 : index
    %11 = vector.load %arg0[%c4, %c0_8, %c0_9] : memref<16x2x8xf32, #tpu.memory_space<vmem>>, vector<1x2x8xf32>
    %12 = vector.shape_cast %11 : vector<1x2x8xf32> to vector<2x8xf32>
    %c5 = arith.constant 5 : index
    %c0_10 = arith.constant 0 : index
    %c0_11 = arith.constant 0 : index
    %13 = vector.load %arg0[%c5, %c0_10, %c0_11] : memref<16x2x8xf32, #tpu.memory_space<vmem>>, vector<1x2x8xf32>
    %14 = vector.shape_cast %13 : vector<1x2x8xf32> to vector<2x8xf32>
    %c6 = arith.constant 6 : index
    %c0_12 = arith.constant 0 : index
    %c0_13 = arith.constant 0 : index
    %15 = vector.load %arg0[%c6, %c0_12, %c0_13] : memref<16x2x8xf32, #tpu.memory_space<vmem>>, vector<1x2x8xf32>
    %16 = vector.shape_cast %15 : vector<1x2x8xf32> to vector<2x8xf32>
    %c7 = arith.constant 7 : index
    %c0_14 = arith.constant 0 : index
    %c0_15 = arith.constant 0 : index
    %17 = vector.load %arg0[%c7, %c0_14, %c0_15] : memref<16x2x8xf32, #tpu.memory_space<vmem>>, vector<1x2x8xf32>
    %18 = vector.shape_cast %17 : vector<1x2x8xf32> to vector<2x8xf32>
    %c8 = arith.constant 8 : index
    %c0_16 = arith.constant 0 : index
    %c0_17 = arith.constant 0 : index
    %19 = vector.load %arg0[%c8, %c0_16, %c0_17] : memref<16x2x8xf32, #tpu.memory_space<vmem>>, vector<1x2x8xf32>
    %20 = vector.shape_cast %19 : vector<1x2x8xf32> to vector<2x8xf32>
    %c9 = arith.constant 9 : index
    %c0_18 = arith.constant 0 : index
    %c0_19 = arith.constant 0 : index
    %21 = vector.load %arg0[%c9, %c0_18, %c0_19] : memref<16x2x8xf32, #tpu.memory_space<vmem>>, vector<1x2x8xf32>
    %22 = vector.shape_cast %21 : vector<1x2x8xf32> to vector<2x8xf32>
    %c10 = arith.constant 10 : index
    %c0_20 = arith.constant 0 : index
    %c0_21 = arith.constant 0 : index
    %23 = vector.load %arg0[%c10, %c0_20, %c0_21] : memref<16x2x8xf32, #tpu.memory_space<vmem>>, vector<1x2x8xf32>
    %24 = vector.shape_cast %23 : vector<1x2x8xf32> to vector<2x8xf32>
    %c11 = arith.constant 11 : index
    %c0_22 = arith.constant 0 : index
    %c0_23 = arith.constant 0 : index
    %25 = vector.load %arg0[%c11, %c0_22, %c0_23] : memref<16x2x8xf32, #tpu.memory_space<vmem>>, vector<1x2x8xf32>
    %26 = vector.shape_cast %25 : vector<1x2x8xf32> to vector<2x8xf32>
    %c12 = arith.constant 12 : index
    %c0_24 = arith.constant 0 : index
    %c0_25 = arith.constant 0 : index
    %27 = vector.load %arg0[%c12, %c0_24, %c0_25] : memref<16x2x8xf32, #tpu.memory_space<vmem>>, vector<1x2x8xf32>
    %28 = vector.shape_cast %27 : vector<1x2x8xf32> to vector<2x8xf32>
    %c13 = arith.constant 13 : index
    %c0_26 = arith.constant 0 : index
    %c0_27 = arith.constant 0 : index
    %29 = vector.load %arg0[%c13, %c0_26, %c0_27] : memref<16x2x8xf32, #tpu.memory_space<vmem>>, vector<1x2x8xf32>
    %30 = vector.shape_cast %29 : vector<1x2x8xf32> to vector<2x8xf32>
    %c14 = arith.constant 14 : index
    %c0_28 = arith.constant 0 : index
    %c0_29 = arith.constant 0 : index
    %31 = vector.load %arg0[%c14, %c0_28, %c0_29] : memref<16x2x8xf32, #tpu.memory_space<vmem>>, vector<1x2x8xf32>
    %32 = vector.shape_cast %31 : vector<1x2x8xf32> to vector<2x8xf32>
    %c15 = arith.constant 15 : index
    %c0_30 = arith.constant 0 : index
    %c0_31 = arith.constant 0 : index
    %33 = vector.load %arg0[%c15, %c0_30, %c0_31] : memref<16x2x8xf32, #tpu.memory_space<vmem>>, vector<1x2x8xf32>
    %34 = vector.shape_cast %33 : vector<1x2x8xf32> to vector<2x8xf32>
    %c0_32 = arith.constant 0 : index
    %c0_33 = arith.constant 0 : index
    %35 = vector.load %arg1[%c0_32, %c0_33] : memref<16x128xf32, #tpu.memory_space<vmem>>, vector<16x128xf32>
    %c0_34 = arith.constant 0 : index
    %c0_35 = arith.constant 0 : index
    %36 = vector.load %arg2[%c0_34, %c0_35] : memref<16x128xf32, #tpu.memory_space<vmem>>, vector<16x128xf32>
    %c0_36 = arith.constant 0 : index
    %c0_37 = arith.constant 0 : index
    %37 = vector.load %arg3[%c0_36, %c0_37] : memref<1x128xf32, #tpu.memory_space<vmem>>, vector<1x128xf32>
    %c0_38 = arith.constant 0 : index
    %c0_39 = arith.constant 0 : index
    %38 = vector.load %arg4[%c0_38, %c0_39] : memref<32x128xf32, #tpu.memory_space<vmem>>, vector<32x128xf32>
    %39 = vector.extract_strided_slice %35 {offsets = [0, 0], sizes = [8, 128], strides = [1, 1]} : vector<16x128xf32> to vector<8x128xf32>
    %40 = vector.extract_strided_slice %35 {offsets = [8, 0], sizes = [8, 128], strides = [1, 1]} : vector<16x128xf32> to vector<8x128xf32>
    %41 = vector.extract_strided_slice %36 {offsets = [0, 0], sizes = [8, 128], strides = [1, 1]} : vector<16x128xf32> to vector<8x128xf32>
    %42 = vector.extract_strided_slice %36 {offsets = [8, 0], sizes = [8, 128], strides = [1, 1]} : vector<16x128xf32> to vector<8x128xf32>
    %cst = arith.constant dense<0.000000e+00> : vector<2x128xf32>
    %43 = tpu.matmul %4, %39, %cst {dimension_numbers = #tpu.dot_dimension_numbers<[1], [0], [0], [1], [0, 0, 1, 1], [], []>} : vector<2x8xf32>, vector<8x128xf32>, vector<2x128xf32> -> vector<2x128xf32>
    %cst_40 = arith.constant dense<0.000000e+00> : vector<2x128xf32>
    %44 = tpu.matmul %6, %40, %cst_40 {dimension_numbers = #tpu.dot_dimension_numbers<[1], [0], [0], [1], [0, 0, 1, 1], [], []>} : vector<2x8xf32>, vector<8x128xf32>, vector<2x128xf32> -> vector<2x128xf32>
    %45 = arith.addf %43, %44 : vector<2x128xf32>
    %46 = vector.broadcast %37 : vector<1x128xf32> to vector<2x128xf32>
    %47 = arith.addf %45, %46 : vector<2x128xf32>
    %cst_41 = arith.constant dense<0.000000e+00> : vector<2x128xf32>
    %48 = tpu.matmul %8, %39, %cst_41 {dimension_numbers = #tpu.dot_dimension_numbers<[1], [0], [0], [1], [0, 0, 1, 1], [], []>} : vector<2x8xf32>, vector<8x128xf32>, vector<2x128xf32> -> vector<2x128xf32>
    %cst_42 = arith.constant dense<0.000000e+00> : vector<2x128xf32>
    %49 = tpu.matmul %10, %40, %cst_42 {dimension_numbers = #tpu.dot_dimension_numbers<[1], [0], [0], [1], [0, 0, 1, 1], [], []>} : vector<2x8xf32>, vector<8x128xf32>, vector<2x128xf32> -> vector<2x128xf32>
    %50 = arith.addf %48, %49 : vector<2x128xf32>
    %51 = vector.broadcast %37 : vector<1x128xf32> to vector<2x128xf32>
    %52 = arith.addf %50, %51 : vector<2x128xf32>
    %cst_43 = arith.constant dense<0.000000e+00> : vector<2x128xf32>
    %53 = tpu.matmul %12, %39, %cst_43 {dimension_numbers = #tpu.dot_dimension_numbers<[1], [0], [0], [1], [0, 0, 1, 1], [], []>} : vector<2x8xf32>, vector<8x128xf32>, vector<2x128xf32> -> vector<2x128xf32>
    %cst_44 = arith.constant dense<0.000000e+00> : vector<2x128xf32>
    %54 = tpu.matmul %14, %40, %cst_44 {dimension_numbers = #tpu.dot_dimension_numbers<[1], [0], [0], [1], [0, 0, 1, 1], [], []>} : vector<2x8xf32>, vector<8x128xf32>, vector<2x128xf32> -> vector<2x128xf32>
    %55 = arith.addf %53, %54 : vector<2x128xf32>
    %56 = vector.broadcast %37 : vector<1x128xf32> to vector<2x128xf32>
    %57 = arith.addf %55, %56 : vector<2x128xf32>
    %cst_45 = arith.constant dense<0.000000e+00> : vector<2x128xf32>
    %58 = tpu.matmul %16, %39, %cst_45 {dimension_numbers = #tpu.dot_dimension_numbers<[1], [0], [0], [1], [0, 0, 1, 1], [], []>} : vector<2x8xf32>, vector<8x128xf32>, vector<2x128xf32> -> vector<2x128xf32>
    %cst_46 = arith.constant dense<0.000000e+00> : vector<2x128xf32>
    %59 = tpu.matmul %18, %40, %cst_46 {dimension_numbers = #tpu.dot_dimension_numbers<[1], [0], [0], [1], [0, 0, 1, 1], [], []>} : vector<2x8xf32>, vector<8x128xf32>, vector<2x128xf32> -> vector<2x128xf32>
    %60 = arith.addf %58, %59 : vector<2x128xf32>
    %61 = vector.broadcast %37 : vector<1x128xf32> to vector<2x128xf32>
    %62 = arith.addf %60, %61 : vector<2x128xf32>
    %cst_47 = arith.constant dense<0.000000e+00> : vector<2x128xf32>
    %63 = tpu.matmul %20, %39, %cst_47 {dimension_numbers = #tpu.dot_dimension_numbers<[1], [0], [0], [1], [0, 0, 1, 1], [], []>} : vector<2x8xf32>, vector<8x128xf32>, vector<2x128xf32> -> vector<2x128xf32>
    %cst_48 = arith.constant dense<0.000000e+00> : vector<2x128xf32>
    %64 = tpu.matmul %22, %40, %cst_48 {dimension_numbers = #tpu.dot_dimension_numbers<[1], [0], [0], [1], [0, 0, 1, 1], [], []>} : vector<2x8xf32>, vector<8x128xf32>, vector<2x128xf32> -> vector<2x128xf32>
    %65 = arith.addf %63, %64 : vector<2x128xf32>
    %66 = vector.broadcast %37 : vector<1x128xf32> to vector<2x128xf32>
    %67 = arith.addf %65, %66 : vector<2x128xf32>
    %cst_49 = arith.constant dense<0.000000e+00> : vector<2x128xf32>
    %68 = tpu.matmul %24, %39, %cst_49 {dimension_numbers = #tpu.dot_dimension_numbers<[1], [0], [0], [1], [0, 0, 1, 1], [], []>} : vector<2x8xf32>, vector<8x128xf32>, vector<2x128xf32> -> vector<2x128xf32>
    %cst_50 = arith.constant dense<0.000000e+00> : vector<2x128xf32>
    %69 = tpu.matmul %26, %40, %cst_50 {dimension_numbers = #tpu.dot_dimension_numbers<[1], [0], [0], [1], [0, 0, 1, 1], [], []>} : vector<2x8xf32>, vector<8x128xf32>, vector<2x128xf32> -> vector<2x128xf32>
    %70 = arith.addf %68, %69 : vector<2x128xf32>
    %71 = vector.broadcast %37 : vector<1x128xf32> to vector<2x128xf32>
    %72 = arith.addf %70, %71 : vector<2x128xf32>
    %cst_51 = arith.constant dense<0.000000e+00> : vector<2x128xf32>
    %73 = tpu.matmul %28, %39, %cst_51 {dimension_numbers = #tpu.dot_dimension_numbers<[1], [0], [0], [1], [0, 0, 1, 1], [], []>} : vector<2x8xf32>, vector<8x128xf32>, vector<2x128xf32> -> vector<2x128xf32>
    %cst_52 = arith.constant dense<0.000000e+00> : vector<2x128xf32>
    %74 = tpu.matmul %30, %40, %cst_52 {dimension_numbers = #tpu.dot_dimension_numbers<[1], [0], [0], [1], [0, 0, 1, 1], [], []>} : vector<2x8xf32>, vector<8x128xf32>, vector<2x128xf32> -> vector<2x128xf32>
    %75 = arith.addf %73, %74 : vector<2x128xf32>
    %76 = vector.broadcast %37 : vector<1x128xf32> to vector<2x128xf32>
    %77 = arith.addf %75, %76 : vector<2x128xf32>
    %cst_53 = arith.constant dense<0.000000e+00> : vector<2x128xf32>
    %78 = tpu.matmul %32, %39, %cst_53 {dimension_numbers = #tpu.dot_dimension_numbers<[1], [0], [0], [1], [0, 0, 1, 1], [], []>} : vector<2x8xf32>, vector<8x128xf32>, vector<2x128xf32> -> vector<2x128xf32>
    %cst_54 = arith.constant dense<0.000000e+00> : vector<2x128xf32>
    %79 = tpu.matmul %34, %40, %cst_54 {dimension_numbers = #tpu.dot_dimension_numbers<[1], [0], [0], [1], [0, 0, 1, 1], [], []>} : vector<2x8xf32>, vector<8x128xf32>, vector<2x128xf32> -> vector<2x128xf32>
    %80 = arith.addf %78, %79 : vector<2x128xf32>
    %81 = vector.broadcast %37 : vector<1x128xf32> to vector<2x128xf32>
    %82 = arith.addf %80, %81 : vector<2x128xf32>
    %cst_55 = arith.constant dense<0.000000e+00> : vector<2x128xf32>
    %83 = tpu.matmul %4, %41, %cst_55 {dimension_numbers = #tpu.dot_dimension_numbers<[1], [0], [0], [1], [0, 0, 1, 1], [], []>} : vector<2x8xf32>, vector<8x128xf32>, vector<2x128xf32> -> vector<2x128xf32>
    %cst_56 = arith.constant dense<0.000000e+00> : vector<2x128xf32>
    %84 = tpu.matmul %6, %42, %cst_56 {dimension_numbers = #tpu.dot_dimension_numbers<[1], [0], [0], [1], [0, 0, 1, 1], [], []>} : vector<2x8xf32>, vector<8x128xf32>, vector<2x128xf32> -> vector<2x128xf32>
    %85 = arith.addf %83, %84 : vector<2x128xf32>
    %cst_57 = arith.constant dense<0.000000e+00> : vector<2x128xf32>
    %86 = tpu.matmul %8, %41, %cst_57 {dimension_numbers = #tpu.dot_dimension_numbers<[1], [0], [0], [1], [0, 0, 1, 1], [], []>} : vector<2x8xf32>, vector<8x128xf32>, vector<2x128xf32> -> vector<2x128xf32>
    %cst_58 = arith.constant dense<0.000000e+00> : vector<2x128xf32>
    %87 = tpu.matmul %10, %42, %cst_58 {dimension_numbers = #tpu.dot_dimension_numbers<[1], [0], [0], [1], [0, 0, 1, 1], [], []>} : vector<2x8xf32>, vector<8x128xf32>, vector<2x128xf32> -> vector<2x128xf32>
    %88 = arith.addf %86, %87 : vector<2x128xf32>
    %cst_59 = arith.constant dense<0.000000e+00> : vector<2x128xf32>
    %89 = tpu.matmul %12, %41, %cst_59 {dimension_numbers = #tpu.dot_dimension_numbers<[1], [0], [0], [1], [0, 0, 1, 1], [], []>} : vector<2x8xf32>, vector<8x128xf32>, vector<2x128xf32> -> vector<2x128xf32>
    %cst_60 = arith.constant dense<0.000000e+00> : vector<2x128xf32>
    %90 = tpu.matmul %14, %42, %cst_60 {dimension_numbers = #tpu.dot_dimension_numbers<[1], [0], [0], [1], [0, 0, 1, 1], [], []>} : vector<2x8xf32>, vector<8x128xf32>, vector<2x128xf32> -> vector<2x128xf32>
    %91 = arith.addf %89, %90 : vector<2x128xf32>
    %cst_61 = arith.constant dense<0.000000e+00> : vector<2x128xf32>
    %92 = tpu.matmul %16, %41, %cst_61 {dimension_numbers = #tpu.dot_dimension_numbers<[1], [0], [0], [1], [0, 0, 1, 1], [], []>} : vector<2x8xf32>, vector<8x128xf32>, vector<2x128xf32> -> vector<2x128xf32>
    %cst_62 = arith.constant dense<0.000000e+00> : vector<2x128xf32>
    %93 = tpu.matmul %18, %42, %cst_62 {dimension_numbers = #tpu.dot_dimension_numbers<[1], [0], [0], [1], [0, 0, 1, 1], [], []>} : vector<2x8xf32>, vector<8x128xf32>, vector<2x128xf32> -> vector<2x128xf32>
    %94 = arith.addf %92, %93 : vector<2x128xf32>
    %cst_63 = arith.constant dense<0.000000e+00> : vector<2x128xf32>
    %95 = tpu.matmul %20, %41, %cst_63 {dimension_numbers = #tpu.dot_dimension_numbers<[1], [0], [0], [1], [0, 0, 1, 1], [], []>} : vector<2x8xf32>, vector<8x128xf32>, vector<2x128xf32> -> vector<2x128xf32>
    %cst_64 = arith.constant dense<0.000000e+00> : vector<2x128xf32>
    %96 = tpu.matmul %22, %42, %cst_64 {dimension_numbers = #tpu.dot_dimension_numbers<[1], [0], [0], [1], [0, 0, 1, 1], [], []>} : vector<2x8xf32>, vector<8x128xf32>, vector<2x128xf32> -> vector<2x128xf32>
    %97 = arith.addf %95, %96 : vector<2x128xf32>
    %cst_65 = arith.constant dense<0.000000e+00> : vector<2x128xf32>
    %98 = tpu.matmul %24, %41, %cst_65 {dimension_numbers = #tpu.dot_dimension_numbers<[1], [0], [0], [1], [0, 0, 1, 1], [], []>} : vector<2x8xf32>, vector<8x128xf32>, vector<2x128xf32> -> vector<2x128xf32>
    %cst_66 = arith.constant dense<0.000000e+00> : vector<2x128xf32>
    %99 = tpu.matmul %26, %42, %cst_66 {dimension_numbers = #tpu.dot_dimension_numbers<[1], [0], [0], [1], [0, 0, 1, 1], [], []>} : vector<2x8xf32>, vector<8x128xf32>, vector<2x128xf32> -> vector<2x128xf32>
    %100 = arith.addf %98, %99 : vector<2x128xf32>
    %cst_67 = arith.constant dense<0.000000e+00> : vector<2x128xf32>
    %101 = tpu.matmul %28, %41, %cst_67 {dimension_numbers = #tpu.dot_dimension_numbers<[1], [0], [0], [1], [0, 0, 1, 1], [], []>} : vector<2x8xf32>, vector<8x128xf32>, vector<2x128xf32> -> vector<2x128xf32>
    %cst_68 = arith.constant dense<0.000000e+00> : vector<2x128xf32>
    %102 = tpu.matmul %30, %42, %cst_68 {dimension_numbers = #tpu.dot_dimension_numbers<[1], [0], [0], [1], [0, 0, 1, 1], [], []>} : vector<2x8xf32>, vector<8x128xf32>, vector<2x128xf32> -> vector<2x128xf32>
    %103 = arith.addf %101, %102 : vector<2x128xf32>
    %cst_69 = arith.constant dense<0.000000e+00> : vector<2x128xf32>
    %104 = tpu.matmul %32, %41, %cst_69 {dimension_numbers = #tpu.dot_dimension_numbers<[1], [0], [0], [1], [0, 0, 1, 1], [], []>} : vector<2x8xf32>, vector<8x128xf32>, vector<2x128xf32> -> vector<2x128xf32>
    %cst_70 = arith.constant dense<0.000000e+00> : vector<2x128xf32>
    %105 = tpu.matmul %34, %42, %cst_70 {dimension_numbers = #tpu.dot_dimension_numbers<[1], [0], [0], [1], [0, 0, 1, 1], [], []>} : vector<2x8xf32>, vector<8x128xf32>, vector<2x128xf32> -> vector<2x128xf32>
    %106 = arith.addf %104, %105 : vector<2x128xf32>
    %cst_71 = arith.constant 0.000000e+00 : f32
    %107 = vector.broadcast %cst_71 : f32 to vector<2x32xf32>
    %cst_72 = arith.constant 0.000000e+00 : f32
    %108 = vector.broadcast %cst_72 : f32 to vector<2x32xf32>
    %109 = arith.addf %47, %106 : vector<2x128xf32>
    %cst_73 = arith.constant dense<0.000000e+00> : vector<2x128xf32>
    %110 = tpu.matmul %107, %38, %cst_73 {dimension_numbers = #tpu.dot_dimension_numbers<[1], [0], [0], [1], [0, 0, 1, 1], [], []>} : vector<2x32xf32>, vector<32x128xf32>, vector<2x128xf32> -> vector<2x128xf32>
    %111 = arith.addf %109, %110 : vector<2x128xf32>
    %112 = vector.extract_strided_slice %111 {offsets = [0, 0], sizes = [2, 32], strides = [1, 1]} : vector<2x128xf32> to vector<2x32xf32>
    %113 = arith.negf %112 : vector<2x32xf32>
    %114 = math.exp %113 : vector<2x32xf32>
    %cst_74 = arith.constant 1.000000e+00 : f32
    %115 = vector.broadcast %cst_74 : f32 to vector<2x32xf32>
    %116 = arith.addf %115, %114 : vector<2x32xf32>
    %117 = arith.divf %115, %116 : vector<2x32xf32>
    %118 = vector.extract_strided_slice %111 {offsets = [0, 32], sizes = [2, 32], strides = [1, 1]} : vector<2x128xf32> to vector<2x32xf32>
    %119 = arith.negf %118 : vector<2x32xf32>
    %120 = math.exp %119 : vector<2x32xf32>
    %cst_75 = arith.constant 1.000000e+00 : f32
    %121 = vector.broadcast %cst_75 : f32 to vector<2x32xf32>
    %122 = arith.addf %121, %120 : vector<2x32xf32>
    %123 = arith.divf %121, %122 : vector<2x32xf32>
    %124 = vector.extract_strided_slice %111 {offsets = [0, 64], sizes = [2, 32], strides = [1, 1]} : vector<2x128xf32> to vector<2x32xf32>
    %125 = math.tanh %124 : vector<2x32xf32>
    %126 = vector.extract_strided_slice %111 {offsets = [0, 96], sizes = [2, 32], strides = [1, 1]} : vector<2x128xf32> to vector<2x32xf32>
    %127 = arith.negf %126 : vector<2x32xf32>
    %128 = math.exp %127 : vector<2x32xf32>
    %cst_76 = arith.constant 1.000000e+00 : f32
    %129 = vector.broadcast %cst_76 : f32 to vector<2x32xf32>
    %130 = arith.addf %129, %128 : vector<2x32xf32>
    %131 = arith.divf %129, %130 : vector<2x32xf32>
    %132 = arith.mulf %123, %108 : vector<2x32xf32>
    %133 = arith.mulf %117, %125 : vector<2x32xf32>
    %134 = arith.addf %132, %133 : vector<2x32xf32>
    %135 = math.tanh %134 : vector<2x32xf32>
    %136 = arith.mulf %131, %135 : vector<2x32xf32>
    %137 = arith.addf %52, %103 : vector<2x128xf32>
    %cst_77 = arith.constant dense<0.000000e+00> : vector<2x128xf32>
    %138 = tpu.matmul %136, %38, %cst_77 {dimension_numbers = #tpu.dot_dimension_numbers<[1], [0], [0], [1], [0, 0, 1, 1], [], []>} : vector<2x32xf32>, vector<32x128xf32>, vector<2x128xf32> -> vector<2x128xf32>
    %139 = arith.addf %137, %138 : vector<2x128xf32>
    %140 = vector.extract_strided_slice %139 {offsets = [0, 0], sizes = [2, 32], strides = [1, 1]} : vector<2x128xf32> to vector<2x32xf32>
    %141 = arith.negf %140 : vector<2x32xf32>
    %142 = math.exp %141 : vector<2x32xf32>
    %cst_78 = arith.constant 1.000000e+00 : f32
    %143 = vector.broadcast %cst_78 : f32 to vector<2x32xf32>
    %144 = arith.addf %143, %142 : vector<2x32xf32>
    %145 = arith.divf %143, %144 : vector<2x32xf32>
    %146 = vector.extract_strided_slice %139 {offsets = [0, 32], sizes = [2, 32], strides = [1, 1]} : vector<2x128xf32> to vector<2x32xf32>
    %147 = arith.negf %146 : vector<2x32xf32>
    %148 = math.exp %147 : vector<2x32xf32>
    %cst_79 = arith.constant 1.000000e+00 : f32
    %149 = vector.broadcast %cst_79 : f32 to vector<2x32xf32>
    %150 = arith.addf %149, %148 : vector<2x32xf32>
    %151 = arith.divf %149, %150 : vector<2x32xf32>
    %152 = vector.extract_strided_slice %139 {offsets = [0, 64], sizes = [2, 32], strides = [1, 1]} : vector<2x128xf32> to vector<2x32xf32>
    %153 = math.tanh %152 : vector<2x32xf32>
    %154 = vector.extract_strided_slice %139 {offsets = [0, 96], sizes = [2, 32], strides = [1, 1]} : vector<2x128xf32> to vector<2x32xf32>
    %155 = arith.negf %154 : vector<2x32xf32>
    %156 = math.exp %155 : vector<2x32xf32>
    %cst_80 = arith.constant 1.000000e+00 : f32
    %157 = vector.broadcast %cst_80 : f32 to vector<2x32xf32>
    %158 = arith.addf %157, %156 : vector<2x32xf32>
    %159 = arith.divf %157, %158 : vector<2x32xf32>
    %160 = arith.mulf %151, %134 : vector<2x32xf32>
    %161 = arith.mulf %145, %153 : vector<2x32xf32>
    %162 = arith.addf %160, %161 : vector<2x32xf32>
    %163 = math.tanh %162 : vector<2x32xf32>
    %164 = arith.mulf %159, %163 : vector<2x32xf32>
    %165 = arith.addf %57, %100 : vector<2x128xf32>
    %cst_81 = arith.constant dense<0.000000e+00> : vector<2x128xf32>
    %166 = tpu.matmul %164, %38, %cst_81 {dimension_numbers = #tpu.dot_dimension_numbers<[1], [0], [0], [1], [0, 0, 1, 1], [], []>} : vector<2x32xf32>, vector<32x128xf32>, vector<2x128xf32> -> vector<2x128xf32>
    %167 = arith.addf %165, %166 : vector<2x128xf32>
    %168 = vector.extract_strided_slice %167 {offsets = [0, 0], sizes = [2, 32], strides = [1, 1]} : vector<2x128xf32> to vector<2x32xf32>
    %169 = arith.negf %168 : vector<2x32xf32>
    %170 = math.exp %169 : vector<2x32xf32>
    %cst_82 = arith.constant 1.000000e+00 : f32
    %171 = vector.broadcast %cst_82 : f32 to vector<2x32xf32>
    %172 = arith.addf %171, %170 : vector<2x32xf32>
    %173 = arith.divf %171, %172 : vector<2x32xf32>
    %174 = vector.extract_strided_slice %167 {offsets = [0, 32], sizes = [2, 32], strides = [1, 1]} : vector<2x128xf32> to vector<2x32xf32>
    %175 = arith.negf %174 : vector<2x32xf32>
    %176 = math.exp %175 : vector<2x32xf32>
    %cst_83 = arith.constant 1.000000e+00 : f32
    %177 = vector.broadcast %cst_83 : f32 to vector<2x32xf32>
    %178 = arith.addf %177, %176 : vector<2x32xf32>
    %179 = arith.divf %177, %178 : vector<2x32xf32>
    %180 = vector.extract_strided_slice %167 {offsets = [0, 64], sizes = [2, 32], strides = [1, 1]} : vector<2x128xf32> to vector<2x32xf32>
    %181 = math.tanh %180 : vector<2x32xf32>
    %182 = vector.extract_strided_slice %167 {offsets = [0, 96], sizes = [2, 32], strides = [1, 1]} : vector<2x128xf32> to vector<2x32xf32>
    %183 = arith.negf %182 : vector<2x32xf32>
    %184 = math.exp %183 : vector<2x32xf32>
    %cst_84 = arith.constant 1.000000e+00 : f32
    %185 = vector.broadcast %cst_84 : f32 to vector<2x32xf32>
    %186 = arith.addf %185, %184 : vector<2x32xf32>
    %187 = arith.divf %185, %186 : vector<2x32xf32>
    %188 = arith.mulf %179, %162 : vector<2x32xf32>
    %189 = arith.mulf %173, %181 : vector<2x32xf32>
    %190 = arith.addf %188, %189 : vector<2x32xf32>
    %191 = math.tanh %190 : vector<2x32xf32>
    %192 = arith.mulf %187, %191 : vector<2x32xf32>
    %193 = arith.addf %62, %97 : vector<2x128xf32>
    %cst_85 = arith.constant dense<0.000000e+00> : vector<2x128xf32>
    %194 = tpu.matmul %192, %38, %cst_85 {dimension_numbers = #tpu.dot_dimension_numbers<[1], [0], [0], [1], [0, 0, 1, 1], [], []>} : vector<2x32xf32>, vector<32x128xf32>, vector<2x128xf32> -> vector<2x128xf32>
    %195 = arith.addf %193, %194 : vector<2x128xf32>
    %196 = vector.extract_strided_slice %195 {offsets = [0, 0], sizes = [2, 32], strides = [1, 1]} : vector<2x128xf32> to vector<2x32xf32>
    %197 = arith.negf %196 : vector<2x32xf32>
    %198 = math.exp %197 : vector<2x32xf32>
    %cst_86 = arith.constant 1.000000e+00 : f32
    %199 = vector.broadcast %cst_86 : f32 to vector<2x32xf32>
    %200 = arith.addf %199, %198 : vector<2x32xf32>
    %201 = arith.divf %199, %200 : vector<2x32xf32>
    %202 = vector.extract_strided_slice %195 {offsets = [0, 32], sizes = [2, 32], strides = [1, 1]} : vector<2x128xf32> to vector<2x32xf32>
    %203 = arith.negf %202 : vector<2x32xf32>
    %204 = math.exp %203 : vector<2x32xf32>
    %cst_87 = arith.constant 1.000000e+00 : f32
    %205 = vector.broadcast %cst_87 : f32 to vector<2x32xf32>
    %206 = arith.addf %205, %204 : vector<2x32xf32>
    %207 = arith.divf %205, %206 : vector<2x32xf32>
    %208 = vector.extract_strided_slice %195 {offsets = [0, 64], sizes = [2, 32], strides = [1, 1]} : vector<2x128xf32> to vector<2x32xf32>
    %209 = math.tanh %208 : vector<2x32xf32>
    %210 = vector.extract_strided_slice %195 {offsets = [0, 96], sizes = [2, 32], strides = [1, 1]} : vector<2x128xf32> to vector<2x32xf32>
    %211 = arith.negf %210 : vector<2x32xf32>
    %212 = math.exp %211 : vector<2x32xf32>
    %cst_88 = arith.constant 1.000000e+00 : f32
    %213 = vector.broadcast %cst_88 : f32 to vector<2x32xf32>
    %214 = arith.addf %213, %212 : vector<2x32xf32>
    %215 = arith.divf %213, %214 : vector<2x32xf32>
    %216 = arith.mulf %207, %190 : vector<2x32xf32>
    %217 = arith.mulf %201, %209 : vector<2x32xf32>
    %218 = arith.addf %216, %217 : vector<2x32xf32>
    %219 = math.tanh %218 : vector<2x32xf32>
    %220 = arith.mulf %215, %219 : vector<2x32xf32>
    %221 = arith.addf %67, %94 : vector<2x128xf32>
    %cst_89 = arith.constant dense<0.000000e+00> : vector<2x128xf32>
    %222 = tpu.matmul %220, %38, %cst_89 {dimension_numbers = #tpu.dot_dimension_numbers<[1], [0], [0], [1], [0, 0, 1, 1], [], []>} : vector<2x32xf32>, vector<32x128xf32>, vector<2x128xf32> -> vector<2x128xf32>
    %223 = arith.addf %221, %222 : vector<2x128xf32>
    %224 = vector.extract_strided_slice %223 {offsets = [0, 0], sizes = [2, 32], strides = [1, 1]} : vector<2x128xf32> to vector<2x32xf32>
    %225 = arith.negf %224 : vector<2x32xf32>
    %226 = math.exp %225 : vector<2x32xf32>
    %cst_90 = arith.constant 1.000000e+00 : f32
    %227 = vector.broadcast %cst_90 : f32 to vector<2x32xf32>
    %228 = arith.addf %227, %226 : vector<2x32xf32>
    %229 = arith.divf %227, %228 : vector<2x32xf32>
    %230 = vector.extract_strided_slice %223 {offsets = [0, 32], sizes = [2, 32], strides = [1, 1]} : vector<2x128xf32> to vector<2x32xf32>
    %231 = arith.negf %230 : vector<2x32xf32>
    %232 = math.exp %231 : vector<2x32xf32>
    %cst_91 = arith.constant 1.000000e+00 : f32
    %233 = vector.broadcast %cst_91 : f32 to vector<2x32xf32>
    %234 = arith.addf %233, %232 : vector<2x32xf32>
    %235 = arith.divf %233, %234 : vector<2x32xf32>
    %236 = vector.extract_strided_slice %223 {offsets = [0, 64], sizes = [2, 32], strides = [1, 1]} : vector<2x128xf32> to vector<2x32xf32>
    %237 = math.tanh %236 : vector<2x32xf32>
    %238 = vector.extract_strided_slice %223 {offsets = [0, 96], sizes = [2, 32], strides = [1, 1]} : vector<2x128xf32> to vector<2x32xf32>
    %239 = arith.negf %238 : vector<2x32xf32>
    %240 = math.exp %239 : vector<2x32xf32>
    %cst_92 = arith.constant 1.000000e+00 : f32
    %241 = vector.broadcast %cst_92 : f32 to vector<2x32xf32>
    %242 = arith.addf %241, %240 : vector<2x32xf32>
    %243 = arith.divf %241, %242 : vector<2x32xf32>
    %244 = arith.mulf %235, %218 : vector<2x32xf32>
    %245 = arith.mulf %229, %237 : vector<2x32xf32>
    %246 = arith.addf %244, %245 : vector<2x32xf32>
    %247 = math.tanh %246 : vector<2x32xf32>
    %248 = arith.mulf %243, %247 : vector<2x32xf32>
    %249 = arith.addf %72, %91 : vector<2x128xf32>
    %cst_93 = arith.constant dense<0.000000e+00> : vector<2x128xf32>
    %250 = tpu.matmul %248, %38, %cst_93 {dimension_numbers = #tpu.dot_dimension_numbers<[1], [0], [0], [1], [0, 0, 1, 1], [], []>} : vector<2x32xf32>, vector<32x128xf32>, vector<2x128xf32> -> vector<2x128xf32>
    %251 = arith.addf %249, %250 : vector<2x128xf32>
    %252 = vector.extract_strided_slice %251 {offsets = [0, 0], sizes = [2, 32], strides = [1, 1]} : vector<2x128xf32> to vector<2x32xf32>
    %253 = arith.negf %252 : vector<2x32xf32>
    %254 = math.exp %253 : vector<2x32xf32>
    %cst_94 = arith.constant 1.000000e+00 : f32
    %255 = vector.broadcast %cst_94 : f32 to vector<2x32xf32>
    %256 = arith.addf %255, %254 : vector<2x32xf32>
    %257 = arith.divf %255, %256 : vector<2x32xf32>
    %258 = vector.extract_strided_slice %251 {offsets = [0, 32], sizes = [2, 32], strides = [1, 1]} : vector<2x128xf32> to vector<2x32xf32>
    %259 = arith.negf %258 : vector<2x32xf32>
    %260 = math.exp %259 : vector<2x32xf32>
    %cst_95 = arith.constant 1.000000e+00 : f32
    %261 = vector.broadcast %cst_95 : f32 to vector<2x32xf32>
    %262 = arith.addf %261, %260 : vector<2x32xf32>
    %263 = arith.divf %261, %262 : vector<2x32xf32>
    %264 = vector.extract_strided_slice %251 {offsets = [0, 64], sizes = [2, 32], strides = [1, 1]} : vector<2x128xf32> to vector<2x32xf32>
    %265 = math.tanh %264 : vector<2x32xf32>
    %266 = vector.extract_strided_slice %251 {offsets = [0, 96], sizes = [2, 32], strides = [1, 1]} : vector<2x128xf32> to vector<2x32xf32>
    %267 = arith.negf %266 : vector<2x32xf32>
    %268 = math.exp %267 : vector<2x32xf32>
    %cst_96 = arith.constant 1.000000e+00 : f32
    %269 = vector.broadcast %cst_96 : f32 to vector<2x32xf32>
    %270 = arith.addf %269, %268 : vector<2x32xf32>
    %271 = arith.divf %269, %270 : vector<2x32xf32>
    %272 = arith.mulf %263, %246 : vector<2x32xf32>
    %273 = arith.mulf %257, %265 : vector<2x32xf32>
    %274 = arith.addf %272, %273 : vector<2x32xf32>
    %275 = math.tanh %274 : vector<2x32xf32>
    %276 = arith.mulf %271, %275 : vector<2x32xf32>
    %277 = arith.addf %77, %88 : vector<2x128xf32>
    %cst_97 = arith.constant dense<0.000000e+00> : vector<2x128xf32>
    %278 = tpu.matmul %276, %38, %cst_97 {dimension_numbers = #tpu.dot_dimension_numbers<[1], [0], [0], [1], [0, 0, 1, 1], [], []>} : vector<2x32xf32>, vector<32x128xf32>, vector<2x128xf32> -> vector<2x128xf32>
    %279 = arith.addf %277, %278 : vector<2x128xf32>
    %280 = vector.extract_strided_slice %279 {offsets = [0, 0], sizes = [2, 32], strides = [1, 1]} : vector<2x128xf32> to vector<2x32xf32>
    %281 = arith.negf %280 : vector<2x32xf32>
    %282 = math.exp %281 : vector<2x32xf32>
    %cst_98 = arith.constant 1.000000e+00 : f32
    %283 = vector.broadcast %cst_98 : f32 to vector<2x32xf32>
    %284 = arith.addf %283, %282 : vector<2x32xf32>
    %285 = arith.divf %283, %284 : vector<2x32xf32>
    %286 = vector.extract_strided_slice %279 {offsets = [0, 32], sizes = [2, 32], strides = [1, 1]} : vector<2x128xf32> to vector<2x32xf32>
    %287 = arith.negf %286 : vector<2x32xf32>
    %288 = math.exp %287 : vector<2x32xf32>
    %cst_99 = arith.constant 1.000000e+00 : f32
    %289 = vector.broadcast %cst_99 : f32 to vector<2x32xf32>
    %290 = arith.addf %289, %288 : vector<2x32xf32>
    %291 = arith.divf %289, %290 : vector<2x32xf32>
    %292 = vector.extract_strided_slice %279 {offsets = [0, 64], sizes = [2, 32], strides = [1, 1]} : vector<2x128xf32> to vector<2x32xf32>
    %293 = math.tanh %292 : vector<2x32xf32>
    %294 = vector.extract_strided_slice %279 {offsets = [0, 96], sizes = [2, 32], strides = [1, 1]} : vector<2x128xf32> to vector<2x32xf32>
    %295 = arith.negf %294 : vector<2x32xf32>
    %296 = math.exp %295 : vector<2x32xf32>
    %cst_100 = arith.constant 1.000000e+00 : f32
    %297 = vector.broadcast %cst_100 : f32 to vector<2x32xf32>
    %298 = arith.addf %297, %296 : vector<2x32xf32>
    %299 = arith.divf %297, %298 : vector<2x32xf32>
    %300 = arith.mulf %291, %274 : vector<2x32xf32>
    %301 = arith.mulf %285, %293 : vector<2x32xf32>
    %302 = arith.addf %300, %301 : vector<2x32xf32>
    %303 = math.tanh %302 : vector<2x32xf32>
    %304 = arith.mulf %299, %303 : vector<2x32xf32>
    %305 = arith.addf %82, %85 : vector<2x128xf32>
    %cst_101 = arith.constant dense<0.000000e+00> : vector<2x128xf32>
    %306 = tpu.matmul %304, %38, %cst_101 {dimension_numbers = #tpu.dot_dimension_numbers<[1], [0], [0], [1], [0, 0, 1, 1], [], []>} : vector<2x32xf32>, vector<32x128xf32>, vector<2x128xf32> -> vector<2x128xf32>
    %307 = arith.addf %305, %306 : vector<2x128xf32>
    %308 = vector.extract_strided_slice %307 {offsets = [0, 0], sizes = [2, 32], strides = [1, 1]} : vector<2x128xf32> to vector<2x32xf32>
    %309 = arith.negf %308 : vector<2x32xf32>
    %310 = math.exp %309 : vector<2x32xf32>
    %cst_102 = arith.constant 1.000000e+00 : f32
    %311 = vector.broadcast %cst_102 : f32 to vector<2x32xf32>
    %312 = arith.addf %311, %310 : vector<2x32xf32>
    %313 = arith.divf %311, %312 : vector<2x32xf32>
    %314 = vector.extract_strided_slice %307 {offsets = [0, 32], sizes = [2, 32], strides = [1, 1]} : vector<2x128xf32> to vector<2x32xf32>
    %315 = arith.negf %314 : vector<2x32xf32>
    %316 = math.exp %315 : vector<2x32xf32>
    %cst_103 = arith.constant 1.000000e+00 : f32
    %317 = vector.broadcast %cst_103 : f32 to vector<2x32xf32>
    %318 = arith.addf %317, %316 : vector<2x32xf32>
    %319 = arith.divf %317, %318 : vector<2x32xf32>
    %320 = vector.extract_strided_slice %307 {offsets = [0, 64], sizes = [2, 32], strides = [1, 1]} : vector<2x128xf32> to vector<2x32xf32>
    %321 = math.tanh %320 : vector<2x32xf32>
    %322 = vector.extract_strided_slice %307 {offsets = [0, 96], sizes = [2, 32], strides = [1, 1]} : vector<2x128xf32> to vector<2x32xf32>
    %323 = arith.negf %322 : vector<2x32xf32>
    %324 = math.exp %323 : vector<2x32xf32>
    %cst_104 = arith.constant 1.000000e+00 : f32
    %325 = vector.broadcast %cst_104 : f32 to vector<2x32xf32>
    %326 = arith.addf %325, %324 : vector<2x32xf32>
    %327 = arith.divf %325, %326 : vector<2x32xf32>
    %328 = arith.mulf %319, %302 : vector<2x32xf32>
    %329 = arith.mulf %313, %321 : vector<2x32xf32>
    %330 = arith.addf %328, %329 : vector<2x32xf32>
    %331 = math.tanh %330 : vector<2x32xf32>
    %332 = arith.mulf %327, %331 : vector<2x32xf32>
    %333 = arith.select %2, %136, %332 : vector<2x32xi1>, vector<2x32xf32>
    %334 = arith.select %2, %164, %304 : vector<2x32xi1>, vector<2x32xf32>
    %335 = arith.select %2, %192, %276 : vector<2x32xi1>, vector<2x32xf32>
    %336 = arith.select %2, %220, %248 : vector<2x32xi1>, vector<2x32xf32>
    %337 = arith.select %2, %248, %220 : vector<2x32xi1>, vector<2x32xf32>
    %338 = arith.select %2, %276, %192 : vector<2x32xi1>, vector<2x32xf32>
    %339 = arith.select %2, %304, %164 : vector<2x32xi1>, vector<2x32xf32>
    %340 = arith.select %2, %332, %136 : vector<2x32xi1>, vector<2x32xf32>
    %c0_105 = arith.constant 0 : index
    %c0_106 = arith.constant 0 : index
    %341 = vector.load %arg5[%c0_105, %c0_106] : memref<64x128xf32, #tpu.memory_space<vmem>>, vector<64x128xf32>
    %c0_107 = arith.constant 0 : index
    %c0_108 = arith.constant 0 : index
    %342 = vector.load %arg6[%c0_107, %c0_108] : memref<64x128xf32, #tpu.memory_space<vmem>>, vector<64x128xf32>
    %c0_109 = arith.constant 0 : index
    %c0_110 = arith.constant 0 : index
    %343 = vector.load %arg7[%c0_109, %c0_110] : memref<1x128xf32, #tpu.memory_space<vmem>>, vector<1x128xf32>
    %c0_111 = arith.constant 0 : index
    %c0_112 = arith.constant 0 : index
    %344 = vector.load %arg8[%c0_111, %c0_112] : memref<32x128xf32, #tpu.memory_space<vmem>>, vector<32x128xf32>
    %345 = vector.extract_strided_slice %341 {offsets = [0, 0], sizes = [32, 128], strides = [1, 1]} : vector<64x128xf32> to vector<32x128xf32>
    %346 = vector.extract_strided_slice %341 {offsets = [32, 0], sizes = [32, 128], strides = [1, 1]} : vector<64x128xf32> to vector<32x128xf32>
    %347 = vector.extract_strided_slice %342 {offsets = [0, 0], sizes = [32, 128], strides = [1, 1]} : vector<64x128xf32> to vector<32x128xf32>
    %348 = vector.extract_strided_slice %342 {offsets = [32, 0], sizes = [32, 128], strides = [1, 1]} : vector<64x128xf32> to vector<32x128xf32>
    %cst_113 = arith.constant dense<0.000000e+00> : vector<2x128xf32>
    %349 = tpu.matmul %333, %345, %cst_113 {dimension_numbers = #tpu.dot_dimension_numbers<[1], [0], [0], [1], [0, 0, 1, 1], [], []>} : vector<2x32xf32>, vector<32x128xf32>, vector<2x128xf32> -> vector<2x128xf32>
    %cst_114 = arith.constant dense<0.000000e+00> : vector<2x128xf32>
    %350 = tpu.matmul %334, %346, %cst_114 {dimension_numbers = #tpu.dot_dimension_numbers<[1], [0], [0], [1], [0, 0, 1, 1], [], []>} : vector<2x32xf32>, vector<32x128xf32>, vector<2x128xf32> -> vector<2x128xf32>
    %351 = arith.addf %349, %350 : vector<2x128xf32>
    %352 = vector.broadcast %343 : vector<1x128xf32> to vector<2x128xf32>
    %353 = arith.addf %351, %352 : vector<2x128xf32>
    %cst_115 = arith.constant dense<0.000000e+00> : vector<2x128xf32>
    %354 = tpu.matmul %335, %345, %cst_115 {dimension_numbers = #tpu.dot_dimension_numbers<[1], [0], [0], [1], [0, 0, 1, 1], [], []>} : vector<2x32xf32>, vector<32x128xf32>, vector<2x128xf32> -> vector<2x128xf32>
    %cst_116 = arith.constant dense<0.000000e+00> : vector<2x128xf32>
    %355 = tpu.matmul %336, %346, %cst_116 {dimension_numbers = #tpu.dot_dimension_numbers<[1], [0], [0], [1], [0, 0, 1, 1], [], []>} : vector<2x32xf32>, vector<32x128xf32>, vector<2x128xf32> -> vector<2x128xf32>
    %356 = arith.addf %354, %355 : vector<2x128xf32>
    %357 = vector.broadcast %343 : vector<1x128xf32> to vector<2x128xf32>
    %358 = arith.addf %356, %357 : vector<2x128xf32>
    %cst_117 = arith.constant dense<0.000000e+00> : vector<2x128xf32>
    %359 = tpu.matmul %337, %345, %cst_117 {dimension_numbers = #tpu.dot_dimension_numbers<[1], [0], [0], [1], [0, 0, 1, 1], [], []>} : vector<2x32xf32>, vector<32x128xf32>, vector<2x128xf32> -> vector<2x128xf32>
    %cst_118 = arith.constant dense<0.000000e+00> : vector<2x128xf32>
    %360 = tpu.matmul %338, %346, %cst_118 {dimension_numbers = #tpu.dot_dimension_numbers<[1], [0], [0], [1], [0, 0, 1, 1], [], []>} : vector<2x32xf32>, vector<32x128xf32>, vector<2x128xf32> -> vector<2x128xf32>
    %361 = arith.addf %359, %360 : vector<2x128xf32>
    %362 = vector.broadcast %343 : vector<1x128xf32> to vector<2x128xf32>
    %363 = arith.addf %361, %362 : vector<2x128xf32>
    %cst_119 = arith.constant dense<0.000000e+00> : vector<2x128xf32>
    %364 = tpu.matmul %339, %345, %cst_119 {dimension_numbers = #tpu.dot_dimension_numbers<[1], [0], [0], [1], [0, 0, 1, 1], [], []>} : vector<2x32xf32>, vector<32x128xf32>, vector<2x128xf32> -> vector<2x128xf32>
    %cst_120 = arith.constant dense<0.000000e+00> : vector<2x128xf32>
    %365 = tpu.matmul %340, %346, %cst_120 {dimension_numbers = #tpu.dot_dimension_numbers<[1], [0], [0], [1], [0, 0, 1, 1], [], []>} : vector<2x32xf32>, vector<32x128xf32>, vector<2x128xf32> -> vector<2x128xf32>
    %366 = arith.addf %364, %365 : vector<2x128xf32>
    %367 = vector.broadcast %343 : vector<1x128xf32> to vector<2x128xf32>
    %368 = arith.addf %366, %367 : vector<2x128xf32>
    %cst_121 = arith.constant dense<0.000000e+00> : vector<2x128xf32>
    %369 = tpu.matmul %333, %347, %cst_121 {dimension_numbers = #tpu.dot_dimension_numbers<[1], [0], [0], [1], [0, 0, 1, 1], [], []>} : vector<2x32xf32>, vector<32x128xf32>, vector<2x128xf32> -> vector<2x128xf32>
    %cst_122 = arith.constant dense<0.000000e+00> : vector<2x128xf32>
    %370 = tpu.matmul %334, %348, %cst_122 {dimension_numbers = #tpu.dot_dimension_numbers<[1], [0], [0], [1], [0, 0, 1, 1], [], []>} : vector<2x32xf32>, vector<32x128xf32>, vector<2x128xf32> -> vector<2x128xf32>
    %371 = arith.addf %369, %370 : vector<2x128xf32>
    %cst_123 = arith.constant dense<0.000000e+00> : vector<2x128xf32>
    %372 = tpu.matmul %335, %347, %cst_123 {dimension_numbers = #tpu.dot_dimension_numbers<[1], [0], [0], [1], [0, 0, 1, 1], [], []>} : vector<2x32xf32>, vector<32x128xf32>, vector<2x128xf32> -> vector<2x128xf32>
    %cst_124 = arith.constant dense<0.000000e+00> : vector<2x128xf32>
    %373 = tpu.matmul %336, %348, %cst_124 {dimension_numbers = #tpu.dot_dimension_numbers<[1], [0], [0], [1], [0, 0, 1, 1], [], []>} : vector<2x32xf32>, vector<32x128xf32>, vector<2x128xf32> -> vector<2x128xf32>
    %374 = arith.addf %372, %373 : vector<2x128xf32>
    %cst_125 = arith.constant dense<0.000000e+00> : vector<2x128xf32>
    %375 = tpu.matmul %337, %347, %cst_125 {dimension_numbers = #tpu.dot_dimension_numbers<[1], [0], [0], [1], [0, 0, 1, 1], [], []>} : vector<2x32xf32>, vector<32x128xf32>, vector<2x128xf32> -> vector<2x128xf32>
    %cst_126 = arith.constant dense<0.000000e+00> : vector<2x128xf32>
    %376 = tpu.matmul %338, %348, %cst_126 {dimension_numbers = #tpu.dot_dimension_numbers<[1], [0], [0], [1], [0, 0, 1, 1], [], []>} : vector<2x32xf32>, vector<32x128xf32>, vector<2x128xf32> -> vector<2x128xf32>
    %377 = arith.addf %375, %376 : vector<2x128xf32>
    %cst_127 = arith.constant dense<0.000000e+00> : vector<2x128xf32>
    %378 = tpu.matmul %339, %347, %cst_127 {dimension_numbers = #tpu.dot_dimension_numbers<[1], [0], [0], [1], [0, 0, 1, 1], [], []>} : vector<2x32xf32>, vector<32x128xf32>, vector<2x128xf32> -> vector<2x128xf32>
    %cst_128 = arith.constant dense<0.000000e+00> : vector<2x128xf32>
    %379 = tpu.matmul %340, %348, %cst_128 {dimension_numbers = #tpu.dot_dimension_numbers<[1], [0], [0], [1], [0, 0, 1, 1], [], []>} : vector<2x32xf32>, vector<32x128xf32>, vector<2x128xf32> -> vector<2x128xf32>
    %380 = arith.addf %378, %379 : vector<2x128xf32>
    %cst_129 = arith.constant 0.000000e+00 : f32
    %381 = vector.broadcast %cst_129 : f32 to vector<2x32xf32>
    %cst_130 = arith.constant 0.000000e+00 : f32
    %382 = vector.broadcast %cst_130 : f32 to vector<2x32xf32>
    %383 = arith.addf %353, %380 : vector<2x128xf32>
    %cst_131 = arith.constant dense<0.000000e+00> : vector<2x128xf32>
    %384 = tpu.matmul %381, %344, %cst_131 {dimension_numbers = #tpu.dot_dimension_numbers<[1], [0], [0], [1], [0, 0, 1, 1], [], []>} : vector<2x32xf32>, vector<32x128xf32>, vector<2x128xf32> -> vector<2x128xf32>
    %385 = arith.addf %383, %384 : vector<2x128xf32>
    %386 = vector.extract_strided_slice %385 {offsets = [0, 0], sizes = [2, 32], strides = [1, 1]} : vector<2x128xf32> to vector<2x32xf32>
    %387 = arith.negf %386 : vector<2x32xf32>
    %388 = math.exp %387 : vector<2x32xf32>
    %cst_132 = arith.constant 1.000000e+00 : f32
    %389 = vector.broadcast %cst_132 : f32 to vector<2x32xf32>
    %390 = arith.addf %389, %388 : vector<2x32xf32>
    %391 = arith.divf %389, %390 : vector<2x32xf32>
    %392 = vector.extract_strided_slice %385 {offsets = [0, 32], sizes = [2, 32], strides = [1, 1]} : vector<2x128xf32> to vector<2x32xf32>
    %393 = arith.negf %392 : vector<2x32xf32>
    %394 = math.exp %393 : vector<2x32xf32>
    %cst_133 = arith.constant 1.000000e+00 : f32
    %395 = vector.broadcast %cst_133 : f32 to vector<2x32xf32>
    %396 = arith.addf %395, %394 : vector<2x32xf32>
    %397 = arith.divf %395, %396 : vector<2x32xf32>
    %398 = vector.extract_strided_slice %385 {offsets = [0, 64], sizes = [2, 32], strides = [1, 1]} : vector<2x128xf32> to vector<2x32xf32>
    %399 = math.tanh %398 : vector<2x32xf32>
    %400 = vector.extract_strided_slice %385 {offsets = [0, 96], sizes = [2, 32], strides = [1, 1]} : vector<2x128xf32> to vector<2x32xf32>
    %401 = arith.negf %400 : vector<2x32xf32>
    %402 = math.exp %401 : vector<2x32xf32>
    %cst_134 = arith.constant 1.000000e+00 : f32
    %403 = vector.broadcast %cst_134 : f32 to vector<2x32xf32>
    %404 = arith.addf %403, %402 : vector<2x32xf32>
    %405 = arith.divf %403, %404 : vector<2x32xf32>
    %406 = arith.mulf %397, %382 : vector<2x32xf32>
    %407 = arith.mulf %391, %399 : vector<2x32xf32>
    %408 = arith.addf %406, %407 : vector<2x32xf32>
    %409 = math.tanh %408 : vector<2x32xf32>
    %410 = arith.mulf %405, %409 : vector<2x32xf32>
    %411 = arith.addf %358, %377 : vector<2x128xf32>
    %cst_135 = arith.constant dense<0.000000e+00> : vector<2x128xf32>
    %412 = tpu.matmul %410, %344, %cst_135 {dimension_numbers = #tpu.dot_dimension_numbers<[1], [0], [0], [1], [0, 0, 1, 1], [], []>} : vector<2x32xf32>, vector<32x128xf32>, vector<2x128xf32> -> vector<2x128xf32>
    %413 = arith.addf %411, %412 : vector<2x128xf32>
    %414 = vector.extract_strided_slice %413 {offsets = [0, 0], sizes = [2, 32], strides = [1, 1]} : vector<2x128xf32> to vector<2x32xf32>
    %415 = arith.negf %414 : vector<2x32xf32>
    %416 = math.exp %415 : vector<2x32xf32>
    %cst_136 = arith.constant 1.000000e+00 : f32
    %417 = vector.broadcast %cst_136 : f32 to vector<2x32xf32>
    %418 = arith.addf %417, %416 : vector<2x32xf32>
    %419 = arith.divf %417, %418 : vector<2x32xf32>
    %420 = vector.extract_strided_slice %413 {offsets = [0, 32], sizes = [2, 32], strides = [1, 1]} : vector<2x128xf32> to vector<2x32xf32>
    %421 = arith.negf %420 : vector<2x32xf32>
    %422 = math.exp %421 : vector<2x32xf32>
    %cst_137 = arith.constant 1.000000e+00 : f32
    %423 = vector.broadcast %cst_137 : f32 to vector<2x32xf32>
    %424 = arith.addf %423, %422 : vector<2x32xf32>
    %425 = arith.divf %423, %424 : vector<2x32xf32>
    %426 = vector.extract_strided_slice %413 {offsets = [0, 64], sizes = [2, 32], strides = [1, 1]} : vector<2x128xf32> to vector<2x32xf32>
    %427 = math.tanh %426 : vector<2x32xf32>
    %428 = vector.extract_strided_slice %413 {offsets = [0, 96], sizes = [2, 32], strides = [1, 1]} : vector<2x128xf32> to vector<2x32xf32>
    %429 = arith.negf %428 : vector<2x32xf32>
    %430 = math.exp %429 : vector<2x32xf32>
    %cst_138 = arith.constant 1.000000e+00 : f32
    %431 = vector.broadcast %cst_138 : f32 to vector<2x32xf32>
    %432 = arith.addf %431, %430 : vector<2x32xf32>
    %433 = arith.divf %431, %432 : vector<2x32xf32>
    %434 = arith.mulf %425, %408 : vector<2x32xf32>
    %435 = arith.mulf %419, %427 : vector<2x32xf32>
    %436 = arith.addf %434, %435 : vector<2x32xf32>
    %437 = math.tanh %436 : vector<2x32xf32>
    %438 = arith.mulf %433, %437 : vector<2x32xf32>
    %439 = arith.addf %363, %374 : vector<2x128xf32>
    %cst_139 = arith.constant dense<0.000000e+00> : vector<2x128xf32>
    %440 = tpu.matmul %438, %344, %cst_139 {dimension_numbers = #tpu.dot_dimension_numbers<[1], [0], [0], [1], [0, 0, 1, 1], [], []>} : vector<2x32xf32>, vector<32x128xf32>, vector<2x128xf32> -> vector<2x128xf32>
    %441 = arith.addf %439, %440 : vector<2x128xf32>
    %442 = vector.extract_strided_slice %441 {offsets = [0, 0], sizes = [2, 32], strides = [1, 1]} : vector<2x128xf32> to vector<2x32xf32>
    %443 = arith.negf %442 : vector<2x32xf32>
    %444 = math.exp %443 : vector<2x32xf32>
    %cst_140 = arith.constant 1.000000e+00 : f32
    %445 = vector.broadcast %cst_140 : f32 to vector<2x32xf32>
    %446 = arith.addf %445, %444 : vector<2x32xf32>
    %447 = arith.divf %445, %446 : vector<2x32xf32>
    %448 = vector.extract_strided_slice %441 {offsets = [0, 32], sizes = [2, 32], strides = [1, 1]} : vector<2x128xf32> to vector<2x32xf32>
    %449 = arith.negf %448 : vector<2x32xf32>
    %450 = math.exp %449 : vector<2x32xf32>
    %cst_141 = arith.constant 1.000000e+00 : f32
    %451 = vector.broadcast %cst_141 : f32 to vector<2x32xf32>
    %452 = arith.addf %451, %450 : vector<2x32xf32>
    %453 = arith.divf %451, %452 : vector<2x32xf32>
    %454 = vector.extract_strided_slice %441 {offsets = [0, 64], sizes = [2, 32], strides = [1, 1]} : vector<2x128xf32> to vector<2x32xf32>
    %455 = math.tanh %454 : vector<2x32xf32>
    %456 = vector.extract_strided_slice %441 {offsets = [0, 96], sizes = [2, 32], strides = [1, 1]} : vector<2x128xf32> to vector<2x32xf32>
    %457 = arith.negf %456 : vector<2x32xf32>
    %458 = math.exp %457 : vector<2x32xf32>
    %cst_142 = arith.constant 1.000000e+00 : f32
    %459 = vector.broadcast %cst_142 : f32 to vector<2x32xf32>
    %460 = arith.addf %459, %458 : vector<2x32xf32>
    %461 = arith.divf %459, %460 : vector<2x32xf32>
    %462 = arith.mulf %453, %436 : vector<2x32xf32>
    %463 = arith.mulf %447, %455 : vector<2x32xf32>
    %464 = arith.addf %462, %463 : vector<2x32xf32>
    %465 = math.tanh %464 : vector<2x32xf32>
    %466 = arith.mulf %461, %465 : vector<2x32xf32>
    %467 = arith.addf %368, %371 : vector<2x128xf32>
    %cst_143 = arith.constant dense<0.000000e+00> : vector<2x128xf32>
    %468 = tpu.matmul %466, %344, %cst_143 {dimension_numbers = #tpu.dot_dimension_numbers<[1], [0], [0], [1], [0, 0, 1, 1], [], []>} : vector<2x32xf32>, vector<32x128xf32>, vector<2x128xf32> -> vector<2x128xf32>
    %469 = arith.addf %467, %468 : vector<2x128xf32>
    %470 = vector.extract_strided_slice %469 {offsets = [0, 0], sizes = [2, 32], strides = [1, 1]} : vector<2x128xf32> to vector<2x32xf32>
    %471 = arith.negf %470 : vector<2x32xf32>
    %472 = math.exp %471 : vector<2x32xf32>
    %cst_144 = arith.constant 1.000000e+00 : f32
    %473 = vector.broadcast %cst_144 : f32 to vector<2x32xf32>
    %474 = arith.addf %473, %472 : vector<2x32xf32>
    %475 = arith.divf %473, %474 : vector<2x32xf32>
    %476 = vector.extract_strided_slice %469 {offsets = [0, 32], sizes = [2, 32], strides = [1, 1]} : vector<2x128xf32> to vector<2x32xf32>
    %477 = arith.negf %476 : vector<2x32xf32>
    %478 = math.exp %477 : vector<2x32xf32>
    %cst_145 = arith.constant 1.000000e+00 : f32
    %479 = vector.broadcast %cst_145 : f32 to vector<2x32xf32>
    %480 = arith.addf %479, %478 : vector<2x32xf32>
    %481 = arith.divf %479, %480 : vector<2x32xf32>
    %482 = vector.extract_strided_slice %469 {offsets = [0, 64], sizes = [2, 32], strides = [1, 1]} : vector<2x128xf32> to vector<2x32xf32>
    %483 = math.tanh %482 : vector<2x32xf32>
    %484 = vector.extract_strided_slice %469 {offsets = [0, 96], sizes = [2, 32], strides = [1, 1]} : vector<2x128xf32> to vector<2x32xf32>
    %485 = arith.negf %484 : vector<2x32xf32>
    %486 = math.exp %485 : vector<2x32xf32>
    %cst_146 = arith.constant 1.000000e+00 : f32
    %487 = vector.broadcast %cst_146 : f32 to vector<2x32xf32>
    %488 = arith.addf %487, %486 : vector<2x32xf32>
    %489 = arith.divf %487, %488 : vector<2x32xf32>
    %490 = arith.mulf %481, %464 : vector<2x32xf32>
    %491 = arith.mulf %475, %483 : vector<2x32xf32>
    %492 = arith.addf %490, %491 : vector<2x32xf32>
    %493 = math.tanh %492 : vector<2x32xf32>
    %494 = arith.mulf %489, %493 : vector<2x32xf32>
    %495 = arith.select %2, %410, %494 : vector<2x32xi1>, vector<2x32xf32>
    %496 = arith.select %2, %438, %466 : vector<2x32xi1>, vector<2x32xf32>
    %497 = arith.select %2, %466, %438 : vector<2x32xi1>, vector<2x32xf32>
    %498 = arith.select %2, %494, %410 : vector<2x32xi1>, vector<2x32xf32>
    %c0_147 = arith.constant 0 : index
    %c0_148 = arith.constant 0 : index
    %499 = vector.load %arg9[%c0_147, %c0_148] : memref<64x128xf32, #tpu.memory_space<vmem>>, vector<64x128xf32>
    %c0_149 = arith.constant 0 : index
    %c0_150 = arith.constant 0 : index
    %500 = vector.load %arg10[%c0_149, %c0_150] : memref<64x128xf32, #tpu.memory_space<vmem>>, vector<64x128xf32>
    %c0_151 = arith.constant 0 : index
    %c0_152 = arith.constant 0 : index
    %501 = vector.load %arg11[%c0_151, %c0_152] : memref<1x128xf32, #tpu.memory_space<vmem>>, vector<1x128xf32>
    %c0_153 = arith.constant 0 : index
    %c0_154 = arith.constant 0 : index
    %502 = vector.load %arg12[%c0_153, %c0_154] : memref<32x128xf32, #tpu.memory_space<vmem>>, vector<32x128xf32>
    %503 = vector.extract_strided_slice %499 {offsets = [0, 0], sizes = [32, 128], strides = [1, 1]} : vector<64x128xf32> to vector<32x128xf32>
    %504 = vector.extract_strided_slice %499 {offsets = [32, 0], sizes = [32, 128], strides = [1, 1]} : vector<64x128xf32> to vector<32x128xf32>
    %505 = vector.extract_strided_slice %500 {offsets = [0, 0], sizes = [32, 128], strides = [1, 1]} : vector<64x128xf32> to vector<32x128xf32>
    %506 = vector.extract_strided_slice %500 {offsets = [32, 0], sizes = [32, 128], strides = [1, 1]} : vector<64x128xf32> to vector<32x128xf32>
    %cst_155 = arith.constant dense<0.000000e+00> : vector<2x128xf32>
    %507 = tpu.matmul %495, %503, %cst_155 {dimension_numbers = #tpu.dot_dimension_numbers<[1], [0], [0], [1], [0, 0, 1, 1], [], []>} : vector<2x32xf32>, vector<32x128xf32>, vector<2x128xf32> -> vector<2x128xf32>
    %cst_156 = arith.constant dense<0.000000e+00> : vector<2x128xf32>
    %508 = tpu.matmul %496, %504, %cst_156 {dimension_numbers = #tpu.dot_dimension_numbers<[1], [0], [0], [1], [0, 0, 1, 1], [], []>} : vector<2x32xf32>, vector<32x128xf32>, vector<2x128xf32> -> vector<2x128xf32>
    %509 = arith.addf %507, %508 : vector<2x128xf32>
    %510 = vector.broadcast %501 : vector<1x128xf32> to vector<2x128xf32>
    %511 = arith.addf %509, %510 : vector<2x128xf32>
    %cst_157 = arith.constant dense<0.000000e+00> : vector<2x128xf32>
    %512 = tpu.matmul %497, %503, %cst_157 {dimension_numbers = #tpu.dot_dimension_numbers<[1], [0], [0], [1], [0, 0, 1, 1], [], []>} : vector<2x32xf32>, vector<32x128xf32>, vector<2x128xf32> -> vector<2x128xf32>
    %cst_158 = arith.constant dense<0.000000e+00> : vector<2x128xf32>
    %513 = tpu.matmul %498, %504, %cst_158 {dimension_numbers = #tpu.dot_dimension_numbers<[1], [0], [0], [1], [0, 0, 1, 1], [], []>} : vector<2x32xf32>, vector<32x128xf32>, vector<2x128xf32> -> vector<2x128xf32>
    %514 = arith.addf %512, %513 : vector<2x128xf32>
    %515 = vector.broadcast %501 : vector<1x128xf32> to vector<2x128xf32>
    %516 = arith.addf %514, %515 : vector<2x128xf32>
    %cst_159 = arith.constant dense<0.000000e+00> : vector<2x128xf32>
    %517 = tpu.matmul %495, %505, %cst_159 {dimension_numbers = #tpu.dot_dimension_numbers<[1], [0], [0], [1], [0, 0, 1, 1], [], []>} : vector<2x32xf32>, vector<32x128xf32>, vector<2x128xf32> -> vector<2x128xf32>
    %cst_160 = arith.constant dense<0.000000e+00> : vector<2x128xf32>
    %518 = tpu.matmul %496, %506, %cst_160 {dimension_numbers = #tpu.dot_dimension_numbers<[1], [0], [0], [1], [0, 0, 1, 1], [], []>} : vector<2x32xf32>, vector<32x128xf32>, vector<2x128xf32> -> vector<2x128xf32>
    %519 = arith.addf %517, %518 : vector<2x128xf32>
    %cst_161 = arith.constant dense<0.000000e+00> : vector<2x128xf32>
    %520 = tpu.matmul %497, %505, %cst_161 {dimension_numbers = #tpu.dot_dimension_numbers<[1], [0], [0], [1], [0, 0, 1, 1], [], []>} : vector<2x32xf32>, vector<32x128xf32>, vector<2x128xf32> -> vector<2x128xf32>
    %cst_162 = arith.constant dense<0.000000e+00> : vector<2x128xf32>
    %521 = tpu.matmul %498, %506, %cst_162 {dimension_numbers = #tpu.dot_dimension_numbers<[1], [0], [0], [1], [0, 0, 1, 1], [], []>} : vector<2x32xf32>, vector<32x128xf32>, vector<2x128xf32> -> vector<2x128xf32>
    %522 = arith.addf %520, %521 : vector<2x128xf32>
    %cst_163 = arith.constant 0.000000e+00 : f32
    %523 = vector.broadcast %cst_163 : f32 to vector<2x32xf32>
    %cst_164 = arith.constant 0.000000e+00 : f32
    %524 = vector.broadcast %cst_164 : f32 to vector<2x32xf32>
    %525 = arith.addf %511, %522 : vector<2x128xf32>
    %cst_165 = arith.constant dense<0.000000e+00> : vector<2x128xf32>
    %526 = tpu.matmul %523, %502, %cst_165 {dimension_numbers = #tpu.dot_dimension_numbers<[1], [0], [0], [1], [0, 0, 1, 1], [], []>} : vector<2x32xf32>, vector<32x128xf32>, vector<2x128xf32> -> vector<2x128xf32>
    %527 = arith.addf %525, %526 : vector<2x128xf32>
    %528 = vector.extract_strided_slice %527 {offsets = [0, 0], sizes = [2, 32], strides = [1, 1]} : vector<2x128xf32> to vector<2x32xf32>
    %529 = arith.negf %528 : vector<2x32xf32>
    %530 = math.exp %529 : vector<2x32xf32>
    %cst_166 = arith.constant 1.000000e+00 : f32
    %531 = vector.broadcast %cst_166 : f32 to vector<2x32xf32>
    %532 = arith.addf %531, %530 : vector<2x32xf32>
    %533 = arith.divf %531, %532 : vector<2x32xf32>
    %534 = vector.extract_strided_slice %527 {offsets = [0, 32], sizes = [2, 32], strides = [1, 1]} : vector<2x128xf32> to vector<2x32xf32>
    %535 = arith.negf %534 : vector<2x32xf32>
    %536 = math.exp %535 : vector<2x32xf32>
    %cst_167 = arith.constant 1.000000e+00 : f32
    %537 = vector.broadcast %cst_167 : f32 to vector<2x32xf32>
    %538 = arith.addf %537, %536 : vector<2x32xf32>
    %539 = arith.divf %537, %538 : vector<2x32xf32>
    %540 = vector.extract_strided_slice %527 {offsets = [0, 64], sizes = [2, 32], strides = [1, 1]} : vector<2x128xf32> to vector<2x32xf32>
    %541 = math.tanh %540 : vector<2x32xf32>
    %542 = vector.extract_strided_slice %527 {offsets = [0, 96], sizes = [2, 32], strides = [1, 1]} : vector<2x128xf32> to vector<2x32xf32>
    %543 = arith.negf %542 : vector<2x32xf32>
    %544 = math.exp %543 : vector<2x32xf32>
    %cst_168 = arith.constant 1.000000e+00 : f32
    %545 = vector.broadcast %cst_168 : f32 to vector<2x32xf32>
    %546 = arith.addf %545, %544 : vector<2x32xf32>
    %547 = arith.divf %545, %546 : vector<2x32xf32>
    %548 = arith.mulf %539, %524 : vector<2x32xf32>
    %549 = arith.mulf %533, %541 : vector<2x32xf32>
    %550 = arith.addf %548, %549 : vector<2x32xf32>
    %551 = math.tanh %550 : vector<2x32xf32>
    %552 = arith.mulf %547, %551 : vector<2x32xf32>
    %553 = arith.addf %516, %519 : vector<2x128xf32>
    %cst_169 = arith.constant dense<0.000000e+00> : vector<2x128xf32>
    %554 = tpu.matmul %552, %502, %cst_169 {dimension_numbers = #tpu.dot_dimension_numbers<[1], [0], [0], [1], [0, 0, 1, 1], [], []>} : vector<2x32xf32>, vector<32x128xf32>, vector<2x128xf32> -> vector<2x128xf32>
    %555 = arith.addf %553, %554 : vector<2x128xf32>
    %556 = vector.extract_strided_slice %555 {offsets = [0, 0], sizes = [2, 32], strides = [1, 1]} : vector<2x128xf32> to vector<2x32xf32>
    %557 = arith.negf %556 : vector<2x32xf32>
    %558 = math.exp %557 : vector<2x32xf32>
    %cst_170 = arith.constant 1.000000e+00 : f32
    %559 = vector.broadcast %cst_170 : f32 to vector<2x32xf32>
    %560 = arith.addf %559, %558 : vector<2x32xf32>
    %561 = arith.divf %559, %560 : vector<2x32xf32>
    %562 = vector.extract_strided_slice %555 {offsets = [0, 32], sizes = [2, 32], strides = [1, 1]} : vector<2x128xf32> to vector<2x32xf32>
    %563 = arith.negf %562 : vector<2x32xf32>
    %564 = math.exp %563 : vector<2x32xf32>
    %cst_171 = arith.constant 1.000000e+00 : f32
    %565 = vector.broadcast %cst_171 : f32 to vector<2x32xf32>
    %566 = arith.addf %565, %564 : vector<2x32xf32>
    %567 = arith.divf %565, %566 : vector<2x32xf32>
    %568 = vector.extract_strided_slice %555 {offsets = [0, 64], sizes = [2, 32], strides = [1, 1]} : vector<2x128xf32> to vector<2x32xf32>
    %569 = math.tanh %568 : vector<2x32xf32>
    %570 = vector.extract_strided_slice %555 {offsets = [0, 96], sizes = [2, 32], strides = [1, 1]} : vector<2x128xf32> to vector<2x32xf32>
    %571 = arith.negf %570 : vector<2x32xf32>
    %572 = math.exp %571 : vector<2x32xf32>
    %cst_172 = arith.constant 1.000000e+00 : f32
    %573 = vector.broadcast %cst_172 : f32 to vector<2x32xf32>
    %574 = arith.addf %573, %572 : vector<2x32xf32>
    %575 = arith.divf %573, %574 : vector<2x32xf32>
    %576 = arith.mulf %567, %550 : vector<2x32xf32>
    %577 = arith.mulf %561, %569 : vector<2x32xf32>
    %578 = arith.addf %576, %577 : vector<2x32xf32>
    %579 = math.tanh %578 : vector<2x32xf32>
    %580 = arith.mulf %575, %579 : vector<2x32xf32>
    %581 = arith.select %2, %552, %580 : vector<2x32xi1>, vector<2x32xf32>
    %582 = arith.select %2, %580, %552 : vector<2x32xi1>, vector<2x32xf32>
    %c0_173 = arith.constant 0 : index
    %c0_174 = arith.constant 0 : index
    %583 = vector.load %arg19[%c0_173, %c0_174] : memref<2x64xf32, #tpu.memory_space<vmem>>, vector<2x32xf32>
    tpu.vector_store %arg19[%c0_173, %c0_174], %581 {strides = array<i32>} : memref<2x64xf32, #tpu.memory_space<vmem>>, vector<2x32xf32>,
    %c0_175 = arith.constant 0 : index
    %c32 = arith.constant 32 : index
    %584 = vector.load %arg19[%c0_175, %c32] : memref<2x64xf32, #tpu.memory_space<vmem>>, vector<2x32xf32>
    tpu.vector_store %arg19[%c0_175, %c32], %582 {strides = array<i32>} : memref<2x64xf32, #tpu.memory_space<vmem>>, vector<2x32xf32>,
    %c0_176 = arith.constant 0 : index
    %c0_177 = arith.constant 0 : index
    %585 = vector.load %arg13[%c0_176, %c0_177] : memref<32x64xf32, #tpu.memory_space<vmem>>, vector<32x64xf32>
    %cst_178 = arith.constant dense<0.000000e+00> : vector<2x64xf32>
    %586 = tpu.matmul %581, %585, %cst_178 {dimension_numbers = #tpu.dot_dimension_numbers<[1], [0], [0], [1], [0, 0, 1, 1], [], []>} : vector<2x32xf32>, vector<32x64xf32>, vector<2x64xf32> -> vector<2x64xf32>
    %c0_179 = arith.constant 0 : index
    %c0_180 = arith.constant 0 : index
    %587 = vector.load %arg14[%c0_179, %c0_180] : memref<1x64xf32, #tpu.memory_space<vmem>>, vector<1x64xf32>
    %588 = vector.broadcast %587 : vector<1x64xf32> to vector<2x64xf32>
    %589 = arith.addf %586, %588 : vector<2x64xf32>
    %590 = vector.extract_strided_slice %589 {offsets = [0, 0], sizes = [2, 16], strides = [1, 1]} : vector<2x64xf32> to vector<2x16xf32>
    %591 = arith.negf %590 : vector<2x16xf32>
    %592 = math.exp %591 : vector<2x16xf32>
    %cst_181 = arith.constant 1.000000e+00 : f32
    %593 = vector.broadcast %cst_181 : f32 to vector<2x16xf32>
    %594 = arith.addf %593, %592 : vector<2x16xf32>
    %595 = arith.divf %593, %594 : vector<2x16xf32>
    %596 = vector.extract_strided_slice %589 {offsets = [0, 32], sizes = [2, 16], strides = [1, 1]} : vector<2x64xf32> to vector<2x16xf32>
    %597 = math.tanh %596 : vector<2x16xf32>
    %598 = arith.mulf %595, %597 : vector<2x16xf32>
    %599 = vector.extract_strided_slice %589 {offsets = [0, 48], sizes = [2, 16], strides = [1, 1]} : vector<2x64xf32> to vector<2x16xf32>
    %600 = arith.negf %599 : vector<2x16xf32>
    %601 = math.exp %600 : vector<2x16xf32>
    %cst_182 = arith.constant 1.000000e+00 : f32
    %602 = vector.broadcast %cst_182 : f32 to vector<2x16xf32>
    %603 = arith.addf %602, %601 : vector<2x16xf32>
    %604 = arith.divf %602, %603 : vector<2x16xf32>
    %605 = math.tanh %598 : vector<2x16xf32>
    %606 = arith.mulf %604, %605 : vector<2x16xf32>
    %c0_183 = arith.constant 0 : index
    %c0_184 = arith.constant 0 : index
    %607 = vector.load %arg15[%c0_183, %c0_184] : memref<16x64xf32, #tpu.memory_space<vmem>>, vector<16x64xf32>
    %cst_185 = arith.constant dense<0.000000e+00> : vector<2x64xf32>
    %608 = tpu.matmul %606, %607, %cst_185 {dimension_numbers = #tpu.dot_dimension_numbers<[1], [0], [0], [1], [0, 0, 1, 1], [], []>} : vector<2x16xf32>, vector<16x64xf32>, vector<2x64xf32> -> vector<2x64xf32>
    %c0_186 = arith.constant 0 : index
    %c0_187 = arith.constant 0 : index
    %609 = vector.load %arg16[%c0_186, %c0_187] : memref<1x64xf32, #tpu.memory_space<vmem>>, vector<1x64xf32>
    %610 = vector.broadcast %609 : vector<1x64xf32> to vector<2x64xf32>
    %611 = arith.addf %608, %610 : vector<2x64xf32>
    %612 = vector.extract_strided_slice %611 {offsets = [0, 0], sizes = [2, 16], strides = [1, 1]} : vector<2x64xf32> to vector<2x16xf32>
    %613 = arith.negf %612 : vector<2x16xf32>
    %614 = math.exp %613 : vector<2x16xf32>
    %cst_188 = arith.constant 1.000000e+00 : f32
    %615 = vector.broadcast %cst_188 : f32 to vector<2x16xf32>
    %616 = arith.addf %615, %614 : vector<2x16xf32>
    %617 = arith.divf %615, %616 : vector<2x16xf32>
    %618 = vector.extract_strided_slice %611 {offsets = [0, 32], sizes = [2, 16], strides = [1, 1]} : vector<2x64xf32> to vector<2x16xf32>
    %619 = math.tanh %618 : vector<2x16xf32>
    %620 = arith.mulf %617, %619 : vector<2x16xf32>
    %621 = vector.extract_strided_slice %611 {offsets = [0, 48], sizes = [2, 16], strides = [1, 1]} : vector<2x64xf32> to vector<2x16xf32>
    %622 = arith.negf %621 : vector<2x16xf32>
    %623 = math.exp %622 : vector<2x16xf32>
    %cst_189 = arith.constant 1.000000e+00 : f32
    %624 = vector.broadcast %cst_189 : f32 to vector<2x16xf32>
    %625 = arith.addf %624, %623 : vector<2x16xf32>
    %626 = arith.divf %624, %625 : vector<2x16xf32>
    %627 = math.tanh %620 : vector<2x16xf32>
    %628 = arith.mulf %626, %627 : vector<2x16xf32>
    %c0_190 = arith.constant 0 : index
    %c0_191 = arith.constant 0 : index
    %629 = vector.load %arg17[%c0_190, %c0_191] : memref<16x32xf32, #tpu.memory_space<vmem>>, vector<16x32xf32>
    %cst_192 = arith.constant dense<0.000000e+00> : vector<2x32xf32>
    %630 = tpu.matmul %628, %629, %cst_192 {dimension_numbers = #tpu.dot_dimension_numbers<[1], [0], [0], [1], [0, 0, 1, 1], [], []>} : vector<2x16xf32>, vector<16x32xf32>, vector<2x32xf32> -> vector<2x32xf32>
    %c0_193 = arith.constant 0 : index
    %c0_194 = arith.constant 0 : index
    %631 = vector.load %arg18[%c0_193, %c0_194] : memref<1x32xf32, #tpu.memory_space<vmem>>, vector<1x32xf32>
    %632 = vector.broadcast %631 : vector<1x32xf32> to vector<2x32xf32>
    %633 = arith.addf %630, %632 : vector<2x32xf32>
    %c0_195 = arith.constant 0 : index
    %c0_196 = arith.constant 0 : index
    %634 = vector.load %arg20[%c0_195, %c0_196] : memref<2x32xf32, #tpu.memory_space<vmem>>, vector<2x32xf32>
    tpu.vector_store %arg20[%c0_195, %c0_196], %633 {strides = array<i32>} : memref<2x32xf32, #tpu.memory_space<vmem>>, vector<2x32xf32>,
    return
  }
}

</mosaic_0001>

<llo_original>
// kernel: las_forward.1
$region0: #{las_forward.1}
  #allocation0 [shape = 'u32[]', space=smem, size = 0x4, offset = 0x4, fixed_abs, tag = 'smem constant byte address 0x4 - core index']
  #allocation1 [shape = 'u32[144,128]{1,0:T(1,128)}', space=vmem, size = 0x12000, scoped, tag = 'internal scratch']
  %s0 = inlined_call_operand.vmem [shape: f32[16,2,8], index: 0, kind: input, shape index: {}]
  %s1 = inlined_call_operand.hbm [shape: f32[16,128], index: 1, kind: input, shape index: {}]
  %s2 = inlined_call_operand.hbm [shape: f32[16,128], index: 2, kind: input, shape index: {}]
  %s3 = inlined_call_operand.hbm [shape: f32[1,128], index: 3, kind: input, shape index: {}]
  %s4 = inlined_call_operand.hbm [shape: f32[32,128], index: 4, kind: input, shape index: {}]
  %s5 = inlined_call_operand.hbm [shape: f32[64,128], index: 5, kind: input, shape index: {}]
  %s6 = inlined_call_operand.hbm [shape: f32[64,128], index: 6, kind: input, shape index: {}]
  %s7 = inlined_call_operand.hbm [shape: f32[1,128], index: 7, kind: input, shape index: {}]
  %s8 = inlined_call_operand.hbm [shape: f32[32,128], index: 8, kind: input, shape index: {}]
  %s9 = inlined_call_operand.hbm [shape: f32[64,128], index: 9, kind: input, shape index: {}]
  %s10 = inlined_call_operand.vmem [shape: f32[64,128], index: 10, kind: input, shape index: {}]
  %s11 = inlined_call_operand.hbm [shape: f32[1,128], index: 11, kind: input, shape index: {}]
  %s12 = inlined_call_operand.hbm [shape: f32[32,128], index: 12, kind: input, shape index: {}]
  %s13 = inlined_call_operand.vmem [shape: f32[32,64], index: 13, kind: input, shape index: {}]
  %s14 = inlined_call_operand.hbm [shape: f32[1,64], index: 14, kind: input, shape index: {}]
  %s15 = inlined_call_operand.hbm [shape: f32[16,64], index: 15, kind: input, shape index: {}]
  %s16 = inlined_call_operand.hbm [shape: f32[1,64], index: 16, kind: input, shape index: {}]
  %s17 = inlined_call_operand.vmem [shape: f32[16,32], index: 17, kind: input, shape index: {}]
  %s18 = inlined_call_operand.vmem [shape: f32[1,32], index: 18, kind: input, shape index: {}]
  %s19 = inlined_call_operand.vmem [shape: f32[2,64], index: 19, kind: output, shape index: {0}]
  %s20 = inlined_call_operand.hbm [shape: f32[2,32], index: 20, kind: output, shape index: {1}]
  %21 = xla_tuple %s19, %s20
  %s22 = sld [smem:[#allocation0]]
  $region150: #{las_forward.1} parent=0
    _
  %s24 = ssub.s32 1, %s22
  %s25 = scalar_select 0, %s24, %s22
  $region1: #{las_forward.1} parent=0
    #allocation2 [shape = 'u8[8192]{0}', space=vmem, size = 0x2000, scoped, tag = 'input window, operand 1, single buffered']
    #allocation3 [shape = 's32[1]{0}', space=sflag, size = 0x4, scoped, tag = 'scoped memory for las_forward.1']
    #allocation4 [shape = 's32[1]{0}', space=sflag, size = 0x4, scoped, tag = 'scoped memory for las_forward.1']
    #allocation5 [shape = 'u8[8192]{0}', space=vmem, size = 0x2000, scoped, tag = 'input window, operand 2, single buffered']
    #allocation6 [shape = 's32[1]{0}', space=sflag, size = 0x4, scoped, tag = 'scoped memory for las_forward.1']
    #allocation7 [shape = 'u8[512]{0}', space=vmem, size = 0x400, scoped, tag = 'input window, operand 3, single buffered']
    #allocation8 [shape = 'u8[16384]{0}', space=vmem, size = 0x4000, scoped, tag = 'input window, operand 4, single buffered']
    #allocation9 [shape = 's32[1]{0}', space=sflag, size = 0x4, scoped, tag = 'scoped memory for las_forward.1']
    #allocation10 [shape = 'u8[32768]{0}', space=vmem, size = 0x8000, scoped, tag = 'input window, operand 5, single buffered']
    #allocation11 [shape = 'u8[32768]{0}', space=vmem, size = 0x8000, scoped, tag = 'input window, operand 6, single buffered']
    #allocation12 [shape = 's32[1]{0}', space=sflag, size = 0x4, scoped, tag = 'scoped memory for las_forward.1']
    #allocation13 [shape = 'u8[512]{0}', space=vmem, size = 0x400, scoped, tag = 'input window, operand 7, single buffered']
    #allocation14 [shape = 'u8[16384]{0}', space=vmem, size = 0x4000, scoped, tag = 'input window, operand 8, single buffered']
    #allocation15 [shape = 's32[1]{0}', space=sflag, size = 0x4, scoped, tag = 'scoped memory for las_forward.1']
    #allocation16 [shape = 'u8[32768]{0}', space=vmem, size = 0x8000, scoped, tag = 'input window, operand 9, single buffered']
    #allocation17 [shape = 'u8[512]{0}', space=vmem, size = 0x400, scoped, tag = 'input window, operand 11, single buffered']
    #allocation18 [shape = 's32[1]{0}', space=sflag, size = 0x4, scoped, tag = 'scoped memory for las_forward.1']
    #allocation19 [shape = 'u8[16384]{0}', space=vmem, size = 0x4000, scoped, tag = 'input window, operand 12, single buffered']
    #allocation20 [shape = 'u8[512]{0}', space=vmem, size = 0x400, scoped, tag = 'input window, operand 14, single buffered']
    #allocation21 [shape = 's32[1]{0}', space=sflag, size = 0x4, scoped, tag = 'scoped memory for las_forward.1']
    #allocation22 [shape = 'u8[8192]{0}', space=vmem, size = 0x2000, scoped, tag = 'input window, operand 15, single buffered']
    #allocation23 [shape = 'u8[512]{0}', space=vmem, size = 0x400, scoped, tag = 'input window, operand 16, single buffered']
    #allocation24 [shape = 's32[1]{0}', space=sflag, size = 0x4, scoped, tag = 'scoped memory for las_forward.1']
    #allocation25 [shape = 'u8[1024]{0}', space=vmem, size = 0x400, scoped, tag = 'output window, operand 1, single buffered']
    %26 = vsyncpa [#allocation3], 0
    %27 = vsyncpa [#allocation6], 0
    %28 = vsyncpa [#allocation9], 0
    %29 = vsyncpa [#allocation12], 0
    %30 = vsyncpa [#allocation15], 0
    %31 = vsyncpa [#allocation18], 0
    %32 = vsyncpa [#allocation21], 0
    %33 = vsyncpa [#allocation24], 0
    %34 = vsyncpa [#allocation4], 0
    // Predicated region
    $region2: #{las_forward.1} parent=1 // pred_check
      _
    $region3: #{las_forward.1} parent=1 // pred_check_branch
      %36 = sbr.rel (0) target = $region5
    $region4: #{las_forward.1} parent=1 // pred_region
      _
    $region5: #{las_forward.1} parent=1 // pred_fallthru
      _
    // Predicated region
    $region6: #{las_forward.1} parent=1 // pred_check
      _
    $region7: #{las_forward.1} parent=1 // pred_check_branch
      %38 = sbr.rel (0) target = $region9
    $region8: #{las_forward.1} parent=1 // pred_region
      %s40 = ssub.s32 256, 256
      %41 = vsyncadd [#allocation3], %s40
      %s42 = sshll.u32 [#allocation2], 4
      %s43 = int_to_ptr.vmem [resolvable:$true] %s42
      %48 = dma.hbm_to_vmem [thread:$0]  %s1, 256, %s43, [#allocation3], 128, 128, 8
    $region9: #{las_forward.1} parent=1 // pred_fallthru
      _
    // Predicated region
    $region10: #{las_forward.1} parent=1 // pred_check
      _
    $region11: #{las_forward.1} parent=1 // pred_check_branch
      %50 = sbr.rel (0) target = $region13
    $region12: #{las_forward.1} parent=1 // pred_region
      %s52 = ssub.s32 256, 256
      %53 = vsyncadd [#allocation6], %s52
      %s54 = sshll.u32 [#allocation5], 4
      %s55 = int_to_ptr.vmem [resolvable:$true] %s54
      %60 = dma.hbm_to_vmem [thread:$0]  %s2, 256, %s55, [#allocation6], 128, 128, 8
    $region13: #{las_forward.1} parent=1 // pred_fallthru
      _
    // Predicated region
    $region14: #{las_forward.1} parent=1 // pred_check
      _
    $region15: #{las_forward.1} parent=1 // pred_check_branch
      %62 = sbr.rel (0) target = $region17
    $region16: #{las_forward.1} parent=1 // pred_region
      %s64 = ssub.s32 16, 16
      %65 = vsyncadd [#allocation6], %s64
      %s67 = sshll.u32 [#allocation7], 4
      %s68 = int_to_ptr.vmem [resolvable:$true] %s67
      %70 = dma.hbm_to_vmem [thread:$0]  %s3, 16, %s68, [#allocation6]
    $region17: #{las_forward.1} parent=1 // pred_fallthru
      _
    // Predicated region
    $region18: #{las_forward.1} parent=1 // pred_check
      _
    $region19: #{las_forward.1} parent=1 // pred_check_branch
      %72 = sbr.rel (0) target = $region21
    $region20: #{las_forward.1} parent=1 // pred_region
      %s74 = ssub.s32 512, 512
      %75 = vsyncadd [#allocation9], %s74
      %s76 = sshll.u32 [#allocation8], 4
      %s77 = int_to_ptr.vmem [resolvable:$true] %s76
      %82 = dma.hbm_to_vmem [thread:$0]  %s4, 512, %s77, [#allocation9], 128, 128, 8
    $region21: #{las_forward.1} parent=1 // pred_fallthru
      _
    // Predicated region
    $region22: #{las_forward.1} parent=1 // pred_check
      _
    $region23: #{las_forward.1} parent=1 // pred_check_branch
      %84 = sbr.rel (0) target = $region25
    $region24: #{las_forward.1} parent=1 // pred_region
      %s86 = ssub.s32 1024, 1024
      %87 = vsyncadd [#allocation9], %s86
      %s88 = sshll.u32 [#allocation10], 4
      %s89 = int_to_ptr.vmem [resolvable:$true] %s88
      %94 = dma.hbm_to_vmem [thread:$0]  %s5, 1024, %s89, [#allocation9], 128, 128, 8
    $region25: #{las_forward.1} parent=1 // pred_fallthru
      _
    // Predicated region
    $region26: #{las_forward.1} parent=1 // pred_check
      _
    $region27: #{las_forward.1} parent=1 // pred_check_branch
      %96 = sbr.rel (0) target = $region29
    $region28: #{las_forward.1} parent=1 // pred_region
      %s98 = ssub.s32 1024, 1024
      %99 = vsyncadd [#allocation12], %s98
      %s100 = sshll.u32 [#allocation11], 4
      %s101 = int_to_ptr.vmem [resolvable:$true] %s100
      %106 = dma.hbm_to_vmem [thread:$0]  %s6, 1024, %s101, [#allocation12], 128, 128, 8
    $region29: #{las_forward.1} parent=1 // pred_fallthru
      _
    // Predicated region
    $region30: #{las_forward.1} parent=1 // pred_check
      _
    $region31: #{las_forward.1} parent=1 // pred_check_branch
      %108 = sbr.rel (0) target = $region33
    $region32: #{las_forward.1} parent=1 // pred_region
      %s110 = ssub.s32 16, 16
      %111 = vsyncadd [#allocation12], %s110
      %s113 = sshll.u32 [#allocation13], 4
      %s114 = int_to_ptr.vmem [resolvable:$true] %s113
      %116 = dma.hbm_to_vmem [thread:$0]  %s7, 16, %s114, [#allocation12]
    $region33: #{las_forward.1} parent=1 // pred_fallthru
      _
    // Predicated region
    $region34: #{las_forward.1} parent=1 // pred_check
      _
    $region35: #{las_forward.1} parent=1 // pred_check_branch
      %118 = sbr.rel (0) target = $region37
    $region36: #{las_forward.1} parent=1 // pred_region
      %s120 = ssub.s32 512, 512
      %121 = vsyncadd [#allocation15], %s120
      %s122 = sshll.u32 [#allocation14], 4
      %s123 = int_to_ptr.vmem [resolvable:$true] %s122
      %128 = dma.hbm_to_vmem [thread:$0]  %s8, 512, %s123, [#allocation15], 128, 128, 8
    $region37: #{las_forward.1} parent=1 // pred_fallthru
      _
    // Predicated region
    $region38: #{las_forward.1} parent=1 // pred_check
      _
    $region39: #{las_forward.1} parent=1 // pred_check_branch
      %130 = sbr.rel (0) target = $region41
    $region40: #{las_forward.1} parent=1 // pred_region
      %s132 = ssub.s32 1024, 1024
      %133 = vsyncadd [#allocation15], %s132
      %s134 = sshll.u32 [#allocation16], 4
      %s135 = int_to_ptr.vmem [resolvable:$true] %s134
      %140 = dma.hbm_to_vmem [thread:$0]  %s9, 1024, %s135, [#allocation15], 128, 128, 8
    $region41: #{las_forward.1} parent=1 // pred_fallthru
      _
    // Predicated region
    $region42: #{las_forward.1} parent=1 // pred_check
      _
    $region43: #{las_forward.1} parent=1 // pred_check_branch
      %142 = sbr.rel (0) target = $region45
    $region44: #{las_forward.1} parent=1 // pred_region
      _
    $region45: #{las_forward.1} parent=1 // pred_fallthru
      _
    // Predicated region
    $region46: #{las_forward.1} parent=1 // pred_check
      _
    $region47: #{las_forward.1} parent=1 // pred_check_branch
      %144 = sbr.rel (0) target = $region49
    $region48: #{las_forward.1} parent=1 // pred_region
      %s146 = ssub.s32 16, 16
      %147 = vsyncadd [#allocation18], %s146
      %s149 = sshll.u32 [#allocation17], 4
      %s150 = int_to_ptr.vmem [resolvable:$true] %s149
      %152 = dma.hbm_to_vmem [thread:$0]  %s11, 16, %s150, [#allocation18]
    $region49: #{las_forward.1} parent=1 // pred_fallthru
      _
    // Predicated region
    $region50: #{las_forward.1} parent=1 // pred_check
      _
    $region51: #{las_forward.1} parent=1 // pred_check_branch
      %154 = sbr.rel (0) target = $region53
    $region52: #{las_forward.1} parent=1 // pred_region
      %s156 = ssub.s32 512, 512
      %157 = vsyncadd [#allocation18], %s156
      %s158 = sshll.u32 [#allocation19], 4
      %s159 = int_to_ptr.vmem [resolvable:$true] %s158
      %164 = dma.hbm_to_vmem [thread:$0]  %s12, 512, %s159, [#allocation18], 128, 128, 8
    $region53: #{las_forward.1} parent=1 // pred_fallthru
      _
    // Predicated region
    $region54: #{las_forward.1} parent=1 // pred_check
      _
    $region55: #{las_forward.1} parent=1 // pred_check_branch
      %166 = sbr.rel (0) target = $region57
    $region56: #{las_forward.1} parent=1 // pred_region
      _
    $region57: #{las_forward.1} parent=1 // pred_fallthru
      _
    // Predicated region
    $region58: #{las_forward.1} parent=1 // pred_check
      _
    $region59: #{las_forward.1} parent=1 // pred_check_branch
      %168 = sbr.rel (0) target = $region61
    $region60: #{las_forward.1} parent=1 // pred_region
      %s170 = ssub.s32 16, 16
      %171 = vsyncadd [#allocation21], %s170
      %s173 = sshll.u32 [#allocation20], 4
      %s174 = int_to_ptr.vmem [resolvable:$true] %s173
      %176 = dma.hbm_to_vmem [thread:$0]  %s14, 16, %s174, [#allocation21]
    $region61: #{las_forward.1} parent=1 // pred_fallthru
      _
    // Predicated region
    $region62: #{las_forward.1} parent=1 // pred_check
      _
    $region63: #{las_forward.1} parent=1 // pred_check_branch
      %178 = sbr.rel (0) target = $region65
    $region64: #{las_forward.1} parent=1 // pred_region
      %s180 = ssub.s32 256, 256
      %181 = vsyncadd [#allocation21], %s180
      %s182 = sshll.u32 [#allocation22], 4
      %s183 = int_to_ptr.vmem [resolvable:$true] %s182
      %188 = dma.hbm_to_vmem [thread:$0]  %s15, 256, %s183, [#allocation21], 128, 128, 8
    $region65: #{las_forward.1} parent=1 // pred_fallthru
      _
    // Predicated region
    $region66: #{las_forward.1} parent=1 // pred_check
      _
    $region67: #{las_forward.1} parent=1 // pred_check_branch
      %190 = sbr.rel (0) target = $region69
    $region68: #{las_forward.1} parent=1 // pred_region
      %s192 = ssub.s32 16, 16
      %193 = vsyncadd [#allocation24], %s192
      %s195 = sshll.u32 [#allocation23], 4
      %s196 = int_to_ptr.vmem [resolvable:$true] %s195
      %198 = dma.hbm_to_vmem [thread:$0]  %s16, 16, %s196, [#allocation24]
    $region69: #{las_forward.1} parent=1 // pred_fallthru
      _
    // Predicated region
    $region70: #{las_forward.1} parent=1 // pred_check
      _
    $region71: #{las_forward.1} parent=1 // pred_check_branch
      %200 = sbr.rel (0) target = $region73
    $region72: #{las_forward.1} parent=1 // pred_region
      _
    $region73: #{las_forward.1} parent=1 // pred_fallthru
      _
    // Predicated region
    $region74: #{las_forward.1} parent=1 // pred_check
      _
    $region75: #{las_forward.1} parent=1 // pred_check_branch
      %202 = sbr.rel (0) target = $region77
    $region76: #{las_forward.1} parent=1 // pred_region
      _
    $region77: #{las_forward.1} parent=1 // pred_fallthru
      _
    // Predicated region
    $region78: #{las_forward.1} parent=1 // pred_check
      _
    $region79: #{las_forward.1} parent=1 // pred_check_branch
      %204 = sbr.rel (0) target = $region81
    $region80: #{las_forward.1} parent=1 // pred_region
      %205 = dma.done [#allocation3], 256
    $region81: #{las_forward.1} parent=1 // pred_fallthru
      _
    // Predicated region
    $region82: #{las_forward.1} parent=1 // pred_check
      _
    $region83: #{las_forward.1} parent=1 // pred_check_branch
      %207 = sbr.rel (0) target = $region85
    $region84: #{las_forward.1} parent=1 // pred_region
      %208 = dma.done [#allocation6], 256
    $region85: #{las_forward.1} parent=1 // pred_fallthru
      _
    // Predicated region
    $region86: #{las_forward.1} parent=1 // pred_check
      _
    $region87: #{las_forward.1} parent=1 // pred_check_branch
      %210 = sbr.rel (0) target = $region89
    $region88: #{las_forward.1} parent=1 // pred_region
      %211 = dma.done [#allocation6], 16
    $region89: #{las_forward.1} parent=1 // pred_fallthru
      _
    // Predicated region
    $region90: #{las_forward.1} parent=1 // pred_check
      _
    $region91: #{las_forward.1} parent=1 // pred_check_branch
      %213 = sbr.rel (0) target = $region93
    $region92: #{las_forward.1} parent=1 // pred_region
      %214 = dma.done [#allocation9], 512
    $region93: #{las_forward.1} parent=1 // pred_fallthru
      _
    // Predicated region
    $region94: #{las_forward.1} parent=1 // pred_check
      _
    $region95: #{las_forward.1} parent=1 // pred_check_branch
      %216 = sbr.rel (0) target = $region97
    $region96: #{las_forward.1} parent=1 // pred_region
      %217 = dma.done [#allocation9], 1024
    $region97: #{las_forward.1} parent=1 // pred_fallthru
      _
    // Predicated region
    $region98: #{las_forward.1} parent=1 // pred_check
      _
    $region99: #{las_forward.1} parent=1 // pred_check_branch
      %219 = sbr.rel (0) target = $region101
    $region100: #{las_forward.1} parent=1 // pred_region
      %220 = dma.done [#allocation12], 1024
    $region101: #{las_forward.1} parent=1 // pred_fallthru
      _
    // Predicated region
    $region102: #{las_forward.1} parent=1 // pred_check
      _
    $region103: #{las_forward.1} parent=1 // pred_check_branch
      %222 = sbr.rel (0) target = $region105
    $region104: #{las_forward.1} parent=1 // pred_region
      %223 = dma.done [#allocation12], 16
    $region105: #{las_forward.1} parent=1 // pred_fallthru
      _
    // Predicated region
    $region106: #{las_forward.1} parent=1 // pred_check
      _
    $region107: #{las_forward.1} parent=1 // pred_check_branch
      %225 = sbr.rel (0) target = $region109
    $region108: #{las_forward.1} parent=1 // pred_region
      %226 = dma.done [#allocation15], 512
    $region109: #{las_forward.1} parent=1 // pred_fallthru
      _
    // Predicated region
    $region110: #{las_forward.1} parent=1 // pred_check
      _
    $region111: #{las_forward.1} parent=1 // pred_check_branch
      %228 = sbr.rel (0) target = $region113
    $region112: #{las_forward.1} parent=1 // pred_region
      %229 = dma.done [#allocation15], 1024
    $region113: #{las_forward.1} parent=1 // pred_fallthru
      _
    // Predicated region
    $region114: #{las_forward.1} parent=1 // pred_check
      _
    $region115: #{las_forward.1} parent=1 // pred_check_branch
      %231 = sbr.rel (0) target = $region117
    $region116: #{las_forward.1} parent=1 // pred_region
      %232 = dma.done [#allocation18], 16
    $region117: #{las_forward.1} parent=1 // pred_fallthru
      _
    // Predicated region
    $region118: #{las_forward.1} parent=1 // pred_check
      _
    $region119: #{las_forward.1} parent=1 // pred_check_branch
      %234 = sbr.rel (0) target = $region121
    $region120: #{las_forward.1} parent=1 // pred_region
      %235 = dma.done [#allocation18], 512
    $region121: #{las_forward.1} parent=1 // pred_fallthru
      _
    // Predicated region
    $region122: #{las_forward.1} parent=1 // pred_check
      _
    $region123: #{las_forward.1} parent=1 // pred_check_branch
      %237 = sbr.rel (0) target = $region125
    $region124: #{las_forward.1} parent=1 // pred_region
      %238 = dma.done [#allocation21], 16
    $region125: #{las_forward.1} parent=1 // pred_fallthru
      _
    // Predicated region
    $region126: #{las_forward.1} parent=1 // pred_check
      _
    $region127: #{las_forward.1} parent=1 // pred_check_branch
      %240 = sbr.rel (0) target = $region129
    $region128: #{las_forward.1} parent=1 // pred_region
      %241 = dma.done [#allocation21], 256
    $region129: #{las_forward.1} parent=1 // pred_fallthru
      _
    // Predicated region
    $region130: #{las_forward.1} parent=1 // pred_check
      _
    $region131: #{las_forward.1} parent=1 // pred_check_branch
      %243 = sbr.rel (0) target = $region133
    $region132: #{las_forward.1} parent=1 // pred_region
      %244 = dma.done [#allocation24], 16
    $region133: #{las_forward.1} parent=1 // pred_fallthru
      _
    %v245 = vlaneseq
    %v246 = vand.u32 %v245, 127
    %vm247 = vcmp.lt.s32.totalorder %v246, 16
    %v248 = vld [vmem:[%s0] sm:$0x3]
    %s249 = scalar_lea.vmem %s0, 2
    %v250 = vld [vmem:[%s249] sm:$0x3]
    %s251 = scalar_lea.vmem %s0, 4
    %v252 = vld [vmem:[%s251] sm:$0x3]
    %s253 = scalar_lea.vmem %s0, 6
    %v254 = vld [vmem:[%s253] sm:$0x3]
    %s255 = scalar_lea.vmem %s0, 8
    %v256 = vld [vmem:[%s255] sm:$0x3]
    %s257 = scalar_lea.vmem %s0, 10
    %v258 = vld [vmem:[%s257] sm:$0x3]
    %s259 = scalar_lea.vmem %s0, 12
    %v260 = vld [vmem:[%s259] sm:$0x3]
    %s261 = scalar_lea.vmem %s0, 14
    %v262 = vld [vmem:[%s261] sm:$0x3]
    %s263 = scalar_lea.vmem %s0, 16
    %v264 = vld [vmem:[%s263] sm:$0x3]
    %s265 = scalar_lea.vmem %s0, 18
    %v266 = vld [vmem:[%s265] sm:$0x3]
    %s267 = scalar_lea.vmem %s0, 20
    %v268 = vld [vmem:[%s267] sm:$0x3]
    %s269 = scalar_lea.vmem %s0, 22
    %v270 = vld [vmem:[%s269] sm:$0x3]
    %s271 = scalar_lea.vmem %s0, 24
    %v272 = vld [vmem:[%s271] sm:$0x3]
    %s273 = scalar_lea.vmem %s0, 26
    %v274 = vld [vmem:[%s273] sm:$0x3]
    %s275 = scalar_lea.vmem %s0, 28
    %v276 = vld [vmem:[%s275] sm:$0x3]
    %s277 = scalar_lea.vmem %s0, 30
    %v278 = vld [vmem:[%s277] sm:$0x3]
    %v279 = vld [vmem:[#allocation2] sm:$0xff]
    %v280 = vld [vmem:[#allocation2 + $0x8] sm:$0xff]
    %v281 = vld [vmem:[#allocation5] sm:$0xff]
    %v282 = vld [vmem:[#allocation5 + $0x8] sm:$0xff]
    %v283 = vld [vmem:[#allocation7] sm:$0x1]
    %v284 = vld [vmem:[#allocation8] sm:$0xff]
    %v285 = vld [vmem:[#allocation8 + $0x8] sm:$0xff]
    %v286 = vld [vmem:[#allocation8 + $0x10] sm:$0xff]
    %v287 = vld [vmem:[#allocation8 + $0x18] sm:$0xff]
    %vm288 = vcmask 64512
    %v290 = vsel %vm288, %v250, 0
    %292 = vmatprep.subr.mxu0 0.0
    %293 = vmatpush1.msra.mxu0 %v280
    %294 = vmatprep.subr.mxu0 0.0
    %295 = vmatpush1.msra.mxu0 0.0
    %296 = vmatprep.subr.mxu0 0.0
    %297 = vmatpush1.msra.mxu0 0.0
    %298 = vmatprep.subr.mxu0 0.0
    %299 = vmatpush1.msra.mxu0 0.0
    %300 = vmatprep.subr.mxu0 0.0
    %301 = vmatpush1.msra.mxu0 0.0
    %302 = vmatprep.subr.mxu0 0.0
    %303 = vmatpush1.msra.mxu0 0.0
    %304 = vmatprep.subr.mxu0 0.0
    %305 = vmatpush1.msra.mxu0 0.0
    %306 = vmatprep.subr.mxu0 0.0
    %307 = vmatpush1.msra.mxu0 0.0
    %308 = vmatprep.subr.mxu0 0.0
    %309 = vmatpush1.msra.mxu0 0.0
    %310 = vmatprep.subr.mxu0 0.0
    %311 = vmatpush1.msra.mxu0 0.0
    %312 = vmatprep.subr.mxu0 0.0
    %313 = vmatpush1.msra.mxu0 0.0
    %314 = vmatprep.subr.mxu0 0.0
    %315 = vmatpush1.msra.mxu0 0.0
    %316 = vmatprep.subr.mxu0 0.0
    %317 = vmatpush1.msra.mxu0 0.0
    %318 = vmatprep.subr.mxu0 0.0
    %319 = vmatpush1.msra.mxu0 0.0
    %320 = vmatprep.subr.mxu0 0.0
    %321 = vmatpush1.msra.mxu0 0.0
    %322 = vmatprep.subr.mxu0 0.0
    %323 = vmatpush1.msra.mxu0 0.0
    %324 = vmatprep.subr.mxu0 0.0
    %325 = vmatpush1.msra.mxu0 0.0
    %326 = vmatprep.subr.mxu0 0.0
    %327 = vmatpush1.msra.mxu0 0.0
    %328 = vmatprep.subr.mxu0 0.0
    %329 = vmatpush1.msra.mxu0 0.0
    %330 = vmatprep.subr.mxu0 0.0
    %331 = vmatpush1.msra.mxu0 0.0
    %332 = vmatprep.subr.mxu0 0.0
    %333 = vmatpush1.msra.mxu0 0.0
    %334 = vmatprep.subr.mxu0 0.0
    %335 = vmatpush1.msra.mxu0 0.0
    %336 = vmatprep.subr.mxu0 0.0
    %337 = vmatpush1.msra.mxu0 0.0
    %338 = vmatprep.subr.mxu0 0.0
    %339 = vmatpush1.msra.mxu0 0.0
    %340 = vmatprep.subr.mxu0 0.0
    %341 = vmatpush1.msra.mxu0 0.0
    %342 = vmatprep.subr.mxu0 0.0
    %343 = vmatpush1.msra.mxu0 0.0
    %344 = vmatprep.subr.mxu0 0.0
    %345 = vmatpush1.msra.mxu0 0.0
    %346 = vmatprep.subr.mxu0 0.0
    %347 = vmatpush1.msra.mxu0 0.0
    %348 = vmatprep.subr.mxu0 0.0
    %349 = vmatpush1.msra.mxu0 0.0
    %350 = vmatprep.subr.mxu0 0.0
    %351 = vmatpush1.msra.mxu0 0.0
    %352 = vmatprep.subr.mxu0 0.0
    %353 = vmatpush1.msra.mxu0 0.0
    %354 = vmatprep.subr.mxu0 0.0
    %355 = vmatpush1.msra.mxu0 0.0
    %356 = vmatprep.mubr.f32.mxu0 0.0
    %357 = vmatmul.mubr.f32.gmra.mrb[0].mxu0 %v290
    %v358 = vpop.f32.mrb[0].mxu0
    %v359 = vadd.f32 0.0, %v358
    %v360 = vpop.f32.mrb[0].mxu0
    %361 = vdwg.mxu0
    %v363 = vsel %vm288, %v248, 0
    %365 = vmatprep.subr.mxu0 0.0
    %366 = vmatpush1.msra.mxu0 %v279
    %367 = vmatprep.subr.mxu0 0.0
    %368 = vmatpush1.msra.mxu0 0.0
    %369 = vmatprep.subr.mxu0 0.0
    %370 = vmatpush1.msra.mxu0 0.0
    %371 = vmatprep.subr.mxu0 0.0
    %372 = vmatpush1.msra.mxu0 0.0
    %373 = vmatprep.subr.mxu0 0.0
    %374 = vmatpush1.msra.mxu0 0.0
    %375 = vmatprep.subr.mxu0 0.0
    %376 = vmatpush1.msra.mxu0 0.0
    %377 = vmatprep.subr.mxu0 0.0
    %378 = vmatpush1.msra.mxu0 0.0
    %379 = vmatprep.subr.mxu0 0.0
    %380 = vmatpush1.msra.mxu0 0.0
    %381 = vmatprep.subr.mxu0 0.0
    %382 = vmatpush1.msra.mxu0 0.0
    %383 = vmatprep.subr.mxu0 0.0
    %384 = vmatpush1.msra.mxu0 0.0
    %385 = vmatprep.subr.mxu0 0.0
    %386 = vmatpush1.msra.mxu0 0.0
    %387 = vmatprep.subr.mxu0 0.0
    %388 = vmatpush1.msra.mxu0 0.0
    %389 = vmatprep.subr.mxu0 0.0
    %390 = vmatpush1.msra.mxu0 0.0
    %391 = vmatprep.subr.mxu0 0.0
    %392 = vmatpush1.msra.mxu0 0.0
    %393 = vmatprep.subr.mxu0 0.0
    %394 = vmatpush1.msra.mxu0 0.0
    %395 = vmatprep.subr.mxu0 0.0
    %396 = vmatpush1.msra.mxu0 0.0
    %397 = vmatprep.subr.mxu0 0.0
    %398 = vmatpush1.msra.mxu0 0.0
    %399 = vmatprep.subr.mxu0 0.0
    %400 = vmatpush1.msra.mxu0 0.0
    %401 = vmatprep.subr.mxu0 0.0
    %402 = vmatpush1.msra.mxu0 0.0
    %403 = vmatprep.subr.mxu0 0.0
    %404 = vmatpush1.msra.mxu0 0.0
    %405 = vmatprep.subr.mxu0 0.0
    %406 = vmatpush1.msra.mxu0 0.0
    %407 = vmatprep.subr.mxu0 0.0
    %408 = vmatpush1.msra.mxu0 0.0
    %409 = vmatprep.subr.mxu0 0.0
    %410 = vmatpush1.msra.mxu0 0.0
    %411 = vmatprep.subr.mxu0 0.0
    %412 = vmatpush1.msra.mxu0 0.0
    %413 = vmatprep.subr.mxu0 0.0
    %414 = vmatpush1.msra.mxu0 0.0
    %415 = vmatprep.subr.mxu0 0.0
    %416 = vmatpush1.msra.mxu0 0.0
    %417 = vmatprep.subr.mxu0 0.0
    %418 = vmatpush1.msra.mxu0 0.0
    %419 = vmatprep.subr.mxu0 0.0
    %420 = vmatpush1.msra.mxu0 0.0
    %421 = vmatprep.subr.mxu0 0.0
    %422 = vmatpush1.msra.mxu0 0.0
    %423 = vmatprep.subr.mxu0 0.0
    %424 = vmatpush1.msra.mxu0 0.0
    %425 = vmatprep.subr.mxu0 0.0
    %426 = vmatpush1.msra.mxu0 0.0
    %427 = vmatprep.subr.mxu0 0.0
    %428 = vmatpush1.msra.mxu0 0.0
    %429 = vmatprep.mubr.f32.mxu0 0.0
    %430 = vmatmul.mubr.f32.gmra.mrb[0].mxu0 %v363
    %v431 = vpop.f32.mrb[0].mxu0
    %v432 = vadd.f32 %v359, %v431
    %v433 = vpop.f32.mrb[0].mxu0
    %434 = vdwg.mxu0
    %v436 = vlaneseq
    %v437 = vshrl.u32 %v436, 7
    %v438 = vsub.s32 0, %v437
    %v439 = vrot.slane %v283, %v438
    %v441 = vadd.f32 %v432, %v439
    %v443 = vsel %vm288, %v254, 0
    %445 = vmatprep.subr.mxu0 0.0
    %446 = vmatpush1.msra.mxu0 %v280
    %447 = vmatprep.subr.mxu0 0.0
    %448 = vmatpush1.msra.mxu0 0.0
    %449 = vmatprep.subr.mxu0 0.0
    %450 = vmatpush1.msra.mxu0 0.0
    %451 = vmatprep.subr.mxu0 0.0
    %452 = vmatpush1.msra.mxu0 0.0
    %453 = vmatprep.subr.mxu0 0.0
    %454 = vmatpush1.msra.mxu0 0.0
    %455 = vmatprep.subr.mxu0 0.0
    %456 = vmatpush1.msra.mxu0 0.0
    %457 = vmatprep.subr.mxu0 0.0
    %458 = vmatpush1.msra.mxu0 0.0
    %459 = vmatprep.subr.mxu0 0.0
    %460 = vmatpush1.msra.mxu0 0.0
    %461 = vmatprep.subr.mxu0 0.0
    %462 = vmatpush1.msra.mxu0 0.0
    %463 = vmatprep.subr.mxu0 0.0
    %464 = vmatpush1.msra.mxu0 0.0
    %465 = vmatprep.subr.mxu0 0.0
    %466 = vmatpush1.msra.mxu0 0.0
    %467 = vmatprep.subr.mxu0 0.0
    %468 = vmatpush1.msra.mxu0 0.0
    %469 = vmatprep.subr.mxu0 0.0
    %470 = vmatpush1.msra.mxu0 0.0
    %471 = vmatprep.subr.mxu0 0.0
    %472 = vmatpush1.msra.mxu0 0.0
    %473 = vmatprep.subr.mxu0 0.0
    %474 = vmatpush1.msra.mxu0 0.0
    %475 = vmatprep.subr.mxu0 0.0
    %476 = vmatpush1.msra.mxu0 0.0
    %477 = vmatprep.subr.mxu0 0.0
    %478 = vmatpush1.msra.mxu0 0.0
    %479 = vmatprep.subr.mxu0 0.0
    %480 = vmatpush1.msra.mxu0 0.0
    %481 = vmatprep.subr.mxu0 0.0
    %482 = vmatpush1.msra.mxu0 0.0
    %483 = vmatprep.subr.mxu0 0.0
    %484 = vmatpush1.msra.mxu0 0.0
    %485 = vmatprep.subr.mxu0 0.0
    %486 = vmatpush1.msra.mxu0 0.0
    %487 = vmatprep.subr.mxu0 0.0
    %488 = vmatpush1.msra.mxu0 0.0
    %489 = vmatprep.subr.mxu0 0.0
    %490 = vmatpush1.msra.mxu0 0.0
    %491 = vmatprep.subr.mxu0 0.0
    %492 = vmatpush1.msra.mxu0 0.0
    %493 = vmatprep.subr.mxu0 0.0
    %494 = vmatpush1.msra.mxu0 0.0
    %495 = vmatprep.subr.mxu0 0.0
    %496 = vmatpush1.msra.mxu0 0.0
    %497 = vmatprep.subr.mxu0 0.0
    %498 = vmatpush1.msra.mxu0 0.0
    %499 = vmatprep.subr.mxu0 0.0
    %500 = vmatpush1.msra.mxu0 0.0
    %501 = vmatprep.subr.mxu0 0.0
    %502 = vmatpush1.msra.mxu0 0.0
    %503 = vmatprep.subr.mxu0 0.0
    %504 = vmatpush1.msra.mxu0 0.0
    %505 = vmatprep.subr.mxu0 0.0
    %506 = vmatpush1.msra.mxu0 0.0
    %507 = vmatprep.subr.mxu0 0.0
    %508 = vmatpush1.msra.mxu0 0.0
    %509 = vmatprep.mubr.f32.mxu0 0.0
    %510 = vmatmul.mubr.f32.gmra.mrb[0].mxu0 %v443
    %v511 = vpop.f32.mrb[0].mxu0
    %v512 = vadd.f32 0.0, %v511
    %v513 = vpop.f32.mrb[0].mxu0
    %514 = vdwg.mxu0
    %v516 = vsel %vm288, %v252, 0
    %518 = vmatprep.subr.mxu0 0.0
    %519 = vmatpush1.msra.mxu0 %v279
    %520 = vmatprep.subr.mxu0 0.0
    %521 = vmatpush1.msra.mxu0 0.0
    %522 = vmatprep.subr.mxu0 0.0
    %523 = vmatpush1.msra.mxu0 0.0
    %524 = vmatprep.subr.mxu0 0.0
    %525 = vmatpush1.msra.mxu0 0.0
    %526 = vmatprep.subr.mxu0 0.0
    %527 = vmatpush1.msra.mxu0 0.0
    %528 = vmatprep.subr.mxu0 0.0
    %529 = vmatpush1.msra.mxu0 0.0
    %530 = vmatprep.subr.mxu0 0.0
    %531 = vmatpush1.msra.mxu0 0.0
    %532 = vmatprep.subr.mxu0 0.0
    %533 = vmatpush1.msra.mxu0 0.0
    %534 = vmatprep.subr.mxu0 0.0
    %535 = vmatpush1.msra.mxu0 0.0
    %536 = vmatprep.subr.mxu0 0.0
    %537 = vmatpush1.msra.mxu0 0.0
    %538 = vmatprep.subr.mxu0 0.0
    %539 = vmatpush1.msra.mxu0 0.0
    %540 = vmatprep.subr.mxu0 0.0
    %541 = vmatpush1.msra.mxu0 0.0
    %542 = vmatprep.subr.mxu0 0.0
    %543 = vmatpush1.msra.mxu0 0.0
    %544 = vmatprep.subr.mxu0 0.0
    %545 = vmatpush1.msra.mxu0 0.0
    %546 = vmatprep.subr.mxu0 0.0
    %547 = vmatpush1.msra.mxu0 0.0
    %548 = vmatprep.subr.mxu0 0.0
    %549 = vmatpush1.msra.mxu0 0.0
    %550 = vmatprep.subr.mxu0 0.0
    %551 = vmatpush1.msra.mxu0 0.0
    %552 = vmatprep.subr.mxu0 0.0
    %553 = vmatpush1.msra.mxu0 0.0
    %554 = vmatprep.subr.mxu0 0.0
    %555 = vmatpush1.msra.mxu0 0.0
    %556 = vmatprep.subr.mxu0 0.0
    %557 = vmatpush1.msra.mxu0 0.0
    %558 = vmatprep.subr.mxu0 0.0
    %559 = vmatpush1.msra.mxu0 0.0
    %560 = vmatprep.subr.mxu0 0.0
    %561 = vmatpush1.msra.mxu0 0.0
    %562 = vmatprep.subr.mxu0 0.0
    %563 = vmatpush1.msra.mxu0 0.0
    %564 = vmatprep.subr.mxu0 0.0
    %565 = vmatpush1.msra.mxu0 0.0
    %566 = vmatprep.subr.mxu0 0.0
    %567 = vmatpush1.msra.mxu0 0.0
    %568 = vmatprep.subr.mxu0 0.0
    %569 = vmatpush1.msra.mxu0 0.0
    %570 = vmatprep.subr.mxu0 0.0
    %571 = vmatpush1.msra.mxu0 0.0
    %572 = vmatprep.subr.mxu0 0.0
    %573 = vmatpush1.msra.mxu0 0.0
    %574 = vmatprep.subr.mxu0 0.0
    %575 = vmatpush1.msra.mxu0 0.0
    %576 = vmatprep.subr.mxu0 0.0
    %577 = vmatpush1.msra.mxu0 0.0
    %578 = vmatprep.subr.mxu0 0.0
    %579 = vmatpush1.msra.mxu0 0.0
    %580 = vmatprep.subr.mxu0 0.0
    %581 = vmatpush1.msra.mxu0 0.0
    %582 = vmatprep.mubr.f32.mxu0 0.0
    %583 = vmatmul.mubr.f32.gmra.mrb[0].mxu0 %v516
    %v584 = vpop.f32.mrb[0].mxu0
    %v585 = vadd.f32 %v512, %v584
    %v586 = vpop.f32.mrb[0].mxu0
    %587 = vdwg.mxu0
    %v588 = vadd.f32 %v585, %v439
    %v590 = vsel %vm288, %v258, 0
    %592 = vmatprep.subr.mxu0 0.0
    %593 = vmatpush1.msra.mxu0 %v280
    %594 = vmatprep.subr.mxu0 0.0
    %595 = vmatpush1.msra.mxu0 0.0
    %596 = vmatprep.subr.mxu0 0.0
    %597 = vmatpush1.msra.mxu0 0.0
    %598 = vmatprep.subr.mxu0 0.0
    %599 = vmatpush1.msra.mxu0 0.0
    %600 = vmatprep.subr.mxu0 0.0
    %601 = vmatpush1.msra.mxu0 0.0
    %602 = vmatprep.subr.mxu0 0.0
    %603 = vmatpush1.msra.mxu0 0.0
    %604 = vmatprep.subr.mxu0 0.0
    %605 = vmatpush1.msra.mxu0 0.0
    %606 = vmatprep.subr.mxu0 0.0
    %607 = vmatpush1.msra.mxu0 0.0
    %608 = vmatprep.subr.mxu0 0.0
    %609 = vmatpush1.msra.mxu0 0.0
    %610 = vmatprep.subr.mxu0 0.0
    %611 = vmatpush1.msra.mxu0 0.0
    %612 = vmatprep.subr.mxu0 0.0
    %613 = vmatpush1.msra.mxu0 0.0
    %614 = vmatprep.subr.mxu0 0.0
    %615 = vmatpush1.msra.mxu0 0.0
    %616 = vmatprep.subr.mxu0 0.0
    %617 = vmatpush1.msra.mxu0 0.0
    %618 = vmatprep.subr.mxu0 0.0
    %619 = vmatpush1.msra.mxu0 0.0
    %620 = vmatprep.subr.mxu0 0.0
    %621 = vmatpush1.msra.mxu0 0.0
    %622 = vmatprep.subr.mxu0 0.0
    %623 = vmatpush1.msra.mxu0 0.0
    %624 = vmatprep.subr.mxu0 0.0
    %625 = vmatpush1.msra.mxu0 0.0
    %626 = vmatprep.subr.mxu0 0.0
    %627 = vmatpush1.msra.mxu0 0.0
    %628 = vmatprep.subr.mxu0 0.0
    %629 = vmatpush1.msra.mxu0 0.0
    %630 = vmatprep.subr.mxu0 0.0
    %631 = vmatpush1.msra.mxu0 0.0
    %632 = vmatprep.subr.mxu0 0.0
    %633 = vmatpush1.msra.mxu0 0.0
    %634 = vmatprep.subr.mxu0 0.0
    %635 = vmatpush1.msra.mxu0 0.0
    %636 = vmatprep.subr.mxu0 0.0
    %637 = vmatpush1.msra.mxu0 0.0
    %638 = vmatprep.subr.mxu0 0.0
    %639 = vmatpush1.msra.mxu0 0.0
    %640 = vmatprep.subr.mxu0 0.0
    %641 = vmatpush1.msra.mxu0 0.0
    %642 = vmatprep.subr.mxu0 0.0
    %643 = vmatpush1.msra.mxu0 0.0
    %644 = vmatprep.subr.mxu0 0.0
    %645 = vmatpush1.msra.mxu0 0.0
    %646 = vmatprep.subr.mxu0 0.0
    %647 = vmatpush1.msra.mxu0 0.0
    %648 = vmatprep.subr.mxu0 0.0
    %649 = vmatpush1.msra.mxu0 0.0
    %650 = vmatprep.subr.mxu0 0.0
    %651 = vmatpush1.msra.mxu0 0.0
    %652 = vmatprep.subr.mxu0 0.0
    %653 = vmatpush1.msra.mxu0 0.0
    %654 = vmatprep.subr.mxu0 0.0
    %655 = vmatpush1.msra.mxu0 0.0
    %656 = vmatprep.mubr.f32.mxu0 0.0
    %657 = vmatmul.mubr.f32.gmra.mrb[0].mxu0 %v590
    %v658 = vpop.f32.mrb[0].mxu0
    %v659 = vadd.f32 0.0, %v658
    %v660 = vpop.f32.mrb[0].mxu0
    %661 = vdwg.mxu0
    %v663 = vsel %vm288, %v256, 0
    %665 = vmatprep.subr.mxu0 0.0
    %666 = vmatpush1.msra.mxu0 %v279
    %667 = vmatprep.subr.mxu0 0.0
    %668 = vmatpush1.msra.mxu0 0.0
    %669 = vmatprep.subr.mxu0 0.0
    %670 = vmatpush1.msra.mxu0 0.0
    %671 = vmatprep.subr.mxu0 0.0
    %672 = vmatpush1.msra.mxu0 0.0
    %673 = vmatprep.subr.mxu0 0.0
    %674 = vmatpush1.msra.mxu0 0.0
    %675 = vmatprep.subr.mxu0 0.0
    %676 = vmatpush1.msra.mxu0 0.0
    %677 = vmatprep.subr.mxu0 0.0
    %678 = vmatpush1.msra.mxu0 0.0
    %679 = vmatprep.subr.mxu0 0.0
    %680 = vmatpush1.msra.mxu0 0.0
    %681 = vmatprep.subr.mxu0 0.0
    %682 = vmatpush1.msra.mxu0 0.0
    %683 = vmatprep.subr.mxu0 0.0
    %684 = vmatpush1.msra.mxu0 0.0
    %685 = vmatprep.subr.mxu0 0.0
    %686 = vmatpush1.msra.mxu0 0.0
    %687 = vmatprep.subr.mxu0 0.0
    %688 = vmatpush1.msra.mxu0 0.0
    %689 = vmatprep.subr.mxu0 0.0
    %690 = vmatpush1.msra.mxu0 0.0
    %691 = vmatprep.subr.mxu0 0.0
    %692 = vmatpush1.msra.mxu0 0.0
    %693 = vmatprep.subr.mxu0 0.0
    %694 = vmatpush1.msra.mxu0 0.0
    %695 = vmatprep.subr.mxu0 0.0
    %696 = vmatpush1.msra.mxu0 0.0
    %697 = vmatprep.subr.mxu0 0.0
    %698 = vmatpush1.msra.mxu0 0.0
    %699 = vmatprep.subr.mxu0 0.0
    %700 = vmatpush1.msra.mxu0 0.0
    %701 = vmatprep.subr.mxu0 0.0
    %702 = vmatpush1.msra.mxu0 0.0
    %703 = vmatprep.subr.mxu0 0.0
    %704 = vmatpush1.msra.mxu0 0.0
    %705 = vmatprep.subr.mxu0 0.0
    %706 = vmatpush1.msra.mxu0 0.0
    %707 = vmatprep.subr.mxu0 0.0
    %708 = vmatpush1.msra.mxu0 0.0
    %709 = vmatprep.subr.mxu0 0.0
    %710 = vmatpush1.msra.mxu0 0.0
    %711 = vmatprep.subr.mxu0 0.0
    %712 = vmatpush1.msra.mxu0 0.0
    %713 = vmatprep.subr.mxu0 0.0
    %714 = vmatpush1.msra.mxu0 0.0
    %715 = vmatprep.subr.mxu0 0.0
    %716 = vmatpush1.msra.mxu0 0.0
    %717 = vmatprep.subr.mxu0 0.0
    %718 = vmatpush1.msra.mxu0 0.0
    %719 = vmatprep.subr.mxu0 0.0
    %720 = vmatpush1.msra.mxu0 0.0
    %721 = vmatprep.subr.mxu0 0.0
    %722 = vmatpush1.msra.mxu0 0.0
    %723 = vmatprep.subr.mxu0 0.0
    %724 = vmatpush1.msra.mxu0 0.0
    %725 = vmatprep.subr.mxu0 0.0
    %726 = vmatpush1.msra.mxu0 0.0
    %727 = vmatprep.subr.mxu0 0.0
    %728 = vmatpush1.msra.mxu0 0.0
    %729 = vmatprep.mubr.f32.mxu0 0.0
    %730 = vmatmul.mubr.f32.gmra.mrb[0].mxu0 %v663
    %v731 = vpop.f32.mrb[0].mxu0
    %v732 = vadd.f32 %v659, %v731
    %v733 = vpop.f32.mrb[0].mxu0
    %734 = vdwg.mxu0
    %v735 = vadd.f32 %v732, %v439
    %v737 = vsel %vm288, %v262, 0
    %739 = vmatprep.subr.mxu0 0.0
    %740 = vmatpush1.msra.mxu0 %v280
    %741 = vmatprep.subr.mxu0 0.0
    %742 = vmatpush1.msra.mxu0 0.0
    %743 = vmatprep.subr.mxu0 0.0
    %744 = vmatpush1.msra.mxu0 0.0
    %745 = vmatprep.subr.mxu0 0.0
    %746 = vmatpush1.msra.mxu0 0.0
    %747 = vmatprep.subr.mxu0 0.0
    %748 = vmatpush1.msra.mxu0 0.0
    %749 = vmatprep.subr.mxu0 0.0
    %750 = vmatpush1.msra.mxu0 0.0
    %751 = vmatprep.subr.mxu0 0.0
    %752 = vmatpush1.msra.mxu0 0.0
    %753 = vmatprep.subr.mxu0 0.0
    %754 = vmatpush1.msra.mxu0 0.0
    %755 = vmatprep.subr.mxu0 0.0
    %756 = vmatpush1.msra.mxu0 0.0
    %757 = vmatprep.subr.mxu0 0.0
    %758 = vmatpush1.msra.mxu0 0.0
    %759 = vmatprep.subr.mxu0 0.0
    %760 = vmatpush1.msra.mxu0 0.0
    %761 = vmatprep.subr.mxu0 0.0
    %762 = vmatpush1.msra.mxu0 0.0
    %763 = vmatprep.subr.mxu0 0.0
    %764 = vmatpush1.msra.mxu0 0.0
    %765 = vmatprep.subr.mxu0 0.0
    %766 = vmatpush1.msra.mxu0 0.0
    %767 = vmatprep.subr.mxu0 0.0
    %768 = vmatpush1.msra.mxu0 0.0
    %769 = vmatprep.subr.mxu0 0.0
    %770 = vmatpush1.msra.mxu0 0.0
    %771 = vmatprep.subr.mxu0 0.0
    %772 = vmatpush1.msra.mxu0 0.0
    %773 = vmatprep.subr.mxu0 0.0
    %774 = vmatpush1.msra.mxu0 0.0
    %775 = vmatprep.subr.mxu0 0.0
    %776 = vmatpush1.msra.mxu0 0.0
    %777 = vmatprep.subr.mxu0 0.0
    %778 = vmatpush1.msra.mxu0 0.0
    %779 = vmatprep.subr.mxu0 0.0
    %780 = vmatpush1.msra.mxu0 0.0
    %781 = vmatprep.subr.mxu0 0.0
    %782 = vmatpush1.msra.mxu0 0.0
    %783 = vmatprep.subr.mxu0 0.0
    %784 = vmatpush1.msra.mxu0 0.0
    %785 = vmatprep.subr.mxu0 0.0
    %786 = vmatpush1.msra.mxu0 0.0
    %787 = vmatprep.subr.mxu0 0.0
    %788 = vmatpush1.msra.mxu0 0.0
    %789 = vmatprep.subr.mxu0 0.0
    %790 = vmatpush1.msra.mxu0 0.0
    %791 = vmatprep.subr.mxu0 0.0
    %792 = vmatpush1.msra.mxu0 0.0
    %793 = vmatprep.subr.mxu0 0.0
    %794 = vmatpush1.msra.mxu0 0.0
    %795 = vmatprep.subr.mxu0 0.0
    %796 = vmatpush1.msra.mxu0 0.0
    %797 = vmatprep.subr.mxu0 0.0
    %798 = vmatpush1.msra.mxu0 0.0
    %799 = vmatprep.subr.mxu0 0.0
    %800 = vmatpush1.msra.mxu0 0.0
    %801 = vmatprep.subr.mxu0 0.0
    %802 = vmatpush1.msra.mxu0 0.0
    %803 = vmatprep.mubr.f32.mxu0 0.0
    %804 = vmatmul.mubr.f32.gmra.mrb[0].mxu0 %v737
    %v805 = vpop.f32.mrb[0].mxu0
    %v806 = vadd.f32 0.0, %v805
    %v807 = vpop.f32.mrb[0].mxu0
    %808 = vdwg.mxu0
    %v810 = vsel %vm288, %v260, 0
    %812 = vmatprep.subr.mxu0 0.0
    %813 = vmatpush1.msra.mxu0 %v279
    %814 = vmatprep.subr.mxu0 0.0
    %815 = vmatpush1.msra.mxu0 0.0
    %816 = vmatprep.subr.mxu0 0.0
    %817 = vmatpush1.msra.mxu0 0.0
    %818 = vmatprep.subr.mxu0 0.0
    %819 = vmatpush1.msra.mxu0 0.0
    %820 = vmatprep.subr.mxu0 0.0
    %821 = vmatpush1.msra.mxu0 0.0
    %822 = vmatprep.subr.mxu0 0.0
    %823 = vmatpush1.msra.mxu0 0.0
    %824 = vmatprep.subr.mxu0 0.0
    %825 = vmatpush1.msra.mxu0 0.0
    %826 = vmatprep.subr.mxu0 0.0
    %827 = vmatpush1.msra.mxu0 0.0
    %828 = vmatprep.subr.mxu0 0.0
    %829 = vmatpush1.msra.mxu0 0.0
    %830 = vmatprep.subr.mxu0 0.0
    %831 = vmatpush1.msra.mxu0 0.0
    %832 = vmatprep.subr.mxu0 0.0
    %833 = vmatpush1.msra.mxu0 0.0
    %834 = vmatprep.subr.mxu0 0.0
    %835 = vmatpush1.msra.mxu0 0.0
    %836 = vmatprep.subr.mxu0 0.0
    %837 = vmatpush1.msra.mxu0 0.0
    %838 = vmatprep.subr.mxu0 0.0
    %839 = vmatpush1.msra.mxu0 0.0
    %840 = vmatprep.subr.mxu0 0.0
    %841 = vmatpush1.msra.mxu0 0.0
    %842 = vmatprep.subr.mxu0 0.0
    %843 = vmatpush1.msra.mxu0 0.0
    %844 = vmatprep.subr.mxu0 0.0
    %845 = vmatpush1.msra.mxu0 0.0
    %846 = vmatprep.subr.mxu0 0.0
    %847 = vmatpush1.msra.mxu0 0.0
    %848 = vmatprep.subr.mxu0 0.0
    %849 = vmatpush1.msra.mxu0 0.0
    %850 = vmatprep.subr.mxu0 0.0
    %851 = vmatpush1.msra.mxu0 0.0
    %852 = vmatprep.subr.mxu0 0.0
    %853 = vmatpush1.msra.mxu0 0.0
    %854 = vmatprep.subr.mxu0 0.0
    %855 = vmatpush1.msra.mxu0 0.0
    %856 = vmatprep.subr.mxu0 0.0
    %857 = vmatpush1.msra.mxu0 0.0
    %858 = vmatprep.subr.mxu0 0.0
    %859 = vmatpush1.msra.mxu0 0.0
    %860 = vmatprep.subr.mxu0 0.0
    %861 = vmatpush1.msra.mxu0 0.0
    %862 = vmatprep.subr.mxu0 0.0
    %863 = vmatpush1.msra.mxu0 0.0
    %864 = vmatprep.subr.mxu0 0.0
    %865 = vmatpush1.msra.mxu0 0.0
    %866 = vmatprep.subr.mxu0 0.0
    %867 = vmatpush1.msra.mxu0 0.0
    %868 = vmatprep.subr.mxu0 0.0
    %869 = vmatpush1.msra.mxu0 0.0
    %870 = vmatprep.subr.mxu0 0.0
    %871 = vmatpush1.msra.mxu0 0.0
    %872 = vmatprep.subr.mxu0 0.0
    %873 = vmatpush1.msra.mxu0 0.0
    %874 = vmatprep.subr.mxu0 0.0
    %875 = vmatpush1.msra.mxu0 0.0
    %876 = vmatprep.mubr.f32.mxu0 0.0
    %877 = vmatmul.mubr.f32.gmra.mrb[0].mxu0 %v810
    %v878 = vpop.f32.mrb[0].mxu0
    %v879 = vadd.f32 %v806, %v878
    %v880 = vpop.f32.mrb[0].mxu0
    %881 = vdwg.mxu0
    %v882 = vadd.f32 %v879, %v439
    %v884 = vsel %vm288, %v266, 0
    %886 = vmatprep.subr.mxu0 0.0
    %887 = vmatpush1.msra.mxu0 %v280
    %888 = vmatprep.subr.mxu0 0.0
    %889 = vmatpush1.msra.mxu0 0.0
    %890 = vmatprep.subr.mxu0 0.0
    %891 = vmatpush1.msra.mxu0 0.0
    %892 = vmatprep.subr.mxu0 0.0
    %893 = vmatpush1.msra.mxu0 0.0
    %894 = vmatprep.subr.mxu0 0.0
    %895 = vmatpush1.msra.mxu0 0.0
    %896 = vmatprep.subr.mxu0 0.0
    %897 = vmatpush1.msra.mxu0 0.0
    %898 = vmatprep.subr.mxu0 0.0
    %899 = vmatpush1.msra.mxu0 0.0
    %900 = vmatprep.subr.mxu0 0.0
    %901 = vmatpush1.msra.mxu0 0.0
    %902 = vmatprep.subr.mxu0 0.0
    %903 = vmatpush1.msra.mxu0 0.0
    %904 = vmatprep.subr.mxu0 0.0
    %905 = vmatpush1.msra.mxu0 0.0
    %906 = vmatprep.subr.mxu0 0.0
    %907 = vmatpush1.msra.mxu0 0.0
    %908 = vmatprep.subr.mxu0 0.0
    %909 = vmatpush1.msra.mxu0 0.0
    %910 = vmatprep.subr.mxu0 0.0
    %911 = vmatpush1.msra.mxu0 0.0
    %912 = vmatprep.subr.mxu0 0.0
    %913 = vmatpush1.msra.mxu0 0.0
    %914 = vmatprep.subr.mxu0 0.0
    %915 = vmatpush1.msra.mxu0 0.0
    %916 = vmatprep.subr.mxu0 0.0
    %917 = vmatpush1.msra.mxu0 0.0
    %918 = vmatprep.subr.mxu0 0.0
    %919 = vmatpush1.msra.mxu0 0.0
    %920 = vmatprep.subr.mxu0 0.0
    %921 = vmatpush1.msra.mxu0 0.0
    %922 = vmatprep.subr.mxu0 0.0
    %923 = vmatpush1.msra.mxu0 0.0
    %924 = vmatprep.subr.mxu0 0.0
    %925 = vmatpush1.msra.mxu0 0.0
    %926 = vmatprep.subr.mxu0 0.0
    %927 = vmatpush1.msra.mxu0 0.0
    %928 = vmatprep.subr.mxu0 0.0
    %929 = vmatpush1.msra.mxu0 0.0
    %930 = vmatprep.subr.mxu0 0.0
    %931 = vmatpush1.msra.mxu0 0.0
    %932 = vmatprep.subr.mxu0 0.0
    %933 = vmatpush1.msra.mxu0 0.0
    %934 = vmatprep.subr.mxu0 0.0
    %935 = vmatpush1.msra.mxu0 0.0
    %936 = vmatprep.subr.mxu0 0.0
    %937 = vmatpush1.msra.mxu0 0.0
    %938 = vmatprep.subr.mxu0 0.0
    %939 = vmatpush1.msra.mxu0 0.0
    %940 = vmatprep.subr.mxu0 0.0
    %941 = vmatpush1.msra.mxu0 0.0
    %942 = vmatprep.subr.mxu0 0.0
    %943 = vmatpush1.msra.mxu0 0.0
    %944 = vmatprep.subr.mxu0 0.0
    %945 = vmatpush1.msra.mxu0 0.0
    %946 = vmatprep.subr.mxu0 0.0
    %947 = vmatpush1.msra.mxu0 0.0
    %948 = vmatprep.subr.mxu0 0.0
    %949 = vmatpush1.msra.mxu0 0.0
    %950 = vmatprep.mubr.f32.mxu0 0.0
    %951 = vmatmul.mubr.f32.gmra.mrb[0].mxu0 %v884
    %v952 = vpop.f32.mrb[0].mxu0
    %v953 = vadd.f32 0.0, %v952
    %v954 = vpop.f32.mrb[0].mxu0
    %955 = vdwg.mxu0
    %v957 = vsel %vm288, %v264, 0
    %959 = vmatprep.subr.mxu0 0.0
    %960 = vmatpush1.msra.mxu0 %v279
    %961 = vmatprep.subr.mxu0 0.0
    %962 = vmatpush1.msra.mxu0 0.0
    %963 = vmatprep.subr.mxu0 0.0
    %964 = vmatpush1.msra.mxu0 0.0
    %965 = vmatprep.subr.mxu0 0.0
    %966 = vmatpush1.msra.mxu0 0.0
    %967 = vmatprep.subr.mxu0 0.0
    %968 = vmatpush1.msra.mxu0 0.0
    %969 = vmatprep.subr.mxu0 0.0
    %970 = vmatpush1.msra.mxu0 0.0
    %971 = vmatprep.subr.mxu0 0.0
    %972 = vmatpush1.msra.mxu0 0.0
    %973 = vmatprep.subr.mxu0 0.0
    %974 = vmatpush1.msra.mxu0 0.0
    %975 = vmatprep.subr.mxu0 0.0
    %976 = vmatpush1.msra.mxu0 0.0
    %977 = vmatprep.subr.mxu0 0.0
    %978 = vmatpush1.msra.mxu0 0.0
    %979 = vmatprep.subr.mxu0 0.0
    %980 = vmatpush1.msra.mxu0 0.0
    %981 = vmatprep.subr.mxu0 0.0
    %982 = vmatpush1.msra.mxu0 0.0
    %983 = vmatprep.subr.mxu0 0.0
    %984 = vmatpush1.msra.mxu0 0.0
    %985 = vmatprep.subr.mxu0 0.0
    %986 = vmatpush1.msra.mxu0 0.0
    %987 = vmatprep.subr.mxu0 0.0
    %988 = vmatpush1.msra.mxu0 0.0
    %989 = vmatprep.subr.mxu0 0.0
    %990 = vmatpush1.msra.mxu0 0.0
    %991 = vmatprep.subr.mxu0 0.0
    %992 = vmatpush1.msra.mxu0 0.0
    %993 = vmatprep.subr.mxu0 0.0
    %994 = vmatpush1.msra.mxu0 0.0
    %995 = vmatprep.subr.mxu0 0.0
    %996 = vmatpush1.msra.mxu0 0.0
    %997 = vmatprep.subr.mxu0 0.0
    %998 = vmatpush1.msra.mxu0 0.0
    %999 = vmatprep.subr.mxu0 0.0
    %1000 = vmatpush1.msra.mxu0 0.0
    %1001 = vmatprep.subr.mxu0 0.0
    %1002 = vmatpush1.msra.mxu0 0.0
    %1003 = vmatprep.subr.mxu0 0.0
    %1004 = vmatpush1.msra.mxu0 0.0
    %1005 = vmatprep.subr.mxu0 0.0
    %1006 = vmatpush1.msra.mxu0 0.0
    %1007 = vmatprep.subr.mxu0 0.0
    %1008 = vmatpush1.msra.mxu0 0.0
    %1009 = vmatprep.subr.mxu0 0.0
    %1010 = vmatpush1.msra.mxu0 0.0
    %1011 = vmatprep.subr.mxu0 0.0
    %1012 = vmatpush1.msra.mxu0 0.0
    %1013 = vmatprep.subr.mxu0 0.0
    %1014 = vmatpush1.msra.mxu0 0.0
    %1015 = vmatprep.subr.mxu0 0.0
    %1016 = vmatpush1.msra.mxu0 0.0
    %1017 = vmatprep.subr.mxu0 0.0
    %1018 = vmatpush1.msra.mxu0 0.0
    %1019 = vmatprep.subr.mxu0 0.0
    %1020 = vmatpush1.msra.mxu0 0.0
    %1021 = vmatprep.subr.mxu0 0.0
    %1022 = vmatpush1.msra.mxu0 0.0
    %1023 = vmatprep.mubr.f32.mxu0 0.0
    %1024 = vmatmul.mubr.f32.gmra.mrb[0].mxu0 %v957
    %v1025 = vpop.f32.mrb[0].mxu0
    %v1026 = vadd.f32 %v953, %v1025
    %v1027 = vpop.f32.mrb[0].mxu0
    %1028 = vdwg.mxu0
    %v1029 = vadd.f32 %v1026, %v439
    %v1031 = vsel %vm288, %v270, 0
    %1033 = vmatprep.subr.mxu0 0.0
    %1034 = vmatpush1.msra.mxu0 %v280
    %1035 = vmatprep.subr.mxu0 0.0
    %1036 = vmatpush1.msra.mxu0 0.0
    %1037 = vmatprep.subr.mxu0 0.0
    %1038 = vmatpush1.msra.mxu0 0.0
    %1039 = vmatprep.subr.mxu0 0.0
    %1040 = vmatpush1.msra.mxu0 0.0
    %1041 = vmatprep.subr.mxu0 0.0
    %1042 = vmatpush1.msra.mxu0 0.0
    %1043 = vmatprep.subr.mxu0 0.0
    %1044 = vmatpush1.msra.mxu0 0.0
    %1045 = vmatprep.subr.mxu0 0.0
    %1046 = vmatpush1.msra.mxu0 0.0
    %1047 = vmatprep.subr.mxu0 0.0
    %1048 = vmatpush1.msra.mxu0 0.0
    %1049 = vmatprep.subr.mxu0 0.0
    %1050 = vmatpush1.msra.mxu0 0.0
    %1051 = vmatprep.subr.mxu0 0.0
    %1052 = vmatpush1.msra.mxu0 0.0
    %1053 = vmatprep.subr.mxu0 0.0
    %1054 = vmatpush1.msra.mxu0 0.0
    %1055 = vmatprep.subr.mxu0 0.0
    %1056 = vmatpush1.msra.mxu0 0.0
    %1057 = vmatprep.subr.mxu0 0.0
    %1058 = vmatpush1.msra.mxu0 0.0
    %1059 = vmatprep.subr.mxu0 0.0
    %1060 = vmatpush1.msra.mxu0 0.0
    %1061 = vmatprep.subr.mxu0 0.0
    %1062 = vmatpush1.msra.mxu0 0.0
    %1063 = vmatprep.subr.mxu0 0.0
    %1064 = vmatpush1.msra.mxu0 0.0
    %1065 = vmatprep.subr.mxu0 0.0
    %1066 = vmatpush1.msra.mxu0 0.0
    %1067 = vmatprep.subr.mxu0 0.0
    %1068 = vmatpush1.msra.mxu0 0.0
    %1069 = vmatprep.subr.mxu0 0.0
    %1070 = vmatpush1.msra.mxu0 0.0
    %1071 = vmatprep.subr.mxu0 0.0
    %1072 = vmatpush1.msra.mxu0 0.0
    %1073 = vmatprep.subr.mxu0 0.0
    %1074 = vmatpush1.msra.mxu0 0.0
    %1075 = vmatprep.subr.mxu0 0.0
    %1076 = vmatpush1.msra.mxu0 0.0
    %1077 = vmatprep.subr.mxu0 0.0
    %1078 = vmatpush1.msra.mxu0 0.0
    %1079 = vmatprep.subr.mxu0 0.0
    %1080 = vmatpush1.msra.mxu0 0.0
    %1081 = vmatprep.subr.mxu0 0.0
    %1082 = vmatpush1.msra.mxu0 0.0
    %1083 = vmatprep.subr.mxu0 0.0
    %1084 = vmatpush1.msra.mxu0 0.0
    %1085 = vmatprep.subr.mxu0 0.0
    %1086 = vmatpush1.msra.mxu0 0.0
    %1087 = vmatprep.subr.mxu0 0.0
    %1088 = vmatpush1.msra.mxu0 0.0
    %1089 = vmatprep.subr.mxu0 0.0
    %1090 = vmatpush1.msra.mxu0 0.0
    %1091 = vmatprep.subr.mxu0 0.0
    %1092 = vmatpush1.msra.mxu0 0.0
    %1093 = vmatprep.subr.mxu0 0.0
    %1094 = vmatpush1.msra.mxu0 0.0
    %1095 = vmatprep.subr.mxu0 0.0
    %1096 = vmatpush1.msra.mxu0 0.0
    %1097 = vmatprep.mubr.f32.mxu0 0.0
    %1098 = vmatmul.mubr.f32.gmra.mrb[0].mxu0 %v1031
    %v1099 = vpop.f32.mrb[0].mxu0
    %v1100 = vadd.f32 0.0, %v1099
    %v1101 = vpop.f32.mrb[0].mxu0
    %1102 = vdwg.mxu0
    %v1104 = vsel %vm288, %v268, 0
    %1106 = vmatprep.subr.mxu0 0.0
    %1107 = vmatpush1.msra.mxu0 %v279
    %1108 = vmatprep.subr.mxu0 0.0
    %1109 = vmatpush1.msra.mxu0 0.0
    %1110 = vmatprep.subr.mxu0 0.0
    %1111 = vmatpush1.msra.mxu0 0.0
    %1112 = vmatprep.subr.mxu0 0.0
    %1113 = vmatpush1.msra.mxu0 0.0
    %1114 = vmatprep.subr.mxu0 0.0
    %1115 = vmatpush1.msra.mxu0 0.0
    %1116 = vmatprep.subr.mxu0 0.0
    %1117 = vmatpush1.msra.mxu0 0.0
    %1118 = vmatprep.subr.mxu0 0.0
    %1119 = vmatpush1.msra.mxu0 0.0
    %1120 = vmatprep.subr.mxu0 0.0
    %1121 = vmatpush1.msra.mxu0 0.0
    %1122 = vmatprep.subr.mxu0 0.0
    %1123 = vmatpush1.msra.mxu0 0.0
    %1124 = vmatprep.subr.mxu0 0.0
    %1125 = vmatpush1.msra.mxu0 0.0
    %1126 = vmatprep.subr.mxu0 0.0
    %1127 = vmatpush1.msra.mxu0 0.0
    %1128 = vmatprep.subr.mxu0 0.0
    %1129 = vmatpush1.msra.mxu0 0.0
    %1130 = vmatprep.subr.mxu0 0.0
    %1131 = vmatpush1.msra.mxu0 0.0
    %1132 = vmatprep.subr.mxu0 0.0
    %1133 = vmatpush1.msra.mxu0 0.0
    %1134 = vmatprep.subr.mxu0 0.0
    %1135 = vmatpush1.msra.mxu0 0.0
    %1136 = vmatprep.subr.mxu0 0.0
    %1137 = vmatpush1.msra.mxu0 0.0
    %1138 = vmatprep.subr.mxu0 0.0
    %1139 = vmatpush1.msra.mxu0 0.0
    %1140 = vmatprep.subr.mxu0 0.0
    %1141 = vmatpush1.msra.mxu0 0.0
    %1142 = vmatprep.subr.mxu0 0.0
    %1143 = vmatpush1.msra.mxu0 0.0
    %1144 = vmatprep.subr.mxu0 0.0
    %1145 = vmatpush1.msra.mxu0 0.0
    %1146 = vmatprep.subr.mxu0 0.0
    %1147 = vmatpush1.msra.mxu0 0.0
    %1148 = vmatprep.subr.mxu0 0.0
    %1149 = vmatpush1.msra.mxu0 0.0
    %1150 = vmatprep.subr.mxu0 0.0
    %1151 = vmatpush1.msra.mxu0 0.0
    %1152 = vmatprep.subr.mxu0 0.0
    %1153 = vmatpush1.msra.mxu0 0.0
    %1154 = vmatprep.subr.mxu0 0.0
    %1155 = vmatpush1.msra.mxu0 0.0
    %1156 = vmatprep.subr.mxu0 0.0
    %1157 = vmatpush1.msra.mxu0 0.0
    %1158 = vmatprep.subr.mxu0 0.0
    %1159 = vmatpush1.msra.mxu0 0.0
    %1160 = vmatprep.subr.mxu0 0.0
    %1161 = vmatpush1.msra.mxu0 0.0
    %1162 = vmatprep.subr.mxu0 0.0
    %1163 = vmatpush1.msra.mxu0 0.0
    %1164 = vmatprep.subr.mxu0 0.0
    %1165 = vmatpush1.msra.mxu0 0.0
    %1166 = vmatprep.subr.mxu0 0.0
    %1167 = vmatpush1.msra.mxu0 0.0
    %1168 = vmatprep.subr.mxu0 0.0
    %1169 = vmatpush1.msra.mxu0 0.0
    %1170 = vmatprep.mubr.f32.mxu0 0.0
    %1171 = vmatmul.mubr.f32.gmra.mrb[0].mxu0 %v1104
    %v1172 = vpop.f32.mrb[0].mxu0
    %v1173 = vadd.f32 %v1100, %v1172
    %v1174 = vpop.f32.mrb[0].mxu0
    %1175 = vdwg.mxu0
    %v1176 = vadd.f32 %v1173, %v439
    %v1178 = vsel %vm288, %v274, 0
    %1180 = vmatprep.subr.mxu0 0.0
    %1181 = vmatpush1.msra.mxu0 %v280
    %1182 = vmatprep.subr.mxu0 0.0
    %1183 = vmatpush1.msra.mxu0 0.0
    %1184 = vmatprep.subr.mxu0 0.0
    %1185 = vmatpush1.msra.mxu0 0.0
    %1186 = vmatprep.subr.mxu0 0.0
    %1187 = vmatpush1.msra.mxu0 0.0
    %1188 = vmatprep.subr.mxu0 0.0
    %1189 = vmatpush1.msra.mxu0 0.0
    %1190 = vmatprep.subr.mxu0 0.0
    %1191 = vmatpush1.msra.mxu0 0.0
    %1192 = vmatprep.subr.mxu0 0.0
    %1193 = vmatpush1.msra.mxu0 0.0
    %1194 = vmatprep.subr.mxu0 0.0
    %1195 = vmatpush1.msra.mxu0 0.0
    %1196 = vmatprep.subr.mxu0 0.0
    %1197 = vmatpush1.msra.mxu0 0.0
    %1198 = vmatprep.subr.mxu0 0.0
    %1199 = vmatpush1.msra.mxu0 0.0
    %1200 = vmatprep.subr.mxu0 0.0
    %1201 = vmatpush1.msra.mxu0 0.0
    %1202 = vmatprep.subr.mxu0 0.0
    %1203 = vmatpush1.msra.mxu0 0.0
    %1204 = vmatprep.subr.mxu0 0.0
    %1205 = vmatpush1.msra.mxu0 0.0
    %1206 = vmatprep.subr.mxu0 0.0
    %1207 = vmatpush1.msra.mxu0 0.0
    %1208 = vmatprep.subr.mxu0 0.0
    %1209 = vmatpush1.msra.mxu0 0.0
    %1210 = vmatprep.subr.mxu0 0.0
    %1211 = vmatpush1.msra.mxu0 0.0
    %1212 = vmatprep.subr.mxu0 0.0
    %1213 = vmatpush1.msra.mxu0 0.0
    %1214 = vmatprep.subr.mxu0 0.0
    %1215 = vmatpush1.msra.mxu0 0.0
    %1216 = vmatprep.subr.mxu0 0.0
    %1217 = vmatpush1.msra.mxu0 0.0
    %1218 = vmatprep.subr.mxu0 0.0
    %1219 = vmatpush1.msra.mxu0 0.0
    %1220 = vmatprep.subr.mxu0 0.0
    %1221 = vmatpush1.msra.mxu0 0.0
    %1222 = vmatprep.subr.mxu0 0.0
    %1223 = vmatpush1.msra.mxu0 0.0
    %1224 = vmatprep.subr.mxu0 0.0
    %1225 = vmatpush1.msra.mxu0 0.0
    %1226 = vmatprep.subr.mxu0 0.0
    %1227 = vmatpush1.msra.mxu0 0.0
    %1228 = vmatprep.subr.mxu0 0.0
    %1229 = vmatpush1.msra.mxu0 0.0
    %1230 = vmatprep.subr.mxu0 0.0
    %1231 = vmatpush1.msra.mxu0 0.0
    %1232 = vmatprep.subr.mxu0 0.0
    %1233 = vmatpush1.msra.mxu0 0.0
    %1234 = vmatprep.subr.mxu0 0.0
    %1235 = vmatpush1.msra.mxu0 0.0
    %1236 = vmatprep.subr.mxu0 0.0
    %1237 = vmatpush1.msra.mxu0 0.0
    %1238 = vmatprep.subr.mxu0 0.0
    %1239 = vmatpush1.msra.mxu0 0.0
    %1240 = vmatprep.subr.mxu0 0.0
    %1241 = vmatpush1.msra.mxu0 0.0
    %1242 = vmatprep.subr.mxu0 0.0
    %1243 = vmatpush1.msra.mxu0 0.0
    %1244 = vmatprep.mubr.f32.mxu0 0.0
    %1245 = vmatmul.mubr.f32.gmra.mrb[0].mxu0 %v1178
    %v1246 = vpop.f32.mrb[0].mxu0
    %v1247 = vadd.f32 0.0, %v1246
    %v1248 = vpop.f32.mrb[0].mxu0
    %1249 = vdwg.mxu0
    %v1251 = vsel %vm288, %v272, 0
    %1253 = vmatprep.subr.mxu0 0.0
    %1254 = vmatpush1.msra.mxu0 %v279
    %1255 = vmatprep.subr.mxu0 0.0
    %1256 = vmatpush1.msra.mxu0 0.0
    %1257 = vmatprep.subr.mxu0 0.0
    %1258 = vmatpush1.msra.mxu0 0.0
    %1259 = vmatprep.subr.mxu0 0.0
    %1260 = vmatpush1.msra.mxu0 0.0
    %1261 = vmatprep.subr.mxu0 0.0
    %1262 = vmatpush1.msra.mxu0 0.0
    %1263 = vmatprep.subr.mxu0 0.0
    %1264 = vmatpush1.msra.mxu0 0.0
    %1265 = vmatprep.subr.mxu0 0.0
    %1266 = vmatpush1.msra.mxu0 0.0
    %1267 = vmatprep.subr.mxu0 0.0
    %1268 = vmatpush1.msra.mxu0 0.0
    %1269 = vmatprep.subr.mxu0 0.0
    %1270 = vmatpush1.msra.mxu0 0.0
    %1271 = vmatprep.subr.mxu0 0.0
    %1272 = vmatpush1.msra.mxu0 0.0
    %1273 = vmatprep.subr.mxu0 0.0
    %1274 = vmatpush1.msra.mxu0 0.0
    %1275 = vmatprep.subr.mxu0 0.0
    %1276 = vmatpush1.msra.mxu0 0.0
    %1277 = vmatprep.subr.mxu0 0.0
    %1278 = vmatpush1.msra.mxu0 0.0
    %1279 = vmatprep.subr.mxu0 0.0
    %1280 = vmatpush1.msra.mxu0 0.0
    %1281 = vmatprep.subr.mxu0 0.0
    %1282 = vmatpush1.msra.mxu0 0.0
    %1283 = vmatprep.subr.mxu0 0.0
    %1284 = vmatpush1.msra.mxu0 0.0
    %1285 = vmatprep.subr.mxu0 0.0
    %1286 = vmatpush1.msra.mxu0 0.0
    %1287 = vmatprep.subr.mxu0 0.0
    %1288 = vmatpush1.msra.mxu0 0.0
    %1289 = vmatprep.subr.mxu0 0.0
    %1290 = vmatpush1.msra.mxu0 0.0
    %1291 = vmatprep.subr.mxu0 0.0
    %1292 = vmatpush1.msra.mxu0 0.0
    %1293 = vmatprep.subr.mxu0 0.0
    %1294 = vmatpush1.msra.mxu0 0.0
    %1295 = vmatprep.subr.mxu0 0.0
    %1296 = vmatpush1.msra.mxu0 0.0
    %1297 = vmatprep.subr.mxu0 0.0
    %1298 = vmatpush1.msra.mxu0 0.0
    %1299 = vmatprep.subr.mxu0 0.0
    %1300 = vmatpush1.msra.mxu0 0.0
    %1301 = vmatprep.subr.mxu0 0.0
    %1302 = vmatpush1.msra.mxu0 0.0
    %1303 = vmatprep.subr.mxu0 0.0
    %1304 = vmatpush1.msra.mxu0 0.0
    %1305 = vmatprep.subr.mxu0 0.0
    %1306 = vmatpush1.msra.mxu0 0.0
    %1307 = vmatprep.subr.mxu0 0.0
    %1308 = vmatpush1.msra.mxu0 0.0
    %1309 = vmatprep.subr.mxu0 0.0
    %1310 = vmatpush1.msra.mxu0 0.0
    %1311 = vmatprep.subr.mxu0 0.0
    %1312 = vmatpush1.msra.mxu0 0.0
    %1313 = vmatprep.subr.mxu0 0.0
    %1314 = vmatpush1.msra.mxu0 0.0
    %1315 = vmatprep.subr.mxu0 0.0
    %1316 = vmatpush1.msra.mxu0 0.0
    %1317 = vmatprep.mubr.f32.mxu0 0.0
    %1318 = vmatmul.mubr.f32.gmra.mrb[0].mxu0 %v1251
    %v1319 = vpop.f32.mrb[0].mxu0
    %v1320 = vadd.f32 %v1247, %v1319
    %v1321 = vpop.f32.mrb[0].mxu0
    %1322 = vdwg.mxu0
    %v1323 = vadd.f32 %v1320, %v439
    %v1325 = vsel %vm288, %v278, 0
    %1327 = vmatprep.subr.mxu0 0.0
    %1328 = vmatpush1.msra.mxu0 %v280
    %1329 = vmatprep.subr.mxu0 0.0
    %1330 = vmatpush1.msra.mxu0 0.0
    %1331 = vmatprep.subr.mxu0 0.0
    %1332 = vmatpush1.msra.mxu0 0.0
    %1333 = vmatprep.subr.mxu0 0.0
    %1334 = vmatpush1.msra.mxu0 0.0
    %1335 = vmatprep.subr.mxu0 0.0
    %1336 = vmatpush1.msra.mxu0 0.0
    %1337 = vmatprep.subr.mxu0 0.0
    %1338 = vmatpush1.msra.mxu0 0.0
    %1339 = vmatprep.subr.mxu0 0.0
    %1340 = vmatpush1.msra.mxu0 0.0
    %1341 = vmatprep.subr.mxu0 0.0
    %1342 = vmatpush1.msra.mxu0 0.0
    %1343 = vmatprep.subr.mxu0 0.0
    %1344 = vmatpush1.msra.mxu0 0.0
    %1345 = vmatprep.subr.mxu0 0.0
    %1346 = vmatpush1.msra.mxu0 0.0
    %1347 = vmatprep.subr.mxu0 0.0
    %1348 = vmatpush1.msra.mxu0 0.0
    %1349 = vmatprep.subr.mxu0 0.0
    %1350 = vmatpush1.msra.mxu0 0.0
    %1351 = vmatprep.subr.mxu0 0.0
    %1352 = vmatpush1.msra.mxu0 0.0
    %1353 = vmatprep.subr.mxu0 0.0
    %1354 = vmatpush1.msra.mxu0 0.0
    %1355 = vmatprep.subr.mxu0 0.0
    %1356 = vmatpush1.msra.mxu0 0.0
    %1357 = vmatprep.subr.mxu0 0.0
    %1358 = vmatpush1.msra.mxu0 0.0
    %1359 = vmatprep.subr.mxu0 0.0
    %1360 = vmatpush1.msra.mxu0 0.0
    %1361 = vmatprep.subr.mxu0 0.0
    %1362 = vmatpush1.msra.mxu0 0.0
    %1363 = vmatprep.subr.mxu0 0.0
    %1364 = vmatpush1.msra.mxu0 0.0
    %1365 = vmatprep.subr.mxu0 0.0
    %1366 = vmatpush1.msra.mxu0 0.0
    %1367 = vmatprep.subr.mxu0 0.0
    %1368 = vmatpush1.msra.mxu0 0.0
    %1369 = vmatprep.subr.mxu0 0.0
    %1370 = vmatpush1.msra.mxu0 0.0
    %1371 = vmatprep.subr.mxu0 0.0
    %1372 = vmatpush1.msra.mxu0 0.0
    %1373 = vmatprep.subr.mxu0 0.0
    %1374 = vmatpush1.msra.mxu0 0.0
    %1375 = vmatprep.subr.mxu0 0.0
    %1376 = vmatpush1.msra.mxu0 0.0
    %1377 = vmatprep.subr.mxu0 0.0
    %1378 = vmatpush1.msra.mxu0 0.0
    %1379 = vmatprep.subr.mxu0 0.0
    %1380 = vmatpush1.msra.mxu0 0.0
    %1381 = vmatprep.subr.mxu0 0.0
    %1382 = vmatpush1.msra.mxu0 0.0
    %1383 = vmatprep.subr.mxu0 0.0
    %1384 = vmatpush1.msra.mxu0 0.0
    %1385 = vmatprep.subr.mxu0 0.0
    %1386 = vmatpush1.msra.mxu0 0.0
    %1387 = vmatprep.subr.mxu0 0.0
    %1388 = vmatpush1.msra.mxu0 0.0
    %1389 = vmatprep.subr.mxu0 0.0
    %1390 = vmatpush1.msra.mxu0 0.0
    %1391 = vmatprep.mubr.f32.mxu0 0.0
    %1392 = vmatmul.mubr.f32.gmra.mrb[0].mxu0 %v1325
    %v1393 = vpop.f32.mrb[0].mxu0
    %v1394 = vadd.f32 0.0, %v1393
    %v1395 = vpop.f32.mrb[0].mxu0
    %1396 = vdwg.mxu0
    %v1398 = vsel %vm288, %v276, 0
    %1400 = vmatprep.subr.mxu0 0.0
    %1401 = vmatpush1.msra.mxu0 %v279
    %1402 = vmatprep.subr.mxu0 0.0
    %1403 = vmatpush1.msra.mxu0 0.0
    %1404 = vmatprep.subr.mxu0 0.0
    %1405 = vmatpush1.msra.mxu0 0.0
    %1406 = vmatprep.subr.mxu0 0.0
    %1407 = vmatpush1.msra.mxu0 0.0
    %1408 = vmatprep.subr.mxu0 0.0
    %1409 = vmatpush1.msra.mxu0 0.0
    %1410 = vmatprep.subr.mxu0 0.0
    %1411 = vmatpush1.msra.mxu0 0.0
    %1412 = vmatprep.subr.mxu0 0.0
    %1413 = vmatpush1.msra.mxu0 0.0
    %1414 = vmatprep.subr.mxu0 0.0
    %1415 = vmatpush1.msra.mxu0 0.0
    %1416 = vmatprep.subr.mxu0 0.0
    %1417 = vmatpush1.msra.mxu0 0.0
    %1418 = vmatprep.subr.mxu0 0.0
    %1419 = vmatpush1.msra.mxu0 0.0
    %1420 = vmatprep.subr.mxu0 0.0
    %1421 = vmatpush1.msra.mxu0 0.0
    %1422 = vmatprep.subr.mxu0 0.0
    %1423 = vmatpush1.msra.mxu0 0.0
    %1424 = vmatprep.subr.mxu0 0.0
    %1425 = vmatpush1.msra.mxu0 0.0
    %1426 = vmatprep.subr.mxu0 0.0
    %1427 = vmatpush1.msra.mxu0 0.0
    %1428 = vmatprep.subr.mxu0 0.0
    %1429 = vmatpush1.msra.mxu0 0.0
    %1430 = vmatprep.subr.mxu0 0.0
    %1431 = vmatpush1.msra.mxu0 0.0
    %1432 = vmatprep.subr.mxu0 0.0
    %1433 = vmatpush1.msra.mxu0 0.0
    %1434 = vmatprep.subr.mxu0 0.0
    %1435 = vmatpush1.msra.mxu0 0.0
    %1436 = vmatprep.subr.mxu0 0.0
    %1437 = vmatpush1.msra.mxu0 0.0
    %1438 = vmatprep.subr.mxu0 0.0
    %1439 = vmatpush1.msra.mxu0 0.0
    %1440 = vmatprep.subr.mxu0 0.0
    %1441 = vmatpush1.msra.mxu0 0.0
    %1442 = vmatprep.subr.mxu0 0.0
    %1443 = vmatpush1.msra.mxu0 0.0
    %1444 = vmatprep.subr.mxu0 0.0
    %1445 = vmatpush1.msra.mxu0 0.0
    %1446 = vmatprep.subr.mxu0 0.0
    %1447 = vmatpush1.msra.mxu0 0.0
    %1448 = vmatprep.subr.mxu0 0.0
    %1449 = vmatpush1.msra.mxu0 0.0
    %1450 = vmatprep.subr.mxu0 0.0
    %1451 = vmatpush1.msra.mxu0 0.0
    %1452 = vmatprep.subr.mxu0 0.0
    %1453 = vmatpush1.msra.mxu0 0.0
    %1454 = vmatprep.subr.mxu0 0.0
    %1455 = vmatpush1.msra.mxu0 0.0
    %1456 = vmatprep.subr.mxu0 0.0
    %1457 = vmatpush1.msra.mxu0 0.0
    %1458 = vmatprep.subr.mxu0 0.0
    %1459 = vmatpush1.msra.mxu0 0.0
    %1460 = vmatprep.subr.mxu0 0.0
    %1461 = vmatpush1.msra.mxu0 0.0
    %1462 = vmatprep.subr.mxu0 0.0
    %1463 = vmatpush1.msra.mxu0 0.0
    %1464 = vmatprep.mubr.f32.mxu0 0.0
    %1465 = vmatmul.mubr.f32.gmra.mrb[0].mxu0 %v1398
    %v1466 = vpop.f32.mrb[0].mxu0
    %v1467 = vadd.f32 %v1394, %v1466
    %v1468 = vpop.f32.mrb[0].mxu0
    %1469 = vdwg.mxu0
    %v1470 = vadd.f32 %v1467, %v439
    %1471 = vmatprep.subr.mxu0 0.0
    %1472 = vmatpush1.msra.mxu0 %v282
    %1473 = vmatprep.subr.mxu0 0.0
    %1474 = vmatpush1.msra.mxu0 0.0
    %1475 = vmatprep.subr.mxu0 0.0
    %1476 = vmatpush1.msra.mxu0 0.0
    %1477 = vmatprep.subr.mxu0 0.0
    %1478 = vmatpush1.msra.mxu0 0.0
    %1479 = vmatprep.subr.mxu0 0.0
    %1480 = vmatpush1.msra.mxu0 0.0
    %1481 = vmatprep.subr.mxu0 0.0
    %1482 = vmatpush1.msra.mxu0 0.0
    %1483 = vmatprep.subr.mxu0 0.0
    %1484 = vmatpush1.msra.mxu0 0.0
    %1485 = vmatprep.subr.mxu0 0.0
    %1486 = vmatpush1.msra.mxu0 0.0
    %1487 = vmatprep.subr.mxu0 0.0
    %1488 = vmatpush1.msra.mxu0 0.0
    %1489 = vmatprep.subr.mxu0 0.0
    %1490 = vmatpush1.msra.mxu0 0.0
    %1491 = vmatprep.subr.mxu0 0.0
    %1492 = vmatpush1.msra.mxu0 0.0
    %1493 = vmatprep.subr.mxu0 0.0
    %1494 = vmatpush1.msra.mxu0 0.0
    %1495 = vmatprep.subr.mxu0 0.0
    %1496 = vmatpush1.msra.mxu0 0.0
    %1497 = vmatprep.subr.mxu0 0.0
    %1498 = vmatpush1.msra.mxu0 0.0
    %1499 = vmatprep.subr.mxu0 0.0
    %1500 = vmatpush1.msra.mxu0 0.0
    %1501 = vmatprep.subr.mxu0 0.0
    %1502 = vmatpush1.msra.mxu0 0.0
    %1503 = vmatprep.subr.mxu0 0.0
    %1504 = vmatpush1.msra.mxu0 0.0
    %1505 = vmatprep.subr.mxu0 0.0
    %1506 = vmatpush1.msra.mxu0 0.0
    %1507 = vmatprep.subr.mxu0 0.0
    %1508 = vmatpush1.msra.mxu0 0.0
    %1509 = vmatprep.subr.mxu0 0.0
    %1510 = vmatpush1.msra.mxu0 0.0
    %1511 = vmatprep.subr.mxu0 0.0
    %1512 = vmatpush1.msra.mxu0 0.0
    %1513 = vmatprep.subr.mxu0 0.0
    %1514 = vmatpush1.msra.mxu0 0.0
    %1515 = vmatprep.subr.mxu0 0.0
    %1516 = vmatpush1.msra.mxu0 0.0
    %1517 = vmatprep.subr.mxu0 0.0
    %1518 = vmatpush1.msra.mxu0 0.0
    %1519 = vmatprep.subr.mxu0 0.0
    %1520 = vmatpush1.msra.mxu0 0.0
    %1521 = vmatprep.subr.mxu0 0.0
    %1522 = vmatpush1.msra.mxu0 0.0
    %1523 = vmatprep.subr.mxu0 0.0
    %1524 = vmatpush1.msra.mxu0 0.0
    %1525 = vmatprep.subr.mxu0 0.0
    %1526 = vmatpush1.msra.mxu0 0.0
    %1527 = vmatprep.subr.mxu0 0.0
    %1528 = vmatpush1.msra.mxu0 0.0
    %1529 = vmatprep.subr.mxu0 0.0
    %1530 = vmatpush1.msra.mxu0 0.0
    %1531 = vmatprep.subr.mxu0 0.0
    %1532 = vmatpush1.msra.mxu0 0.0
    %1533 = vmatprep.subr.mxu0 0.0
    %1534 = vmatpush1.msra.mxu0 0.0
    %1535 = vmatprep.mubr.f32.mxu0 0.0
    %1536 = vmatmul.mubr.f32.gmra.mrb[0].mxu0 %v290
    %v1537 = vpop.f32.mrb[0].mxu0
    %v1538 = vadd.f32 0.0, %v1537
    %v1539 = vpop.f32.mrb[0].mxu0
    %1540 = vdwg.mxu0
    %1541 = vmatprep.subr.mxu0 0.0
    %1542 = vmatpush1.msra.mxu0 %v281
    %1543 = vmatprep.subr.mxu0 0.0
    %1544 = vmatpush1.msra.mxu0 0.0
    %1545 = vmatprep.subr.mxu0 0.0
    %1546 = vmatpush1.msra.mxu0 0.0
    %1547 = vmatprep.subr.mxu0 0.0
    %1548 = vmatpush1.msra.mxu0 0.0
    %1549 = vmatprep.subr.mxu0 0.0
    %1550 = vmatpush1.msra.mxu0 0.0
    %1551 = vmatprep.subr.mxu0 0.0
    %1552 = vmatpush1.msra.mxu0 0.0
    %1553 = vmatprep.subr.mxu0 0.0
    %1554 = vmatpush1.msra.mxu0 0.0
    %1555 = vmatprep.subr.mxu0 0.0
    %1556 = vmatpush1.msra.mxu0 0.0
    %1557 = vmatprep.subr.mxu0 0.0
    %1558 = vmatpush1.msra.mxu0 0.0
    %1559 = vmatprep.subr.mxu0 0.0
    %1560 = vmatpush1.msra.mxu0 0.0
    %1561 = vmatprep.subr.mxu0 0.0
    %1562 = vmatpush1.msra.mxu0 0.0
    %1563 = vmatprep.subr.mxu0 0.0
    %1564 = vmatpush1.msra.mxu0 0.0
    %1565 = vmatprep.subr.mxu0 0.0
    %1566 = vmatpush1.msra.mxu0 0.0
    %1567 = vmatprep.subr.mxu0 0.0
    %1568 = vmatpush1.msra.mxu0 0.0
    %1569 = vmatprep.subr.mxu0 0.0
    %1570 = vmatpush1.msra.mxu0 0.0
    %1571 = vmatprep.subr.mxu0 0.0
    %1572 = vmatpush1.msra.mxu0 0.0
    %1573 = vmatprep.subr.mxu0 0.0
    %1574 = vmatpush1.msra.mxu0 0.0
    %1575 = vmatprep.subr.mxu0 0.0
    %1576 = vmatpush1.msra.mxu0 0.0
    %1577 = vmatprep.subr.mxu0 0.0
    %1578 = vmatpush1.msra.mxu0 0.0
    %1579 = vmatprep.subr.mxu0 0.0
    %1580 = vmatpush1.msra.mxu0 0.0
    %1581 = vmatprep.subr.mxu0 0.0
    %1582 = vmatpush1.msra.mxu0 0.0
    %1583 = vmatprep.subr.mxu0 0.0
    %1584 = vmatpush1.msra.mxu0 0.0
    %1585 = vmatprep.subr.mxu0 0.0
    %1586 = vmatpush1.msra.mxu0 0.0
    %1587 = vmatprep.subr.mxu0 0.0
    %1588 = vmatpush1.msra.mxu0 0.0
    %1589 = vmatprep.subr.mxu0 0.0
    %1590 = vmatpush1.msra.mxu0 0.0
    %1591 = vmatprep.subr.mxu0 0.0
    %1592 = vmatpush1.msra.mxu0 0.0
    %1593 = vmatprep.subr.mxu0 0.0
    %1594 = vmatpush1.msra.mxu0 0.0
    %1595 = vmatprep.subr.mxu0 0.0
    %1596 = vmatpush1.msra.mxu0 0.0
    %1597 = vmatprep.subr.mxu0 0.0
    %1598 = vmatpush1.msra.mxu0 0.0
    %1599 = vmatprep.subr.mxu0 0.0
    %1600 = vmatpush1.msra.mxu0 0.0
    %1601 = vmatprep.subr.mxu0 0.0
    %1602 = vmatpush1.msra.mxu0 0.0
    %1603 = vmatprep.subr.mxu0 0.0
    %1604 = vmatpush1.msra.mxu0 0.0
    %1605 = vmatprep.mubr.f32.mxu0 0.0
    %1606 = vmatmul.mubr.f32.gmra.mrb[0].mxu0 %v363
    %v1607 = vpop.f32.mrb[0].mxu0
    %v1608 = vadd.f32 %v1538, %v1607
    %v1609 = vpop.f32.mrb[0].mxu0
    %1610 = vdwg.mxu0
    %1611 = vmatprep.subr.mxu0 0.0
    %1612 = vmatpush1.msra.mxu0 %v282
    %1613 = vmatprep.subr.mxu0 0.0
    %1614 = vmatpush1.msra.mxu0 0.0
    %1615 = vmatprep.subr.mxu0 0.0
    %1616 = vmatpush1.msra.mxu0 0.0
    %1617 = vmatprep.subr.mxu0 0.0
    %1618 = vmatpush1.msra.mxu0 0.0
    %1619 = vmatprep.subr.mxu0 0.0
    %1620 = vmatpush1.msra.mxu0 0.0
    %1621 = vmatprep.subr.mxu0 0.0
    %1622 = vmatpush1.msra.mxu0 0.0
    %1623 = vmatprep.subr.mxu0 0.0
    %1624 = vmatpush1.msra.mxu0 0.0
    %1625 = vmatprep.subr.mxu0 0.0
    %1626 = vmatpush1.msra.mxu0 0.0
    %1627 = vmatprep.subr.mxu0 0.0
    %1628 = vmatpush1.msra.mxu0 0.0
    %1629 = vmatprep.subr.mxu0 0.0
    %1630 = vmatpush1.msra.mxu0 0.0
    %1631 = vmatprep.subr.mxu0 0.0
    %1632 = vmatpush1.msra.mxu0 0.0
    %1633 = vmatprep.subr.mxu0 0.0
    %1634 = vmatpush1.msra.mxu0 0.0
    %1635 = vmatprep.subr.mxu0 0.0
    %1636 = vmatpush1.msra.mxu0 0.0
    %1637 = vmatprep.subr.mxu0 0.0
    %1638 = vmatpush1.msra.mxu0 0.0
    %1639 = vmatprep.subr.mxu0 0.0
    %1640 = vmatpush1.msra.mxu0 0.0
    %1641 = vmatprep.subr.mxu0 0.0
    %1642 = vmatpush1.msra.mxu0 0.0
    %1643 = vmatprep.subr.mxu0 0.0
    %1644 = vmatpush1.msra.mxu0 0.0
    %1645 = vmatprep.subr.mxu0 0.0
    %1646 = vmatpush1.msra.mxu0 0.0
    %1647 = vmatprep.subr.mxu0 0.0
    %1648 = vmatpush1.msra.mxu0 0.0
    %1649 = vmatprep.subr.mxu0 0.0
    %1650 = vmatpush1.msra.mxu0 0.0
    %1651 = vmatprep.subr.mxu0 0.0
    %1652 = vmatpush1.msra.mxu0 0.0
    %1653 = vmatprep.subr.mxu0 0.0
    %1654 = vmatpush1.msra.mxu0 0.0
    %1655 = vmatprep.subr.mxu0 0.0
    %1656 = vmatpush1.msra.mxu0 0.0
    %1657 = vmatprep.subr.mxu0 0.0
    %1658 = vmatpush1.msra.mxu0 0.0
    %1659 = vmatprep.subr.mxu0 0.0
    %1660 = vmatpush1.msra.mxu0 0.0
    %1661 = vmatprep.subr.mxu0 0.0
    %1662 = vmatpush1.msra.mxu0 0.0
    %1663 = vmatprep.subr.mxu0 0.0
    %1664 = vmatpush1.msra.mxu0 0.0
    %1665 = vmatprep.subr.mxu0 0.0
    %1666 = vmatpush1.msra.mxu0 0.0
    %1667 = vmatprep.subr.mxu0 0.0
    %1668 = vmatpush1.msra.mxu0 0.0
    %1669 = vmatprep.subr.mxu0 0.0
    %1670 = vmatpush1.msra.mxu0 0.0
    %1671 = vmatprep.subr.mxu0 0.0
    %1672 = vmatpush1.msra.mxu0 0.0
    %1673 = vmatprep.subr.mxu0 0.0
    %1674 = vmatpush1.msra.mxu0 0.0
    %1675 = vmatprep.mubr.f32.mxu0 0.0
    %1676 = vmatmul.mubr.f32.gmra.mrb[0].mxu0 %v443
    %v1677 = vpop.f32.mrb[0].mxu0
    %v1678 = vadd.f32 0.0, %v1677
    %v1679 = vpop.f32.mrb[0].mxu0
    %1680 = vdwg.mxu0
    %1681 = vmatprep.subr.mxu0 0.0
    %1682 = vmatpush1.msra.mxu0 %v281
    %1683 = vmatprep.subr.mxu0 0.0
    %1684 = vmatpush1.msra.mxu0 0.0
    %1685 = vmatprep.subr.mxu0 0.0
    %1686 = vmatpush1.msra.mxu0 0.0
    %1687 = vmatprep.subr.mxu0 0.0
    %1688 = vmatpush1.msra.mxu0 0.0
    %1689 = vmatprep.subr.mxu0 0.0
    %1690 = vmatpush1.msra.mxu0 0.0
    %1691 = vmatprep.subr.mxu0 0.0
    %1692 = vmatpush1.msra.mxu0 0.0
    %1693 = vmatprep.subr.mxu0 0.0
    %1694 = vmatpush1.msra.mxu0 0.0
    %1695 = vmatprep.subr.mxu0 0.0
    %1696 = vmatpush1.msra.mxu0 0.0
    %1697 = vmatprep.subr.mxu0 0.0
    %1698 = vmatpush1.msra.mxu0 0.0
    %1699 = vmatprep.subr.mxu0 0.0
    %1700 = vmatpush1.msra.mxu0 0.0
    %1701 = vmatprep.subr.mxu0 0.0
    %1702 = vmatpush1.msra.mxu0 0.0
    %1703 = vmatprep.subr.mxu0 0.0
    %1704 = vmatpush1.msra.mxu0 0.0
    %1705 = vmatprep.subr.mxu0 0.0
    %1706 = vmatpush1.msra.mxu0 0.0
    %1707 = vmatprep.subr.mxu0 0.0
    %1708 = vmatpush1.msra.mxu0 0.0
    %1709 = vmatprep.subr.mxu0 0.0
    %1710 = vmatpush1.msra.mxu0 0.0
    %1711 = vmatprep.subr.mxu0 0.0
    %1712 = vmatpush1.msra.mxu0 0.0
    %1713 = vmatprep.subr.mxu0 0.0
    %1714 = vmatpush1.msra.mxu0 0.0
    %1715 = vmatprep.subr.mxu0 0.0
    %1716 = vmatpush1.msra.mxu0 0.0
    %1717 = vmatprep.subr.mxu0 0.0
    %1718 = vmatpush1.msra.mxu0 0.0
    %1719 = vmatprep.subr.mxu0 0.0
    %1720 = vmatpush1.msra.mxu0 0.0
    %1721 = vmatprep.subr.mxu0 0.0
    %1722 = vmatpush1.msra.mxu0 0.0
    %1723 = vmatprep.subr.mxu0 0.0
    %1724 = vmatpush1.msra.mxu0 0.0
    %1725 = vmatprep.subr.mxu0 0.0
    %1726 = vmatpush1.msra.mxu0 0.0
    %1727 = vmatprep.subr.mxu0 0.0
    %1728 = vmatpush1.msra.mxu0 0.0
    %1729 = vmatprep.subr.mxu0 0.0
    %1730 = vmatpush1.msra.mxu0 0.0
    %1731 = vmatprep.subr.mxu0 0.0
    %1732 = vmatpush1.msra.mxu0 0.0
    %1733 = vmatprep.subr.mxu0 0.0
    %1734 = vmatpush1.msra.mxu0 0.0
    %1735 = vmatprep.subr.mxu0 0.0
    %1736 = vmatpush1.msra.mxu0 0.0
    %1737 = vmatprep.subr.mxu0 0.0
    %1738 = vmatpush1.msra.mxu0 0.0
    %1739 = vmatprep.subr.mxu0 0.0
    %1740 = vmatpush1.msra.mxu0 0.0
    %1741 = vmatprep.subr.mxu0 0.0
    %1742 = vmatpush1.msra.mxu0 0.0
    %1743 = vmatprep.subr.mxu0 0.0
    %1744 = vmatpush1.msra.mxu0 0.0
    %1745 = vmatprep.mubr.f32.mxu0 0.0
    %1746 = vmatmul.mubr.f32.gmra.mrb[0].mxu0 %v516
    %v1747 = vpop.f32.mrb[0].mxu0
    %v1748 = vadd.f32 %v1678, %v1747
    %v1749 = vpop.f32.mrb[0].mxu0
    %1750 = vdwg.mxu0
    %1751 = vmatprep.subr.mxu0 0.0
    %1752 = vmatpush1.msra.mxu0 %v282
    %1753 = vmatprep.subr.mxu0 0.0
    %1754 = vmatpush1.msra.mxu0 0.0
    %1755 = vmatprep.subr.mxu0 0.0
    %1756 = vmatpush1.msra.mxu0 0.0
    %1757 = vmatprep.subr.mxu0 0.0
    %1758 = vmatpush1.msra.mxu0 0.0
    %1759 = vmatprep.subr.mxu0 0.0
    %1760 = vmatpush1.msra.mxu0 0.0
    %1761 = vmatprep.subr.mxu0 0.0
    %1762 = vmatpush1.msra.mxu0 0.0
    %1763 = vmatprep.subr.mxu0 0.0
    %1764 = vmatpush1.msra.mxu0 0.0
    %1765 = vmatprep.subr.mxu0 0.0
    %1766 = vmatpush1.msra.mxu0 0.0
    %1767 = vmatprep.subr.mxu0 0.0
    %1768 = vmatpush1.msra.mxu0 0.0
    %1769 = vmatprep.subr.mxu0 0.0
    %1770 = vmatpush1.msra.mxu0 0.0
    %1771 = vmatprep.subr.mxu0 0.0
    %1772 = vmatpush1.msra.mxu0 0.0
    %1773 = vmatprep.subr.mxu0 0.0
    %1774 = vmatpush1.msra.mxu0 0.0
    %1775 = vmatprep.subr.mxu0 0.0
    %1776 = vmatpush1.msra.mxu0 0.0
    %1777 = vmatprep.subr.mxu0 0.0
    %1778 = vmatpush1.msra.mxu0 0.0
    %1779 = vmatprep.subr.mxu0 0.0
    %1780 = vmatpush1.msra.mxu0 0.0
    %1781 = vmatprep.subr.mxu0 0.0
    %1782 = vmatpush1.msra.mxu0 0.0
    %1783 = vmatprep.subr.mxu0 0.0
    %1784 = vmatpush1.msra.mxu0 0.0
    %1785 = vmatprep.subr.mxu0 0.0
    %1786 = vmatpush1.msra.mxu0 0.0
    %1787 = vmatprep.subr.mxu0 0.0
    %1788 = vmatpush1.msra.mxu0 0.0
    %1789 = vmatprep.subr.mxu0 0.0
    %1790 = vmatpush1.msra.mxu0 0.0
    %1791 = vmatprep.subr.mxu0 0.0
    %1792 = vmatpush1.msra.mxu0 0.0
    %1793 = vmatprep.subr.mxu0 0.0
    %1794 = vmatpush1.msra.mxu0 0.0
    %1795 = vmatprep.subr.mxu0 0.0
    %1796 = vmatpush1.msra.mxu0 0.0
    %1797 = vmatprep.subr.mxu0 0.0
    %1798 = vmatpush1.msra.mxu0 0.0
    %1799 = vmatprep.subr.mxu0 0.0
    %1800 = vmatpush1.msra.mxu0 0.0
    %1801 = vmatprep.subr.mxu0 0.0
    %1802 = vmatpush1.msra.mxu0 0.0
    %1803 = vmatprep.subr.mxu0 0.0
    %1804 = vmatpush1.msra.mxu0 0.0
    %1805 = vmatprep.subr.mxu0 0.0
    %1806 = vmatpush1.msra.mxu0 0.0
    %1807 = vmatprep.subr.mxu0 0.0
    %1808 = vmatpush1.msra.mxu0 0.0
    %1809 = vmatprep.subr.mxu0 0.0
    %1810 = vmatpush1.msra.mxu0 0.0
    %1811 = vmatprep.subr.mxu0 0.0
    %1812 = vmatpush1.msra.mxu0 0.0
    %1813 = vmatprep.subr.mxu0 0.0
    %1814 = vmatpush1.msra.mxu0 0.0
    %1815 = vmatprep.mubr.f32.mxu0 0.0
    %1816 = vmatmul.mubr.f32.gmra.mrb[0].mxu0 %v590
    %v1817 = vpop.f32.mrb[0].mxu0
    %v1818 = vadd.f32 0.0, %v1817
    %v1819 = vpop.f32.mrb[0].mxu0
    %1820 = vdwg.mxu0
    %1821 = vmatprep.subr.mxu0 0.0
    %1822 = vmatpush1.msra.mxu0 %v281
    %1823 = vmatprep.subr.mxu0 0.0
    %1824 = vmatpush1.msra.mxu0 0.0
    %1825 = vmatprep.subr.mxu0 0.0
    %1826 = vmatpush1.msra.mxu0 0.0
    %1827 = vmatprep.subr.mxu0 0.0
    %1828 = vmatpush1.msra.mxu0 0.0
    %1829 = vmatprep.subr.mxu0 0.0
    %1830 = vmatpush1.msra.mxu0 0.0
    %1831 = vmatprep.subr.mxu0 0.0
    %1832 = vmatpush1.msra.mxu0 0.0
    %1833 = vmatprep.subr.mxu0 0.0
    %1834 = vmatpush1.msra.mxu0 0.0
    %1835 = vmatprep.subr.mxu0 0.0
    %1836 = vmatpush1.msra.mxu0 0.0
    %1837 = vmatprep.subr.mxu0 0.0
    %1838 = vmatpush1.msra.mxu0 0.0
    %1839 = vmatprep.subr.mxu0 0.0
    %1840 = vmatpush1.msra.mxu0 0.0
    %1841 = vmatprep.subr.mxu0 0.0
    %1842 = vmatpush1.msra.mxu0 0.0
    %1843 = vmatprep.subr.mxu0 0.0
    %1844 = vmatpush1.msra.mxu0 0.0
    %1845 = vmatprep.subr.mxu0 0.0
    %1846 = vmatpush1.msra.mxu0 0.0
    %1847 = vmatprep.subr.mxu0 0.0
    %1848 = vmatpush1.msra.mxu0 0.0
    %1849 = vmatprep.subr.mxu0 0.0
    %1850 = vmatpush1.msra.mxu0 0.0
    %1851 = vmatprep.subr.mxu0 0.0
    %1852 = vmatpush1.msra.mxu0 0.0
    %1853 = vmatprep.subr.mxu0 0.0
    %1854 = vmatpush1.msra.mxu0 0.0
    %1855 = vmatprep.subr.mxu0 0.0
    %1856 = vmatpush1.msra.mxu0 0.0
    %1857 = vmatprep.subr.mxu0 0.0
    %1858 = vmatpush1.msra.mxu0 0.0
    %1859 = vmatprep.subr.mxu0 0.0
    %1860 = vmatpush1.msra.mxu0 0.0
    %1861 = vmatprep.subr.mxu0 0.0
    %1862 = vmatpush1.msra.mxu0 0.0
    %1863 = vmatprep.subr.mxu0 0.0
    %1864 = vmatpush1.msra.mxu0 0.0
    %1865 = vmatprep.subr.mxu0 0.0
    %1866 = vmatpush1.msra.mxu0 0.0
    %1867 = vmatprep.subr.mxu0 0.0
    %1868 = vmatpush1.msra.mxu0 0.0
    %1869 = vmatprep.subr.mxu0 0.0
    %1870 = vmatpush1.msra.mxu0 0.0
    %1871 = vmatprep.subr.mxu0 0.0
    %1872 = vmatpush1.msra.mxu0 0.0
    %1873 = vmatprep.subr.mxu0 0.0
    %1874 = vmatpush1.msra.mxu0 0.0
    %1875 = vmatprep.subr.mxu0 0.0
    %1876 = vmatpush1.msra.mxu0 0.0
    %1877 = vmatprep.subr.mxu0 0.0
    %1878 = vmatpush1.msra.mxu0 0.0
    %1879 = vmatprep.subr.mxu0 0.0
    %1880 = vmatpush1.msra.mxu0 0.0
    %1881 = vmatprep.subr.mxu0 0.0
    %1882 = vmatpush1.msra.mxu0 0.0
    %1883 = vmatprep.subr.mxu0 0.0
    %1884 = vmatpush1.msra.mxu0 0.0
    %1885 = vmatprep.mubr.f32.mxu0 0.0
    %1886 = vmatmul.mubr.f32.gmra.mrb[0].mxu0 %v663
    %v1887 = vpop.f32.mrb[0].mxu0
    %v1888 = vadd.f32 %v1818, %v1887
    %v1889 = vpop.f32.mrb[0].mxu0
    %1890 = vdwg.mxu0
    %1891 = vmatprep.subr.mxu0 0.0
    %1892 = vmatpush1.msra.mxu0 %v282
    %1893 = vmatprep.subr.mxu0 0.0
    %1894 = vmatpush1.msra.mxu0 0.0
    %1895 = vmatprep.subr.mxu0 0.0
    %1896 = vmatpush1.msra.mxu0 0.0
    %1897 = vmatprep.subr.mxu0 0.0
    %1898 = vmatpush1.msra.mxu0 0.0
    %1899 = vmatprep.subr.mxu0 0.0
    %1900 = vmatpush1.msra.mxu0 0.0
    %1901 = vmatprep.subr.mxu0 0.0
    %1902 = vmatpush1.msra.mxu0 0.0
    %1903 = vmatprep.subr.mxu0 0.0
    %1904 = vmatpush1.msra.mxu0 0.0
    %1905 = vmatprep.subr.mxu0 0.0
    %1906 = vmatpush1.msra.mxu0 0.0
    %1907 = vmatprep.subr.mxu0 0.0
    %1908 = vmatpush1.msra.mxu0 0.0
    %1909 = vmatprep.subr.mxu0 0.0
    %1910 = vmatpush1.msra.mxu0 0.0
    %1911 = vmatprep.subr.mxu0 0.0
    %1912 = vmatpush1.msra.mxu0 0.0
    %1913 = vmatprep.subr.mxu0 0.0
    %1914 = vmatpush1.msra.mxu0 0.0
    %1915 = vmatprep.subr.mxu0 0.0
    %1916 = vmatpush1.msra.mxu0 0.0
    %1917 = vmatprep.subr.mxu0 0.0
    %1918 = vmatpush1.msra.mxu0 0.0
    %1919 = vmatprep.subr.mxu0 0.0
    %1920 = vmatpush1.msra.mxu0 0.0
    %1921 = vmatprep.subr.mxu0 0.0
    %1922 = vmatpush1.msra.mxu0 0.0
    %1923 = vmatprep.subr.mxu0 0.0
    %1924 = vmatpush1.msra.mxu0 0.0
    %1925 = vmatprep.subr.mxu0 0.0
    %1926 = vmatpush1.msra.mxu0 0.0
    %1927 = vmatprep.subr.mxu0 0.0
    %1928 = vmatpush1.msra.mxu0 0.0
    %1929 = vmatprep.subr.mxu0 0.0
    %1930 = vmatpush1.msra.mxu0 0.0
    %1931 = vmatprep.subr.mxu0 0.0
    %1932 = vmatpush1.msra.mxu0 0.0
    %1933 = vmatprep.subr.mxu0 0.0
    %1934 = vmatpush1.msra.mxu0 0.0
    %1935 = vmatprep.subr.mxu0 0.0
    %1936 = vmatpush1.msra.mxu0 0.0
    %1937 = vmatprep.subr.mxu0 0.0
    %1938 = vmatpush1.msra.mxu0 0.0
    %1939 = vmatprep.subr.mxu0 0.0
    %1940 = vmatpush1.msra.mxu0 0.0
    %1941 = vmatprep.subr.mxu0 0.0
    %1942 = vmatpush1.msra.mxu0 0.0
    %1943 = vmatprep.subr.mxu0 0.0
    %1944 = vmatpush1.msra.mxu0 0.0
    %1945 = vmatprep.subr.mxu0 0.0
    %1946 = vmatpush1.msra.mxu0 0.0
    %1947 = vmatprep.subr.mxu0 0.0
    %1948 = vmatpush1.msra.mxu0 0.0
    %1949 = vmatprep.subr.mxu0 0.0
    %1950 = vmatpush1.msra.mxu0 0.0
    %1951 = vmatprep.subr.mxu0 0.0
    %1952 = vmatpush1.msra.mxu0 0.0
    %1953 = vmatprep.subr.mxu0 0.0
    %1954 = vmatpush1.msra.mxu0 0.0
    %1955 = vmatprep.mubr.f32.mxu0 0.0
    %1956 = vmatmul.mubr.f32.gmra.mrb[0].mxu0 %v737
    %v1957 = vpop.f32.mrb[0].mxu0
    %v1958 = vadd.f32 0.0, %v1957
    %v1959 = vpop.f32.mrb[0].mxu0
    %1960 = vdwg.mxu0
    %1961 = vmatprep.subr.mxu0 0.0
    %1962 = vmatpush1.msra.mxu0 %v281
    %1963 = vmatprep.subr.mxu0 0.0
    %1964 = vmatpush1.msra.mxu0 0.0
    %1965 = vmatprep.subr.mxu0 0.0
    %1966 = vmatpush1.msra.mxu0 0.0
    %1967 = vmatprep.subr.mxu0 0.0
    %1968 = vmatpush1.msra.mxu0 0.0
    %1969 = vmatprep.subr.mxu0 0.0
    %1970 = vmatpush1.msra.mxu0 0.0
    %1971 = vmatprep.subr.mxu0 0.0
    %1972 = vmatpush1.msra.mxu0 0.0
    %1973 = vmatprep.subr.mxu0 0.0
    %1974 = vmatpush1.msra.mxu0 0.0
    %1975 = vmatprep.subr.mxu0 0.0
    %1976 = vmatpush1.msra.mxu0 0.0
    %1977 = vmatprep.subr.mxu0 0.0
    %1978 = vmatpush1.msra.mxu0 0.0
    %1979 = vmatprep.subr.mxu0 0.0
    %1980 = vmatpush1.msra.mxu0 0.0
    %1981 = vmatprep.subr.mxu0 0.0
    %1982 = vmatpush1.msra.mxu0 0.0
    %1983 = vmatprep.subr.mxu0 0.0
    %1984 = vmatpush1.msra.mxu0 0.0
    %1985 = vmatprep.subr.mxu0 0.0
    %1986 = vmatpush1.msra.mxu0 0.0
    %1987 = vmatprep.subr.mxu0 0.0
    %1988 = vmatpush1.msra.mxu0 0.0
    %1989 = vmatprep.subr.mxu0 0.0
    %1990 = vmatpush1.msra.mxu0 0.0
    %1991 = vmatprep.subr.mxu0 0.0
    %1992 = vmatpush1.msra.mxu0 0.0
    %1993 = vmatprep.subr.mxu0 0.0
    %1994 = vmatpush1.msra.mxu0 0.0
    %1995 = vmatprep.subr.mxu0 0.0
    %1996 = vmatpush1.msra.mxu0 0.0
    %1997 = vmatprep.subr.mxu0 0.0
    %1998 = vmatpush1.msra.mxu0 0.0
    %1999 = vmatprep.subr.mxu0 0.0
    %2000 = vmatpush1.msra.mxu0 0.0
    %2001 = vmatprep.subr.mxu0 0.0
    %2002 = vmatpush1.msra.mxu0 0.0
    %2003 = vmatprep.subr.mxu0 0.0
    %2004 = vmatpush1.msra.mxu0 0.0
    %2005 = vmatprep.subr.mxu0 0.0
    %2006 = vmatpush1.msra.mxu0 0.0
    %2007 = vmatprep.subr.mxu0 0.0
    %2008 = vmatpush1.msra.mxu0 0.0
    %2009 = vmatprep.subr.mxu0 0.0
    %2010 = vmatpush1.msra.mxu0 0.0
    %2011 = vmatprep.subr.mxu0 0.0
    %2012 = vmatpush1.msra.mxu0 0.0
    %2013 = vmatprep.subr.mxu0 0.0
    %2014 = vmatpush1.msra.mxu0 0.0
    %2015 = vmatprep.subr.mxu0 0.0
    %2016 = vmatpush1.msra.mxu0 0.0
    %2017 = vmatprep.subr.mxu0 0.0
    %2018 = vmatpush1.msra.mxu0 0.0
    %2019 = vmatprep.subr.mxu0 0.0
    %2020 = vmatpush1.msra.mxu0 0.0
    %2021 = vmatprep.subr.mxu0 0.0
    %2022 = vmatpush1.msra.mxu0 0.0
    %2023 = vmatprep.subr.mxu0 0.0
    %2024 = vmatpush1.msra.mxu0 0.0
    %2025 = vmatprep.mubr.f32.mxu0 0.0
    %2026 = vmatmul.mubr.f32.gmra.mrb[0].mxu0 %v810
    %v2027 = vpop.f32.mrb[0].mxu0
    %v2028 = vadd.f32 %v1958, %v2027
    %v2029 = vpop.f32.mrb[0].mxu0
    %2030 = vdwg.mxu0
    %2031 = vmatprep.subr.mxu0 0.0
    %2032 = vmatpush1.msra.mxu0 %v282
    %2033 = vmatprep.subr.mxu0 0.0
    %2034 = vmatpush1.msra.mxu0 0.0
    %2035 = vmatprep.subr.mxu0 0.0
    %2036 = vmatpush1.msra.mxu0 0.0
    %2037 = vmatprep.subr.mxu0 0.0
    %2038 = vmatpush1.msra.mxu0 0.0
    %2039 = vmatprep.subr.mxu0 0.0
    %2040 = vmatpush1.msra.mxu0 0.0
    %2041 = vmatprep.subr.mxu0 0.0
    %2042 = vmatpush1.msra.mxu0 0.0
    %2043 = vmatprep.subr.mxu0 0.0
    %2044 = vmatpush1.msra.mxu0 0.0
    %2045 = vmatprep.subr.mxu0 0.0
    %2046 = vmatpush1.msra.mxu0 0.0
    %2047 = vmatprep.subr.mxu0 0.0
    %2048 = vmatpush1.msra.mxu0 0.0
    %2049 = vmatprep.subr.mxu0 0.0
    %2050 = vmatpush1.msra.mxu0 0.0
    %2051 = vmatprep.subr.mxu0 0.0
    %2052 = vmatpush1.msra.mxu0 0.0
    %2053 = vmatprep.subr.mxu0 0.0
    %2054 = vmatpush1.msra.mxu0 0.0
    %2055 = vmatprep.subr.mxu0 0.0
    %2056 = vmatpush1.msra.mxu0 0.0
    %2057 = vmatprep.subr.mxu0 0.0
    %2058 = vmatpush1.msra.mxu0 0.0
    %2059 = vmatprep.subr.mxu0 0.0
    %2060 = vmatpush1.msra.mxu0 0.0
    %2061 = vmatprep.subr.mxu0 0.0
    %2062 = vmatpush1.msra.mxu0 0.0
    %2063 = vmatprep.subr.mxu0 0.0
    %2064 = vmatpush1.msra.mxu0 0.0
    %2065 = vmatprep.subr.mxu0 0.0
    %2066 = vmatpush1.msra.mxu0 0.0
    %2067 = vmatprep.subr.mxu0 0.0
    %2068 = vmatpush1.msra.mxu0 0.0
    %2069 = vmatprep.subr.mxu0 0.0
    %2070 = vmatpush1.msra.mxu0 0.0
    %2071 = vmatprep.subr.mxu0 0.0
    %2072 = vmatpush1.msra.mxu0 0.0
    %2073 = vmatprep.subr.mxu0 0.0
    %2074 = vmatpush1.msra.mxu0 0.0
    %2075 = vmatprep.subr.mxu0 0.0
    %2076 = vmatpush1.msra.mxu0 0.0
    %2077 = vmatprep.subr.mxu0 0.0
    %2078 = vmatpush1.msra.mxu0 0.0
    %2079 = vmatprep.subr.mxu0 0.0
    %2080 = vmatpush1.msra.mxu0 0.0
    %2081 = vmatprep.subr.mxu0 0.0
    %2082 = vmatpush1.msra.mxu0 0.0
    %2083 = vmatprep.subr.mxu0 0.0
    %2084 = vmatpush1.msra.mxu0 0.0
    %2085 = vmatprep.subr.mxu0 0.0
    %2086 = vmatpush1.msra.mxu0 0.0
    %2087 = vmatprep.subr.mxu0 0.0
    %2088 = vmatpush1.msra.mxu0 0.0
    %2089 = vmatprep.subr.mxu0 0.0
    %2090 = vmatpush1.msra.mxu0 0.0
    %2091 = vmatprep.subr.mxu0 0.0
    %2092 = vmatpush1.msra.mxu0 0.0
    %2093 = vmatprep.subr.mxu0 0.0
    %2094 = vmatpush1.msra.mxu0 0.0
    %2095 = vmatprep.mubr.f32.mxu0 0.0
    %2096 = vmatmul.mubr.f32.gmra.mrb[0].mxu0 %v884
    %v2097 = vpop.f32.mrb[0].mxu0
    %v2098 = vadd.f32 0.0, %v2097
    %v2099 = vpop.f32.mrb[0].mxu0
    %2100 = vdwg.mxu0
    %2101 = vmatprep.subr.mxu0 0.0
    %2102 = vmatpush1.msra.mxu0 %v281
    %2103 = vmatprep.subr.mxu0 0.0
    %2104 = vmatpush1.msra.mxu0 0.0
    %2105 = vmatprep.subr.mxu0 0.0
    %2106 = vmatpush1.msra.mxu0 0.0
    %2107 = vmatprep.subr.mxu0 0.0
    %2108 = vmatpush1.msra.mxu0 0.0
    %2109 = vmatprep.subr.mxu0 0.0
    %2110 = vmatpush1.msra.mxu0 0.0
    %2111 = vmatprep.subr.mxu0 0.0
    %2112 = vmatpush1.msra.mxu0 0.0
    %2113 = vmatprep.subr.mxu0 0.0
    %2114 = vmatpush1.msra.mxu0 0.0
    %2115 = vmatprep.subr.mxu0 0.0
    %2116 = vmatpush1.msra.mxu0 0.0
    %2117 = vmatprep.subr.mxu0 0.0
    %2118 = vmatpush1.msra.mxu0 0.0
    %2119 = vmatprep.subr.mxu0 0.0
    %2120 = vmatpush1.msra.mxu0 0.0
    %2121 = vmatprep.subr.mxu0 0.0
    %2122 = vmatpush1.msra.mxu0 0.0
    %2123 = vmatprep.subr.mxu0 0.0
    %2124 = vmatpush1.msra.mxu0 0.0
    %2125 = vmatprep.subr.mxu0 0.0
    %2126 = vmatpush1.msra.mxu0 0.0
    %2127 = vmatprep.subr.mxu0 0.0
    %2128 = vmatpush1.msra.mxu0 0.0
    %2129 = vmatprep.subr.mxu0 0.0
    %2130 = vmatpush1.msra.mxu0 0.0
    %2131 = vmatprep.subr.mxu0 0.0
    %2132 = vmatpush1.msra.mxu0 0.0
    %2133 = vmatprep.subr.mxu0 0.0
    %2134 = vmatpush1.msra.mxu0 0.0
    %2135 = vmatprep.subr.mxu0 0.0
    %2136 = vmatpush1.msra.mxu0 0.0
    %2137 = vmatprep.subr.mxu0 0.0
    %2138 = vmatpush1.msra.mxu0 0.0
    %2139 = vmatprep.subr.mxu0 0.0
    %2140 = vmatpush1.msra.mxu0 0.0
    %2141 = vmatprep.subr.mxu0 0.0
    %2142 = vmatpush1.msra.mxu0 0.0
    %2143 = vmatprep.subr.mxu0 0.0
    %2144 = vmatpush1.msra.mxu0 0.0
    %2145 = vmatprep.subr.mxu0 0.0
    %2146 = vmatpush1.msra.mxu0 0.0
    %2147 = vmatprep.subr.mxu0 0.0
    %2148 = vmatpush1.msra.mxu0 0.0
    %2149 = vmatprep.subr.mxu0 0.0
    %2150 = vmatpush1.msra.mxu0 0.0
    %2151 = vmatprep.subr.mxu0 0.0
    %2152 = vmatpush1.msra.mxu0 0.0
    %2153 = vmatprep.subr.mxu0 0.0
    %2154 = vmatpush1.msra.mxu0 0.0
    %2155 = vmatprep.subr.mxu0 0.0
    %2156 = vmatpush1.msra.mxu0 0.0
    %2157 = vmatprep.subr.mxu0 0.0
    %2158 = vmatpush1.msra.mxu0 0.0
    %2159 = vmatprep.subr.mxu0 0.0
    %2160 = vmatpush1.msra.mxu0 0.0
    %2161 = vmatprep.subr.mxu0 0.0
    %2162 = vmatpush1.msra.mxu0 0.0
    %2163 = vmatprep.subr.mxu0 0.0
    %2164 = vmatpush1.msra.mxu0 0.0
    %2165 = vmatprep.mubr.f32.mxu0 0.0
    %2166 = vmatmul.mubr.f32.gmra.mrb[0].mxu0 %v957
    %v2167 = vpop.f32.mrb[0].mxu0
    %v2168 = vadd.f32 %v2098, %v2167
    %v2169 = vpop.f32.mrb[0].mxu0
    %2170 = vdwg.mxu0
    %2171 = vmatprep.subr.mxu0 0.0
    %2172 = vmatpush1.msra.mxu0 %v282
    %2173 = vmatprep.subr.mxu0 0.0
    %2174 = vmatpush1.msra.mxu0 0.0
    %2175 = vmatprep.subr.mxu0 0.0
    %2176 = vmatpush1.msra.mxu0 0.0
    %2177 = vmatprep.subr.mxu0 0.0
    %2178 = vmatpush1.msra.mxu0 0.0
    %2179 = vmatprep.subr.mxu0 0.0
    %2180 = vmatpush1.msra.mxu0 0.0
    %2181 = vmatprep.subr.mxu0 0.0
    %2182 = vmatpush1.msra.mxu0 0.0
    %2183 = vmatprep.subr.mxu0 0.0
    %2184 = vmatpush1.msra.mxu0 0.0
    %2185 = vmatprep.subr.mxu0 0.0
    %2186 = vmatpush1.msra.mxu0 0.0
    %2187 = vmatprep.subr.mxu0 0.0
    %2188 = vmatpush1.msra.mxu0 0.0
    %2189 = vmatprep.subr.mxu0 0.0
    %2190 = vmatpush1.msra.mxu0 0.0
    %2191 = vmatprep.subr.mxu0 0.0
    %2192 = vmatpush1.msra.mxu0 0.0
    %2193 = vmatprep.subr.mxu0 0.0
    %2194 = vmatpush1.msra.mxu0 0.0
    %2195 = vmatprep.subr.mxu0 0.0
    %2196 = vmatpush1.msra.mxu0 0.0
    %2197 = vmatprep.subr.mxu0 0.0
    %2198 = vmatpush1.msra.mxu0 0.0
    %2199 = vmatprep.subr.mxu0 0.0
    %2200 = vmatpush1.msra.mxu0 0.0
    %2201 = vmatprep.subr.mxu0 0.0
    %2202 = vmatpush1.msra.mxu0 0.0
    %2203 = vmatprep.subr.mxu0 0.0
    %2204 = vmatpush1.msra.mxu0 0.0
    %2205 = vmatprep.subr.mxu0 0.0
    %2206 = vmatpush1.msra.mxu0 0.0
    %2207 = vmatprep.subr.mxu0 0.0
    %2208 = vmatpush1.msra.mxu0 0.0
    %2209 = vmatprep.subr.mxu0 0.0
    %2210 = vmatpush1.msra.mxu0 0.0
    %2211 = vmatprep.subr.mxu0 0.0
    %2212 = vmatpush1.msra.mxu0 0.0
    %2213 = vmatprep.subr.mxu0 0.0
    %2214 = vmatpush1.msra.mxu0 0.0
    %2215 = vmatprep.subr.mxu0 0.0
    %2216 = vmatpush1.msra.mxu0 0.0
    %2217 = vmatprep.subr.mxu0 0.0
    %2218 = vmatpush1.msra.mxu0 0.0
    %2219 = vmatprep.subr.mxu0 0.0
    %2220 = vmatpush1.msra.mxu0 0.0
    %2221 = vmatprep.subr.mxu0 0.0
    %2222 = vmatpush1.msra.mxu0 0.0
    %2223 = vmatprep.subr.mxu0 0.0
    %2224 = vmatpush1.msra.mxu0 0.0
    %2225 = vmatprep.subr.mxu0 0.0
    %2226 = vmatpush1.msra.mxu0 0.0
    %2227 = vmatprep.subr.mxu0 0.0
    %2228 = vmatpush1.msra.mxu0 0.0
    %2229 = vmatprep.subr.mxu0 0.0
    %2230 = vmatpush1.msra.mxu0 0.0
    %2231 = vmatprep.subr.mxu0 0.0
    %2232 = vmatpush1.msra.mxu0 0.0
    %2233 = vmatprep.subr.mxu0 0.0
    %2234 = vmatpush1.msra.mxu0 0.0
    %2235 = vmatprep.mubr.f32.mxu0 0.0
    %2236 = vmatmul.mubr.f32.gmra.mrb[0].mxu0 %v1031
    %v2237 = vpop.f32.mrb[0].mxu0
    %v2238 = vadd.f32 0.0, %v2237
    %v2239 = vpop.f32.mrb[0].mxu0
    %2240 = vdwg.mxu0
    %2241 = vmatprep.subr.mxu0 0.0
    %2242 = vmatpush1.msra.mxu0 %v281
    %2243 = vmatprep.subr.mxu0 0.0
    %2244 = vmatpush1.msra.mxu0 0.0
    %2245 = vmatprep.subr.mxu0 0.0
    %2246 = vmatpush1.msra.mxu0 0.0
    %2247 = vmatprep.subr.mxu0 0.0
    %2248 = vmatpush1.msra.mxu0 0.0
    %2249 = vmatprep.subr.mxu0 0.0
    %2250 = vmatpush1.msra.mxu0 0.0
    %2251 = vmatprep.subr.mxu0 0.0
    %2252 = vmatpush1.msra.mxu0 0.0
    %2253 = vmatprep.subr.mxu0 0.0
    %2254 = vmatpush1.msra.mxu0 0.0
    %2255 = vmatprep.subr.mxu0 0.0
    %2256 = vmatpush1.msra.mxu0 0.0
    %2257 = vmatprep.subr.mxu0 0.0
    %2258 = vmatpush1.msra.mxu0 0.0
    %2259 = vmatprep.subr.mxu0 0.0
    %2260 = vmatpush1.msra.mxu0 0.0
    %2261 = vmatprep.subr.mxu0 0.0
    %2262 = vmatpush1.msra.mxu0 0.0
    %2263 = vmatprep.subr.mxu0 0.0
    %2264 = vmatpush1.msra.mxu0 0.0
    %2265 = vmatprep.subr.mxu0 0.0
    %2266 = vmatpush1.msra.mxu0 0.0
    %2267 = vmatprep.subr.mxu0 0.0
    %2268 = vmatpush1.msra.mxu0 0.0
    %2269 = vmatprep.subr.mxu0 0.0
    %2270 = vmatpush1.msra.mxu0 0.0
    %2271 = vmatprep.subr.mxu0 0.0
    %2272 = vmatpush1.msra.mxu0 0.0
    %2273 = vmatprep.subr.mxu0 0.0
    %2274 = vmatpush1.msra.mxu0 0.0
    %2275 = vmatprep.subr.mxu0 0.0
    %2276 = vmatpush1.msra.mxu0 0.0
    %2277 = vmatprep.subr.mxu0 0.0
    %2278 = vmatpush1.msra.mxu0 0.0
    %2279 = vmatprep.subr.mxu0 0.0
    %2280 = vmatpush1.msra.mxu0 0.0
    %2281 = vmatprep.subr.mxu0 0.0
    %2282 = vmatpush1.msra.mxu0 0.0
    %2283 = vmatprep.subr.mxu0 0.0
    %2284 = vmatpush1.msra.mxu0 0.0
    %2285 = vmatprep.subr.mxu0 0.0
    %2286 = vmatpush1.msra.mxu0 0.0
    %2287 = vmatprep.subr.mxu0 0.0
    %2288 = vmatpush1.msra.mxu0 0.0
    %2289 = vmatprep.subr.mxu0 0.0
    %2290 = vmatpush1.msra.mxu0 0.0
    %2291 = vmatprep.subr.mxu0 0.0
    %2292 = vmatpush1.msra.mxu0 0.0
    %2293 = vmatprep.subr.mxu0 0.0
    %2294 = vmatpush1.msra.mxu0 0.0
    %2295 = vmatprep.subr.mxu0 0.0
    %2296 = vmatpush1.msra.mxu0 0.0
    %2297 = vmatprep.subr.mxu0 0.0
    %2298 = vmatpush1.msra.mxu0 0.0
    %2299 = vmatprep.subr.mxu0 0.0
    %2300 = vmatpush1.msra.mxu0 0.0
    %2301 = vmatprep.subr.mxu0 0.0
    %2302 = vmatpush1.msra.mxu0 0.0
    %2303 = vmatprep.subr.mxu0 0.0
    %2304 = vmatpush1.msra.mxu0 0.0
    %2305 = vmatprep.mubr.f32.mxu0 0.0
    %2306 = vmatmul.mubr.f32.gmra.mrb[0].mxu0 %v1104
    %v2307 = vpop.f32.mrb[0].mxu0
    %v2308 = vadd.f32 %v2238, %v2307
    %v2309 = vpop.f32.mrb[0].mxu0
    %2310 = vdwg.mxu0
    %2311 = vmatprep.subr.mxu0 0.0
    %2312 = vmatpush1.msra.mxu0 %v282
    %2313 = vmatprep.subr.mxu0 0.0
    %2314 = vmatpush1.msra.mxu0 0.0
    %2315 = vmatprep.subr.mxu0 0.0
    %2316 = vmatpush1.msra.mxu0 0.0
    %2317 = vmatprep.subr.mxu0 0.0
    %2318 = vmatpush1.msra.mxu0 0.0
    %2319 = vmatprep.subr.mxu0 0.0
    %2320 = vmatpush1.msra.mxu0 0.0
    %2321 = vmatprep.subr.mxu0 0.0
    %2322 = vmatpush1.msra.mxu0 0.0
    %2323 = vmatprep.subr.mxu0 0.0
    %2324 = vmatpush1.msra.mxu0 0.0
    %2325 = vmatprep.subr.mxu0 0.0
    %2326 = vmatpush1.msra.mxu0 0.0
    %2327 = vmatprep.subr.mxu0 0.0
    %2328 = vmatpush1.msra.mxu0 0.0
    %2329 = vmatprep.subr.mxu0 0.0
    %2330 = vmatpush1.msra.mxu0 0.0
    %2331 = vmatprep.subr.mxu0 0.0
    %2332 = vmatpush1.msra.mxu0 0.0
    %2333 = vmatprep.subr.mxu0 0.0
    %2334 = vmatpush1.msra.mxu0 0.0
    %2335 = vmatprep.subr.mxu0 0.0
    %2336 = vmatpush1.msra.mxu0 0.0
    %2337 = vmatprep.subr.mxu0 0.0
    %2338 = vmatpush1.msra.mxu0 0.0
    %2339 = vmatprep.subr.mxu0 0.0
    %2340 = vmatpush1.msra.mxu0 0.0
    %2341 = vmatprep.subr.mxu0 0.0
    %2342 = vmatpush1.msra.mxu0 0.0
    %2343 = vmatprep.subr.mxu0 0.0
    %2344 = vmatpush1.msra.mxu0 0.0
    %2345 = vmatprep.subr.mxu0 0.0
    %2346 = vmatpush1.msra.mxu0 0.0
    %2347 = vmatprep.subr.mxu0 0.0
    %2348 = vmatpush1.msra.mxu0 0.0
    %2349 = vmatprep.subr.mxu0 0.0
    %2350 = vmatpush1.msra.mxu0 0.0
    %2351 = vmatprep.subr.mxu0 0.0
    %2352 = vmatpush1.msra.mxu0 0.0
    %2353 = vmatprep.subr.mxu0 0.0
    %2354 = vmatpush1.msra.mxu0 0.0
    %2355 = vmatprep.subr.mxu0 0.0
    %2356 = vmatpush1.msra.mxu0 0.0
    %2357 = vmatprep.subr.mxu0 0.0
    %2358 = vmatpush1.msra.mxu0 0.0
    %2359 = vmatprep.subr.mxu0 0.0
    %2360 = vmatpush1.msra.mxu0 0.0
    %2361 = vmatprep.subr.mxu0 0.0
    %2362 = vmatpush1.msra.mxu0 0.0
    %2363 = vmatprep.subr.mxu0 0.0
    %2364 = vmatpush1.msra.mxu0 0.0
    %2365 = vmatprep.subr.mxu0 0.0
    %2366 = vmatpush1.msra.mxu0 0.0
    %2367 = vmatprep.subr.mxu0 0.0
    %2368 = vmatpush1.msra.mxu0 0.0
    %2369 = vmatprep.subr.mxu0 0.0
    %2370 = vmatpush1.msra.mxu0 0.0
    %2371 = vmatprep.subr.mxu0 0.0
    %2372 = vmatpush1.msra.mxu0 0.0
    %2373 = vmatprep.subr.mxu0 0.0
    %2374 = vmatpush1.msra.mxu0 0.0
    %2375 = vmatprep.mubr.f32.mxu0 0.0
    %2376 = vmatmul.mubr.f32.gmra.mrb[0].mxu0 %v1178
    %v2377 = vpop.f32.mrb[0].mxu0
    %v2378 = vadd.f32 0.0, %v2377
    %v2379 = vpop.f32.mrb[0].mxu0
    %2380 = vdwg.mxu0
    %2381 = vmatprep.subr.mxu0 0.0
    %2382 = vmatpush1.msra.mxu0 %v281
    %2383 = vmatprep.subr.mxu0 0.0
    %2384 = vmatpush1.msra.mxu0 0.0
    %2385 = vmatprep.subr.mxu0 0.0
    %2386 = vmatpush1.msra.mxu0 0.0
    %2387 = vmatprep.subr.mxu0 0.0
    %2388 = vmatpush1.msra.mxu0 0.0
    %2389 = vmatprep.subr.mxu0 0.0
    %2390 = vmatpush1.msra.mxu0 0.0
    %2391 = vmatprep.subr.mxu0 0.0
    %2392 = vmatpush1.msra.mxu0 0.0
    %2393 = vmatprep.subr.mxu0 0.0
    %2394 = vmatpush1.msra.mxu0 0.0
    %2395 = vmatprep.subr.mxu0 0.0
    %2396 = vmatpush1.msra.mxu0 0.0
    %2397 = vmatprep.subr.mxu0 0.0
    %2398 = vmatpush1.msra.mxu0 0.0
    %2399 = vmatprep.subr.mxu0 0.0
    %2400 = vmatpush1.msra.mxu0 0.0
    %2401 = vmatprep.subr.mxu0 0.0
    %2402 = vmatpush1.msra.mxu0 0.0
    %2403 = vmatprep.subr.mxu0 0.0
    %2404 = vmatpush1.msra.mxu0 0.0
    %2405 = vmatprep.subr.mxu0 0.0
    %2406 = vmatpush1.msra.mxu0 0.0
    %2407 = vmatprep.subr.mxu0 0.0
    %2408 = vmatpush1.msra.mxu0 0.0
    %2409 = vmatprep.subr.mxu0 0.0
    %2410 = vmatpush1.msra.mxu0 0.0
    %2411 = vmatprep.subr.mxu0 0.0
    %2412 = vmatpush1.msra.mxu0 0.0
    %2413 = vmatprep.subr.mxu0 0.0
    %2414 = vmatpush1.msra.mxu0 0.0
    %2415 = vmatprep.subr.mxu0 0.0
    %2416 = vmatpush1.msra.mxu0 0.0
    %2417 = vmatprep.subr.mxu0 0.0
    %2418 = vmatpush1.msra.mxu0 0.0
    %2419 = vmatprep.subr.mxu0 0.0
    %2420 = vmatpush1.msra.mxu0 0.0
    %2421 = vmatprep.subr.mxu0 0.0
    %2422 = vmatpush1.msra.mxu0 0.0
    %2423 = vmatprep.subr.mxu0 0.0
    %2424 = vmatpush1.msra.mxu0 0.0
    %2425 = vmatprep.subr.mxu0 0.0
    %2426 = vmatpush1.msra.mxu0 0.0
    %2427 = vmatprep.subr.mxu0 0.0
    %2428 = vmatpush1.msra.mxu0 0.0
    %2429 = vmatprep.subr.mxu0 0.0
    %2430 = vmatpush1.msra.mxu0 0.0
    %2431 = vmatprep.subr.mxu0 0.0
    %2432 = vmatpush1.msra.mxu0 0.0
    %2433 = vmatprep.subr.mxu0 0.0
    %2434 = vmatpush1.msra.mxu0 0.0
    %2435 = vmatprep.subr.mxu0 0.0
    %2436 = vmatpush1.msra.mxu0 0.0
    %2437 = vmatprep.subr.mxu0 0.0
    %2438 = vmatpush1.msra.mxu0 0.0
    %2439 = vmatprep.subr.mxu0 0.0
    %2440 = vmatpush1.msra.mxu0 0.0
    %2441 = vmatprep.subr.mxu0 0.0
    %2442 = vmatpush1.msra.mxu0 0.0
    %2443 = vmatprep.subr.mxu0 0.0
    %2444 = vmatpush1.msra.mxu0 0.0
    %2445 = vmatprep.mubr.f32.mxu0 0.0
    %2446 = vmatmul.mubr.f32.gmra.mrb[0].mxu0 %v1251
    %v2447 = vpop.f32.mrb[0].mxu0
    %v2448 = vadd.f32 %v2378, %v2447
    %v2449 = vpop.f32.mrb[0].mxu0
    %2450 = vdwg.mxu0
    %2451 = vmatprep.subr.mxu0 0.0
    %2452 = vmatpush1.msra.mxu0 %v282
    %2453 = vmatprep.subr.mxu0 0.0
    %2454 = vmatpush1.msra.mxu0 0.0
    %2455 = vmatprep.subr.mxu0 0.0
    %2456 = vmatpush1.msra.mxu0 0.0
    %2457 = vmatprep.subr.mxu0 0.0
    %2458 = vmatpush1.msra.mxu0 0.0
    %2459 = vmatprep.subr.mxu0 0.0
    %2460 = vmatpush1.msra.mxu0 0.0
    %2461 = vmatprep.subr.mxu0 0.0
    %2462 = vmatpush1.msra.mxu0 0.0
    %2463 = vmatprep.subr.mxu0 0.0
    %2464 = vmatpush1.msra.mxu0 0.0
    %2465 = vmatprep.subr.mxu0 0.0
    %2466 = vmatpush1.msra.mxu0 0.0
    %2467 = vmatprep.subr.mxu0 0.0
    %2468 = vmatpush1.msra.mxu0 0.0
    %2469 = vmatprep.subr.mxu0 0.0
    %2470 = vmatpush1.msra.mxu0 0.0
    %2471 = vmatprep.subr.mxu0 0.0
    %2472 = vmatpush1.msra.mxu0 0.0
    %2473 = vmatprep.subr.mxu0 0.0
    %2474 = vmatpush1.msra.mxu0 0.0
    %2475 = vmatprep.subr.mxu0 0.0
    %2476 = vmatpush1.msra.mxu0 0.0
    %2477 = vmatprep.subr.mxu0 0.0
    %2478 = vmatpush1.msra.mxu0 0.0
    %2479 = vmatprep.subr.mxu0 0.0
    %2480 = vmatpush1.msra.mxu0 0.0
    %2481 = vmatprep.subr.mxu0 0.0
    %2482 = vmatpush1.msra.mxu0 0.0
    %2483 = vmatprep.subr.mxu0 0.0
    %2484 = vmatpush1.msra.mxu0 0.0
    %2485 = vmatprep.subr.mxu0 0.0
    %2486 = vmatpush1.msra.mxu0 0.0
    %2487 = vmatprep.subr.mxu0 0.0
    %2488 = vmatpush1.msra.mxu0 0.0
    %2489 = vmatprep.subr.mxu0 0.0
    %2490 = vmatpush1.msra.mxu0 0.0
    %2491 = vmatprep.subr.mxu0 0.0
    %2492 = vmatpush1.msra.mxu0 0.0
    %2493 = vmatprep.subr.mxu0 0.0
    %2494 = vmatpush1.msra.mxu0 0.0
    %2495 = vmatprep.subr.mxu0 0.0
    %2496 = vmatpush1.msra.mxu0 0.0
    %2497 = vmatprep.subr.mxu0 0.0
    %2498 = vmatpush1.msra.mxu0 0.0
    %2499 = vmatprep.subr.mxu0 0.0
    %2500 = vmatpush1.msra.mxu0 0.0
    %2501 = vmatprep.subr.mxu0 0.0
    %2502 = vmatpush1.msra.mxu0 0.0
    %2503 = vmatprep.subr.mxu0 0.0
    %2504 = vmatpush1.msra.mxu0 0.0
    %2505 = vmatprep.subr.mxu0 0.0
    %2506 = vmatpush1.msra.mxu0 0.0
    %2507 = vmatprep.subr.mxu0 0.0
    %2508 = vmatpush1.msra.mxu0 0.0
    %2509 = vmatprep.subr.mxu0 0.0
    %2510 = vmatpush1.msra.mxu0 0.0
    %2511 = vmatprep.subr.mxu0 0.0
    %2512 = vmatpush1.msra.mxu0 0.0
    %2513 = vmatprep.subr.mxu0 0.0
    %2514 = vmatpush1.msra.mxu0 0.0
    %2515 = vmatprep.mubr.f32.mxu0 0.0
    %2516 = vmatmul.mubr.f32.gmra.mrb[0].mxu0 %v1325
    %v2517 = vpop.f32.mrb[0].mxu0
    %v2518 = vadd.f32 0.0, %v2517
    %v2519 = vpop.f32.mrb[0].mxu0
    %2520 = vdwg.mxu0
    %2521 = vmatprep.subr.mxu0 0.0
    %2522 = vmatpush1.msra.mxu0 %v281
    %2523 = vmatprep.subr.mxu0 0.0
    %2524 = vmatpush1.msra.mxu0 0.0
    %2525 = vmatprep.subr.mxu0 0.0
    %2526 = vmatpush1.msra.mxu0 0.0
    %2527 = vmatprep.subr.mxu0 0.0
    %2528 = vmatpush1.msra.mxu0 0.0
    %2529 = vmatprep.subr.mxu0 0.0
    %2530 = vmatpush1.msra.mxu0 0.0
    %2531 = vmatprep.subr.mxu0 0.0
    %2532 = vmatpush1.msra.mxu0 0.0
    %2533 = vmatprep.subr.mxu0 0.0
    %2534 = vmatpush1.msra.mxu0 0.0
    %2535 = vmatprep.subr.mxu0 0.0
    %2536 = vmatpush1.msra.mxu0 0.0
    %2537 = vmatprep.subr.mxu0 0.0
    %2538 = vmatpush1.msra.mxu0 0.0
    %2539 = vmatprep.subr.mxu0 0.0
    %2540 = vmatpush1.msra.mxu0 0.0
    %2541 = vmatprep.subr.mxu0 0.0
    %2542 = vmatpush1.msra.mxu0 0.0
    %2543 = vmatprep.subr.mxu0 0.0
    %2544 = vmatpush1.msra.mxu0 0.0
    %2545 = vmatprep.subr.mxu0 0.0
    %2546 = vmatpush1.msra.mxu0 0.0
    %2547 = vmatprep.subr.mxu0 0.0
    %2548 = vmatpush1.msra.mxu0 0.0
    %2549 = vmatprep.subr.mxu0 0.0
    %2550 = vmatpush1.msra.mxu0 0.0
    %2551 = vmatprep.subr.mxu0 0.0
    %2552 = vmatpush1.msra.mxu0 0.0
    %2553 = vmatprep.subr.mxu0 0.0
    %2554 = vmatpush1.msra.mxu0 0.0
    %2555 = vmatprep.subr.mxu0 0.0
    %2556 = vmatpush1.msra.mxu0 0.0
    %2557 = vmatprep.subr.mxu0 0.0
    %2558 = vmatpush1.msra.mxu0 0.0
    %2559 = vmatprep.subr.mxu0 0.0
    %2560 = vmatpush1.msra.mxu0 0.0
    %2561 = vmatprep.subr.mxu0 0.0
    %2562 = vmatpush1.msra.mxu0 0.0
    %2563 = vmatprep.subr.mxu0 0.0
    %2564 = vmatpush1.msra.mxu0 0.0
    %2565 = vmatprep.subr.mxu0 0.0
    %2566 = vmatpush1.msra.mxu0 0.0
    %2567 = vmatprep.subr.mxu0 0.0
    %2568 = vmatpush1.msra.mxu0 0.0
    %2569 = vmatprep.subr.mxu0 0.0
    %2570 = vmatpush1.msra.mxu0 0.0
    %2571 = vmatprep.subr.mxu0 0.0
    %2572 = vmatpush1.msra.mxu0 0.0
    %2573 = vmatprep.subr.mxu0 0.0
    %2574 = vmatpush1.msra.mxu0 0.0
    %2575 = vmatprep.subr.mxu0 0.0
    %2576 = vmatpush1.msra.mxu0 0.0
    %2577 = vmatprep.subr.mxu0 0.0
    %2578 = vmatpush1.msra.mxu0 0.0
    %2579 = vmatprep.subr.mxu0 0.0
    %2580 = vmatpush1.msra.mxu0 0.0
    %2581 = vmatprep.subr.mxu0 0.0
    %2582 = vmatpush1.msra.mxu0 0.0
    %2583 = vmatprep.subr.mxu0 0.0
    %2584 = vmatpush1.msra.mxu0 0.0
    %2585 = vmatprep.mubr.f32.mxu0 0.0
    %2586 = vmatmul.mubr.f32.gmra.mrb[0].mxu0 %v1398
    %v2587 = vpop.f32.mrb[0].mxu0
    %v2588 = vadd.f32 %v2518, %v2587
    %v2589 = vpop.f32.mrb[0].mxu0
    %2590 = vdwg.mxu0
    %v2591 = vadd.f32 %v441, %v2588
    %vm2592 = vcmask 261120
    %v2594 = vsel %vm2592, 0.0, 0
    %2596 = vmatprep.subr.mxu0 0.0
    %2597 = vmatpush1.msra.mxu0 %v284
    %2598 = vmatprep.subr.mxu0 0.0
    %2599 = vmatpush1.msra.mxu0 %v285
    %2600 = vmatprep.subr.mxu0 0.0
    %2601 = vmatpush1.msra.mxu0 %v286
    %2602 = vmatprep.subr.mxu0 0.0
    %2603 = vmatpush1.msra.mxu0 %v287
    %2604 = vmatprep.subr.mxu0 0.0
    %2605 = vmatpush1.msra.mxu0 0.0
    %2606 = vmatprep.subr.mxu0 0.0
    %2607 = vmatpush1.msra.mxu0 0.0
    %2608 = vmatprep.subr.mxu0 0.0
    %2609 = vmatpush1.msra.mxu0 0.0
    %2610 = vmatprep.subr.mxu0 0.0
    %2611 = vmatpush1.msra.mxu0 0.0
    %2612 = vmatprep.subr.mxu0 0.0
    %2613 = vmatpush1.msra.mxu0 0.0
    %2614 = vmatprep.subr.mxu0 0.0
    %2615 = vmatpush1.msra.mxu0 0.0
    %2616 = vmatprep.subr.mxu0 0.0
    %2617 = vmatpush1.msra.mxu0 0.0
    %2618 = vmatprep.subr.mxu0 0.0
    %2619 = vmatpush1.msra.mxu0 0.0
    %2620 = vmatprep.subr.mxu0 0.0
    %2621 = vmatpush1.msra.mxu0 0.0
    %2622 = vmatprep.subr.mxu0 0.0
    %2623 = vmatpush1.msra.mxu0 0.0
    %2624 = vmatprep.subr.mxu0 0.0
    %2625 = vmatpush1.msra.mxu0 0.0
    %2626 = vmatprep.subr.mxu0 0.0
    %2627 = vmatpush1.msra.mxu0 0.0
    %2628 = vmatprep.subr.mxu0 0.0
    %2629 = vmatpush1.msra.mxu0 0.0
    %2630 = vmatprep.subr.mxu0 0.0
    %2631 = vmatpush1.msra.mxu0 0.0
    %2632 = vmatprep.subr.mxu0 0.0
    %2633 = vmatpush1.msra.mxu0 0.0
    %2634 = vmatprep.subr.mxu0 0.0
    %2635 = vmatpush1.msra.mxu0 0.0
    %2636 = vmatprep.subr.mxu0 0.0
    %2637 = vmatpush1.msra.mxu0 0.0
    %2638 = vmatprep.subr.mxu0 0.0
    %2639 = vmatpush1.msra.mxu0 0.0
    %2640 = vmatprep.subr.mxu0 0.0
    %2641 = vmatpush1.msra.mxu0 0.0
    %2642 = vmatprep.subr.mxu0 0.0
    %2643 = vmatpush1.msra.mxu0 0.0
    %2644 = vmatprep.subr.mxu0 0.0
    %2645 = vmatpush1.msra.mxu0 0.0
    %2646 = vmatprep.subr.mxu0 0.0
    %2647 = vmatpush1.msra.mxu0 0.0
    %2648 = vmatprep.subr.mxu0 0.0
    %2649 = vmatpush1.msra.mxu0 0.0
    %2650 = vmatprep.subr.mxu0 0.0
    %2651 = vmatpush1.msra.mxu0 0.0
    %2652 = vmatprep.subr.mxu0 0.0
    %2653 = vmatpush1.msra.mxu0 0.0
    %2654 = vmatprep.subr.mxu0 0.0
    %2655 = vmatpush1.msra.mxu0 0.0
    %2656 = vmatprep.subr.mxu0 0.0
    %2657 = vmatpush1.msra.mxu0 0.0
    %2658 = vmatprep.subr.mxu0 0.0
    %2659 = vmatpush1.msra.mxu0 0.0
    %2660 = vmatprep.mubr.f32.mxu0 0.0
    %2661 = vmatmul.mubr.f32.gmra.mrb[0].mxu0 %v2594
    %v2662 = vpop.f32.mrb[0].mxu0
    %v2663 = vadd.f32 0.0, %v2662
    %v2664 = vpop.f32.mrb[0].mxu0
    %2665 = vdwg.mxu0
    %v2666 = vadd.f32 %v2591, %v2663
    %v2667 = vxor.u32 %v2666, 2147483648
    %v2668 = vmul.f32 %v2667, 1.442695
    %v2669 = vpow.pop %v2668
    %v2670 = vadd.f32 %v2669, 1.0
    %v2671 = vrcp.pop %v2670
    %v2672 = vmul.f32 1.0, %v2671
    %v2673 = vtanh.pop %v2666
    %v2674 = vmul.f32 %v2672, 0.0
    %2676 = vrot.lane.b32.xlu0 %v2673, 64
    %v2677 = vpop.permute.xlu0 %2676
    %v2679 = vmul.f32 %v2672, %v2677
    %2681 = vrot.lane.b32.xlu0 %v2679, 32
    %v2682 = vpop.permute.xlu0 %2681
    %v2684 = vadd.f32 %v2674, %v2682
    %v2685 = vtanh.pop %v2684
    %2687 = vrot.lane.b32.xlu0 %v2685, 64
    %v2688 = vpop.permute.xlu0 %2687
    %v2690 = vmul.f32 %v2672, %v2688
    %v2691 = vadd.f32 %v588, %v2448
    %2693 = vrot.lane.b32.xlu0 %v2690, 32
    %v2694 = vpop.permute.xlu0 %2693
    %v2695 = vsel %vm2592, %v2694, 0
    %2697 = vmatprep.subr.mxu0 0.0
    %2698 = vmatpush1.msra.mxu0 %v284
    %2699 = vmatprep.subr.mxu0 0.0
    %2700 = vmatpush1.msra.mxu0 %v285
    %2701 = vmatprep.subr.mxu0 0.0
    %2702 = vmatpush1.msra.mxu0 %v286
    %2703 = vmatprep.subr.mxu0 0.0
    %2704 = vmatpush1.msra.mxu0 %v287
    %2705 = vmatprep.subr.mxu0 0.0
    %2706 = vmatpush1.msra.mxu0 0.0
    %2707 = vmatprep.subr.mxu0 0.0
    %2708 = vmatpush1.msra.mxu0 0.0
    %2709 = vmatprep.subr.mxu0 0.0
    %2710 = vmatpush1.msra.mxu0 0.0
    %2711 = vmatprep.subr.mxu0 0.0
    %2712 = vmatpush1.msra.mxu0 0.0
    %2713 = vmatprep.subr.mxu0 0.0
    %2714 = vmatpush1.msra.mxu0 0.0
    %2715 = vmatprep.subr.mxu0 0.0
    %2716 = vmatpush1.msra.mxu0 0.0
    %2717 = vmatprep.subr.mxu0 0.0
    %2718 = vmatpush1.msra.mxu0 0.0
    %2719 = vmatprep.subr.mxu0 0.0
    %2720 = vmatpush1.msra.mxu0 0.0
    %2721 = vmatprep.subr.mxu0 0.0
    %2722 = vmatpush1.msra.mxu0 0.0
    %2723 = vmatprep.subr.mxu0 0.0
    %2724 = vmatpush1.msra.mxu0 0.0
    %2725 = vmatprep.subr.mxu0 0.0
    %2726 = vmatpush1.msra.mxu0 0.0
    %2727 = vmatprep.subr.mxu0 0.0
    %2728 = vmatpush1.msra.mxu0 0.0
    %2729 = vmatprep.subr.mxu0 0.0
    %2730 = vmatpush1.msra.mxu0 0.0
    %2731 = vmatprep.subr.mxu0 0.0
    %2732 = vmatpush1.msra.mxu0 0.0
    %2733 = vmatprep.subr.mxu0 0.0
    %2734 = vmatpush1.msra.mxu0 0.0
    %2735 = vmatprep.subr.mxu0 0.0
    %2736 = vmatpush1.msra.mxu0 0.0
    %2737 = vmatprep.subr.mxu0 0.0
    %2738 = vmatpush1.msra.mxu0 0.0
    %2739 = vmatprep.subr.mxu0 0.0
    %2740 = vmatpush1.msra.mxu0 0.0
    %2741 = vmatprep.subr.mxu0 0.0
    %2742 = vmatpush1.msra.mxu0 0.0
    %2743 = vmatprep.subr.mxu0 0.0
    %2744 = vmatpush1.msra.mxu0 0.0
    %2745 = vmatprep.subr.mxu0 0.0
    %2746 = vmatpush1.msra.mxu0 0.0
    %2747 = vmatprep.subr.mxu0 0.0
    %2748 = vmatpush1.msra.mxu0 0.0
    %2749 = vmatprep.subr.mxu0 0.0
    %2750 = vmatpush1.msra.mxu0 0.0
    %2751 = vmatprep.subr.mxu0 0.0
    %2752 = vmatpush1.msra.mxu0 0.0
    %2753 = vmatprep.subr.mxu0 0.0
    %2754 = vmatpush1.msra.mxu0 0.0
    %2755 = vmatprep.subr.mxu0 0.0
    %2756 = vmatpush1.msra.mxu0 0.0
    %2757 = vmatprep.subr.mxu0 0.0
    %2758 = vmatpush1.msra.mxu0 0.0
    %2759 = vmatprep.subr.mxu0 0.0
    %2760 = vmatpush1.msra.mxu0 0.0
    %2761 = vmatprep.mubr.f32.mxu0 0.0
    %2762 = vmatmul.mubr.f32.gmra.mrb[0].mxu0 %v2695
    %v2763 = vpop.f32.mrb[0].mxu0
    %v2764 = vadd.f32 0.0, %v2763
    %v2765 = vpop.f32.mrb[0].mxu0
    %2766 = vdwg.mxu0
    %v2767 = vadd.f32 %v2691, %v2764
    %v2768 = vxor.u32 %v2767, 2147483648
    %v2769 = vmul.f32 %v2768, 1.442695
    %v2770 = vpow.pop %v2769
    %v2771 = vadd.f32 %v2770, 1.0
    %v2772 = vrcp.pop %v2771
    %v2773 = vmul.f32 1.0, %v2772
    %v2774 = vtanh.pop %v2767
    %v2775 = vmul.f32 %v2773, %v2684
    %2777 = vrot.lane.b32.xlu0 %v2774, 64
    %v2778 = vpop.permute.xlu0 %2777
    %v2780 = vmul.f32 %v2773, %v2778
    %2782 = vrot.lane.b32.xlu0 %v2780, 32
    %v2783 = vpop.permute.xlu0 %2782
    %v2785 = vadd.f32 %v2775, %v2783
    %v2786 = vtanh.pop %v2785
    %2788 = vrot.lane.b32.xlu0 %v2786, 64
    %v2789 = vpop.permute.xlu0 %2788
    %v2791 = vmul.f32 %v2773, %v2789
    %v2792 = vadd.f32 %v735, %v2308
    %2794 = vrot.lane.b32.xlu0 %v2791, 32
    %v2795 = vpop.permute.xlu0 %2794
    %v2796 = vsel %vm2592, %v2795, 0
    %2798 = vmatprep.subr.mxu0 0.0
    %2799 = vmatpush1.msra.mxu0 %v284
    %2800 = vmatprep.subr.mxu0 0.0
    %2801 = vmatpush1.msra.mxu0 %v285
    %2802 = vmatprep.subr.mxu0 0.0
    %2803 = vmatpush1.msra.mxu0 %v286
    %2804 = vmatprep.subr.mxu0 0.0
    %2805 = vmatpush1.msra.mxu0 %v287
    %2806 = vmatprep.subr.mxu0 0.0
    %2807 = vmatpush1.msra.mxu0 0.0
    %2808 = vmatprep.subr.mxu0 0.0
    %2809 = vmatpush1.msra.mxu0 0.0
    %2810 = vmatprep.subr.mxu0 0.0
    %2811 = vmatpush1.msra.mxu0 0.0
    %2812 = vmatprep.subr.mxu0 0.0
    %2813 = vmatpush1.msra.mxu0 0.0
    %2814 = vmatprep.subr.mxu0 0.0
    %2815 = vmatpush1.msra.mxu0 0.0
    %2816 = vmatprep.subr.mxu0 0.0
    %2817 = vmatpush1.msra.mxu0 0.0
    %2818 = vmatprep.subr.mxu0 0.0
    %2819 = vmatpush1.msra.mxu0 0.0
    %2820 = vmatprep.subr.mxu0 0.0
    %2821 = vmatpush1.msra.mxu0 0.0
    %2822 = vmatprep.subr.mxu0 0.0
    %2823 = vmatpush1.msra.mxu0 0.0
    %2824 = vmatprep.subr.mxu0 0.0
    %2825 = vmatpush1.msra.mxu0 0.0
    %2826 = vmatprep.subr.mxu0 0.0
    %2827 = vmatpush1.msra.mxu0 0.0
    %2828 = vmatprep.subr.mxu0 0.0
    %2829 = vmatpush1.msra.mxu0 0.0
    %2830 = vmatprep.subr.mxu0 0.0
    %2831 = vmatpush1.msra.mxu0 0.0
    %2832 = vmatprep.subr.mxu0 0.0
    %2833 = vmatpush1.msra.mxu0 0.0
    %2834 = vmatprep.subr.mxu0 0.0
    %2835 = vmatpush1.msra.mxu0 0.0
    %2836 = vmatprep.subr.mxu0 0.0
    %2837 = vmatpush1.msra.mxu0 0.0
    %2838 = vmatprep.subr.mxu0 0.0
    %2839 = vmatpush1.msra.mxu0 0.0
    %2840 = vmatprep.subr.mxu0 0.0
    %2841 = vmatpush1.msra.mxu0 0.0
    %2842 = vmatprep.subr.mxu0 0.0
    %2843 = vmatpush1.msra.mxu0 0.0
    %2844 = vmatprep.subr.mxu0 0.0
    %2845 = vmatpush1.msra.mxu0 0.0
    %2846 = vmatprep.subr.mxu0 0.0
    %2847 = vmatpush1.msra.mxu0 0.0
    %2848 = vmatprep.subr.mxu0 0.0
    %2849 = vmatpush1.msra.mxu0 0.0
    %2850 = vmatprep.subr.mxu0 0.0
    %2851 = vmatpush1.msra.mxu0 0.0
    %2852 = vmatprep.subr.mxu0 0.0
    %2853 = vmatpush1.msra.mxu0 0.0
    %2854 = vmatprep.subr.mxu0 0.0
    %2855 = vmatpush1.msra.mxu0 0.0
    %2856 = vmatprep.subr.mxu0 0.0
    %2857 = vmatpush1.msra.mxu0 0.0
    %2858 = vmatprep.subr.mxu0 0.0
    %2859 = vmatpush1.msra.mxu0 0.0
    %2860 = vmatprep.subr.mxu0 0.0
    %2861 = vmatpush1.msra.mxu0 0.0
    %2862 = vmatprep.mubr.f32.mxu0 0.0
    %2863 = vmatmul.mubr.f32.gmra.mrb[0].mxu0 %v2796
    %v2864 = vpop.f32.mrb[0].mxu0
    %v2865 = vadd.f32 0.0, %v2864
    %v2866 = vpop.f32.mrb[0].mxu0
    %2867 = vdwg.mxu0
    %v2868 = vadd.f32 %v2792, %v2865
    %v2869 = vxor.u32 %v2868, 2147483648
    %v2870 = vmul.f32 %v2869, 1.442695
    %v2871 = vpow.pop %v2870
    %v2872 = vadd.f32 %v2871, 1.0
    %v2873 = vrcp.pop %v2872
    %v2874 = vmul.f32 1.0, %v2873
    %v2875 = vtanh.pop %v2868
    %v2876 = vmul.f32 %v2874, %v2785
    %2878 = vrot.lane.b32.xlu0 %v2875, 64
    %v2879 = vpop.permute.xlu0 %2878
    %v2881 = vmul.f32 %v2874, %v2879
    %2883 = vrot.lane.b32.xlu0 %v2881, 32
    %v2884 = vpop.permute.xlu0 %2883
    %v2886 = vadd.f32 %v2876, %v2884
    %v2887 = vtanh.pop %v2886
    %2889 = vrot.lane.b32.xlu0 %v2887, 64
    %v2890 = vpop.permute.xlu0 %2889
    %v2892 = vmul.f32 %v2874, %v2890
    %v2893 = vadd.f32 %v882, %v2168
    %2895 = vrot.lane.b32.xlu0 %v2892, 32
    %v2896 = vpop.permute.xlu0 %2895
    %v2897 = vsel %vm2592, %v2896, 0
    %2899 = vmatprep.subr.mxu0 0.0
    %2900 = vmatpush1.msra.mxu0 %v284
    %2901 = vmatprep.subr.mxu0 0.0
    %2902 = vmatpush1.msra.mxu0 %v285
    %2903 = vmatprep.subr.mxu0 0.0
    %2904 = vmatpush1.msra.mxu0 %v286
    %2905 = vmatprep.subr.mxu0 0.0
    %2906 = vmatpush1.msra.mxu0 %v287
    %2907 = vmatprep.subr.mxu0 0.0
    %2908 = vmatpush1.msra.mxu0 0.0
    %2909 = vmatprep.subr.mxu0 0.0
    %2910 = vmatpush1.msra.mxu0 0.0
    %2911 = vmatprep.subr.mxu0 0.0
    %2912 = vmatpush1.msra.mxu0 0.0
    %2913 = vmatprep.subr.mxu0 0.0
    %2914 = vmatpush1.msra.mxu0 0.0
    %2915 = vmatprep.subr.mxu0 0.0
    %2916 = vmatpush1.msra.mxu0 0.0
    %2917 = vmatprep.subr.mxu0 0.0
    %2918 = vmatpush1.msra.mxu0 0.0
    %2919 = vmatprep.subr.mxu0 0.0
    %2920 = vmatpush1.msra.mxu0 0.0
    %2921 = vmatprep.subr.mxu0 0.0
    %2922 = vmatpush1.msra.mxu0 0.0
    %2923 = vmatprep.subr.mxu0 0.0
    %2924 = vmatpush1.msra.mxu0 0.0
    %2925 = vmatprep.subr.mxu0 0.0
    %2926 = vmatpush1.msra.mxu0 0.0
    %2927 = vmatprep.subr.mxu0 0.0
    %2928 = vmatpush1.msra.mxu0 0.0
    %2929 = vmatprep.subr.mxu0 0.0
    %2930 = vmatpush1.msra.mxu0 0.0
    %2931 = vmatprep.subr.mxu0 0.0
    %2932 = vmatpush1.msra.mxu0 0.0
    %2933 = vmatprep.subr.mxu0 0.0
    %2934 = vmatpush1.msra.mxu0 0.0
    %2935 = vmatprep.subr.mxu0 0.0
    %2936 = vmatpush1.msra.mxu0 0.0
    %2937 = vmatprep.subr.mxu0 0.0
    %2938 = vmatpush1.msra.mxu0 0.0
    %2939 = vmatprep.subr.mxu0 0.0
    %2940 = vmatpush1.msra.mxu0 0.0
    %2941 = vmatprep.subr.mxu0 0.0
    %2942 = vmatpush1.msra.mxu0 0.0
    %2943 = vmatprep.subr.mxu0 0.0
    %2944 = vmatpush1.msra.mxu0 0.0
    %2945 = vmatprep.subr.mxu0 0.0
    %2946 = vmatpush1.msra.mxu0 0.0
    %2947 = vmatprep.subr.mxu0 0.0
    %2948 = vmatpush1.msra.mxu0 0.0
    %2949 = vmatprep.subr.mxu0 0.0
    %2950 = vmatpush1.msra.mxu0 0.0
    %2951 = vmatprep.subr.mxu0 0.0
    %2952 = vmatpush1.msra.mxu0 0.0
    %2953 = vmatprep.subr.mxu0 0.0
    %2954 = vmatpush1.msra.mxu0 0.0
    %2955 = vmatprep.subr.mxu0 0.0
    %2956 = vmatpush1.msra.mxu0 0.0
    %2957 = vmatprep.subr.mxu0 0.0
    %2958 = vmatpush1.msra.mxu0 0.0
    %2959 = vmatprep.subr.mxu0 0.0
    %2960 = vmatpush1.msra.mxu0 0.0
    %2961 = vmatprep.subr.mxu0 0.0
    %2962 = vmatpush1.msra.mxu0 0.0
    %2963 = vmatprep.mubr.f32.mxu0 0.0
    %2964 = vmatmul.mubr.f32.gmra.mrb[0].mxu0 %v2897
    %v2965 = vpop.f32.mrb[0].mxu0
    %v2966 = vadd.f32 0.0, %v2965
    %v2967 = vpop.f32.mrb[0].mxu0
    %2968 = vdwg.mxu0
    %v2969 = vadd.f32 %v2893, %v2966
    %v2970 = vxor.u32 %v2969, 2147483648
    %v2971 = vmul.f32 %v2970, 1.442695
    %v2972 = vpow.pop %v2971
    %v2973 = vadd.f32 %v2972, 1.0
    %v2974 = vrcp.pop %v2973
    %v2975 = vmul.f32 1.0, %v2974
    %v2976 = vtanh.pop %v2969
    %v2977 = vmul.f32 %v2975, %v2886
    %2979 = vrot.lane.b32.xlu0 %v2976, 64
    %v2980 = vpop.permute.xlu0 %2979
    %v2982 = vmul.f32 %v2975, %v2980
    %2984 = vrot.lane.b32.xlu0 %v2982, 32
    %v2985 = vpop.permute.xlu0 %2984
    %v2987 = vadd.f32 %v2977, %v2985
    %v2988 = vtanh.pop %v2987
    %2990 = vrot.lane.b32.xlu0 %v2988, 64
    %v2991 = vpop.permute.xlu0 %2990
    %v2993 = vmul.f32 %v2975, %v2991
    %v2994 = vadd.f32 %v1029, %v2028
    %2996 = vrot.lane.b32.xlu0 %v2993, 32
    %v2997 = vpop.permute.xlu0 %2996
    %v2998 = vsel %vm2592, %v2997, 0
    %3000 = vmatprep.subr.mxu0 0.0
    %3001 = vmatpush1.msra.mxu0 %v284
    %3002 = vmatprep.subr.mxu0 0.0
    %3003 = vmatpush1.msra.mxu0 %v285
    %3004 = vmatprep.subr.mxu0 0.0
    %3005 = vmatpush1.msra.mxu0 %v286
    %3006 = vmatprep.subr.mxu0 0.0
    %3007 = vmatpush1.msra.mxu0 %v287
    %3008 = vmatprep.subr.mxu0 0.0
    %3009 = vmatpush1.msra.mxu0 0.0
    %3010 = vmatprep.subr.mxu0 0.0
    %3011 = vmatpush1.msra.mxu0 0.0
    %3012 = vmatprep.subr.mxu0 0.0
    %3013 = vmatpush1.msra.mxu0 0.0
    %3014 = vmatprep.subr.mxu0 0.0
    %3015 = vmatpush1.msra.mxu0 0.0
    %3016 = vmatprep.subr.mxu0 0.0
    %3017 = vmatpush1.msra.mxu0 0.0
    %3018 = vmatprep.subr.mxu0 0.0
    %3019 = vmatpush1.msra.mxu0 0.0
    %3020 = vmatprep.subr.mxu0 0.0
    %3021 = vmatpush1.msra.mxu0 0.0
    %3022 = vmatprep.subr.mxu0 0.0
    %3023 = vmatpush1.msra.mxu0 0.0
    %3024 = vmatprep.subr.mxu0 0.0
    %3025 = vmatpush1.msra.mxu0 0.0
    %3026 = vmatprep.subr.mxu0 0.0
    %3027 = vmatpush1.msra.mxu0 0.0
    %3028 = vmatprep.subr.mxu0 0.0
    %3029 = vmatpush1.msra.mxu0 0.0
    %3030 = vmatprep.subr.mxu0 0.0
    %3031 = vmatpush1.msra.mxu0 0.0
    %3032 = vmatprep.subr.mxu0 0.0
    %3033 = vmatpush1.msra.mxu0 0.0
    %3034 = vmatprep.subr.mxu0 0.0
    %3035 = vmatpush1.msra.mxu0 0.0
    %3036 = vmatprep.subr.mxu0 0.0
    %3037 = vmatpush1.msra.mxu0 0.0
    %3038 = vmatprep.subr.mxu0 0.0
    %3039 = vmatpush1.msra.mxu0 0.0
    %3040 = vmatprep.subr.mxu0 0.0
    %3041 = vmatpush1.msra.mxu0 0.0
    %3042 = vmatprep.subr.mxu0 0.0
    %3043 = vmatpush1.msra.mxu0 0.0
    %3044 = vmatprep.subr.mxu0 0.0
    %3045 = vmatpush1.msra.mxu0 0.0
    %3046 = vmatprep.subr.mxu0 0.0
    %3047 = vmatpush1.msra.mxu0 0.0
    %3048 = vmatprep.subr.mxu0 0.0
    %3049 = vmatpush1.msra.mxu0 0.0
    %3050 = vmatprep.subr.mxu0 0.0
    %3051 = vmatpush1.msra.mxu0 0.0
    %3052 = vmatprep.subr.mxu0 0.0
    %3053 = vmatpush1.msra.mxu0 0.0
    %3054 = vmatprep.subr.mxu0 0.0
    %3055 = vmatpush1.msra.mxu0 0.0
    %3056 = vmatprep.subr.mxu0 0.0
    %3057 = vmatpush1.msra.mxu0 0.0
    %3058 = vmatprep.subr.mxu0 0.0
    %3059 = vmatpush1.msra.mxu0 0.0
    %3060 = vmatprep.subr.mxu0 0.0
    %3061 = vmatpush1.msra.mxu0 0.0
    %3062 = vmatprep.subr.mxu0 0.0
    %3063 = vmatpush1.msra.mxu0 0.0
    %3064 = vmatprep.mubr.f32.mxu0 0.0
    %3065 = vmatmul.mubr.f32.gmra.mrb[0].mxu0 %v2998
    %v3066 = vpop.f32.mrb[0].mxu0
    %v3067 = vadd.f32 0.0, %v3066
    %v3068 = vpop.f32.mrb[0].mxu0
    %3069 = vdwg.mxu0
    %v3070 = vadd.f32 %v2994, %v3067
    %v3071 = vxor.u32 %v3070, 2147483648
    %v3072 = vmul.f32 %v3071, 1.442695
    %v3073 = vpow.pop %v3072
    %v3074 = vadd.f32 %v3073, 1.0
    %v3075 = vrcp.pop %v3074
    %v3076 = vmul.f32 1.0, %v3075
    %v3077 = vtanh.pop %v3070
    %v3078 = vmul.f32 %v3076, %v2987
    %3080 = vrot.lane.b32.xlu0 %v3077, 64
    %v3081 = vpop.permute.xlu0 %3080
    %v3083 = vmul.f32 %v3076, %v3081
    %3085 = vrot.lane.b32.xlu0 %v3083, 32
    %v3086 = vpop.permute.xlu0 %3085
    %v3088 = vadd.f32 %v3078, %v3086
    %v3089 = vtanh.pop %v3088
    %3091 = vrot.lane.b32.xlu0 %v3089, 64
    %v3092 = vpop.permute.xlu0 %3091
    %v3094 = vmul.f32 %v3076, %v3092
    %v3095 = vadd.f32 %v1176, %v1888
    %3097 = vrot.lane.b32.xlu0 %v3094, 32
    %v3098 = vpop.permute.xlu0 %3097
    %v3099 = vsel %vm2592, %v3098, 0
    %3101 = vmatprep.subr.mxu0 0.0
    %3102 = vmatpush1.msra.mxu0 %v284
    %3103 = vmatprep.subr.mxu0 0.0
    %3104 = vmatpush1.msra.mxu0 %v285
    %3105 = vmatprep.subr.mxu0 0.0
    %3106 = vmatpush1.msra.mxu0 %v286
    %3107 = vmatprep.subr.mxu0 0.0
    %3108 = vmatpush1.msra.mxu0 %v287
    %3109 = vmatprep.subr.mxu0 0.0
    %3110 = vmatpush1.msra.mxu0 0.0
    %3111 = vmatprep.subr.mxu0 0.0
    %3112 = vmatpush1.msra.mxu0 0.0
    %3113 = vmatprep.subr.mxu0 0.0
    %3114 = vmatpush1.msra.mxu0 0.0
    %3115 = vmatprep.subr.mxu0 0.0
    %3116 = vmatpush1.msra.mxu0 0.0
    %3117 = vmatprep.subr.mxu0 0.0
    %3118 = vmatpush1.msra.mxu0 0.0
    %3119 = vmatprep.subr.mxu0 0.0
    %3120 = vmatpush1.msra.mxu0 0.0
    %3121 = vmatprep.subr.mxu0 0.0
    %3122 = vmatpush1.msra.mxu0 0.0
    %3123 = vmatprep.subr.mxu0 0.0
    %3124 = vmatpush1.msra.mxu0 0.0
    %3125 = vmatprep.subr.mxu0 0.0
    %3126 = vmatpush1.msra.mxu0 0.0
    %3127 = vmatprep.subr.mxu0 0.0
    %3128 = vmatpush1.msra.mxu0 0.0
    %3129 = vmatprep.subr.mxu0 0.0
    %3130 = vmatpush1.msra.mxu0 0.0
    %3131 = vmatprep.subr.mxu0 0.0
    %3132 = vmatpush1.msra.mxu0 0.0
    %3133 = vmatprep.subr.mxu0 0.0
    %3134 = vmatpush1.msra.mxu0 0.0
    %3135 = vmatprep.subr.mxu0 0.0
    %3136 = vmatpush1.msra.mxu0 0.0
    %3137 = vmatprep.subr.mxu0 0.0
    %3138 = vmatpush1.msra.mxu0 0.0
    %3139 = vmatprep.subr.mxu0 0.0
    %3140 = vmatpush1.msra.mxu0 0.0
    %3141 = vmatprep.subr.mxu0 0.0
    %3142 = vmatpush1.msra.mxu0 0.0
    %3143 = vmatprep.subr.mxu0 0.0
    %3144 = vmatpush1.msra.mxu0 0.0
    %3145 = vmatprep.subr.mxu0 0.0
    %3146 = vmatpush1.msra.mxu0 0.0
    %3147 = vmatprep.subr.mxu0 0.0
    %3148 = vmatpush1.msra.mxu0 0.0
    %3149 = vmatprep.subr.mxu0 0.0
    %3150 = vmatpush1.msra.mxu0 0.0
    %3151 = vmatprep.subr.mxu0 0.0
    %3152 = vmatpush1.msra.mxu0 0.0
    %3153 = vmatprep.subr.mxu0 0.0
    %3154 = vmatpush1.msra.mxu0 0.0
    %3155 = vmatprep.subr.mxu0 0.0
    %3156 = vmatpush1.msra.mxu0 0.0
    %3157 = vmatprep.subr.mxu0 0.0
    %3158 = vmatpush1.msra.mxu0 0.0
    %3159 = vmatprep.subr.mxu0 0.0
    %3160 = vmatpush1.msra.mxu0 0.0
    %3161 = vmatprep.subr.mxu0 0.0
    %3162 = vmatpush1.msra.mxu0 0.0
    %3163 = vmatprep.subr.mxu0 0.0
    %3164 = vmatpush1.msra.mxu0 0.0
    %3165 = vmatprep.mubr.f32.mxu0 0.0
    %3166 = vmatmul.mubr.f32.gmra.mrb[0].mxu0 %v3099
    %v3167 = vpop.f32.mrb[0].mxu0
    %v3168 = vadd.f32 0.0, %v3167
    %v3169 = vpop.f32.mrb[0].mxu0
    %3170 = vdwg.mxu0
    %v3171 = vadd.f32 %v3095, %v3168
    %v3172 = vxor.u32 %v3171, 2147483648
    %v3173 = vmul.f32 %v3172, 1.442695
    %v3174 = vpow.pop %v3173
    %v3175 = vadd.f32 %v3174, 1.0
    %v3176 = vrcp.pop %v3175
    %v3177 = vmul.f32 1.0, %v3176
    %v3178 = vtanh.pop %v3171
    %v3179 = vmul.f32 %v3177, %v3088
    %3181 = vrot.lane.b32.xlu0 %v3178, 64
    %v3182 = vpop.permute.xlu0 %3181
    %v3184 = vmul.f32 %v3177, %v3182
    %3186 = vrot.lane.b32.xlu0 %v3184, 32
    %v3187 = vpop.permute.xlu0 %3186
    %v3189 = vadd.f32 %v3179, %v3187
    %v3190 = vtanh.pop %v3189
    %3192 = vrot.lane.b32.xlu0 %v3190, 64
    %v3193 = vpop.permute.xlu0 %3192
    %v3195 = vmul.f32 %v3177, %v3193
    %v3196 = vadd.f32 %v1323, %v1748
    %3198 = vrot.lane.b32.xlu0 %v3195, 32
    %v3199 = vpop.permute.xlu0 %3198
    %v3200 = vsel %vm2592, %v3199, 0
    %3202 = vmatprep.subr.mxu0 0.0
    %3203 = vmatpush1.msra.mxu0 %v284
    %3204 = vmatprep.subr.mxu0 0.0
    %3205 = vmatpush1.msra.mxu0 %v285
    %3206 = vmatprep.subr.mxu0 0.0
    %3207 = vmatpush1.msra.mxu0 %v286
    %3208 = vmatprep.subr.mxu0 0.0
    %3209 = vmatpush1.msra.mxu0 %v287
    %3210 = vmatprep.subr.mxu0 0.0
    %3211 = vmatpush1.msra.mxu0 0.0
    %3212 = vmatprep.subr.mxu0 0.0
    %3213 = vmatpush1.msra.mxu0 0.0
    %3214 = vmatprep.subr.mxu0 0.0
    %3215 = vmatpush1.msra.mxu0 0.0
    %3216 = vmatprep.subr.mxu0 0.0
    %3217 = vmatpush1.msra.mxu0 0.0
    %3218 = vmatprep.subr.mxu0 0.0
    %3219 = vmatpush1.msra.mxu0 0.0
    %3220 = vmatprep.subr.mxu0 0.0
    %3221 = vmatpush1.msra.mxu0 0.0
    %3222 = vmatprep.subr.mxu0 0.0
    %3223 = vmatpush1.msra.mxu0 0.0
    %3224 = vmatprep.subr.mxu0 0.0
    %3225 = vmatpush1.msra.mxu0 0.0
    %3226 = vmatprep.subr.mxu0 0.0
    %3227 = vmatpush1.msra.mxu0 0.0
    %3228 = vmatprep.subr.mxu0 0.0
    %3229 = vmatpush1.msra.mxu0 0.0
    %3230 = vmatprep.subr.mxu0 0.0
    %3231 = vmatpush1.msra.mxu0 0.0
    %3232 = vmatprep.subr.mxu0 0.0
    %3233 = vmatpush1.msra.mxu0 0.0
    %3234 = vmatprep.subr.mxu0 0.0
    %3235 = vmatpush1.msra.mxu0 0.0
    %3236 = vmatprep.subr.mxu0 0.0
    %3237 = vmatpush1.msra.mxu0 0.0
    %3238 = vmatprep.subr.mxu0 0.0
    %3239 = vmatpush1.msra.mxu0 0.0
    %3240 = vmatprep.subr.mxu0 0.0
    %3241 = vmatpush1.msra.mxu0 0.0
    %3242 = vmatprep.subr.mxu0 0.0
    %3243 = vmatpush1.msra.mxu0 0.0
    %3244 = vmatprep.subr.mxu0 0.0
    %3245 = vmatpush1.msra.mxu0 0.0
    %3246 = vmatprep.subr.mxu0 0.0
    %3247 = vmatpush1.msra.mxu0 0.0
    %3248 = vmatprep.subr.mxu0 0.0
    %3249 = vmatpush1.msra.mxu0 0.0
    %3250 = vmatprep.subr.mxu0 0.0
    %3251 = vmatpush1.msra.mxu0 0.0
    %3252 = vmatprep.subr.mxu0 0.0
    %3253 = vmatpush1.msra.mxu0 0.0
    %3254 = vmatprep.subr.mxu0 0.0
    %3255 = vmatpush1.msra.mxu0 0.0
    %3256 = vmatprep.subr.mxu0 0.0
    %3257 = vmatpush1.msra.mxu0 0.0
    %3258 = vmatprep.subr.mxu0 0.0
    %3259 = vmatpush1.msra.mxu0 0.0
    %3260 = vmatprep.subr.mxu0 0.0
    %3261 = vmatpush1.msra.mxu0 0.0
    %3262 = vmatprep.subr.mxu0 0.0
    %3263 = vmatpush1.msra.mxu0 0.0
    %3264 = vmatprep.subr.mxu0 0.0
    %3265 = vmatpush1.msra.mxu0 0.0
    %3266 = vmatprep.mubr.f32.mxu0 0.0
    %3267 = vmatmul.mubr.f32.gmra.mrb[0].mxu0 %v3200
    %v3268 = vpop.f32.mrb[0].mxu0
    %v3269 = vadd.f32 0.0, %v3268
    %v3270 = vpop.f32.mrb[0].mxu0
    %3271 = vdwg.mxu0
    %v3272 = vadd.f32 %v3196, %v3269
    %v3273 = vxor.u32 %v3272, 2147483648
    %v3274 = vmul.f32 %v3273, 1.442695
    %v3275 = vpow.pop %v3274
    %v3276 = vadd.f32 %v3275, 1.0
    %v3277 = vrcp.pop %v3276
    %v3278 = vmul.f32 1.0, %v3277
    %v3279 = vtanh.pop %v3272
    %v3280 = vmul.f32 %v3278, %v3189
    %3282 = vrot.lane.b32.xlu0 %v3279, 64
    %v3283 = vpop.permute.xlu0 %3282
    %v3285 = vmul.f32 %v3278, %v3283
    %3287 = vrot.lane.b32.xlu0 %v3285, 32
    %v3288 = vpop.permute.xlu0 %3287
    %v3290 = vadd.f32 %v3280, %v3288
    %v3291 = vtanh.pop %v3290
    %3293 = vrot.lane.b32.xlu0 %v3291, 64
    %v3294 = vpop.permute.xlu0 %3293
    %v3296 = vmul.f32 %v3278, %v3294
    %v3297 = vadd.f32 %v1470, %v1608
    %3299 = vrot.lane.b32.xlu0 %v3296, 32
    %v3300 = vpop.permute.xlu0 %3299
    %v3301 = vsel %vm2592, %v3300, 0
    %3303 = vmatprep.subr.mxu0 0.0
    %3304 = vmatpush1.msra.mxu0 %v284
    %3305 = vmatprep.subr.mxu0 0.0
    %3306 = vmatpush1.msra.mxu0 %v285
    %3307 = vmatprep.subr.mxu0 0.0
    %3308 = vmatpush1.msra.mxu0 %v286
    %3309 = vmatprep.subr.mxu0 0.0
    %3310 = vmatpush1.msra.mxu0 %v287
    %3311 = vmatprep.subr.mxu0 0.0
    %3312 = vmatpush1.msra.mxu0 0.0
    %3313 = vmatprep.subr.mxu0 0.0
    %3314 = vmatpush1.msra.mxu0 0.0
    %3315 = vmatprep.subr.mxu0 0.0
    %3316 = vmatpush1.msra.mxu0 0.0
    %3317 = vmatprep.subr.mxu0 0.0
    %3318 = vmatpush1.msra.mxu0 0.0
    %3319 = vmatprep.subr.mxu0 0.0
    %3320 = vmatpush1.msra.mxu0 0.0
    %3321 = vmatprep.subr.mxu0 0.0
    %3322 = vmatpush1.msra.mxu0 0.0
    %3323 = vmatprep.subr.mxu0 0.0
    %3324 = vmatpush1.msra.mxu0 0.0
    %3325 = vmatprep.subr.mxu0 0.0
    %3326 = vmatpush1.msra.mxu0 0.0
    %3327 = vmatprep.subr.mxu0 0.0
    %3328 = vmatpush1.msra.mxu0 0.0
    %3329 = vmatprep.subr.mxu0 0.0
    %3330 = vmatpush1.msra.mxu0 0.0
    %3331 = vmatprep.subr.mxu0 0.0
    %3332 = vmatpush1.msra.mxu0 0.0
    %3333 = vmatprep.subr.mxu0 0.0
    %3334 = vmatpush1.msra.mxu0 0.0
    %3335 = vmatprep.subr.mxu0 0.0
    %3336 = vmatpush1.msra.mxu0 0.0
    %3337 = vmatprep.subr.mxu0 0.0
    %3338 = vmatpush1.msra.mxu0 0.0
    %3339 = vmatprep.subr.mxu0 0.0
    %3340 = vmatpush1.msra.mxu0 0.0
    %3341 = vmatprep.subr.mxu0 0.0
    %3342 = vmatpush1.msra.mxu0 0.0
    %3343 = vmatprep.subr.mxu0 0.0
    %3344 = vmatpush1.msra.mxu0 0.0
    %3345 = vmatprep.subr.mxu0 0.0
    %3346 = vmatpush1.msra.mxu0 0.0
    %3347 = vmatprep.subr.mxu0 0.0
    %3348 = vmatpush1.msra.mxu0 0.0
    %3349 = vmatprep.subr.mxu0 0.0
    %3350 = vmatpush1.msra.mxu0 0.0
    %3351 = vmatprep.subr.mxu0 0.0
    %3352 = vmatpush1.msra.mxu0 0.0
    %3353 = vmatprep.subr.mxu0 0.0
    %3354 = vmatpush1.msra.mxu0 0.0
    %3355 = vmatprep.subr.mxu0 0.0
    %3356 = vmatpush1.msra.mxu0 0.0
    %3357 = vmatprep.subr.mxu0 0.0
    %3358 = vmatpush1.msra.mxu0 0.0
    %3359 = vmatprep.subr.mxu0 0.0
    %3360 = vmatpush1.msra.mxu0 0.0
    %3361 = vmatprep.subr.mxu0 0.0
    %3362 = vmatpush1.msra.mxu0 0.0
    %3363 = vmatprep.subr.mxu0 0.0
    %3364 = vmatpush1.msra.mxu0 0.0
    %3365 = vmatprep.subr.mxu0 0.0
    %3366 = vmatpush1.msra.mxu0 0.0
    %3367 = vmatprep.mubr.f32.mxu0 0.0
    %3368 = vmatmul.mubr.f32.gmra.mrb[0].mxu0 %v3301
    %v3369 = vpop.f32.mrb[0].mxu0
    %v3370 = vadd.f32 0.0, %v3369
    %v3371 = vpop.f32.mrb[0].mxu0
    %3372 = vdwg.mxu0
    %v3373 = vadd.f32 %v3297, %v3370
    %v3374 = vxor.u32 %v3373, 2147483648
    %v3375 = vmul.f32 %v3374, 1.442695
    %v3376 = vpow.pop %v3375
    %v3377 = vadd.f32 %v3376, 1.0
    %v3378 = vrcp.pop %v3377
    %v3379 = vmul.f32 1.0, %v3378
    %v3380 = vtanh.pop %v3373
    %v3381 = vmul.f32 %v3379, %v3290
    %3383 = vrot.lane.b32.xlu0 %v3380, 64
    %v3384 = vpop.permute.xlu0 %3383
    %v3386 = vmul.f32 %v3379, %v3384
    %3388 = vrot.lane.b32.xlu0 %v3386, 32
    %v3389 = vpop.permute.xlu0 %3388
    %v3391 = vadd.f32 %v3381, %v3389
    %v3392 = vtanh.pop %v3391
    %3394 = vrot.lane.b32.xlu0 %v3392, 64
    %v3395 = vpop.permute.xlu0 %3394
    %v3397 = vmul.f32 %v3379, %v3395
    %3400 = vrot.lane.b32.xlu0 %v3397, 32
    %v3401 = vpop.permute.xlu0 %3400
    %v3403 = vsel %vm247, %v2694, %v3401
    %v3406 = vsel %vm247, %v2795, %v3300
    %v3409 = vsel %vm247, %v2896, %v3199
    %v3412 = vsel %vm247, %v2997, %v3098
    %v3413 = vsel %vm247, %v3098, %v2997
    %v3414 = vsel %vm247, %v3199, %v2896
    %v3415 = vsel %vm247, %v3300, %v2795
    %v3416 = vsel %vm247, %v3401, %v2694
    %v3417 = vld [vmem:[#allocation10] sm:$0xff]
    %v3418 = vld [vmem:[#allocation10 + $0x8] sm:$0xff]
    %v3419 = vld [vmem:[#allocation10 + $0x10] sm:$0xff]
    %v3420 = vld [vmem:[#allocation10 + $0x18] sm:$0xff]
    %v3421 = vld [vmem:[#allocation10 + $0x20] sm:$0xff]
    %v3422 = vld [vmem:[#allocation10 + $0x28] sm:$0xff]
    %v3423 = vld [vmem:[#allocation10 + $0x30] sm:$0xff]
    %v3424 = vld [vmem:[#allocation10 + $0x38] sm:$0xff]
    %v3425 = vld [vmem:[#allocation11] sm:$0xff]
    %v3426 = vld [vmem:[#allocation11 + $0x8] sm:$0xff]
    %v3427 = vld [vmem:[#allocation11 + $0x10] sm:$0xff]
    %v3428 = vld [vmem:[#allocation11 + $0x18] sm:$0xff]
    %v3429 = vld [vmem:[#allocation11 + $0x20] sm:$0xff]
    %v3430 = vld [vmem:[#allocation11 + $0x28] sm:$0xff]
    %v3431 = vld [vmem:[#allocation11 + $0x30] sm:$0xff]
    %v3432 = vld [vmem:[#allocation11 + $0x38] sm:$0xff]
    %v3433 = vld [vmem:[#allocation13] sm:$0x1]
    %v3434 = vld [vmem:[#allocation14] sm:$0xff]
    %v3435 = vld [vmem:[#allocation14 + $0x8] sm:$0xff]
    %v3436 = vld [vmem:[#allocation14 + $0x10] sm:$0xff]
    %v3437 = vld [vmem:[#allocation14 + $0x18] sm:$0xff]
    %v3439 = vsel %vm2592, %v3406, 0
    %3441 = vmatprep.subr.mxu0 0.0
    %3442 = vmatpush1.msra.mxu0 %v3421
    %3443 = vmatprep.subr.mxu0 0.0
    %3444 = vmatpush1.msra.mxu0 %v3422
    %3445 = vmatprep.subr.mxu0 0.0
    %3446 = vmatpush1.msra.mxu0 %v3423
    %3447 = vmatprep.subr.mxu0 0.0
    %3448 = vmatpush1.msra.mxu0 %v3424
    %3449 = vmatprep.subr.mxu0 0.0
    %3450 = vmatpush1.msra.mxu0 0.0
    %3451 = vmatprep.subr.mxu0 0.0
    %3452 = vmatpush1.msra.mxu0 0.0
    %3453 = vmatprep.subr.mxu0 0.0
    %3454 = vmatpush1.msra.mxu0 0.0
    %3455 = vmatprep.subr.mxu0 0.0
    %3456 = vmatpush1.msra.mxu0 0.0
    %3457 = vmatprep.subr.mxu0 0.0
    %3458 = vmatpush1.msra.mxu0 0.0
    %3459 = vmatprep.subr.mxu0 0.0
    %3460 = vmatpush1.msra.mxu0 0.0
    %3461 = vmatprep.subr.mxu0 0.0
    %3462 = vmatpush1.msra.mxu0 0.0
    %3463 = vmatprep.subr.mxu0 0.0
    %3464 = vmatpush1.msra.mxu0 0.0
    %3465 = vmatprep.subr.mxu0 0.0
    %3466 = vmatpush1.msra.mxu0 0.0
    %3467 = vmatprep.subr.mxu0 0.0
    %3468 = vmatpush1.msra.mxu0 0.0
    %3469 = vmatprep.subr.mxu0 0.0
    %3470 = vmatpush1.msra.mxu0 0.0
    %3471 = vmatprep.subr.mxu0 0.0
    %3472 = vmatpush1.msra.mxu0 0.0
    %3473 = vmatprep.subr.mxu0 0.0
    %3474 = vmatpush1.msra.mxu0 0.0
    %3475 = vmatprep.subr.mxu0 0.0
    %3476 = vmatpush1.msra.mxu0 0.0
    %3477 = vmatprep.subr.mxu0 0.0
    %3478 = vmatpush1.msra.mxu0 0.0
    %3479 = vmatprep.subr.mxu0 0.0
    %3480 = vmatpush1.msra.mxu0 0.0
    %3481 = vmatprep.subr.mxu0 0.0
    %3482 = vmatpush1.msra.mxu0 0.0
    %3483 = vmatprep.subr.mxu0 0.0
    %3484 = vmatpush1.msra.mxu0 0.0
    %3485 = vmatprep.subr.mxu0 0.0
    %3486 = vmatpush1.msra.mxu0 0.0
    %3487 = vmatprep.subr.mxu0 0.0
    %3488 = vmatpush1.msra.mxu0 0.0
    %3489 = vmatprep.subr.mxu0 0.0
    %3490 = vmatpush1.msra.mxu0 0.0
    %3491 = vmatprep.subr.mxu0 0.0
    %3492 = vmatpush1.msra.mxu0 0.0
    %3493 = vmatprep.subr.mxu0 0.0
    %3494 = vmatpush1.msra.mxu0 0.0
    %3495 = vmatprep.subr.mxu0 0.0
    %3496 = vmatpush1.msra.mxu0 0.0
    %3497 = vmatprep.subr.mxu0 0.0
    %3498 = vmatpush1.msra.mxu0 0.0
    %3499 = vmatprep.subr.mxu0 0.0
    %3500 = vmatpush1.msra.mxu0 0.0
    %3501 = vmatprep.subr.mxu0 0.0
    %3502 = vmatpush1.msra.mxu0 0.0
    %3503 = vmatprep.subr.mxu0 0.0
    %3504 = vmatpush1.msra.mxu0 0.0
    %3505 = vmatprep.mubr.f32.mxu0 0.0
    %3506 = vmatmul.mubr.f32.gmra.mrb[0].mxu0 %v3439
    %v3507 = vpop.f32.mrb[0].mxu0
    %v3508 = vadd.f32 0.0, %v3507
    %v3509 = vpop.f32.mrb[0].mxu0
    %3510 = vdwg.mxu0
    %v3512 = vsel %vm2592, %v3403, 0
    %3514 = vmatprep.subr.mxu0 0.0
    %3515 = vmatpush1.msra.mxu0 %v3417
    %3516 = vmatprep.subr.mxu0 0.0
    %3517 = vmatpush1.msra.mxu0 %v3418
    %3518 = vmatprep.subr.mxu0 0.0
    %3519 = vmatpush1.msra.mxu0 %v3419
    %3520 = vmatprep.subr.mxu0 0.0
    %3521 = vmatpush1.msra.mxu0 %v3420
    %3522 = vmatprep.subr.mxu0 0.0
    %3523 = vmatpush1.msra.mxu0 0.0
    %3524 = vmatprep.subr.mxu0 0.0
    %3525 = vmatpush1.msra.mxu0 0.0
    %3526 = vmatprep.subr.mxu0 0.0
    %3527 = vmatpush1.msra.mxu0 0.0
    %3528 = vmatprep.subr.mxu0 0.0
    %3529 = vmatpush1.msra.mxu0 0.0
    %3530 = vmatprep.subr.mxu0 0.0
    %3531 = vmatpush1.msra.mxu0 0.0
    %3532 = vmatprep.subr.mxu0 0.0
    %3533 = vmatpush1.msra.mxu0 0.0
    %3534 = vmatprep.subr.mxu0 0.0
    %3535 = vmatpush1.msra.mxu0 0.0
    %3536 = vmatprep.subr.mxu0 0.0
    %3537 = vmatpush1.msra.mxu0 0.0
    %3538 = vmatprep.subr.mxu0 0.0
    %3539 = vmatpush1.msra.mxu0 0.0
    %3540 = vmatprep.subr.mxu0 0.0
    %3541 = vmatpush1.msra.mxu0 0.0
    %3542 = vmatprep.subr.mxu0 0.0
    %3543 = vmatpush1.msra.mxu0 0.0
    %3544 = vmatprep.subr.mxu0 0.0
    %3545 = vmatpush1.msra.mxu0 0.0
    %3546 = vmatprep.subr.mxu0 0.0
    %3547 = vmatpush1.msra.mxu0 0.0
    %3548 = vmatprep.subr.mxu0 0.0
    %3549 = vmatpush1.msra.mxu0 0.0
    %3550 = vmatprep.subr.mxu0 0.0
    %3551 = vmatpush1.msra.mxu0 0.0
    %3552 = vmatprep.subr.mxu0 0.0
    %3553 = vmatpush1.msra.mxu0 0.0
    %3554 = vmatprep.subr.mxu0 0.0
    %3555 = vmatpush1.msra.mxu0 0.0
    %3556 = vmatprep.subr.mxu0 0.0
    %3557 = vmatpush1.msra.mxu0 0.0
    %3558 = vmatprep.subr.mxu0 0.0
    %3559 = vmatpush1.msra.mxu0 0.0
    %3560 = vmatprep.subr.mxu0 0.0
    %3561 = vmatpush1.msra.mxu0 0.0
    %3562 = vmatprep.subr.mxu0 0.0
    %3563 = vmatpush1.msra.mxu0 0.0
    %3564 = vmatprep.subr.mxu0 0.0
    %3565 = vmatpush1.msra.mxu0 0.0
    %3566 = vmatprep.subr.mxu0 0.0
    %3567 = vmatpush1.msra.mxu0 0.0
    %3568 = vmatprep.subr.mxu0 0.0
    %3569 = vmatpush1.msra.mxu0 0.0
    %3570 = vmatprep.subr.mxu0 0.0
    %3571 = vmatpush1.msra.mxu0 0.0
    %3572 = vmatprep.subr.mxu0 0.0
    %3573 = vmatpush1.msra.mxu0 0.0
    %3574 = vmatprep.subr.mxu0 0.0
    %3575 = vmatpush1.msra.mxu0 0.0
    %3576 = vmatprep.subr.mxu0 0.0
    %3577 = vmatpush1.msra.mxu0 0.0
    %3578 = vmatprep.mubr.f32.mxu0 0.0
    %3579 = vmatmul.mubr.f32.gmra.mrb[0].mxu0 %v3512
    %v3580 = vpop.f32.mrb[0].mxu0
    %v3581 = vadd.f32 %v3508, %v3580
    %v3582 = vpop.f32.mrb[0].mxu0
    %3583 = vdwg.mxu0
    %v3585 = vlaneseq
    %v3586 = vshrl.u32 %v3585, 7
    %v3587 = vsub.s32 0, %v3586
    %v3588 = vrot.slane %v3433, %v3587
    %v3590 = vadd.f32 %v3581, %v3588
    %v3592 = vsel %vm2592, %v3412, 0
    %3594 = vmatprep.subr.mxu0 0.0
    %3595 = vmatpush1.msra.mxu0 %v3421
    %3596 = vmatprep.subr.mxu0 0.0
    %3597 = vmatpush1.msra.mxu0 %v3422
    %3598 = vmatprep.subr.mxu0 0.0
    %3599 = vmatpush1.msra.mxu0 %v3423
    %3600 = vmatprep.subr.mxu0 0.0
    %3601 = vmatpush1.msra.mxu0 %v3424
    %3602 = vmatprep.subr.mxu0 0.0
    %3603 = vmatpush1.msra.mxu0 0.0
    %3604 = vmatprep.subr.mxu0 0.0
    %3605 = vmatpush1.msra.mxu0 0.0
    %3606 = vmatprep.subr.mxu0 0.0
    %3607 = vmatpush1.msra.mxu0 0.0
    %3608 = vmatprep.subr.mxu0 0.0
    %3609 = vmatpush1.msra.mxu0 0.0
    %3610 = vmatprep.subr.mxu0 0.0
    %3611 = vmatpush1.msra.mxu0 0.0
    %3612 = vmatprep.subr.mxu0 0.0
    %3613 = vmatpush1.msra.mxu0 0.0
    %3614 = vmatprep.subr.mxu0 0.0
    %3615 = vmatpush1.msra.mxu0 0.0
    %3616 = vmatprep.subr.mxu0 0.0
    %3617 = vmatpush1.msra.mxu0 0.0
    %3618 = vmatprep.subr.mxu0 0.0
    %3619 = vmatpush1.msra.mxu0 0.0
    %3620 = vmatprep.subr.mxu0 0.0
    %3621 = vmatpush1.msra.mxu0 0.0
    %3622 = vmatprep.subr.mxu0 0.0
    %3623 = vmatpush1.msra.mxu0 0.0
    %3624 = vmatprep.subr.mxu0 0.0
    %3625 = vmatpush1.msra.mxu0 0.0
    %3626 = vmatprep.subr.mxu0 0.0
    %3627 = vmatpush1.msra.mxu0 0.0
    %3628 = vmatprep.subr.mxu0 0.0
    %3629 = vmatpush1.msra.mxu0 0.0
    %3630 = vmatprep.subr.mxu0 0.0
    %3631 = vmatpush1.msra.mxu0 0.0
    %3632 = vmatprep.subr.mxu0 0.0
    %3633 = vmatpush1.msra.mxu0 0.0
    %3634 = vmatprep.subr.mxu0 0.0
    %3635 = vmatpush1.msra.mxu0 0.0
    %3636 = vmatprep.subr.mxu0 0.0
    %3637 = vmatpush1.msra.mxu0 0.0
    %3638 = vmatprep.subr.mxu0 0.0
    %3639 = vmatpush1.msra.mxu0 0.0
    %3640 = vmatprep.subr.mxu0 0.0
    %3641 = vmatpush1.msra.mxu0 0.0
    %3642 = vmatprep.subr.mxu0 0.0
    %3643 = vmatpush1.msra.mxu0 0.0
    %3644 = vmatprep.subr.mxu0 0.0
    %3645 = vmatpush1.msra.mxu0 0.0
    %3646 = vmatprep.subr.mxu0 0.0
    %3647 = vmatpush1.msra.mxu0 0.0
    %3648 = vmatprep.subr.mxu0 0.0
    %3649 = vmatpush1.msra.mxu0 0.0
    %3650 = vmatprep.subr.mxu0 0.0
    %3651 = vmatpush1.msra.mxu0 0.0
    %3652 = vmatprep.subr.mxu0 0.0
    %3653 = vmatpush1.msra.mxu0 0.0
    %3654 = vmatprep.subr.mxu0 0.0
    %3655 = vmatpush1.msra.mxu0 0.0
    %3656 = vmatprep.subr.mxu0 0.0
    %3657 = vmatpush1.msra.mxu0 0.0
    %3658 = vmatprep.mubr.f32.mxu0 0.0
    %3659 = vmatmul.mubr.f32.gmra.mrb[0].mxu0 %v3592
    %v3660 = vpop.f32.mrb[0].mxu0
    %v3661 = vadd.f32 0.0, %v3660
    %v3662 = vpop.f32.mrb[0].mxu0
    %3663 = vdwg.mxu0
    %v3665 = vsel %vm2592, %v3409, 0
    %3667 = vmatprep.subr.mxu0 0.0
    %3668 = vmatpush1.msra.mxu0 %v3417
    %3669 = vmatprep.subr.mxu0 0.0
    %3670 = vmatpush1.msra.mxu0 %v3418
    %3671 = vmatprep.subr.mxu0 0.0
    %3672 = vmatpush1.msra.mxu0 %v3419
    %3673 = vmatprep.subr.mxu0 0.0
    %3674 = vmatpush1.msra.mxu0 %v3420
    %3675 = vmatprep.subr.mxu0 0.0
    %3676 = vmatpush1.msra.mxu0 0.0
    %3677 = vmatprep.subr.mxu0 0.0
    %3678 = vmatpush1.msra.mxu0 0.0
    %3679 = vmatprep.subr.mxu0 0.0
    %3680 = vmatpush1.msra.mxu0 0.0
    %3681 = vmatprep.subr.mxu0 0.0
    %3682 = vmatpush1.msra.mxu0 0.0
    %3683 = vmatprep.subr.mxu0 0.0
    %3684 = vmatpush1.msra.mxu0 0.0
    %3685 = vmatprep.subr.mxu0 0.0
    %3686 = vmatpush1.msra.mxu0 0.0
    %3687 = vmatprep.subr.mxu0 0.0
    %3688 = vmatpush1.msra.mxu0 0.0
    %3689 = vmatprep.subr.mxu0 0.0
    %3690 = vmatpush1.msra.mxu0 0.0
    %3691 = vmatprep.subr.mxu0 0.0
    %3692 = vmatpush1.msra.mxu0 0.0
    %3693 = vmatprep.subr.mxu0 0.0
    %3694 = vmatpush1.msra.mxu0 0.0
    %3695 = vmatprep.subr.mxu0 0.0
    %3696 = vmatpush1.msra.mxu0 0.0
    %3697 = vmatprep.subr.mxu0 0.0
    %3698 = vmatpush1.msra.mxu0 0.0
    %3699 = vmatprep.subr.mxu0 0.0
    %3700 = vmatpush1.msra.mxu0 0.0
    %3701 = vmatprep.subr.mxu0 0.0
    %3702 = vmatpush1.msra.mxu0 0.0
    %3703 = vmatprep.subr.mxu0 0.0
    %3704 = vmatpush1.msra.mxu0 0.0
    %3705 = vmatprep.subr.mxu0 0.0
    %3706 = vmatpush1.msra.mxu0 0.0
    %3707 = vmatprep.subr.mxu0 0.0
    %3708 = vmatpush1.msra.mxu0 0.0
    %3709 = vmatprep.subr.mxu0 0.0
    %3710 = vmatpush1.msra.mxu0 0.0
    %3711 = vmatprep.subr.mxu0 0.0
    %3712 = vmatpush1.msra.mxu0 0.0
    %3713 = vmatprep.subr.mxu0 0.0
    %3714 = vmatpush1.msra.mxu0 0.0
    %3715 = vmatprep.subr.mxu0 0.0
    %3716 = vmatpush1.msra.mxu0 0.0
    %3717 = vmatprep.subr.mxu0 0.0
    %3718 = vmatpush1.msra.mxu0 0.0
    %3719 = vmatprep.subr.mxu0 0.0
    %3720 = vmatpush1.msra.mxu0 0.0
    %3721 = vmatprep.subr.mxu0 0.0
    %3722 = vmatpush1.msra.mxu0 0.0
    %3723 = vmatprep.subr.mxu0 0.0
    %3724 = vmatpush1.msra.mxu0 0.0
    %3725 = vmatprep.subr.mxu0 0.0
    %3726 = vmatpush1.msra.mxu0 0.0
    %3727 = vmatprep.subr.mxu0 0.0
    %3728 = vmatpush1.msra.mxu0 0.0
    %3729 = vmatprep.subr.mxu0 0.0
    %3730 = vmatpush1.msra.mxu0 0.0
    %3731 = vmatprep.mubr.f32.mxu0 0.0
    %3732 = vmatmul.mubr.f32.gmra.mrb[0].mxu0 %v3665
    %v3733 = vpop.f32.mrb[0].mxu0
    %v3734 = vadd.f32 %v3661, %v3733
    %v3735 = vpop.f32.mrb[0].mxu0
    %3736 = vdwg.mxu0
    %v3737 = vadd.f32 %v3734, %v3588
    %v3739 = vsel %vm2592, %v3414, 0
    %3741 = vmatprep.subr.mxu0 0.0
    %3742 = vmatpush1.msra.mxu0 %v3421
    %3743 = vmatprep.subr.mxu0 0.0
    %3744 = vmatpush1.msra.mxu0 %v3422
    %3745 = vmatprep.subr.mxu0 0.0
    %3746 = vmatpush1.msra.mxu0 %v3423
    %3747 = vmatprep.subr.mxu0 0.0
    %3748 = vmatpush1.msra.mxu0 %v3424
    %3749 = vmatprep.subr.mxu0 0.0
    %3750 = vmatpush1.msra.mxu0 0.0
    %3751 = vmatprep.subr.mxu0 0.0
    %3752 = vmatpush1.msra.mxu0 0.0
    %3753 = vmatprep.subr.mxu0 0.0
    %3754 = vmatpush1.msra.mxu0 0.0
    %3755 = vmatprep.subr.mxu0 0.0
    %3756 = vmatpush1.msra.mxu0 0.0
    %3757 = vmatprep.subr.mxu0 0.0
    %3758 = vmatpush1.msra.mxu0 0.0
    %3759 = vmatprep.subr.mxu0 0.0
    %3760 = vmatpush1.msra.mxu0 0.0
    %3761 = vmatprep.subr.mxu0 0.0
    %3762 = vmatpush1.msra.mxu0 0.0
    %3763 = vmatprep.subr.mxu0 0.0
    %3764 = vmatpush1.msra.mxu0 0.0
    %3765 = vmatprep.subr.mxu0 0.0
    %3766 = vmatpush1.msra.mxu0 0.0
    %3767 = vmatprep.subr.mxu0 0.0
    %3768 = vmatpush1.msra.mxu0 0.0
    %3769 = vmatprep.subr.mxu0 0.0
    %3770 = vmatpush1.msra.mxu0 0.0
    %3771 = vmatprep.subr.mxu0 0.0
    %3772 = vmatpush1.msra.mxu0 0.0
    %3773 = vmatprep.subr.mxu0 0.0
    %3774 = vmatpush1.msra.mxu0 0.0
    %3775 = vmatprep.subr.mxu0 0.0
    %3776 = vmatpush1.msra.mxu0 0.0
    %3777 = vmatprep.subr.mxu0 0.0
    %3778 = vmatpush1.msra.mxu0 0.0
    %3779 = vmatprep.subr.mxu0 0.0
    %3780 = vmatpush1.msra.mxu0 0.0
    %3781 = vmatprep.subr.mxu0 0.0
    %3782 = vmatpush1.msra.mxu0 0.0
    %3783 = vmatprep.subr.mxu0 0.0
    %3784 = vmatpush1.msra.mxu0 0.0
    %3785 = vmatprep.subr.mxu0 0.0
    %3786 = vmatpush1.msra.mxu0 0.0
    %3787 = vmatprep.subr.mxu0 0.0
    %3788 = vmatpush1.msra.mxu0 0.0
    %3789 = vmatprep.subr.mxu0 0.0
    %3790 = vmatpush1.msra.mxu0 0.0
    %3791 = vmatprep.subr.mxu0 0.0
    %3792 = vmatpush1.msra.mxu0 0.0
    %3793 = vmatprep.subr.mxu0 0.0
    %3794 = vmatpush1.msra.mxu0 0.0
    %3795 = vmatprep.subr.mxu0 0.0
    %3796 = vmatpush1.msra.mxu0 0.0
    %3797 = vmatprep.subr.mxu0 0.0
    %3798 = vmatpush1.msra.mxu0 0.0
    %3799 = vmatprep.subr.mxu0 0.0
    %3800 = vmatpush1.msra.mxu0 0.0
    %3801 = vmatprep.subr.mxu0 0.0
    %3802 = vmatpush1.msra.mxu0 0.0
    %3803 = vmatprep.subr.mxu0 0.0
    %3804 = vmatpush1.msra.mxu0 0.0
    %3805 = vmatprep.mubr.f32.mxu0 0.0
    %3806 = vmatmul.mubr.f32.gmra.mrb[0].mxu0 %v3739
    %v3807 = vpop.f32.mrb[0].mxu0
    %v3808 = vadd.f32 0.0, %v3807
    %v3809 = vpop.f32.mrb[0].mxu0
    %3810 = vdwg.mxu0
    %v3812 = vsel %vm2592, %v3413, 0
    %3814 = vmatprep.subr.mxu0 0.0
    %3815 = vmatpush1.msra.mxu0 %v3417
    %3816 = vmatprep.subr.mxu0 0.0
    %3817 = vmatpush1.msra.mxu0 %v3418
    %3818 = vmatprep.subr.mxu0 0.0
    %3819 = vmatpush1.msra.mxu0 %v3419
    %3820 = vmatprep.subr.mxu0 0.0
    %3821 = vmatpush1.msra.mxu0 %v3420
    %3822 = vmatprep.subr.mxu0 0.0
    %3823 = vmatpush1.msra.mxu0 0.0
    %3824 = vmatprep.subr.mxu0 0.0
    %3825 = vmatpush1.msra.mxu0 0.0
    %3826 = vmatprep.subr.mxu0 0.0
    %3827 = vmatpush1.msra.mxu0 0.0
    %3828 = vmatprep.subr.mxu0 0.0
    %3829 = vmatpush1.msra.mxu0 0.0
    %3830 = vmatprep.subr.mxu0 0.0
    %3831 = vmatpush1.msra.mxu0 0.0
    %3832 = vmatprep.subr.mxu0 0.0
    %3833 = vmatpush1.msra.mxu0 0.0
    %3834 = vmatprep.subr.mxu0 0.0
    %3835 = vmatpush1.msra.mxu0 0.0
    %3836 = vmatprep.subr.mxu0 0.0
    %3837 = vmatpush1.msra.mxu0 0.0
    %3838 = vmatprep.subr.mxu0 0.0
    %3839 = vmatpush1.msra.mxu0 0.0
    %3840 = vmatprep.subr.mxu0 0.0
    %3841 = vmatpush1.msra.mxu0 0.0
    %3842 = vmatprep.subr.mxu0 0.0
    %3843 = vmatpush1.msra.mxu0 0.0
    %3844 = vmatprep.subr.mxu0 0.0
    %3845 = vmatpush1.msra.mxu0 0.0
    %3846 = vmatprep.subr.mxu0 0.0
    %3847 = vmatpush1.msra.mxu0 0.0
    %3848 = vmatprep.subr.mxu0 0.0
    %3849 = vmatpush1.msra.mxu0 0.0
    %3850 = vmatprep.subr.mxu0 0.0
    %3851 = vmatpush1.msra.mxu0 0.0
    %3852 = vmatprep.subr.mxu0 0.0
    %3853 = vmatpush1.msra.mxu0 0.0
    %3854 = vmatprep.subr.mxu0 0.0
    %3855 = vmatpush1.msra.mxu0 0.0
    %3856 = vmatprep.subr.mxu0 0.0
    %3857 = vmatpush1.msra.mxu0 0.0
    %3858 = vmatprep.subr.mxu0 0.0
    %3859 = vmatpush1.msra.mxu0 0.0
    %3860 = vmatprep.subr.mxu0 0.0
    %3861 = vmatpush1.msra.mxu0 0.0
    %3862 = vmatprep.subr.mxu0 0.0
    %3863 = vmatpush1.msra.mxu0 0.0
    %3864 = vmatprep.subr.mxu0 0.0
    %3865 = vmatpush1.msra.mxu0 0.0
    %3866 = vmatprep.subr.mxu0 0.0
    %3867 = vmatpush1.msra.mxu0 0.0
    %3868 = vmatprep.subr.mxu0 0.0
    %3869 = vmatpush1.msra.mxu0 0.0
    %3870 = vmatprep.subr.mxu0 0.0
    %3871 = vmatpush1.msra.mxu0 0.0
    %3872 = vmatprep.subr.mxu0 0.0
    %3873 = vmatpush1.msra.mxu0 0.0
    %3874 = vmatprep.subr.mxu0 0.0
    %3875 = vmatpush1.msra.mxu0 0.0
    %3876 = vmatprep.subr.mxu0 0.0
    %3877 = vmatpush1.msra.mxu0 0.0
    %3878 = vmatprep.mubr.f32.mxu0 0.0
    %3879 = vmatmul.mubr.f32.gmra.mrb[0].mxu0 %v3812
    %v3880 = vpop.f32.mrb[0].mxu0
    %v3881 = vadd.f32 %v3808, %v3880
    %v3882 = vpop.f32.mrb[0].mxu0
    %3883 = vdwg.mxu0
    %v3884 = vadd.f32 %v3881, %v3588
    %v3886 = vsel %vm2592, %v3416, 0
    %3888 = vmatprep.subr.mxu0 0.0
    %3889 = vmatpush1.msra.mxu0 %v3421
    %3890 = vmatprep.subr.mxu0 0.0
    %3891 = vmatpush1.msra.mxu0 %v3422
    %3892 = vmatprep.subr.mxu0 0.0
    %3893 = vmatpush1.msra.mxu0 %v3423
    %3894 = vmatprep.subr.mxu0 0.0
    %3895 = vmatpush1.msra.mxu0 %v3424
    %3896 = vmatprep.subr.mxu0 0.0
    %3897 = vmatpush1.msra.mxu0 0.0
    %3898 = vmatprep.subr.mxu0 0.0
    %3899 = vmatpush1.msra.mxu0 0.0
    %3900 = vmatprep.subr.mxu0 0.0
    %3901 = vmatpush1.msra.mxu0 0.0
    %3902 = vmatprep.subr.mxu0 0.0
    %3903 = vmatpush1.msra.mxu0 0.0
    %3904 = vmatprep.subr.mxu0 0.0
    %3905 = vmatpush1.msra.mxu0 0.0
    %3906 = vmatprep.subr.mxu0 0.0
    %3907 = vmatpush1.msra.mxu0 0.0
    %3908 = vmatprep.subr.mxu0 0.0
    %3909 = vmatpush1.msra.mxu0 0.0
    %3910 = vmatprep.subr.mxu0 0.0
    %3911 = vmatpush1.msra.mxu0 0.0
    %3912 = vmatprep.subr.mxu0 0.0
    %3913 = vmatpush1.msra.mxu0 0.0
    %3914 = vmatprep.subr.mxu0 0.0
    %3915 = vmatpush1.msra.mxu0 0.0
    %3916 = vmatprep.subr.mxu0 0.0
    %3917 = vmatpush1.msra.mxu0 0.0
    %3918 = vmatprep.subr.mxu0 0.0
    %3919 = vmatpush1.msra.mxu0 0.0
    %3920 = vmatprep.subr.mxu0 0.0
    %3921 = vmatpush1.msra.mxu0 0.0
    %3922 = vmatprep.subr.mxu0 0.0
    %3923 = vmatpush1.msra.mxu0 0.0
    %3924 = vmatprep.subr.mxu0 0.0
    %3925 = vmatpush1.msra.mxu0 0.0
    %3926 = vmatprep.subr.mxu0 0.0
    %3927 = vmatpush1.msra.mxu0 0.0
    %3928 = vmatprep.subr.mxu0 0.0
    %3929 = vmatpush1.msra.mxu0 0.0
    %3930 = vmatprep.subr.mxu0 0.0
    %3931 = vmatpush1.msra.mxu0 0.0
    %3932 = vmatprep.subr.mxu0 0.0
    %3933 = vmatpush1.msra.mxu0 0.0
    %3934 = vmatprep.subr.mxu0 0.0
    %3935 = vmatpush1.msra.mxu0 0.0
    %3936 = vmatprep.subr.mxu0 0.0
    %3937 = vmatpush1.msra.mxu0 0.0
    %3938 = vmatprep.subr.mxu0 0.0
    %3939 = vmatpush1.msra.mxu0 0.0
    %3940 = vmatprep.subr.mxu0 0.0
    %3941 = vmatpush1.msra.mxu0 0.0
    %3942 = vmatprep.subr.mxu0 0.0
    %3943 = vmatpush1.msra.mxu0 0.0
    %3944 = vmatprep.subr.mxu0 0.0
    %3945 = vmatpush1.msra.mxu0 0.0
    %3946 = vmatprep.subr.mxu0 0.0
    %3947 = vmatpush1.msra.mxu0 0.0
    %3948 = vmatprep.subr.mxu0 0.0
    %3949 = vmatpush1.msra.mxu0 0.0
    %3950 = vmatprep.subr.mxu0 0.0
    %3951 = vmatpush1.msra.mxu0 0.0
    %3952 = vmatprep.mubr.f32.mxu0 0.0
    %3953 = vmatmul.mubr.f32.gmra.mrb[0].mxu0 %v3886
    %v3954 = vpop.f32.mrb[0].mxu0
    %v3955 = vadd.f32 0.0, %v3954
    %v3956 = vpop.f32.mrb[0].mxu0
    %3957 = vdwg.mxu0
    %v3959 = vsel %vm2592, %v3415, 0
    %3961 = vmatprep.subr.mxu0 0.0
    %3962 = vmatpush1.msra.mxu0 %v3417
    %3963 = vmatprep.subr.mxu0 0.0
    %3964 = vmatpush1.msra.mxu0 %v3418
    %3965 = vmatprep.subr.mxu0 0.0
    %3966 = vmatpush1.msra.mxu0 %v3419
    %3967 = vmatprep.subr.mxu0 0.0
    %3968 = vmatpush1.msra.mxu0 %v3420
    %3969 = vmatprep.subr.mxu0 0.0
    %3970 = vmatpush1.msra.mxu0 0.0
    %3971 = vmatprep.subr.mxu0 0.0
    %3972 = vmatpush1.msra.mxu0 0.0
    %3973 = vmatprep.subr.mxu0 0.0
    %3974 = vmatpush1.msra.mxu0 0.0
    %3975 = vmatprep.subr.mxu0 0.0
    %3976 = vmatpush1.msra.mxu0 0.0
    %3977 = vmatprep.subr.mxu0 0.0
    %3978 = vmatpush1.msra.mxu0 0.0
    %3979 = vmatprep.subr.mxu0 0.0
    %3980 = vmatpush1.msra.mxu0 0.0
    %3981 = vmatprep.subr.mxu0 0.0
    %3982 = vmatpush1.msra.mxu0 0.0
    %3983 = vmatprep.subr.mxu0 0.0
    %3984 = vmatpush1.msra.mxu0 0.0
    %3985 = vmatprep.subr.mxu0 0.0
    %3986 = vmatpush1.msra.mxu0 0.0
    %3987 = vmatprep.subr.mxu0 0.0
    %3988 = vmatpush1.msra.mxu0 0.0
    %3989 = vmatprep.subr.mxu0 0.0
    %3990 = vmatpush1.msra.mxu0 0.0
    %3991 = vmatprep.subr.mxu0 0.0
    %3992 = vmatpush1.msra.mxu0 0.0
    %3993 = vmatprep.subr.mxu0 0.0
    %3994 = vmatpush1.msra.mxu0 0.0
    %3995 = vmatprep.subr.mxu0 0.0
    %3996 = vmatpush1.msra.mxu0 0.0
    %3997 = vmatprep.subr.mxu0 0.0
    %3998 = vmatpush1.msra.mxu0 0.0
    %3999 = vmatprep.subr.mxu0 0.0
    %4000 = vmatpush1.msra.mxu0 0.0
    %4001 = vmatprep.subr.mxu0 0.0
    %4002 = vmatpush1.msra.mxu0 0.0
    %4003 = vmatprep.subr.mxu0 0.0
    %4004 = vmatpush1.msra.mxu0 0.0
    %4005 = vmatprep.subr.mxu0 0.0
    %4006 = vmatpush1.msra.mxu0 0.0
    %4007 = vmatprep.subr.mxu0 0.0
    %4008 = vmatpush1.msra.mxu0 0.0
    %4009 = vmatprep.subr.mxu0 0.0
    %4010 = vmatpush1.msra.mxu0 0.0
    %4011 = vmatprep.subr.mxu0 0.0
    %4012 = vmatpush1.msra.mxu0 0.0
    %4013 = vmatprep.subr.mxu0 0.0
    %4014 = vmatpush1.msra.mxu0 0.0
    %4015 = vmatprep.subr.mxu0 0.0
    %4016 = vmatpush1.msra.mxu0 0.0
    %4017 = vmatprep.subr.mxu0 0.0
    %4018 = vmatpush1.msra.mxu0 0.0
    %4019 = vmatprep.subr.mxu0 0.0
    %4020 = vmatpush1.msra.mxu0 0.0
    %4021 = vmatprep.subr.mxu0 0.0
    %4022 = vmatpush1.msra.mxu0 0.0
    %4023 = vmatprep.subr.mxu0 0.0
    %4024 = vmatpush1.msra.mxu0 0.0
    %4025 = vmatprep.mubr.f32.mxu0 0.0
    %4026 = vmatmul.mubr.f32.gmra.mrb[0].mxu0 %v3959
    %v4027 = vpop.f32.mrb[0].mxu0
    %v4028 = vadd.f32 %v3955, %v4027
    %v4029 = vpop.f32.mrb[0].mxu0
    %4030 = vdwg.mxu0
    %v4031 = vadd.f32 %v4028, %v3588
    %4032 = vmatprep.subr.mxu0 0.0
    %4033 = vmatpush1.msra.mxu0 %v3429
    %4034 = vmatprep.subr.mxu0 0.0
    %4035 = vmatpush1.msra.mxu0 %v3430
    %4036 = vmatprep.subr.mxu0 0.0
    %4037 = vmatpush1.msra.mxu0 %v3431
    %4038 = vmatprep.subr.mxu0 0.0
    %4039 = vmatpush1.msra.mxu0 %v3432
    %4040 = vmatprep.subr.mxu0 0.0
    %4041 = vmatpush1.msra.mxu0 0.0
    %4042 = vmatprep.subr.mxu0 0.0
    %4043 = vmatpush1.msra.mxu0 0.0
    %4044 = vmatprep.subr.mxu0 0.0
    %4045 = vmatpush1.msra.mxu0 0.0
    %4046 = vmatprep.subr.mxu0 0.0
    %4047 = vmatpush1.msra.mxu0 0.0
    %4048 = vmatprep.subr.mxu0 0.0
    %4049 = vmatpush1.msra.mxu0 0.0
    %4050 = vmatprep.subr.mxu0 0.0
    %4051 = vmatpush1.msra.mxu0 0.0
    %4052 = vmatprep.subr.mxu0 0.0
    %4053 = vmatpush1.msra.mxu0 0.0
    %4054 = vmatprep.subr.mxu0 0.0
    %4055 = vmatpush1.msra.mxu0 0.0
    %4056 = vmatprep.subr.mxu0 0.0
    %4057 = vmatpush1.msra.mxu0 0.0
    %4058 = vmatprep.subr.mxu0 0.0
    %4059 = vmatpush1.msra.mxu0 0.0
    %4060 = vmatprep.subr.mxu0 0.0
    %4061 = vmatpush1.msra.mxu0 0.0
    %4062 = vmatprep.subr.mxu0 0.0
    %4063 = vmatpush1.msra.mxu0 0.0
    %4064 = vmatprep.subr.mxu0 0.0
    %4065 = vmatpush1.msra.mxu0 0.0
    %4066 = vmatprep.subr.mxu0 0.0
    %4067 = vmatpush1.msra.mxu0 0.0
    %4068 = vmatprep.subr.mxu0 0.0
    %4069 = vmatpush1.msra.mxu0 0.0
    %4070 = vmatprep.subr.mxu0 0.0
    %4071 = vmatpush1.msra.mxu0 0.0
    %4072 = vmatprep.subr.mxu0 0.0
    %4073 = vmatpush1.msra.mxu0 0.0
    %4074 = vmatprep.subr.mxu0 0.0
    %4075 = vmatpush1.msra.mxu0 0.0
    %4076 = vmatprep.subr.mxu0 0.0
    %4077 = vmatpush1.msra.mxu0 0.0
    %4078 = vmatprep.subr.mxu0 0.0
    %4079 = vmatpush1.msra.mxu0 0.0
    %4080 = vmatprep.subr.mxu0 0.0
    %4081 = vmatpush1.msra.mxu0 0.0
    %4082 = vmatprep.subr.mxu0 0.0
    %4083 = vmatpush1.msra.mxu0 0.0
    %4084 = vmatprep.subr.mxu0 0.0
    %4085 = vmatpush1.msra.mxu0 0.0
    %4086 = vmatprep.subr.mxu0 0.0
    %4087 = vmatpush1.msra.mxu0 0.0
    %4088 = vmatprep.subr.mxu0 0.0
    %4089 = vmatpush1.msra.mxu0 0.0
    %4090 = vmatprep.subr.mxu0 0.0
    %4091 = vmatpush1.msra.mxu0 0.0
    %4092 = vmatprep.subr.mxu0 0.0
    %4093 = vmatpush1.msra.mxu0 0.0
    %4094 = vmatprep.subr.mxu0 0.0
    %4095 = vmatpush1.msra.mxu0 0.0
    %4096 = vmatprep.mubr.f32.mxu0 0.0
    %4097 = vmatmul.mubr.f32.gmra.mrb[0].mxu0 %v3439
    %v4098 = vpop.f32.mrb[0].mxu0
    %v4099 = vadd.f32 0.0, %v4098
    %v4100 = vpop.f32.mrb[0].mxu0
    %4101 = vdwg.mxu0
    %4102 = vmatprep.subr.mxu0 0.0
    %4103 = vmatpush1.msra.mxu0 %v3425
    %4104 = vmatprep.subr.mxu0 0.0
    %4105 = vmatpush1.msra.mxu0 %v3426
    %4106 = vmatprep.subr.mxu0 0.0
    %4107 = vmatpush1.msra.mxu0 %v3427
    %4108 = vmatprep.subr.mxu0 0.0
    %4109 = vmatpush1.msra.mxu0 %v3428
    %4110 = vmatprep.subr.mxu0 0.0
    %4111 = vmatpush1.msra.mxu0 0.0
    %4112 = vmatprep.subr.mxu0 0.0
    %4113 = vmatpush1.msra.mxu0 0.0
    %4114 = vmatprep.subr.mxu0 0.0
    %4115 = vmatpush1.msra.mxu0 0.0
    %4116 = vmatprep.subr.mxu0 0.0
    %4117 = vmatpush1.msra.mxu0 0.0
    %4118 = vmatprep.subr.mxu0 0.0
    %4119 = vmatpush1.msra.mxu0 0.0
    %4120 = vmatprep.subr.mxu0 0.0
    %4121 = vmatpush1.msra.mxu0 0.0
    %4122 = vmatprep.subr.mxu0 0.0
    %4123 = vmatpush1.msra.mxu0 0.0
    %4124 = vmatprep.subr.mxu0 0.0
    %4125 = vmatpush1.msra.mxu0 0.0
    %4126 = vmatprep.subr.mxu0 0.0
    %4127 = vmatpush1.msra.mxu0 0.0
    %4128 = vmatprep.subr.mxu0 0.0
    %4129 = vmatpush1.msra.mxu0 0.0
    %4130 = vmatprep.subr.mxu0 0.0
    %4131 = vmatpush1.msra.mxu0 0.0
    %4132 = vmatprep.subr.mxu0 0.0
    %4133 = vmatpush1.msra.mxu0 0.0
    %4134 = vmatprep.subr.mxu0 0.0
    %4135 = vmatpush1.msra.mxu0 0.0
    %4136 = vmatprep.subr.mxu0 0.0
    %4137 = vmatpush1.msra.mxu0 0.0
    %4138 = vmatprep.subr.mxu0 0.0
    %4139 = vmatpush1.msra.mxu0 0.0
    %4140 = vmatprep.subr.mxu0 0.0
    %4141 = vmatpush1.msra.mxu0 0.0
    %4142 = vmatprep.subr.mxu0 0.0
    %4143 = vmatpush1.msra.mxu0 0.0
    %4144 = vmatprep.subr.mxu0 0.0
    %4145 = vmatpush1.msra.mxu0 0.0
    %4146 = vmatprep.subr.mxu0 0.0
    %4147 = vmatpush1.msra.mxu0 0.0
    %4148 = vmatprep.subr.mxu0 0.0
    %4149 = vmatpush1.msra.mxu0 0.0
    %4150 = vmatprep.subr.mxu0 0.0
    %4151 = vmatpush1.msra.mxu0 0.0
    %4152 = vmatprep.subr.mxu0 0.0
    %4153 = vmatpush1.msra.mxu0 0.0
    %4154 = vmatprep.subr.mxu0 0.0
    %4155 = vmatpush1.msra.mxu0 0.0
    %4156 = vmatprep.subr.mxu0 0.0
    %4157 = vmatpush1.msra.mxu0 0.0
    %4158 = vmatprep.subr.mxu0 0.0
    %4159 = vmatpush1.msra.mxu0 0.0
    %4160 = vmatprep.subr.mxu0 0.0
    %4161 = vmatpush1.msra.mxu0 0.0
    %4162 = vmatprep.subr.mxu0 0.0
    %4163 = vmatpush1.msra.mxu0 0.0
    %4164 = vmatprep.subr.mxu0 0.0
    %4165 = vmatpush1.msra.mxu0 0.0
    %4166 = vmatprep.mubr.f32.mxu0 0.0
    %4167 = vmatmul.mubr.f32.gmra.mrb[0].mxu0 %v3512
    %v4168 = vpop.f32.mrb[0].mxu0
    %v4169 = vadd.f32 %v4099, %v4168
    %v4170 = vpop.f32.mrb[0].mxu0
    %4171 = vdwg.mxu0
    %4172 = vmatprep.subr.mxu0 0.0
    %4173 = vmatpush1.msra.mxu0 %v3429
    %4174 = vmatprep.subr.mxu0 0.0
    %4175 = vmatpush1.msra.mxu0 %v3430
    %4176 = vmatprep.subr.mxu0 0.0
    %4177 = vmatpush1.msra.mxu0 %v3431
    %4178 = vmatprep.subr.mxu0 0.0
    %4179 = vmatpush1.msra.mxu0 %v3432
    %4180 = vmatprep.subr.mxu0 0.0
    %4181 = vmatpush1.msra.mxu0 0.0
    %4182 = vmatprep.subr.mxu0 0.0
    %4183 = vmatpush1.msra.mxu0 0.0
    %4184 = vmatprep.subr.mxu0 0.0
    %4185 = vmatpush1.msra.mxu0 0.0
    %4186 = vmatprep.subr.mxu0 0.0
    %4187 = vmatpush1.msra.mxu0 0.0
    %4188 = vmatprep.subr.mxu0 0.0
    %4189 = vmatpush1.msra.mxu0 0.0
    %4190 = vmatprep.subr.mxu0 0.0
    %4191 = vmatpush1.msra.mxu0 0.0
    %4192 = vmatprep.subr.mxu0 0.0
    %4193 = vmatpush1.msra.mxu0 0.0
    %4194 = vmatprep.subr.mxu0 0.0
    %4195 = vmatpush1.msra.mxu0 0.0
    %4196 = vmatprep.subr.mxu0 0.0
    %4197 = vmatpush1.msra.mxu0 0.0
    %4198 = vmatprep.subr.mxu0 0.0
    %4199 = vmatpush1.msra.mxu0 0.0
    %4200 = vmatprep.subr.mxu0 0.0
    %4201 = vmatpush1.msra.mxu0 0.0
    %4202 = vmatprep.subr.mxu0 0.0
    %4203 = vmatpush1.msra.mxu0 0.0
    %4204 = vmatprep.subr.mxu0 0.0
    %4205 = vmatpush1.msra.mxu0 0.0
    %4206 = vmatprep.subr.mxu0 0.0
    %4207 = vmatpush1.msra.mxu0 0.0
    %4208 = vmatprep.subr.mxu0 0.0
    %4209 = vmatpush1.msra.mxu0 0.0
    %4210 = vmatprep.subr.mxu0 0.0
    %4211 = vmatpush1.msra.mxu0 0.0
    %4212 = vmatprep.subr.mxu0 0.0
    %4213 = vmatpush1.msra.mxu0 0.0
    %4214 = vmatprep.subr.mxu0 0.0
    %4215 = vmatpush1.msra.mxu0 0.0
    %4216 = vmatprep.subr.mxu0 0.0
    %4217 = vmatpush1.msra.mxu0 0.0
    %4218 = vmatprep.subr.mxu0 0.0
    %4219 = vmatpush1.msra.mxu0 0.0
    %4220 = vmatprep.subr.mxu0 0.0
    %4221 = vmatpush1.msra.mxu0 0.0
    %4222 = vmatprep.subr.mxu0 0.0
    %4223 = vmatpush1.msra.mxu0 0.0
    %4224 = vmatprep.subr.mxu0 0.0
    %4225 = vmatpush1.msra.mxu0 0.0
    %4226 = vmatprep.subr.mxu0 0.0
    %4227 = vmatpush1.msra.mxu0 0.0
    %4228 = vmatprep.subr.mxu0 0.0
    %4229 = vmatpush1.msra.mxu0 0.0
    %4230 = vmatprep.subr.mxu0 0.0
    %4231 = vmatpush1.msra.mxu0 0.0
    %4232 = vmatprep.subr.mxu0 0.0
    %4233 = vmatpush1.msra.mxu0 0.0
    %4234 = vmatprep.subr.mxu0 0.0
    %4235 = vmatpush1.msra.mxu0 0.0
    %4236 = vmatprep.mubr.f32.mxu0 0.0
    %4237 = vmatmul.mubr.f32.gmra.mrb[0].mxu0 %v3592
    %v4238 = vpop.f32.mrb[0].mxu0
    %v4239 = vadd.f32 0.0, %v4238
    %v4240 = vpop.f32.mrb[0].mxu0
    %4241 = vdwg.mxu0
    %4242 = vmatprep.subr.mxu0 0.0
    %4243 = vmatpush1.msra.mxu0 %v3425
    %4244 = vmatprep.subr.mxu0 0.0
    %4245 = vmatpush1.msra.mxu0 %v3426
    %4246 = vmatprep.subr.mxu0 0.0
    %4247 = vmatpush1.msra.mxu0 %v3427
    %4248 = vmatprep.subr.mxu0 0.0
    %4249 = vmatpush1.msra.mxu0 %v3428
    %4250 = vmatprep.subr.mxu0 0.0
    %4251 = vmatpush1.msra.mxu0 0.0
    %4252 = vmatprep.subr.mxu0 0.0
    %4253 = vmatpush1.msra.mxu0 0.0
    %4254 = vmatprep.subr.mxu0 0.0
    %4255 = vmatpush1.msra.mxu0 0.0
    %4256 = vmatprep.subr.mxu0 0.0
    %4257 = vmatpush1.msra.mxu0 0.0
    %4258 = vmatprep.subr.mxu0 0.0
    %4259 = vmatpush1.msra.mxu0 0.0
    %4260 = vmatprep.subr.mxu0 0.0
    %4261 = vmatpush1.msra.mxu0 0.0
    %4262 = vmatprep.subr.mxu0 0.0
    %4263 = vmatpush1.msra.mxu0 0.0
    %4264 = vmatprep.subr.mxu0 0.0
    %4265 = vmatpush1.msra.mxu0 0.0
    %4266 = vmatprep.subr.mxu0 0.0
    %4267 = vmatpush1.msra.mxu0 0.0
    %4268 = vmatprep.subr.mxu0 0.0
    %4269 = vmatpush1.msra.mxu0 0.0
    %4270 = vmatprep.subr.mxu0 0.0
    %4271 = vmatpush1.msra.mxu0 0.0
    %4272 = vmatprep.subr.mxu0 0.0
    %4273 = vmatpush1.msra.mxu0 0.0
    %4274 = vmatprep.subr.mxu0 0.0
    %4275 = vmatpush1.msra.mxu0 0.0
    %4276 = vmatprep.subr.mxu0 0.0
    %4277 = vmatpush1.msra.mxu0 0.0
    %4278 = vmatprep.subr.mxu0 0.0
    %4279 = vmatpush1.msra.mxu0 0.0
    %4280 = vmatprep.subr.mxu0 0.0
    %4281 = vmatpush1.msra.mxu0 0.0
    %4282 = vmatprep.subr.mxu0 0.0
    %4283 = vmatpush1.msra.mxu0 0.0
    %4284 = vmatprep.subr.mxu0 0.0
    %4285 = vmatpush1.msra.mxu0 0.0
    %4286 = vmatprep.subr.mxu0 0.0
    %4287 = vmatpush1.msra.mxu0 0.0
    %4288 = vmatprep.subr.mxu0 0.0
    %4289 = vmatpush1.msra.mxu0 0.0
    %4290 = vmatprep.subr.mxu0 0.0
    %4291 = vmatpush1.msra.mxu0 0.0
    %4292 = vmatprep.subr.mxu0 0.0
    %4293 = vmatpush1.msra.mxu0 0.0
    %4294 = vmatprep.subr.mxu0 0.0
    %4295 = vmatpush1.msra.mxu0 0.0
    %4296 = vmatprep.subr.mxu0 0.0
    %4297 = vmatpush1.msra.mxu0 0.0
    %4298 = vmatprep.subr.mxu0 0.0
    %4299 = vmatpush1.msra.mxu0 0.0
    %4300 = vmatprep.subr.mxu0 0.0
    %4301 = vmatpush1.msra.mxu0 0.0
    %4302 = vmatprep.subr.mxu0 0.0
    %4303 = vmatpush1.msra.mxu0 0.0
    %4304 = vmatprep.subr.mxu0 0.0
    %4305 = vmatpush1.msra.mxu0 0.0
    %4306 = vmatprep.mubr.f32.mxu0 0.0
    %4307 = vmatmul.mubr.f32.gmra.mrb[0].mxu0 %v3665
    %v4308 = vpop.f32.mrb[0].mxu0
    %v4309 = vadd.f32 %v4239, %v4308
    %v4310 = vpop.f32.mrb[0].mxu0
    %4311 = vdwg.mxu0
    %4312 = vmatprep.subr.mxu0 0.0
    %4313 = vmatpush1.msra.mxu0 %v3429
    %4314 = vmatprep.subr.mxu0 0.0
    %4315 = vmatpush1.msra.mxu0 %v3430
    %4316 = vmatprep.subr.mxu0 0.0
    %4317 = vmatpush1.msra.mxu0 %v3431
    %4318 = vmatprep.subr.mxu0 0.0
    %4319 = vmatpush1.msra.mxu0 %v3432
    %4320 = vmatprep.subr.mxu0 0.0
    %4321 = vmatpush1.msra.mxu0 0.0
    %4322 = vmatprep.subr.mxu0 0.0
    %4323 = vmatpush1.msra.mxu0 0.0
    %4324 = vmatprep.subr.mxu0 0.0
    %4325 = vmatpush1.msra.mxu0 0.0
    %4326 = vmatprep.subr.mxu0 0.0
    %4327 = vmatpush1.msra.mxu0 0.0
    %4328 = vmatprep.subr.mxu0 0.0
    %4329 = vmatpush1.msra.mxu0 0.0
    %4330 = vmatprep.subr.mxu0 0.0
    %4331 = vmatpush1.msra.mxu0 0.0
    %4332 = vmatprep.subr.mxu0 0.0
    %4333 = vmatpush1.msra.mxu0 0.0
    %4334 = vmatprep.subr.mxu0 0.0
    %4335 = vmatpush1.msra.mxu0 0.0
    %4336 = vmatprep.subr.mxu0 0.0
    %4337 = vmatpush1.msra.mxu0 0.0
    %4338 = vmatprep.subr.mxu0 0.0
    %4339 = vmatpush1.msra.mxu0 0.0
    %4340 = vmatprep.subr.mxu0 0.0
    %4341 = vmatpush1.msra.mxu0 0.0
    %4342 = vmatprep.subr.mxu0 0.0
    %4343 = vmatpush1.msra.mxu0 0.0
    %4344 = vmatprep.subr.mxu0 0.0
    %4345 = vmatpush1.msra.mxu0 0.0
    %4346 = vmatprep.subr.mxu0 0.0
    %4347 = vmatpush1.msra.mxu0 0.0
    %4348 = vmatprep.subr.mxu0 0.0
    %4349 = vmatpush1.msra.mxu0 0.0
    %4350 = vmatprep.subr.mxu0 0.0
    %4351 = vmatpush1.msra.mxu0 0.0
    %4352 = vmatprep.subr.mxu0 0.0
    %4353 = vmatpush1.msra.mxu0 0.0
    %4354 = vmatprep.subr.mxu0 0.0
    %4355 = vmatpush1.msra.mxu0 0.0
    %4356 = vmatprep.subr.mxu0 0.0
    %4357 = vmatpush1.msra.mxu0 0.0
    %4358 = vmatprep.subr.mxu0 0.0
    %4359 = vmatpush1.msra.mxu0 0.0
    %4360 = vmatprep.subr.mxu0 0.0
    %4361 = vmatpush1.msra.mxu0 0.0
    %4362 = vmatprep.subr.mxu0 0.0
    %4363 = vmatpush1.msra.mxu0 0.0
    %4364 = vmatprep.subr.mxu0 0.0
    %4365 = vmatpush1.msra.mxu0 0.0
    %4366 = vmatprep.subr.mxu0 0.0
    %4367 = vmatpush1.msra.mxu0 0.0
    %4368 = vmatprep.subr.mxu0 0.0
    %4369 = vmatpush1.msra.mxu0 0.0
    %4370 = vmatprep.subr.mxu0 0.0
    %4371 = vmatpush1.msra.mxu0 0.0
    %4372 = vmatprep.subr.mxu0 0.0
    %4373 = vmatpush1.msra.mxu0 0.0
    %4374 = vmatprep.subr.mxu0 0.0
    %4375 = vmatpush1.msra.mxu0 0.0
    %4376 = vmatprep.mubr.f32.mxu0 0.0
    %4377 = vmatmul.mubr.f32.gmra.mrb[0].mxu0 %v3739
    %v4378 = vpop.f32.mrb[0].mxu0
    %v4379 = vadd.f32 0.0, %v4378
    %v4380 = vpop.f32.mrb[0].mxu0
    %4381 = vdwg.mxu0
    %4382 = vmatprep.subr.mxu0 0.0
    %4383 = vmatpush1.msra.mxu0 %v3425
    %4384 = vmatprep.subr.mxu0 0.0
    %4385 = vmatpush1.msra.mxu0 %v3426
    %4386 = vmatprep.subr.mxu0 0.0
    %4387 = vmatpush1.msra.mxu0 %v3427
    %4388 = vmatprep.subr.mxu0 0.0
    %4389 = vmatpush1.msra.mxu0 %v3428
    %4390 = vmatprep.subr.mxu0 0.0
    %4391 = vmatpush1.msra.mxu0 0.0
    %4392 = vmatprep.subr.mxu0 0.0
    %4393 = vmatpush1.msra.mxu0 0.0
    %4394 = vmatprep.subr.mxu0 0.0
    %4395 = vmatpush1.msra.mxu0 0.0
    %4396 = vmatprep.subr.mxu0 0.0
    %4397 = vmatpush1.msra.mxu0 0.0
    %4398 = vmatprep.subr.mxu0 0.0
    %4399 = vmatpush1.msra.mxu0 0.0
    %4400 = vmatprep.subr.mxu0 0.0
    %4401 = vmatpush1.msra.mxu0 0.0
    %4402 = vmatprep.subr.mxu0 0.0
    %4403 = vmatpush1.msra.mxu0 0.0
    %4404 = vmatprep.subr.mxu0 0.0
    %4405 = vmatpush1.msra.mxu0 0.0
    %4406 = vmatprep.subr.mxu0 0.0
    %4407 = vmatpush1.msra.mxu0 0.0
    %4408 = vmatprep.subr.mxu0 0.0
    %4409 = vmatpush1.msra.mxu0 0.0
    %4410 = vmatprep.subr.mxu0 0.0
    %4411 = vmatpush1.msra.mxu0 0.0
    %4412 = vmatprep.subr.mxu0 0.0
    %4413 = vmatpush1.msra.mxu0 0.0
    %4414 = vmatprep.subr.mxu0 0.0
    %4415 = vmatpush1.msra.mxu0 0.0
    %4416 = vmatprep.subr.mxu0 0.0
    %4417 = vmatpush1.msra.mxu0 0.0
    %4418 = vmatprep.subr.mxu0 0.0
    %4419 = vmatpush1.msra.mxu0 0.0
    %4420 = vmatprep.subr.mxu0 0.0
    %4421 = vmatpush1.msra.mxu0 0.0
    %4422 = vmatprep.subr.mxu0 0.0
    %4423 = vmatpush1.msra.mxu0 0.0
    %4424 = vmatprep.subr.mxu0 0.0
    %4425 = vmatpush1.msra.mxu0 0.0
    %4426 = vmatprep.subr.mxu0 0.0
    %4427 = vmatpush1.msra.mxu0 0.0
    %4428 = vmatprep.subr.mxu0 0.0
    %4429 = vmatpush1.msra.mxu0 0.0
    %4430 = vmatprep.subr.mxu0 0.0
    %4431 = vmatpush1.msra.mxu0 0.0
    %4432 = vmatprep.subr.mxu0 0.0
    %4433 = vmatpush1.msra.mxu0 0.0
    %4434 = vmatprep.subr.mxu0 0.0
    %4435 = vmatpush1.msra.mxu0 0.0
    %4436 = vmatprep.subr.mxu0 0.0
    %4437 = vmatpush1.msra.mxu0 0.0
    %4438 = vmatprep.subr.mxu0 0.0
    %4439 = vmatpush1.msra.mxu0 0.0
    %4440 = vmatprep.subr.mxu0 0.0
    %4441 = vmatpush1.msra.mxu0 0.0
    %4442 = vmatprep.subr.mxu0 0.0
    %4443 = vmatpush1.msra.mxu0 0.0
    %4444 = vmatprep.subr.mxu0 0.0
    %4445 = vmatpush1.msra.mxu0 0.0
    %4446 = vmatprep.mubr.f32.mxu0 0.0
    %4447 = vmatmul.mubr.f32.gmra.mrb[0].mxu0 %v3812
    %v4448 = vpop.f32.mrb[0].mxu0
    %v4449 = vadd.f32 %v4379, %v4448
    %v4450 = vpop.f32.mrb[0].mxu0
    %4451 = vdwg.mxu0
    %4452 = vmatprep.subr.mxu0 0.0
    %4453 = vmatpush1.msra.mxu0 %v3429
    %4454 = vmatprep.subr.mxu0 0.0
    %4455 = vmatpush1.msra.mxu0 %v3430
    %4456 = vmatprep.subr.mxu0 0.0
    %4457 = vmatpush1.msra.mxu0 %v3431
    %4458 = vmatprep.subr.mxu0 0.0
    %4459 = vmatpush1.msra.mxu0 %v3432
    %4460 = vmatprep.subr.mxu0 0.0
    %4461 = vmatpush1.msra.mxu0 0.0
    %4462 = vmatprep.subr.mxu0 0.0
    %4463 = vmatpush1.msra.mxu0 0.0
    %4464 = vmatprep.subr.mxu0 0.0
    %4465 = vmatpush1.msra.mxu0 0.0
    %4466 = vmatprep.subr.mxu0 0.0
    %4467 = vmatpush1.msra.mxu0 0.0
    %4468 = vmatprep.subr.mxu0 0.0
    %4469 = vmatpush1.msra.mxu0 0.0
    %4470 = vmatprep.subr.mxu0 0.0
    %4471 = vmatpush1.msra.mxu0 0.0
    %4472 = vmatprep.subr.mxu0 0.0
    %4473 = vmatpush1.msra.mxu0 0.0
    %4474 = vmatprep.subr.mxu0 0.0
    %4475 = vmatpush1.msra.mxu0 0.0
    %4476 = vmatprep.subr.mxu0 0.0
    %4477 = vmatpush1.msra.mxu0 0.0
    %4478 = vmatprep.subr.mxu0 0.0
    %4479 = vmatpush1.msra.mxu0 0.0
    %4480 = vmatprep.subr.mxu0 0.0
    %4481 = vmatpush1.msra.mxu0 0.0
    %4482 = vmatprep.subr.mxu0 0.0
    %4483 = vmatpush1.msra.mxu0 0.0
    %4484 = vmatprep.subr.mxu0 0.0
    %4485 = vmatpush1.msra.mxu0 0.0
    %4486 = vmatprep.subr.mxu0 0.0
    %4487 = vmatpush1.msra.mxu0 0.0
    %4488 = vmatprep.subr.mxu0 0.0
    %4489 = vmatpush1.msra.mxu0 0.0
    %4490 = vmatprep.subr.mxu0 0.0
    %4491 = vmatpush1.msra.mxu0 0.0
    %4492 = vmatprep.subr.mxu0 0.0
    %4493 = vmatpush1.msra.mxu0 0.0
    %4494 = vmatprep.subr.mxu0 0.0
    %4495 = vmatpush1.msra.mxu0 0.0
    %4496 = vmatprep.subr.mxu0 0.0
    %4497 = vmatpush1.msra.mxu0 0.0
    %4498 = vmatprep.subr.mxu0 0.0
    %4499 = vmatpush1.msra.mxu0 0.0
    %4500 = vmatprep.subr.mxu0 0.0
    %4501 = vmatpush1.msra.mxu0 0.0
    %4502 = vmatprep.subr.mxu0 0.0
    %4503 = vmatpush1.msra.mxu0 0.0
    %4504 = vmatprep.subr.mxu0 0.0
    %4505 = vmatpush1.msra.mxu0 0.0
    %4506 = vmatprep.subr.mxu0 0.0
    %4507 = vmatpush1.msra.mxu0 0.0
    %4508 = vmatprep.subr.mxu0 0.0
    %4509 = vmatpush1.msra.mxu0 0.0
    %4510 = vmatprep.subr.mxu0 0.0
    %4511 = vmatpush1.msra.mxu0 0.0
    %4512 = vmatprep.subr.mxu0 0.0
    %4513 = vmatpush1.msra.mxu0 0.0
    %4514 = vmatprep.subr.mxu0 0.0
    %4515 = vmatpush1.msra.mxu0 0.0
    %4516 = vmatprep.mubr.f32.mxu0 0.0
    %4517 = vmatmul.mubr.f32.gmra.mrb[0].mxu0 %v3886
    %v4518 = vpop.f32.mrb[0].mxu0
    %v4519 = vadd.f32 0.0, %v4518
    %v4520 = vpop.f32.mrb[0].mxu0
    %4521 = vdwg.mxu0
    %4522 = vmatprep.subr.mxu0 0.0
    %4523 = vmatpush1.msra.mxu0 %v3425
    %4524 = vmatprep.subr.mxu0 0.0
    %4525 = vmatpush1.msra.mxu0 %v3426
    %4526 = vmatprep.subr.mxu0 0.0
    %4527 = vmatpush1.msra.mxu0 %v3427
    %4528 = vmatprep.subr.mxu0 0.0
    %4529 = vmatpush1.msra.mxu0 %v3428
    %4530 = vmatprep.subr.mxu0 0.0
    %4531 = vmatpush1.msra.mxu0 0.0
    %4532 = vmatprep.subr.mxu0 0.0
    %4533 = vmatpush1.msra.mxu0 0.0
    %4534 = vmatprep.subr.mxu0 0.0
    %4535 = vmatpush1.msra.mxu0 0.0
    %4536 = vmatprep.subr.mxu0 0.0
    %4537 = vmatpush1.msra.mxu0 0.0
    %4538 = vmatprep.subr.mxu0 0.0
    %4539 = vmatpush1.msra.mxu0 0.0
    %4540 = vmatprep.subr.mxu0 0.0
    %4541 = vmatpush1.msra.mxu0 0.0
    %4542 = vmatprep.subr.mxu0 0.0
    %4543 = vmatpush1.msra.mxu0 0.0
    %4544 = vmatprep.subr.mxu0 0.0
    %4545 = vmatpush1.msra.mxu0 0.0
    %4546 = vmatprep.subr.mxu0 0.0
    %4547 = vmatpush1.msra.mxu0 0.0
    %4548 = vmatprep.subr.mxu0 0.0
    %4549 = vmatpush1.msra.mxu0 0.0
    %4550 = vmatprep.subr.mxu0 0.0
    %4551 = vmatpush1.msra.mxu0 0.0
    %4552 = vmatprep.subr.mxu0 0.0
    %4553 = vmatpush1.msra.mxu0 0.0
    %4554 = vmatprep.subr.mxu0 0.0
    %4555 = vmatpush1.msra.mxu0 0.0
    %4556 = vmatprep.subr.mxu0 0.0
    %4557 = vmatpush1.msra.mxu0 0.0
    %4558 = vmatprep.subr.mxu0 0.0
    %4559 = vmatpush1.msra.mxu0 0.0
    %4560 = vmatprep.subr.mxu0 0.0
    %4561 = vmatpush1.msra.mxu0 0.0
    %4562 = vmatprep.subr.mxu0 0.0
    %4563 = vmatpush1.msra.mxu0 0.0
    %4564 = vmatprep.subr.mxu0 0.0
    %4565 = vmatpush1.msra.mxu0 0.0
    %4566 = vmatprep.subr.mxu0 0.0
    %4567 = vmatpush1.msra.mxu0 0.0
    %4568 = vmatprep.subr.mxu0 0.0
    %4569 = vmatpush1.msra.mxu0 0.0
    %4570 = vmatprep.subr.mxu0 0.0
    %4571 = vmatpush1.msra.mxu0 0.0
    %4572 = vmatprep.subr.mxu0 0.0
    %4573 = vmatpush1.msra.mxu0 0.0
    %4574 = vmatprep.subr.mxu0 0.0
    %4575 = vmatpush1.msra.mxu0 0.0
    %4576 = vmatprep.subr.mxu0 0.0
    %4577 = vmatpush1.msra.mxu0 0.0
    %4578 = vmatprep.subr.mxu0 0.0
    %4579 = vmatpush1.msra.mxu0 0.0
    %4580 = vmatprep.subr.mxu0 0.0
    %4581 = vmatpush1.msra.mxu0 0.0
    %4582 = vmatprep.subr.mxu0 0.0
    %4583 = vmatpush1.msra.mxu0 0.0
    %4584 = vmatprep.subr.mxu0 0.0
    %4585 = vmatpush1.msra.mxu0 0.0
    %4586 = vmatprep.mubr.f32.mxu0 0.0
    %4587 = vmatmul.mubr.f32.gmra.mrb[0].mxu0 %v3959
    %v4588 = vpop.f32.mrb[0].mxu0
    %v4589 = vadd.f32 %v4519, %v4588
    %v4590 = vpop.f32.mrb[0].mxu0
    %4591 = vdwg.mxu0
    %v4592 = vadd.f32 %v3590, %v4589
    %4593 = vmatprep.subr.mxu0 0.0
    %4594 = vmatpush1.msra.mxu0 %v3434
    %4595 = vmatprep.subr.mxu0 0.0
    %4596 = vmatpush1.msra.mxu0 %v3435
    %4597 = vmatprep.subr.mxu0 0.0
    %4598 = vmatpush1.msra.mxu0 %v3436
    %4599 = vmatprep.subr.mxu0 0.0
    %4600 = vmatpush1.msra.mxu0 %v3437
    %4601 = vmatprep.subr.mxu0 0.0
    %4602 = vmatpush1.msra.mxu0 0.0
    %4603 = vmatprep.subr.mxu0 0.0
    %4604 = vmatpush1.msra.mxu0 0.0
    %4605 = vmatprep.subr.mxu0 0.0
    %4606 = vmatpush1.msra.mxu0 0.0
    %4607 = vmatprep.subr.mxu0 0.0
    %4608 = vmatpush1.msra.mxu0 0.0
    %4609 = vmatprep.subr.mxu0 0.0
    %4610 = vmatpush1.msra.mxu0 0.0
    %4611 = vmatprep.subr.mxu0 0.0
    %4612 = vmatpush1.msra.mxu0 0.0
    %4613 = vmatprep.subr.mxu0 0.0
    %4614 = vmatpush1.msra.mxu0 0.0
    %4615 = vmatprep.subr.mxu0 0.0
    %4616 = vmatpush1.msra.mxu0 0.0
    %4617 = vmatprep.subr.mxu0 0.0
    %4618 = vmatpush1.msra.mxu0 0.0
    %4619 = vmatprep.subr.mxu0 0.0
    %4620 = vmatpush1.msra.mxu0 0.0
    %4621 = vmatprep.subr.mxu0 0.0
    %4622 = vmatpush1.msra.mxu0 0.0
    %4623 = vmatprep.subr.mxu0 0.0
    %4624 = vmatpush1.msra.mxu0 0.0
    %4625 = vmatprep.subr.mxu0 0.0
    %4626 = vmatpush1.msra.mxu0 0.0
    %4627 = vmatprep.subr.mxu0 0.0
    %4628 = vmatpush1.msra.mxu0 0.0
    %4629 = vmatprep.subr.mxu0 0.0
    %4630 = vmatpush1.msra.mxu0 0.0
    %4631 = vmatprep.subr.mxu0 0.0
    %4632 = vmatpush1.msra.mxu0 0.0
    %4633 = vmatprep.subr.mxu0 0.0
    %4634 = vmatpush1.msra.mxu0 0.0
    %4635 = vmatprep.subr.mxu0 0.0
    %4636 = vmatpush1.msra.mxu0 0.0
    %4637 = vmatprep.subr.mxu0 0.0
    %4638 = vmatpush1.msra.mxu0 0.0
    %4639 = vmatprep.subr.mxu0 0.0
    %4640 = vmatpush1.msra.mxu0 0.0
    %4641 = vmatprep.subr.mxu0 0.0
    %4642 = vmatpush1.msra.mxu0 0.0
    %4643 = vmatprep.subr.mxu0 0.0
    %4644 = vmatpush1.msra.mxu0 0.0
    %4645 = vmatprep.subr.mxu0 0.0
    %4646 = vmatpush1.msra.mxu0 0.0
    %4647 = vmatprep.subr.mxu0 0.0
    %4648 = vmatpush1.msra.mxu0 0.0
    %4649 = vmatprep.subr.mxu0 0.0
    %4650 = vmatpush1.msra.mxu0 0.0
    %4651 = vmatprep.subr.mxu0 0.0
    %4652 = vmatpush1.msra.mxu0 0.0
    %4653 = vmatprep.subr.mxu0 0.0
    %4654 = vmatpush1.msra.mxu0 0.0
    %4655 = vmatprep.subr.mxu0 0.0
    %4656 = vmatpush1.msra.mxu0 0.0
    %4657 = vmatprep.mubr.f32.mxu0 0.0
    %4658 = vmatmul.mubr.f32.gmra.mrb[0].mxu0 %v2594
    %v4659 = vpop.f32.mrb[0].mxu0
    %v4660 = vadd.f32 0.0, %v4659
    %v4661 = vpop.f32.mrb[0].mxu0
    %4662 = vdwg.mxu0
    %v4663 = vadd.f32 %v4592, %v4660
    %v4664 = vxor.u32 %v4663, 2147483648
    %v4665 = vmul.f32 %v4664, 1.442695
    %v4666 = vpow.pop %v4665
    %v4667 = vadd.f32 %v4666, 1.0
    %v4668 = vrcp.pop %v4667
    %v4669 = vmul.f32 1.0, %v4668
    %v4670 = vtanh.pop %v4663
    %v4671 = vmul.f32 %v4669, 0.0
    %4673 = vrot.lane.b32.xlu0 %v4670, 64
    %v4674 = vpop.permute.xlu0 %4673
    %v4676 = vmul.f32 %v4669, %v4674
    %4678 = vrot.lane.b32.xlu0 %v4676, 32
    %v4679 = vpop.permute.xlu0 %4678
    %v4681 = vadd.f32 %v4671, %v4679
    %v4682 = vtanh.pop %v4681
    %4684 = vrot.lane.b32.xlu0 %v4682, 64
    %v4685 = vpop.permute.xlu0 %4684
    %v4687 = vmul.f32 %v4669, %v4685
    %v4688 = vadd.f32 %v3737, %v4449
    %4690 = vrot.lane.b32.xlu0 %v4687, 32
    %v4691 = vpop.permute.xlu0 %4690
    %v4692 = vsel %vm2592, %v4691, 0
    %4694 = vmatprep.subr.mxu0 0.0
    %4695 = vmatpush1.msra.mxu0 %v3434
    %4696 = vmatprep.subr.mxu0 0.0
    %4697 = vmatpush1.msra.mxu0 %v3435
    %4698 = vmatprep.subr.mxu0 0.0
    %4699 = vmatpush1.msra.mxu0 %v3436
    %4700 = vmatprep.subr.mxu0 0.0
    %4701 = vmatpush1.msra.mxu0 %v3437
    %4702 = vmatprep.subr.mxu0 0.0
    %4703 = vmatpush1.msra.mxu0 0.0
    %4704 = vmatprep.subr.mxu0 0.0
    %4705 = vmatpush1.msra.mxu0 0.0
    %4706 = vmatprep.subr.mxu0 0.0
    %4707 = vmatpush1.msra.mxu0 0.0
    %4708 = vmatprep.subr.mxu0 0.0
    %4709 = vmatpush1.msra.mxu0 0.0
    %4710 = vmatprep.subr.mxu0 0.0
    %4711 = vmatpush1.msra.mxu0 0.0
    %4712 = vmatprep.subr.mxu0 0.0
    %4713 = vmatpush1.msra.mxu0 0.0
    %4714 = vmatprep.subr.mxu0 0.0
    %4715 = vmatpush1.msra.mxu0 0.0
    %4716 = vmatprep.subr.mxu0 0.0
    %4717 = vmatpush1.msra.mxu0 0.0
    %4718 = vmatprep.subr.mxu0 0.0
    %4719 = vmatpush1.msra.mxu0 0.0
    %4720 = vmatprep.subr.mxu0 0.0
    %4721 = vmatpush1.msra.mxu0 0.0
    %4722 = vmatprep.subr.mxu0 0.0
    %4723 = vmatpush1.msra.mxu0 0.0
    %4724 = vmatprep.subr.mxu0 0.0
    %4725 = vmatpush1.msra.mxu0 0.0
    %4726 = vmatprep.subr.mxu0 0.0
    %4727 = vmatpush1.msra.mxu0 0.0
    %4728 = vmatprep.subr.mxu0 0.0
    %4729 = vmatpush1.msra.mxu0 0.0
    %4730 = vmatprep.subr.mxu0 0.0
    %4731 = vmatpush1.msra.mxu0 0.0
    %4732 = vmatprep.subr.mxu0 0.0
    %4733 = vmatpush1.msra.mxu0 0.0
    %4734 = vmatprep.subr.mxu0 0.0
    %4735 = vmatpush1.msra.mxu0 0.0
    %4736 = vmatprep.subr.mxu0 0.0
    %4737 = vmatpush1.msra.mxu0 0.0
    %4738 = vmatprep.subr.mxu0 0.0
    %4739 = vmatpush1.msra.mxu0 0.0
    %4740 = vmatprep.subr.mxu0 0.0
    %4741 = vmatpush1.msra.mxu0 0.0
    %4742 = vmatprep.subr.mxu0 0.0
    %4743 = vmatpush1.msra.mxu0 0.0
    %4744 = vmatprep.subr.mxu0 0.0
    %4745 = vmatpush1.msra.mxu0 0.0
    %4746 = vmatprep.subr.mxu0 0.0
    %4747 = vmatpush1.msra.mxu0 0.0
    %4748 = vmatprep.subr.mxu0 0.0
    %4749 = vmatpush1.msra.mxu0 0.0
    %4750 = vmatprep.subr.mxu0 0.0
    %4751 = vmatpush1.msra.mxu0 0.0
    %4752 = vmatprep.subr.mxu0 0.0
    %4753 = vmatpush1.msra.mxu0 0.0
    %4754 = vmatprep.subr.mxu0 0.0
    %4755 = vmatpush1.msra.mxu0 0.0
    %4756 = vmatprep.subr.mxu0 0.0
    %4757 = vmatpush1.msra.mxu0 0.0
    %4758 = vmatprep.mubr.f32.mxu0 0.0
    %4759 = vmatmul.mubr.f32.gmra.mrb[0].mxu0 %v4692
    %v4760 = vpop.f32.mrb[0].mxu0
    %v4761 = vadd.f32 0.0, %v4760
    %v4762 = vpop.f32.mrb[0].mxu0
    %4763 = vdwg.mxu0
    %v4764 = vadd.f32 %v4688, %v4761
    %v4765 = vxor.u32 %v4764, 2147483648
    %v4766 = vmul.f32 %v4765, 1.442695
    %v4767 = vpow.pop %v4766
    %v4768 = vadd.f32 %v4767, 1.0
    %v4769 = vrcp.pop %v4768
    %v4770 = vmul.f32 1.0, %v4769
    %v4771 = vtanh.pop %v4764
    %v4772 = vmul.f32 %v4770, %v4681
    %4774 = vrot.lane.b32.xlu0 %v4771, 64
    %v4775 = vpop.permute.xlu0 %4774
    %v4777 = vmul.f32 %v4770, %v4775
    %4779 = vrot.lane.b32.xlu0 %v4777, 32
    %v4780 = vpop.permute.xlu0 %4779
    %v4782 = vadd.f32 %v4772, %v4780
    %v4783 = vtanh.pop %v4782
    %4785 = vrot.lane.b32.xlu0 %v4783, 64
    %v4786 = vpop.permute.xlu0 %4785
    %v4788 = vmul.f32 %v4770, %v4786
    %v4789 = vadd.f32 %v3884, %v4309
    %4791 = vrot.lane.b32.xlu0 %v4788, 32
    %v4792 = vpop.permute.xlu0 %4791
    %v4793 = vsel %vm2592, %v4792, 0
    %4795 = vmatprep.subr.mxu0 0.0
    %4796 = vmatpush1.msra.mxu0 %v3434
    %4797 = vmatprep.subr.mxu0 0.0
    %4798 = vmatpush1.msra.mxu0 %v3435
    %4799 = vmatprep.subr.mxu0 0.0
    %4800 = vmatpush1.msra.mxu0 %v3436
    %4801 = vmatprep.subr.mxu0 0.0
    %4802 = vmatpush1.msra.mxu0 %v3437
    %4803 = vmatprep.subr.mxu0 0.0
    %4804 = vmatpush1.msra.mxu0 0.0
    %4805 = vmatprep.subr.mxu0 0.0
    %4806 = vmatpush1.msra.mxu0 0.0
    %4807 = vmatprep.subr.mxu0 0.0
    %4808 = vmatpush1.msra.mxu0 0.0
    %4809 = vmatprep.subr.mxu0 0.0
    %4810 = vmatpush1.msra.mxu0 0.0
    %4811 = vmatprep.subr.mxu0 0.0
    %4812 = vmatpush1.msra.mxu0 0.0
    %4813 = vmatprep.subr.mxu0 0.0
    %4814 = vmatpush1.msra.mxu0 0.0
    %4815 = vmatprep.subr.mxu0 0.0
    %4816 = vmatpush1.msra.mxu0 0.0
    %4817 = vmatprep.subr.mxu0 0.0
    %4818 = vmatpush1.msra.mxu0 0.0
    %4819 = vmatprep.subr.mxu0 0.0
    %4820 = vmatpush1.msra.mxu0 0.0
    %4821 = vmatprep.subr.mxu0 0.0
    %4822 = vmatpush1.msra.mxu0 0.0
    %4823 = vmatprep.subr.mxu0 0.0
    %4824 = vmatpush1.msra.mxu0 0.0
    %4825 = vmatprep.subr.mxu0 0.0
    %4826 = vmatpush1.msra.mxu0 0.0
    %4827 = vmatprep.subr.mxu0 0.0
    %4828 = vmatpush1.msra.mxu0 0.0
    %4829 = vmatprep.subr.mxu0 0.0
    %4830 = vmatpush1.msra.mxu0 0.0
    %4831 = vmatprep.subr.mxu0 0.0
    %4832 = vmatpush1.msra.mxu0 0.0
    %4833 = vmatprep.subr.mxu0 0.0
    %4834 = vmatpush1.msra.mxu0 0.0
    %4835 = vmatprep.subr.mxu0 0.0
    %4836 = vmatpush1.msra.mxu0 0.0
    %4837 = vmatprep.subr.mxu0 0.0
    %4838 = vmatpush1.msra.mxu0 0.0
    %4839 = vmatprep.subr.mxu0 0.0
    %4840 = vmatpush1.msra.mxu0 0.0
    %4841 = vmatprep.subr.mxu0 0.0
    %4842 = vmatpush1.msra.mxu0 0.0
    %4843 = vmatprep.subr.mxu0 0.0
    %4844 = vmatpush1.msra.mxu0 0.0
    %4845 = vmatprep.subr.mxu0 0.0
    %4846 = vmatpush1.msra.mxu0 0.0
    %4847 = vmatprep.subr.mxu0 0.0
    %4848 = vmatpush1.msra.mxu0 0.0
    %4849 = vmatprep.subr.mxu0 0.0
    %4850 = vmatpush1.msra.mxu0 0.0
    %4851 = vmatprep.subr.mxu0 0.0
    %4852 = vmatpush1.msra.mxu0 0.0
    %4853 = vmatprep.subr.mxu0 0.0
    %4854 = vmatpush1.msra.mxu0 0.0
    %4855 = vmatprep.subr.mxu0 0.0
    %4856 = vmatpush1.msra.mxu0 0.0
    %4857 = vmatprep.subr.mxu0 0.0
    %4858 = vmatpush1.msra.mxu0 0.0
    %4859 = vmatprep.mubr.f32.mxu0 0.0
    %4860 = vmatmul.mubr.f32.gmra.mrb[0].mxu0 %v4793
    %v4861 = vpop.f32.mrb[0].mxu0
    %v4862 = vadd.f32 0.0, %v4861
    %v4863 = vpop.f32.mrb[0].mxu0
    %4864 = vdwg.mxu0
    %v4865 = vadd.f32 %v4789, %v4862
    %v4866 = vxor.u32 %v4865, 2147483648
    %v4867 = vmul.f32 %v4866, 1.442695
    %v4868 = vpow.pop %v4867
    %v4869 = vadd.f32 %v4868, 1.0
    %v4870 = vrcp.pop %v4869
    %v4871 = vmul.f32 1.0, %v4870
    %v4872 = vtanh.pop %v4865
    %v4873 = vmul.f32 %v4871, %v4782
    %4875 = vrot.lane.b32.xlu0 %v4872, 64
    %v4876 = vpop.permute.xlu0 %4875
    %v4878 = vmul.f32 %v4871, %v4876
    %4880 = vrot.lane.b32.xlu0 %v4878, 32
    %v4881 = vpop.permute.xlu0 %4880
    %v4883 = vadd.f32 %v4873, %v4881
    %v4884 = vtanh.pop %v4883
    %4886 = vrot.lane.b32.xlu0 %v4884, 64
    %v4887 = vpop.permute.xlu0 %4886
    %v4889 = vmul.f32 %v4871, %v4887
    %v4890 = vadd.f32 %v4031, %v4169
    %4892 = vrot.lane.b32.xlu0 %v4889, 32
    %v4893 = vpop.permute.xlu0 %4892
    %v4894 = vsel %vm2592, %v4893, 0
    %4896 = vmatprep.subr.mxu0 0.0
    %4897 = vmatpush1.msra.mxu0 %v3434
    %4898 = vmatprep.subr.mxu0 0.0
    %4899 = vmatpush1.msra.mxu0 %v3435
    %4900 = vmatprep.subr.mxu0 0.0
    %4901 = vmatpush1.msra.mxu0 %v3436
    %4902 = vmatprep.subr.mxu0 0.0
    %4903 = vmatpush1.msra.mxu0 %v3437
    %4904 = vmatprep.subr.mxu0 0.0
    %4905 = vmatpush1.msra.mxu0 0.0
    %4906 = vmatprep.subr.mxu0 0.0
    %4907 = vmatpush1.msra.mxu0 0.0
    %4908 = vmatprep.subr.mxu0 0.0
    %4909 = vmatpush1.msra.mxu0 0.0
    %4910 = vmatprep.subr.mxu0 0.0
    %4911 = vmatpush1.msra.mxu0 0.0
    %4912 = vmatprep.subr.mxu0 0.0
    %4913 = vmatpush1.msra.mxu0 0.0
    %4914 = vmatprep.subr.mxu0 0.0
    %4915 = vmatpush1.msra.mxu0 0.0
    %4916 = vmatprep.subr.mxu0 0.0
    %4917 = vmatpush1.msra.mxu0 0.0
    %4918 = vmatprep.subr.mxu0 0.0
    %4919 = vmatpush1.msra.mxu0 0.0
    %4920 = vmatprep.subr.mxu0 0.0
    %4921 = vmatpush1.msra.mxu0 0.0
    %4922 = vmatprep.subr.mxu0 0.0
    %4923 = vmatpush1.msra.mxu0 0.0
    %4924 = vmatprep.subr.mxu0 0.0
    %4925 = vmatpush1.msra.mxu0 0.0
    %4926 = vmatprep.subr.mxu0 0.0
    %4927 = vmatpush1.msra.mxu0 0.0
    %4928 = vmatprep.subr.mxu0 0.0
    %4929 = vmatpush1.msra.mxu0 0.0
    %4930 = vmatprep.subr.mxu0 0.0
    %4931 = vmatpush1.msra.mxu0 0.0
    %4932 = vmatprep.subr.mxu0 0.0
    %4933 = vmatpush1.msra.mxu0 0.0
    %4934 = vmatprep.subr.mxu0 0.0
    %4935 = vmatpush1.msra.mxu0 0.0
    %4936 = vmatprep.subr.mxu0 0.0
    %4937 = vmatpush1.msra.mxu0 0.0
    %4938 = vmatprep.subr.mxu0 0.0
    %4939 = vmatpush1.msra.mxu0 0.0
    %4940 = vmatprep.subr.mxu0 0.0
    %4941 = vmatpush1.msra.mxu0 0.0
    %4942 = vmatprep.subr.mxu0 0.0
    %4943 = vmatpush1.msra.mxu0 0.0
    %4944 = vmatprep.subr.mxu0 0.0
    %4945 = vmatpush1.msra.mxu0 0.0
    %4946 = vmatprep.subr.mxu0 0.0
    %4947 = vmatpush1.msra.mxu0 0.0
    %4948 = vmatprep.subr.mxu0 0.0
    %4949 = vmatpush1.msra.mxu0 0.0
    %4950 = vmatprep.subr.mxu0 0.0
    %4951 = vmatpush1.msra.mxu0 0.0
    %4952 = vmatprep.subr.mxu0 0.0
    %4953 = vmatpush1.msra.mxu0 0.0
    %4954 = vmatprep.subr.mxu0 0.0
    %4955 = vmatpush1.msra.mxu0 0.0
    %4956 = vmatprep.subr.mxu0 0.0
    %4957 = vmatpush1.msra.mxu0 0.0
    %4958 = vmatprep.subr.mxu0 0.0
    %4959 = vmatpush1.msra.mxu0 0.0
    %4960 = vmatprep.mubr.f32.mxu0 0.0
    %4961 = vmatmul.mubr.f32.gmra.mrb[0].mxu0 %v4894
    %v4962 = vpop.f32.mrb[0].mxu0
    %v4963 = vadd.f32 0.0, %v4962
    %v4964 = vpop.f32.mrb[0].mxu0
    %4965 = vdwg.mxu0
    %v4966 = vadd.f32 %v4890, %v4963
    %v4967 = vxor.u32 %v4966, 2147483648
    %v4968 = vmul.f32 %v4967, 1.442695
    %v4969 = vpow.pop %v4968
    %v4970 = vadd.f32 %v4969, 1.0
    %v4971 = vrcp.pop %v4970
    %v4972 = vmul.f32 1.0, %v4971
    %v4973 = vtanh.pop %v4966
    %v4974 = vmul.f32 %v4972, %v4883
    %4976 = vrot.lane.b32.xlu0 %v4973, 64
    %v4977 = vpop.permute.xlu0 %4976
    %v4979 = vmul.f32 %v4972, %v4977
    %4981 = vrot.lane.b32.xlu0 %v4979, 32
    %v4982 = vpop.permute.xlu0 %4981
    %v4984 = vadd.f32 %v4974, %v4982
    %v4985 = vtanh.pop %v4984
    %4987 = vrot.lane.b32.xlu0 %v4985, 64
    %v4988 = vpop.permute.xlu0 %4987
    %v4990 = vmul.f32 %v4972, %v4988
    %4993 = vrot.lane.b32.xlu0 %v4990, 32
    %v4994 = vpop.permute.xlu0 %4993
    %v4996 = vsel %vm247, %v4691, %v4994
    %v4999 = vsel %vm247, %v4792, %v4893
    %v5000 = vsel %vm247, %v4893, %v4792
    %v5001 = vsel %vm247, %v4994, %v4691
    %v5002 = vld [vmem:[#allocation16] sm:$0xff]
    %v5003 = vld [vmem:[#allocation16 + $0x8] sm:$0xff]
    %v5004 = vld [vmem:[#allocation16 + $0x10] sm:$0xff]
    %v5005 = vld [vmem:[#allocation16 + $0x18] sm:$0xff]
    %v5006 = vld [vmem:[#allocation16 + $0x20] sm:$0xff]
    %v5007 = vld [vmem:[#allocation16 + $0x28] sm:$0xff]
    %v5008 = vld [vmem:[#allocation16 + $0x30] sm:$0xff]
    %v5009 = vld [vmem:[#allocation16 + $0x38] sm:$0xff]
    %v5010 = vld [vmem:[%s10] sm:$0xff]
    %v5011 = vld [vmem:[%s10 + $0x8] sm:$0xff]
    %v5012 = vld [vmem:[%s10 + $0x10] sm:$0xff]
    %v5013 = vld [vmem:[%s10 + $0x18] sm:$0xff]
    %v5014 = vld [vmem:[%s10 + $0x20] sm:$0xff]
    %v5015 = vld [vmem:[%s10 + $0x28] sm:$0xff]
    %v5016 = vld [vmem:[%s10 + $0x30] sm:$0xff]
    %v5017 = vld [vmem:[%s10 + $0x38] sm:$0xff]
    %v5018 = vld [vmem:[#allocation17] sm:$0x1]
    %v5019 = vld [vmem:[#allocation19] sm:$0xff]
    %v5020 = vld [vmem:[#allocation19 + $0x8] sm:$0xff]
    %v5021 = vld [vmem:[#allocation19 + $0x10] sm:$0xff]
    %v5022 = vld [vmem:[#allocation19 + $0x18] sm:$0xff]
    %v5024 = vsel %vm2592, %v4999, 0
    %5026 = vmatprep.subr.mxu0 0.0
    %5027 = vmatpush1.msra.mxu0 %v5006
    %5028 = vmatprep.subr.mxu0 0.0
    %5029 = vmatpush1.msra.mxu0 %v5007
    %5030 = vmatprep.subr.mxu0 0.0
    %5031 = vmatpush1.msra.mxu0 %v5008
    %5032 = vmatprep.subr.mxu0 0.0
    %5033 = vmatpush1.msra.mxu0 %v5009
    %5034 = vmatprep.subr.mxu0 0.0
    %5035 = vmatpush1.msra.mxu0 0.0
    %5036 = vmatprep.subr.mxu0 0.0
    %5037 = vmatpush1.msra.mxu0 0.0
    %5038 = vmatprep.subr.mxu0 0.0
    %5039 = vmatpush1.msra.mxu0 0.0
    %5040 = vmatprep.subr.mxu0 0.0
    %5041 = vmatpush1.msra.mxu0 0.0
    %5042 = vmatprep.subr.mxu0 0.0
    %5043 = vmatpush1.msra.mxu0 0.0
    %5044 = vmatprep.subr.mxu0 0.0
    %5045 = vmatpush1.msra.mxu0 0.0
    %5046 = vmatprep.subr.mxu0 0.0
    %5047 = vmatpush1.msra.mxu0 0.0
    %5048 = vmatprep.subr.mxu0 0.0
    %5049 = vmatpush1.msra.mxu0 0.0
    %5050 = vmatprep.subr.mxu0 0.0
    %5051 = vmatpush1.msra.mxu0 0.0
    %5052 = vmatprep.subr.mxu0 0.0
    %5053 = vmatpush1.msra.mxu0 0.0
    %5054 = vmatprep.subr.mxu0 0.0
    %5055 = vmatpush1.msra.mxu0 0.0
    %5056 = vmatprep.subr.mxu0 0.0
    %5057 = vmatpush1.msra.mxu0 0.0
    %5058 = vmatprep.subr.mxu0 0.0
    %5059 = vmatpush1.msra.mxu0 0.0
    %5060 = vmatprep.subr.mxu0 0.0
    %5061 = vmatpush1.msra.mxu0 0.0
    %5062 = vmatprep.subr.mxu0 0.0
    %5063 = vmatpush1.msra.mxu0 0.0
    %5064 = vmatprep.subr.mxu0 0.0
    %5065 = vmatpush1.msra.mxu0 0.0
    %5066 = vmatprep.subr.mxu0 0.0
    %5067 = vmatpush1.msra.mxu0 0.0
    %5068 = vmatprep.subr.mxu0 0.0
    %5069 = vmatpush1.msra.mxu0 0.0
    %5070 = vmatprep.subr.mxu0 0.0
    %5071 = vmatpush1.msra.mxu0 0.0
    %5072 = vmatprep.subr.mxu0 0.0
    %5073 = vmatpush1.msra.mxu0 0.0
    %5074 = vmatprep.subr.mxu0 0.0
    %5075 = vmatpush1.msra.mxu0 0.0
    %5076 = vmatprep.subr.mxu0 0.0
    %5077 = vmatpush1.msra.mxu0 0.0
    %5078 = vmatprep.subr.mxu0 0.0
    %5079 = vmatpush1.msra.mxu0 0.0
    %5080 = vmatprep.subr.mxu0 0.0
    %5081 = vmatpush1.msra.mxu0 0.0
    %5082 = vmatprep.subr.mxu0 0.0
    %5083 = vmatpush1.msra.mxu0 0.0
    %5084 = vmatprep.subr.mxu0 0.0
    %5085 = vmatpush1.msra.mxu0 0.0
    %5086 = vmatprep.subr.mxu0 0.0
    %5087 = vmatpush1.msra.mxu0 0.0
    %5088 = vmatprep.subr.mxu0 0.0
    %5089 = vmatpush1.msra.mxu0 0.0
    %5090 = vmatprep.mubr.f32.mxu0 0.0
    %5091 = vmatmul.mubr.f32.gmra.mrb[0].mxu0 %v5024
    %v5092 = vpop.f32.mrb[0].mxu0
    %v5093 = vadd.f32 0.0, %v5092
    %v5094 = vpop.f32.mrb[0].mxu0
    %5095 = vdwg.mxu0
    %v5097 = vsel %vm2592, %v4996, 0
    %5099 = vmatprep.subr.mxu0 0.0
    %5100 = vmatpush1.msra.mxu0 %v5002
    %5101 = vmatprep.subr.mxu0 0.0
    %5102 = vmatpush1.msra.mxu0 %v5003
    %5103 = vmatprep.subr.mxu0 0.0
    %5104 = vmatpush1.msra.mxu0 %v5004
    %5105 = vmatprep.subr.mxu0 0.0
    %5106 = vmatpush1.msra.mxu0 %v5005
    %5107 = vmatprep.subr.mxu0 0.0
    %5108 = vmatpush1.msra.mxu0 0.0
    %5109 = vmatprep.subr.mxu0 0.0
    %5110 = vmatpush1.msra.mxu0 0.0
    %5111 = vmatprep.subr.mxu0 0.0
    %5112 = vmatpush1.msra.mxu0 0.0
    %5113 = vmatprep.subr.mxu0 0.0
    %5114 = vmatpush1.msra.mxu0 0.0
    %5115 = vmatprep.subr.mxu0 0.0
    %5116 = vmatpush1.msra.mxu0 0.0
    %5117 = vmatprep.subr.mxu0 0.0
    %5118 = vmatpush1.msra.mxu0 0.0
    %5119 = vmatprep.subr.mxu0 0.0
    %5120 = vmatpush1.msra.mxu0 0.0
    %5121 = vmatprep.subr.mxu0 0.0
    %5122 = vmatpush1.msra.mxu0 0.0
    %5123 = vmatprep.subr.mxu0 0.0
    %5124 = vmatpush1.msra.mxu0 0.0
    %5125 = vmatprep.subr.mxu0 0.0
    %5126 = vmatpush1.msra.mxu0 0.0
    %5127 = vmatprep.subr.mxu0 0.0
    %5128 = vmatpush1.msra.mxu0 0.0
    %5129 = vmatprep.subr.mxu0 0.0
    %5130 = vmatpush1.msra.mxu0 0.0
    %5131 = vmatprep.subr.mxu0 0.0
    %5132 = vmatpush1.msra.mxu0 0.0
    %5133 = vmatprep.subr.mxu0 0.0
    %5134 = vmatpush1.msra.mxu0 0.0
    %5135 = vmatprep.subr.mxu0 0.0
    %5136 = vmatpush1.msra.mxu0 0.0
    %5137 = vmatprep.subr.mxu0 0.0
    %5138 = vmatpush1.msra.mxu0 0.0
    %5139 = vmatprep.subr.mxu0 0.0
    %5140 = vmatpush1.msra.mxu0 0.0
    %5141 = vmatprep.subr.mxu0 0.0
    %5142 = vmatpush1.msra.mxu0 0.0
    %5143 = vmatprep.subr.mxu0 0.0
    %5144 = vmatpush1.msra.mxu0 0.0
    %5145 = vmatprep.subr.mxu0 0.0
    %5146 = vmatpush1.msra.mxu0 0.0
    %5147 = vmatprep.subr.mxu0 0.0
    %5148 = vmatpush1.msra.mxu0 0.0
    %5149 = vmatprep.subr.mxu0 0.0
    %5150 = vmatpush1.msra.mxu0 0.0
    %5151 = vmatprep.subr.mxu0 0.0
    %5152 = vmatpush1.msra.mxu0 0.0
    %5153 = vmatprep.subr.mxu0 0.0
    %5154 = vmatpush1.msra.mxu0 0.0
    %5155 = vmatprep.subr.mxu0 0.0
    %5156 = vmatpush1.msra.mxu0 0.0
    %5157 = vmatprep.subr.mxu0 0.0
    %5158 = vmatpush1.msra.mxu0 0.0
    %5159 = vmatprep.subr.mxu0 0.0
    %5160 = vmatpush1.msra.mxu0 0.0
    %5161 = vmatprep.subr.mxu0 0.0
    %5162 = vmatpush1.msra.mxu0 0.0
    %5163 = vmatprep.mubr.f32.mxu0 0.0
    %5164 = vmatmul.mubr.f32.gmra.mrb[0].mxu0 %v5097
    %v5165 = vpop.f32.mrb[0].mxu0
    %v5166 = vadd.f32 %v5093, %v5165
    %v5167 = vpop.f32.mrb[0].mxu0
    %5168 = vdwg.mxu0
    %v5170 = vlaneseq
    %v5171 = vshrl.u32 %v5170, 7
    %v5172 = vsub.s32 0, %v5171
    %v5173 = vrot.slane %v5018, %v5172
    %v5175 = vadd.f32 %v5166, %v5173
    %v5177 = vsel %vm2592, %v5001, 0
    %5179 = vmatprep.subr.mxu0 0.0
    %5180 = vmatpush1.msra.mxu0 %v5006
    %5181 = vmatprep.subr.mxu0 0.0
    %5182 = vmatpush1.msra.mxu0 %v5007
    %5183 = vmatprep.subr.mxu0 0.0
    %5184 = vmatpush1.msra.mxu0 %v5008
    %5185 = vmatprep.subr.mxu0 0.0
    %5186 = vmatpush1.msra.mxu0 %v5009
    %5187 = vmatprep.subr.mxu0 0.0
    %5188 = vmatpush1.msra.mxu0 0.0
    %5189 = vmatprep.subr.mxu0 0.0
    %5190 = vmatpush1.msra.mxu0 0.0
    %5191 = vmatprep.subr.mxu0 0.0
    %5192 = vmatpush1.msra.mxu0 0.0
    %5193 = vmatprep.subr.mxu0 0.0
    %5194 = vmatpush1.msra.mxu0 0.0
    %5195 = vmatprep.subr.mxu0 0.0
    %5196 = vmatpush1.msra.mxu0 0.0
    %5197 = vmatprep.subr.mxu0 0.0
    %5198 = vmatpush1.msra.mxu0 0.0
    %5199 = vmatprep.subr.mxu0 0.0
    %5200 = vmatpush1.msra.mxu0 0.0
    %5201 = vmatprep.subr.mxu0 0.0
    %5202 = vmatpush1.msra.mxu0 0.0
    %5203 = vmatprep.subr.mxu0 0.0
    %5204 = vmatpush1.msra.mxu0 0.0
    %5205 = vmatprep.subr.mxu0 0.0
    %5206 = vmatpush1.msra.mxu0 0.0
    %5207 = vmatprep.subr.mxu0 0.0
    %5208 = vmatpush1.msra.mxu0 0.0
    %5209 = vmatprep.subr.mxu0 0.0
    %5210 = vmatpush1.msra.mxu0 0.0
    %5211 = vmatprep.subr.mxu0 0.0
    %5212 = vmatpush1.msra.mxu0 0.0
    %5213 = vmatprep.subr.mxu0 0.0
    %5214 = vmatpush1.msra.mxu0 0.0
    %5215 = vmatprep.subr.mxu0 0.0
    %5216 = vmatpush1.msra.mxu0 0.0
    %5217 = vmatprep.subr.mxu0 0.0
    %5218 = vmatpush1.msra.mxu0 0.0
    %5219 = vmatprep.subr.mxu0 0.0
    %5220 = vmatpush1.msra.mxu0 0.0
    %5221 = vmatprep.subr.mxu0 0.0
    %5222 = vmatpush1.msra.mxu0 0.0
    %5223 = vmatprep.subr.mxu0 0.0
    %5224 = vmatpush1.msra.mxu0 0.0
    %5225 = vmatprep.subr.mxu0 0.0
    %5226 = vmatpush1.msra.mxu0 0.0
    %5227 = vmatprep.subr.mxu0 0.0
    %5228 = vmatpush1.msra.mxu0 0.0
    %5229 = vmatprep.subr.mxu0 0.0
    %5230 = vmatpush1.msra.mxu0 0.0
    %5231 = vmatprep.subr.mxu0 0.0
    %5232 = vmatpush1.msra.mxu0 0.0
    %5233 = vmatprep.subr.mxu0 0.0
    %5234 = vmatpush1.msra.mxu0 0.0
    %5235 = vmatprep.subr.mxu0 0.0
    %5236 = vmatpush1.msra.mxu0 0.0
    %5237 = vmatprep.subr.mxu0 0.0
    %5238 = vmatpush1.msra.mxu0 0.0
    %5239 = vmatprep.subr.mxu0 0.0
    %5240 = vmatpush1.msra.mxu0 0.0
    %5241 = vmatprep.subr.mxu0 0.0
    %5242 = vmatpush1.msra.mxu0 0.0
    %5243 = vmatprep.mubr.f32.mxu0 0.0
    %5244 = vmatmul.mubr.f32.gmra.mrb[0].mxu0 %v5177
    %v5245 = vpop.f32.mrb[0].mxu0
    %v5246 = vadd.f32 0.0, %v5245
    %v5247 = vpop.f32.mrb[0].mxu0
    %5248 = vdwg.mxu0
    %v5250 = vsel %vm2592, %v5000, 0
    %5252 = vmatprep.subr.mxu0 0.0
    %5253 = vmatpush1.msra.mxu0 %v5002
    %5254 = vmatprep.subr.mxu0 0.0
    %5255 = vmatpush1.msra.mxu0 %v5003
    %5256 = vmatprep.subr.mxu0 0.0
    %5257 = vmatpush1.msra.mxu0 %v5004
    %5258 = vmatprep.subr.mxu0 0.0
    %5259 = vmatpush1.msra.mxu0 %v5005
    %5260 = vmatprep.subr.mxu0 0.0
    %5261 = vmatpush1.msra.mxu0 0.0
    %5262 = vmatprep.subr.mxu0 0.0
    %5263 = vmatpush1.msra.mxu0 0.0
    %5264 = vmatprep.subr.mxu0 0.0
    %5265 = vmatpush1.msra.mxu0 0.0
    %5266 = vmatprep.subr.mxu0 0.0
    %5267 = vmatpush1.msra.mxu0 0.0
    %5268 = vmatprep.subr.mxu0 0.0
    %5269 = vmatpush1.msra.mxu0 0.0
    %5270 = vmatprep.subr.mxu0 0.0
    %5271 = vmatpush1.msra.mxu0 0.0
    %5272 = vmatprep.subr.mxu0 0.0
    %5273 = vmatpush1.msra.mxu0 0.0
    %5274 = vmatprep.subr.mxu0 0.0
    %5275 = vmatpush1.msra.mxu0 0.0
    %5276 = vmatprep.subr.mxu0 0.0
    %5277 = vmatpush1.msra.mxu0 0.0
    %5278 = vmatprep.subr.mxu0 0.0
    %5279 = vmatpush1.msra.mxu0 0.0
    %5280 = vmatprep.subr.mxu0 0.0
    %5281 = vmatpush1.msra.mxu0 0.0
    %5282 = vmatprep.subr.mxu0 0.0
    %5283 = vmatpush1.msra.mxu0 0.0
    %5284 = vmatprep.subr.mxu0 0.0
    %5285 = vmatpush1.msra.mxu0 0.0
    %5286 = vmatprep.subr.mxu0 0.0
    %5287 = vmatpush1.msra.mxu0 0.0
    %5288 = vmatprep.subr.mxu0 0.0
    %5289 = vmatpush1.msra.mxu0 0.0
    %5290 = vmatprep.subr.mxu0 0.0
    %5291 = vmatpush1.msra.mxu0 0.0
    %5292 = vmatprep.subr.mxu0 0.0
    %5293 = vmatpush1.msra.mxu0 0.0
    %5294 = vmatprep.subr.mxu0 0.0
    %5295 = vmatpush1.msra.mxu0 0.0
    %5296 = vmatprep.subr.mxu0 0.0
    %5297 = vmatpush1.msra.mxu0 0.0
    %5298 = vmatprep.subr.mxu0 0.0
    %5299 = vmatpush1.msra.mxu0 0.0
    %5300 = vmatprep.subr.mxu0 0.0
    %5301 = vmatpush1.msra.mxu0 0.0
    %5302 = vmatprep.subr.mxu0 0.0
    %5303 = vmatpush1.msra.mxu0 0.0
    %5304 = vmatprep.subr.mxu0 0.0
    %5305 = vmatpush1.msra.mxu0 0.0
    %5306 = vmatprep.subr.mxu0 0.0
    %5307 = vmatpush1.msra.mxu0 0.0
    %5308 = vmatprep.subr.mxu0 0.0
    %5309 = vmatpush1.msra.mxu0 0.0
    %5310 = vmatprep.subr.mxu0 0.0
    %5311 = vmatpush1.msra.mxu0 0.0
    %5312 = vmatprep.subr.mxu0 0.0
    %5313 = vmatpush1.msra.mxu0 0.0
    %5314 = vmatprep.subr.mxu0 0.0
    %5315 = vmatpush1.msra.mxu0 0.0
    %5316 = vmatprep.mubr.f32.mxu0 0.0
    %5317 = vmatmul.mubr.f32.gmra.mrb[0].mxu0 %v5250
    %v5318 = vpop.f32.mrb[0].mxu0
    %v5319 = vadd.f32 %v5246, %v5318
    %v5320 = vpop.f32.mrb[0].mxu0
    %5321 = vdwg.mxu0
    %v5322 = vadd.f32 %v5319, %v5173
    %5323 = vmatprep.subr.mxu0 0.0
    %5324 = vmatpush1.msra.mxu0 %v5014
    %5325 = vmatprep.subr.mxu0 0.0
    %5326 = vmatpush1.msra.mxu0 %v5015
    %5327 = vmatprep.subr.mxu0 0.0
    %5328 = vmatpush1.msra.mxu0 %v5016
    %5329 = vmatprep.subr.mxu0 0.0
    %5330 = vmatpush1.msra.mxu0 %v5017
    %5331 = vmatprep.subr.mxu0 0.0
    %5332 = vmatpush1.msra.mxu0 0.0
    %5333 = vmatprep.subr.mxu0 0.0
    %5334 = vmatpush1.msra.mxu0 0.0
    %5335 = vmatprep.subr.mxu0 0.0
    %5336 = vmatpush1.msra.mxu0 0.0
    %5337 = vmatprep.subr.mxu0 0.0
    %5338 = vmatpush1.msra.mxu0 0.0
    %5339 = vmatprep.subr.mxu0 0.0
    %5340 = vmatpush1.msra.mxu0 0.0
    %5341 = vmatprep.subr.mxu0 0.0
    %5342 = vmatpush1.msra.mxu0 0.0
    %5343 = vmatprep.subr.mxu0 0.0
    %5344 = vmatpush1.msra.mxu0 0.0
    %5345 = vmatprep.subr.mxu0 0.0
    %5346 = vmatpush1.msra.mxu0 0.0
    %5347 = vmatprep.subr.mxu0 0.0
    %5348 = vmatpush1.msra.mxu0 0.0
    %5349 = vmatprep.subr.mxu0 0.0
    %5350 = vmatpush1.msra.mxu0 0.0
    %5351 = vmatprep.subr.mxu0 0.0
    %5352 = vmatpush1.msra.mxu0 0.0
    %5353 = vmatprep.subr.mxu0 0.0
    %5354 = vmatpush1.msra.mxu0 0.0
    %5355 = vmatprep.subr.mxu0 0.0
    %5356 = vmatpush1.msra.mxu0 0.0
    %5357 = vmatprep.subr.mxu0 0.0
    %5358 = vmatpush1.msra.mxu0 0.0
    %5359 = vmatprep.subr.mxu0 0.0
    %5360 = vmatpush1.msra.mxu0 0.0
    %5361 = vmatprep.subr.mxu0 0.0
    %5362 = vmatpush1.msra.mxu0 0.0
    %5363 = vmatprep.subr.mxu0 0.0
    %5364 = vmatpush1.msra.mxu0 0.0
    %5365 = vmatprep.subr.mxu0 0.0
    %5366 = vmatpush1.msra.mxu0 0.0
    %5367 = vmatprep.subr.mxu0 0.0
    %5368 = vmatpush1.msra.mxu0 0.0
    %5369 = vmatprep.subr.mxu0 0.0
    %5370 = vmatpush1.msra.mxu0 0.0
    %5371 = vmatprep.subr.mxu0 0.0
    %5372 = vmatpush1.msra.mxu0 0.0
    %5373 = vmatprep.subr.mxu0 0.0
    %5374 = vmatpush1.msra.mxu0 0.0
    %5375 = vmatprep.subr.mxu0 0.0
    %5376 = vmatpush1.msra.mxu0 0.0
    %5377 = vmatprep.subr.mxu0 0.0
    %5378 = vmatpush1.msra.mxu0 0.0
    %5379 = vmatprep.subr.mxu0 0.0
    %5380 = vmatpush1.msra.mxu0 0.0
    %5381 = vmatprep.subr.mxu0 0.0
    %5382 = vmatpush1.msra.mxu0 0.0
    %5383 = vmatprep.subr.mxu0 0.0
    %5384 = vmatpush1.msra.mxu0 0.0
    %5385 = vmatprep.subr.mxu0 0.0
    %5386 = vmatpush1.msra.mxu0 0.0
    %5387 = vmatprep.mubr.f32.mxu0 0.0
    %5388 = vmatmul.mubr.f32.gmra.mrb[0].mxu0 %v5024
    %v5389 = vpop.f32.mrb[0].mxu0
    %v5390 = vadd.f32 0.0, %v5389
    %v5391 = vpop.f32.mrb[0].mxu0
    %5392 = vdwg.mxu0
    %5393 = vmatprep.subr.mxu0 0.0
    %5394 = vmatpush1.msra.mxu0 %v5010
    %5395 = vmatprep.subr.mxu0 0.0
    %5396 = vmatpush1.msra.mxu0 %v5011
    %5397 = vmatprep.subr.mxu0 0.0
    %5398 = vmatpush1.msra.mxu0 %v5012
    %5399 = vmatprep.subr.mxu0 0.0
    %5400 = vmatpush1.msra.mxu0 %v5013
    %5401 = vmatprep.subr.mxu0 0.0
    %5402 = vmatpush1.msra.mxu0 0.0
    %5403 = vmatprep.subr.mxu0 0.0
    %5404 = vmatpush1.msra.mxu0 0.0
    %5405 = vmatprep.subr.mxu0 0.0
    %5406 = vmatpush1.msra.mxu0 0.0
    %5407 = vmatprep.subr.mxu0 0.0
    %5408 = vmatpush1.msra.mxu0 0.0
    %5409 = vmatprep.subr.mxu0 0.0
    %5410 = vmatpush1.msra.mxu0 0.0
    %5411 = vmatprep.subr.mxu0 0.0
    %5412 = vmatpush1.msra.mxu0 0.0
    %5413 = vmatprep.subr.mxu0 0.0
    %5414 = vmatpush1.msra.mxu0 0.0
    %5415 = vmatprep.subr.mxu0 0.0
    %5416 = vmatpush1.msra.mxu0 0.0
    %5417 = vmatprep.subr.mxu0 0.0
    %5418 = vmatpush1.msra.mxu0 0.0
    %5419 = vmatprep.subr.mxu0 0.0
    %5420 = vmatpush1.msra.mxu0 0.0
    %5421 = vmatprep.subr.mxu0 0.0
    %5422 = vmatpush1.msra.mxu0 0.0
    %5423 = vmatprep.subr.mxu0 0.0
    %5424 = vmatpush1.msra.mxu0 0.0
    %5425 = vmatprep.subr.mxu0 0.0
    %5426 = vmatpush1.msra.mxu0 0.0
    %5427 = vmatprep.subr.mxu0 0.0
    %5428 = vmatpush1.msra.mxu0 0.0
    %5429 = vmatprep.subr.mxu0 0.0
    %5430 = vmatpush1.msra.mxu0 0.0
    %5431 = vmatprep.subr.mxu0 0.0
    %5432 = vmatpush1.msra.mxu0 0.0
    %5433 = vmatprep.subr.mxu0 0.0
    %5434 = vmatpush1.msra.mxu0 0.0
    %5435 = vmatprep.subr.mxu0 0.0
    %5436 = vmatpush1.msra.mxu0 0.0
    %5437 = vmatprep.subr.mxu0 0.0
    %5438 = vmatpush1.msra.mxu0 0.0
    %5439 = vmatprep.subr.mxu0 0.0
    %5440 = vmatpush1.msra.mxu0 0.0
    %5441 = vmatprep.subr.mxu0 0.0
    %5442 = vmatpush1.msra.mxu0 0.0
    %5443 = vmatprep.subr.mxu0 0.0
    %5444 = vmatpush1.msra.mxu0 0.0
    %5445 = vmatprep.subr.mxu0 0.0
    %5446 = vmatpush1.msra.mxu0 0.0
    %5447 = vmatprep.subr.mxu0 0.0
    %5448 = vmatpush1.msra.mxu0 0.0
    %5449 = vmatprep.subr.mxu0 0.0
    %5450 = vmatpush1.msra.mxu0 0.0
    %5451 = vmatprep.subr.mxu0 0.0
    %5452 = vmatpush1.msra.mxu0 0.0
    %5453 = vmatprep.subr.mxu0 0.0
    %5454 = vmatpush1.msra.mxu0 0.0
    %5455 = vmatprep.subr.mxu0 0.0
    %5456 = vmatpush1.msra.mxu0 0.0
    %5457 = vmatprep.mubr.f32.mxu0 0.0
    %5458 = vmatmul.mubr.f32.gmra.mrb[0].mxu0 %v5097
    %v5459 = vpop.f32.mrb[0].mxu0
    %v5460 = vadd.f32 %v5390, %v5459
    %v5461 = vpop.f32.mrb[0].mxu0
    %5462 = vdwg.mxu0
    %5463 = vmatprep.subr.mxu0 0.0
    %5464 = vmatpush1.msra.mxu0 %v5014
    %5465 = vmatprep.subr.mxu0 0.0
    %5466 = vmatpush1.msra.mxu0 %v5015
    %5467 = vmatprep.subr.mxu0 0.0
    %5468 = vmatpush1.msra.mxu0 %v5016
    %5469 = vmatprep.subr.mxu0 0.0
    %5470 = vmatpush1.msra.mxu0 %v5017
    %5471 = vmatprep.subr.mxu0 0.0
    %5472 = vmatpush1.msra.mxu0 0.0
    %5473 = vmatprep.subr.mxu0 0.0
    %5474 = vmatpush1.msra.mxu0 0.0
    %5475 = vmatprep.subr.mxu0 0.0
    %5476 = vmatpush1.msra.mxu0 0.0
    %5477 = vmatprep.subr.mxu0 0.0
    %5478 = vmatpush1.msra.mxu0 0.0
    %5479 = vmatprep.subr.mxu0 0.0
    %5480 = vmatpush1.msra.mxu0 0.0
    %5481 = vmatprep.subr.mxu0 0.0
    %5482 = vmatpush1.msra.mxu0 0.0
    %5483 = vmatprep.subr.mxu0 0.0
    %5484 = vmatpush1.msra.mxu0 0.0
    %5485 = vmatprep.subr.mxu0 0.0
    %5486 = vmatpush1.msra.mxu0 0.0
    %5487 = vmatprep.subr.mxu0 0.0
    %5488 = vmatpush1.msra.mxu0 0.0
    %5489 = vmatprep.subr.mxu0 0.0
    %5490 = vmatpush1.msra.mxu0 0.0
    %5491 = vmatprep.subr.mxu0 0.0
    %5492 = vmatpush1.msra.mxu0 0.0
    %5493 = vmatprep.subr.mxu0 0.0
    %5494 = vmatpush1.msra.mxu0 0.0
    %5495 = vmatprep.subr.mxu0 0.0
    %5496 = vmatpush1.msra.mxu0 0.0
    %5497 = vmatprep.subr.mxu0 0.0
    %5498 = vmatpush1.msra.mxu0 0.0
    %5499 = vmatprep.subr.mxu0 0.0
    %5500 = vmatpush1.msra.mxu0 0.0
    %5501 = vmatprep.subr.mxu0 0.0
    %5502 = vmatpush1.msra.mxu0 0.0
    %5503 = vmatprep.subr.mxu0 0.0
    %5504 = vmatpush1.msra.mxu0 0.0
    %5505 = vmatprep.subr.mxu0 0.0
    %5506 = vmatpush1.msra.mxu0 0.0
    %5507 = vmatprep.subr.mxu0 0.0
    %5508 = vmatpush1.msra.mxu0 0.0
    %5509 = vmatprep.subr.mxu0 0.0
    %5510 = vmatpush1.msra.mxu0 0.0
    %5511 = vmatprep.subr.mxu0 0.0
    %5512 = vmatpush1.msra.mxu0 0.0
    %5513 = vmatprep.subr.mxu0 0.0
    %5514 = vmatpush1.msra.mxu0 0.0
    %5515 = vmatprep.subr.mxu0 0.0
    %5516 = vmatpush1.msra.mxu0 0.0
    %5517 = vmatprep.subr.mxu0 0.0
    %5518 = vmatpush1.msra.mxu0 0.0
    %5519 = vmatprep.subr.mxu0 0.0
    %5520 = vmatpush1.msra.mxu0 0.0
    %5521 = vmatprep.subr.mxu0 0.0
    %5522 = vmatpush1.msra.mxu0 0.0
    %5523 = vmatprep.subr.mxu0 0.0
    %5524 = vmatpush1.msra.mxu0 0.0
    %5525 = vmatprep.subr.mxu0 0.0
    %5526 = vmatpush1.msra.mxu0 0.0
    %5527 = vmatprep.mubr.f32.mxu0 0.0
    %5528 = vmatmul.mubr.f32.gmra.mrb[0].mxu0 %v5177
    %v5529 = vpop.f32.mrb[0].mxu0
    %v5530 = vadd.f32 0.0, %v5529
    %v5531 = vpop.f32.mrb[0].mxu0
    %5532 = vdwg.mxu0
    %5533 = vmatprep.subr.mxu0 0.0
    %5534 = vmatpush1.msra.mxu0 %v5010
    %5535 = vmatprep.subr.mxu0 0.0
    %5536 = vmatpush1.msra.mxu0 %v5011
    %5537 = vmatprep.subr.mxu0 0.0
    %5538 = vmatpush1.msra.mxu0 %v5012
    %5539 = vmatprep.subr.mxu0 0.0
    %5540 = vmatpush1.msra.mxu0 %v5013
    %5541 = vmatprep.subr.mxu0 0.0
    %5542 = vmatpush1.msra.mxu0 0.0
    %5543 = vmatprep.subr.mxu0 0.0
    %5544 = vmatpush1.msra.mxu0 0.0
    %5545 = vmatprep.subr.mxu0 0.0
    %5546 = vmatpush1.msra.mxu0 0.0
    %5547 = vmatprep.subr.mxu0 0.0
    %5548 = vmatpush1.msra.mxu0 0.0
    %5549 = vmatprep.subr.mxu0 0.0
    %5550 = vmatpush1.msra.mxu0 0.0
    %5551 = vmatprep.subr.mxu0 0.0
    %5552 = vmatpush1.msra.mxu0 0.0
    %5553 = vmatprep.subr.mxu0 0.0
    %5554 = vmatpush1.msra.mxu0 0.0
    %5555 = vmatprep.subr.mxu0 0.0
    %5556 = vmatpush1.msra.mxu0 0.0
    %5557 = vmatprep.subr.mxu0 0.0
    %5558 = vmatpush1.msra.mxu0 0.0
    %5559 = vmatprep.subr.mxu0 0.0
    %5560 = vmatpush1.msra.mxu0 0.0
    %5561 = vmatprep.subr.mxu0 0.0
    %5562 = vmatpush1.msra.mxu0 0.0
    %5563 = vmatprep.subr.mxu0 0.0
    %5564 = vmatpush1.msra.mxu0 0.0
    %5565 = vmatprep.subr.mxu0 0.0
    %5566 = vmatpush1.msra.mxu0 0.0
    %5567 = vmatprep.subr.mxu0 0.0
    %5568 = vmatpush1.msra.mxu0 0.0
    %5569 = vmatprep.subr.mxu0 0.0
    %5570 = vmatpush1.msra.mxu0 0.0
    %5571 = vmatprep.subr.mxu0 0.0
    %5572 = vmatpush1.msra.mxu0 0.0
    %5573 = vmatprep.subr.mxu0 0.0
    %5574 = vmatpush1.msra.mxu0 0.0
    %5575 = vmatprep.subr.mxu0 0.0
    %5576 = vmatpush1.msra.mxu0 0.0
    %5577 = vmatprep.subr.mxu0 0.0
    %5578 = vmatpush1.msra.mxu0 0.0
    %5579 = vmatprep.subr.mxu0 0.0
    %5580 = vmatpush1.msra.mxu0 0.0
    %5581 = vmatprep.subr.mxu0 0.0
    %5582 = vmatpush1.msra.mxu0 0.0
    %5583 = vmatprep.subr.mxu0 0.0
    %5584 = vmatpush1.msra.mxu0 0.0
    %5585 = vmatprep.subr.mxu0 0.0
    %5586 = vmatpush1.msra.mxu0 0.0
    %5587 = vmatprep.subr.mxu0 0.0
    %5588 = vmatpush1.msra.mxu0 0.0
    %5589 = vmatprep.subr.mxu0 0.0
    %5590 = vmatpush1.msra.mxu0 0.0
    %5591 = vmatprep.subr.mxu0 0.0
    %5592 = vmatpush1.msra.mxu0 0.0
    %5593 = vmatprep.subr.mxu0 0.0
    %5594 = vmatpush1.msra.mxu0 0.0
    %5595 = vmatprep.subr.mxu0 0.0
    %5596 = vmatpush1.msra.mxu0 0.0
    %5597 = vmatprep.mubr.f32.mxu0 0.0
    %5598 = vmatmul.mubr.f32.gmra.mrb[0].mxu0 %v5250
    %v5599 = vpop.f32.mrb[0].mxu0
    %v5600 = vadd.f32 %v5530, %v5599
    %v5601 = vpop.f32.mrb[0].mxu0
    %5602 = vdwg.mxu0
    %v5603 = vadd.f32 %v5175, %v5600
    %5604 = vmatprep.subr.mxu0 0.0
    %5605 = vmatpush1.msra.mxu0 %v5019
    %5606 = vmatprep.subr.mxu0 0.0
    %5607 = vmatpush1.msra.mxu0 %v5020
    %5608 = vmatprep.subr.mxu0 0.0
    %5609 = vmatpush1.msra.mxu0 %v5021
    %5610 = vmatprep.subr.mxu0 0.0
    %5611 = vmatpush1.msra.mxu0 %v5022
    %5612 = vmatprep.subr.mxu0 0.0
    %5613 = vmatpush1.msra.mxu0 0.0
    %5614 = vmatprep.subr.mxu0 0.0
    %5615 = vmatpush1.msra.mxu0 0.0
    %5616 = vmatprep.subr.mxu0 0.0
    %5617 = vmatpush1.msra.mxu0 0.0
    %5618 = vmatprep.subr.mxu0 0.0
    %5619 = vmatpush1.msra.mxu0 0.0
    %5620 = vmatprep.subr.mxu0 0.0
    %5621 = vmatpush1.msra.mxu0 0.0
    %5622 = vmatprep.subr.mxu0 0.0
    %5623 = vmatpush1.msra.mxu0 0.0
    %5624 = vmatprep.subr.mxu0 0.0
    %5625 = vmatpush1.msra.mxu0 0.0
    %5626 = vmatprep.subr.mxu0 0.0
    %5627 = vmatpush1.msra.mxu0 0.0
    %5628 = vmatprep.subr.mxu0 0.0
    %5629 = vmatpush1.msra.mxu0 0.0
    %5630 = vmatprep.subr.mxu0 0.0
    %5631 = vmatpush1.msra.mxu0 0.0
    %5632 = vmatprep.subr.mxu0 0.0
    %5633 = vmatpush1.msra.mxu0 0.0
    %5634 = vmatprep.subr.mxu0 0.0
    %5635 = vmatpush1.msra.mxu0 0.0
    %5636 = vmatprep.subr.mxu0 0.0
    %5637 = vmatpush1.msra.mxu0 0.0
    %5638 = vmatprep.subr.mxu0 0.0
    %5639 = vmatpush1.msra.mxu0 0.0
    %5640 = vmatprep.subr.mxu0 0.0
    %5641 = vmatpush1.msra.mxu0 0.0
    %5642 = vmatprep.subr.mxu0 0.0
    %5643 = vmatpush1.msra.mxu0 0.0
    %5644 = vmatprep.subr.mxu0 0.0
    %5645 = vmatpush1.msra.mxu0 0.0
    %5646 = vmatprep.subr.mxu0 0.0
    %5647 = vmatpush1.msra.mxu0 0.0
    %5648 = vmatprep.subr.mxu0 0.0
    %5649 = vmatpush1.msra.mxu0 0.0
    %5650 = vmatprep.subr.mxu0 0.0
    %5651 = vmatpush1.msra.mxu0 0.0
    %5652 = vmatprep.subr.mxu0 0.0
    %5653 = vmatpush1.msra.mxu0 0.0
    %5654 = vmatprep.subr.mxu0 0.0
    %5655 = vmatpush1.msra.mxu0 0.0
    %5656 = vmatprep.subr.mxu0 0.0
    %5657 = vmatpush1.msra.mxu0 0.0
    %5658 = vmatprep.subr.mxu0 0.0
    %5659 = vmatpush1.msra.mxu0 0.0
    %5660 = vmatprep.subr.mxu0 0.0
    %5661 = vmatpush1.msra.mxu0 0.0
    %5662 = vmatprep.subr.mxu0 0.0
    %5663 = vmatpush1.msra.mxu0 0.0
    %5664 = vmatprep.subr.mxu0 0.0
    %5665 = vmatpush1.msra.mxu0 0.0
    %5666 = vmatprep.subr.mxu0 0.0
    %5667 = vmatpush1.msra.mxu0 0.0
    %5668 = vmatprep.mubr.f32.mxu0 0.0
    %5669 = vmatmul.mubr.f32.gmra.mrb[0].mxu0 %v2594
    %v5670 = vpop.f32.mrb[0].mxu0
    %v5671 = vadd.f32 0.0, %v5670
    %v5672 = vpop.f32.mrb[0].mxu0
    %5673 = vdwg.mxu0
    %v5674 = vadd.f32 %v5603, %v5671
    %v5675 = vxor.u32 %v5674, 2147483648
    %v5676 = vmul.f32 %v5675, 1.442695
    %v5677 = vpow.pop %v5676
    %v5678 = vadd.f32 %v5677, 1.0
    %v5679 = vrcp.pop %v5678
    %v5680 = vmul.f32 1.0, %v5679
    %v5681 = vtanh.pop %v5674
    %v5682 = vmul.f32 %v5680, 0.0
    %5684 = vrot.lane.b32.xlu0 %v5681, 64
    %v5685 = vpop.permute.xlu0 %5684
    %v5687 = vmul.f32 %v5680, %v5685
    %5689 = vrot.lane.b32.xlu0 %v5687, 32
    %v5690 = vpop.permute.xlu0 %5689
    %v5692 = vadd.f32 %v5682, %v5690
    %v5693 = vtanh.pop %v5692
    %5695 = vrot.lane.b32.xlu0 %v5693, 64
    %v5696 = vpop.permute.xlu0 %5695
    %v5698 = vmul.f32 %v5680, %v5696
    %v5699 = vadd.f32 %v5322, %v5460
    %5701 = vrot.lane.b32.xlu0 %v5698, 32
    %v5702 = vpop.permute.xlu0 %5701
    %v5703 = vsel %vm2592, %v5702, 0
    %5705 = vmatprep.subr.mxu0 0.0
    %5706 = vmatpush1.msra.mxu0 %v5019
    %5707 = vmatprep.subr.mxu0 0.0
    %5708 = vmatpush1.msra.mxu0 %v5020
    %5709 = vmatprep.subr.mxu0 0.0
    %5710 = vmatpush1.msra.mxu0 %v5021
    %5711 = vmatprep.subr.mxu0 0.0
    %5712 = vmatpush1.msra.mxu0 %v5022
    %5713 = vmatprep.subr.mxu0 0.0
    %5714 = vmatpush1.msra.mxu0 0.0
    %5715 = vmatprep.subr.mxu0 0.0
    %5716 = vmatpush1.msra.mxu0 0.0
    %5717 = vmatprep.subr.mxu0 0.0
    %5718 = vmatpush1.msra.mxu0 0.0
    %5719 = vmatprep.subr.mxu0 0.0
    %5720 = vmatpush1.msra.mxu0 0.0
    %5721 = vmatprep.subr.mxu0 0.0
    %5722 = vmatpush1.msra.mxu0 0.0
    %5723 = vmatprep.subr.mxu0 0.0
    %5724 = vmatpush1.msra.mxu0 0.0
    %5725 = vmatprep.subr.mxu0 0.0
    %5726 = vmatpush1.msra.mxu0 0.0
    %5727 = vmatprep.subr.mxu0 0.0
    %5728 = vmatpush1.msra.mxu0 0.0
    %5729 = vmatprep.subr.mxu0 0.0
    %5730 = vmatpush1.msra.mxu0 0.0
    %5731 = vmatprep.subr.mxu0 0.0
    %5732 = vmatpush1.msra.mxu0 0.0
    %5733 = vmatprep.subr.mxu0 0.0
    %5734 = vmatpush1.msra.mxu0 0.0
    %5735 = vmatprep.subr.mxu0 0.0
    %5736 = vmatpush1.msra.mxu0 0.0
    %5737 = vmatprep.subr.mxu0 0.0
    %5738 = vmatpush1.msra.mxu0 0.0
    %5739 = vmatprep.subr.mxu0 0.0
    %5740 = vmatpush1.msra.mxu0 0.0
    %5741 = vmatprep.subr.mxu0 0.0
    %5742 = vmatpush1.msra.mxu0 0.0
    %5743 = vmatprep.subr.mxu0 0.0
    %5744 = vmatpush1.msra.mxu0 0.0
    %5745 = vmatprep.subr.mxu0 0.0
    %5746 = vmatpush1.msra.mxu0 0.0
    %5747 = vmatprep.subr.mxu0 0.0
    %5748 = vmatpush1.msra.mxu0 0.0
    %5749 = vmatprep.subr.mxu0 0.0
    %5750 = vmatpush1.msra.mxu0 0.0
    %5751 = vmatprep.subr.mxu0 0.0
    %5752 = vmatpush1.msra.mxu0 0.0
    %5753 = vmatprep.subr.mxu0 0.0
    %5754 = vmatpush1.msra.mxu0 0.0
    %5755 = vmatprep.subr.mxu0 0.0
    %5756 = vmatpush1.msra.mxu0 0.0
    %5757 = vmatprep.subr.mxu0 0.0
    %5758 = vmatpush1.msra.mxu0 0.0
    %5759 = vmatprep.subr.mxu0 0.0
    %5760 = vmatpush1.msra.mxu0 0.0
    %5761 = vmatprep.subr.mxu0 0.0
    %5762 = vmatpush1.msra.mxu0 0.0
    %5763 = vmatprep.subr.mxu0 0.0
    %5764 = vmatpush1.msra.mxu0 0.0
    %5765 = vmatprep.subr.mxu0 0.0
    %5766 = vmatpush1.msra.mxu0 0.0
    %5767 = vmatprep.subr.mxu0 0.0
    %5768 = vmatpush1.msra.mxu0 0.0
    %5769 = vmatprep.mubr.f32.mxu0 0.0
    %5770 = vmatmul.mubr.f32.gmra.mrb[0].mxu0 %v5703
    %v5771 = vpop.f32.mrb[0].mxu0
    %v5772 = vadd.f32 0.0, %v5771
    %v5773 = vpop.f32.mrb[0].mxu0
    %5774 = vdwg.mxu0
    %v5775 = vadd.f32 %v5699, %v5772
    %v5776 = vxor.u32 %v5775, 2147483648
    %v5777 = vmul.f32 %v5776, 1.442695
    %v5778 = vpow.pop %v5777
    %v5779 = vadd.f32 %v5778, 1.0
    %v5780 = vrcp.pop %v5779
    %v5781 = vmul.f32 1.0, %v5780
    %v5782 = vtanh.pop %v5775
    %v5783 = vmul.f32 %v5781, %v5692
    %5785 = vrot.lane.b32.xlu0 %v5782, 64
    %v5786 = vpop.permute.xlu0 %5785
    %v5788 = vmul.f32 %v5781, %v5786
    %5790 = vrot.lane.b32.xlu0 %v5788, 32
    %v5791 = vpop.permute.xlu0 %5790
    %v5793 = vadd.f32 %v5783, %v5791
    %v5794 = vtanh.pop %v5793
    %5796 = vrot.lane.b32.xlu0 %v5794, 64
    %v5797 = vpop.permute.xlu0 %5796
    %v5799 = vmul.f32 %v5781, %v5797
    %5802 = vrot.lane.b32.xlu0 %v5799, 32
    %v5803 = vpop.permute.xlu0 %5802
    %v5805 = vsel %vm247, %v5702, %v5803
    %v5806 = vsel %vm247, %v5803, %v5702
    %vm5807 = vcmask 254976
    %5808 = vst.msk [vmem:[%s19] sm:$0x3] %vm5807, %v5805
    %5810 = vrot.lane.b32.xlu0 %v5806, 32
    %v5811 = vpop.permute.xlu0 %5810
    %vm5813 = vcmask 517376
    %5814 = vst.msk [vmem:[%s19] sm:$0x3] %vm5813, %v5811
    %v5815 = vld [vmem:[%s13] sm:$0xff]
    %v5816 = vld [vmem:[%s13 + $0x8] sm:$0xff]
    %v5817 = vld [vmem:[%s13 + $0x10] sm:$0xff]
    %v5818 = vld [vmem:[%s13 + $0x18] sm:$0xff]
    %v5819 = vld [vmem:[#allocation20] sm:$0x1]
    %v5821 = vlaneseq
    %v5822 = vshrl.u32 %v5821, 7
    %v5823 = vsub.s32 0, %v5822
    %v5824 = vrot.slane %v5819, %v5823
    %v5827 = vsel %vm2592, %v5805, 0
    %5829 = vmatprep.subr.mxu0 0.0
    %5830 = vmatpush1.msra.mxu0 %v5815
    %5831 = vmatprep.subr.mxu0 0.0
    %5832 = vmatpush1.msra.mxu0 %v5816
    %5833 = vmatprep.subr.mxu0 0.0
    %5834 = vmatpush1.msra.mxu0 %v5817
    %5835 = vmatprep.subr.mxu0 0.0
    %5836 = vmatpush1.msra.mxu0 %v5818
    %5837 = vmatprep.subr.mxu0 0.0
    %5838 = vmatpush1.msra.mxu0 0.0
    %5839 = vmatprep.subr.mxu0 0.0
    %5840 = vmatpush1.msra.mxu0 0.0
    %5841 = vmatprep.subr.mxu0 0.0
    %5842 = vmatpush1.msra.mxu0 0.0
    %5843 = vmatprep.subr.mxu0 0.0
    %5844 = vmatpush1.msra.mxu0 0.0
    %5845 = vmatprep.subr.mxu0 0.0
    %5846 = vmatpush1.msra.mxu0 0.0
    %5847 = vmatprep.subr.mxu0 0.0
    %5848 = vmatpush1.msra.mxu0 0.0
    %5849 = vmatprep.subr.mxu0 0.0
    %5850 = vmatpush1.msra.mxu0 0.0
    %5851 = vmatprep.subr.mxu0 0.0
    %5852 = vmatpush1.msra.mxu0 0.0
    %5853 = vmatprep.subr.mxu0 0.0
    %5854 = vmatpush1.msra.mxu0 0.0
    %5855 = vmatprep.subr.mxu0 0.0
    %5856 = vmatpush1.msra.mxu0 0.0
    %5857 = vmatprep.subr.mxu0 0.0
    %5858 = vmatpush1.msra.mxu0 0.0
    %5859 = vmatprep.subr.mxu0 0.0
    %5860 = vmatpush1.msra.mxu0 0.0
    %5861 = vmatprep.subr.mxu0 0.0
    %5862 = vmatpush1.msra.mxu0 0.0
    %5863 = vmatprep.subr.mxu0 0.0
    %5864 = vmatpush1.msra.mxu0 0.0
    %5865 = vmatprep.subr.mxu0 0.0
    %5866 = vmatpush1.msra.mxu0 0.0
    %5867 = vmatprep.subr.mxu0 0.0
    %5868 = vmatpush1.msra.mxu0 0.0
    %5869 = vmatprep.subr.mxu0 0.0
    %5870 = vmatpush1.msra.mxu0 0.0
    %5871 = vmatprep.subr.mxu0 0.0
    %5872 = vmatpush1.msra.mxu0 0.0
    %5873 = vmatprep.subr.mxu0 0.0
    %5874 = vmatpush1.msra.mxu0 0.0
    %5875 = vmatprep.subr.mxu0 0.0
    %5876 = vmatpush1.msra.mxu0 0.0
    %5877 = vmatprep.subr.mxu0 0.0
    %5878 = vmatpush1.msra.mxu0 0.0
    %5879 = vmatprep.subr.mxu0 0.0
    %5880 = vmatpush1.msra.mxu0 0.0
    %5881 = vmatprep.subr.mxu0 0.0
    %5882 = vmatpush1.msra.mxu0 0.0
    %5883 = vmatprep.subr.mxu0 0.0
    %5884 = vmatpush1.msra.mxu0 0.0
    %5885 = vmatprep.subr.mxu0 0.0
    %5886 = vmatpush1.msra.mxu0 0.0
    %5887 = vmatprep.subr.mxu0 0.0
    %5888 = vmatpush1.msra.mxu0 0.0
    %5889 = vmatprep.subr.mxu0 0.0
    %5890 = vmatpush1.msra.mxu0 0.0
    %5891 = vmatprep.subr.mxu0 0.0
    %5892 = vmatpush1.msra.mxu0 0.0
    %5893 = vmatprep.mubr.f32.mxu0 0.0
    %5894 = vmatmul.mubr.f32.gmra.mrb[0].mxu0 %v5827
    %v5895 = vpop.f32.mrb[0].mxu0
    %v5896 = vadd.f32 %v5824, %v5895
    %v5897 = vpop.f32.mrb[0].mxu0
    %5898 = vdwg.mxu0
    %v5899 = vxor.u32 %v5896, 2147483648
    %v5900 = vmul.f32 %v5899, 1.442695
    %v5901 = vpow.pop %v5900
    %v5902 = vadd.f32 %v5901, 1.0
    %v5903 = vrcp.pop %v5902
    %v5904 = vmul.f32 1.0, %v5903
    %v5905 = vtanh.pop %v5896
    %5907 = vrot.lane.b32.xlu0 %v5905, 96
    %v5908 = vpop.permute.xlu0 %5907
    %v5910 = vmul.f32 %v5904, %v5908
    %v5911 = vtanh.pop %v5910
    %5913 = vrot.lane.b32.xlu0 %v5911, 48
    %v5914 = vpop.permute.xlu0 %5913
    %v5916 = vmul.f32 %v5904, %v5914
    %v5917 = vld [vmem:[#allocation22] sm:$0xff]
    %v5918 = vld [vmem:[#allocation22 + $0x8] sm:$0xff]
    %v5919 = vld [vmem:[#allocation23] sm:$0x1]
    %v5921 = vlaneseq
    %v5922 = vshrl.u32 %v5921, 7
    %v5923 = vsub.s32 0, %v5922
    %v5924 = vrot.slane %v5919, %v5923
    %5927 = vrot.lane.b32.xlu0 %v5916, 80
    %v5928 = vpop.permute.xlu0 %5927
    %vm5929 = vcmask 130048
    %v5930 = vsel %vm5929, %v5928, 0
    %5932 = vmatprep.subr.mxu0 0.0
    %5933 = vmatpush1.msra.mxu0 %v5917
    %5934 = vmatprep.subr.mxu0 0.0
    %5935 = vmatpush1.msra.mxu0 %v5918
    %5936 = vmatprep.subr.mxu0 0.0
    %5937 = vmatpush1.msra.mxu0 0.0
    %5938 = vmatprep.subr.mxu0 0.0
    %5939 = vmatpush1.msra.mxu0 0.0
    %5940 = vmatprep.subr.mxu0 0.0
    %5941 = vmatpush1.msra.mxu0 0.0
    %5942 = vmatprep.subr.mxu0 0.0
    %5943 = vmatpush1.msra.mxu0 0.0
    %5944 = vmatprep.subr.mxu0 0.0
    %5945 = vmatpush1.msra.mxu0 0.0
    %5946 = vmatprep.subr.mxu0 0.0
    %5947 = vmatpush1.msra.mxu0 0.0
    %5948 = vmatprep.subr.mxu0 0.0
    %5949 = vmatpush1.msra.mxu0 0.0
    %5950 = vmatprep.subr.mxu0 0.0
    %5951 = vmatpush1.msra.mxu0 0.0
    %5952 = vmatprep.subr.mxu0 0.0
    %5953 = vmatpush1.msra.mxu0 0.0
    %5954 = vmatprep.subr.mxu0 0.0
    %5955 = vmatpush1.msra.mxu0 0.0
    %5956 = vmatprep.subr.mxu0 0.0
    %5957 = vmatpush1.msra.mxu0 0.0
    %5958 = vmatprep.subr.mxu0 0.0
    %5959 = vmatpush1.msra.mxu0 0.0
    %5960 = vmatprep.subr.mxu0 0.0
    %5961 = vmatpush1.msra.mxu0 0.0
    %5962 = vmatprep.subr.mxu0 0.0
    %5963 = vmatpush1.msra.mxu0 0.0
    %5964 = vmatprep.subr.mxu0 0.0
    %5965 = vmatpush1.msra.mxu0 0.0
    %5966 = vmatprep.subr.mxu0 0.0
    %5967 = vmatpush1.msra.mxu0 0.0
    %5968 = vmatprep.subr.mxu0 0.0
    %5969 = vmatpush1.msra.mxu0 0.0
    %5970 = vmatprep.subr.mxu0 0.0
    %5971 = vmatpush1.msra.mxu0 0.0
    %5972 = vmatprep.subr.mxu0 0.0
    %5973 = vmatpush1.msra.mxu0 0.0
    %5974 = vmatprep.subr.mxu0 0.0
    %5975 = vmatpush1.msra.mxu0 0.0
    %5976 = vmatprep.subr.mxu0 0.0
    %5977 = vmatpush1.msra.mxu0 0.0
    %5978 = vmatprep.subr.mxu0 0.0
    %5979 = vmatpush1.msra.mxu0 0.0
    %5980 = vmatprep.subr.mxu0 0.0
    %5981 = vmatpush1.msra.mxu0 0.0
    %5982 = vmatprep.subr.mxu0 0.0
    %5983 = vmatpush1.msra.mxu0 0.0
    %5984 = vmatprep.subr.mxu0 0.0
    %5985 = vmatpush1.msra.mxu0 0.0
    %5986 = vmatprep.subr.mxu0 0.0
    %5987 = vmatpush1.msra.mxu0 0.0
    %5988 = vmatprep.subr.mxu0 0.0
    %5989 = vmatpush1.msra.mxu0 0.0
    %5990 = vmatprep.subr.mxu0 0.0
    %5991 = vmatpush1.msra.mxu0 0.0
    %5992 = vmatprep.subr.mxu0 0.0
    %5993 = vmatpush1.msra.mxu0 0.0
    %5994 = vmatprep.subr.mxu0 0.0
    %5995 = vmatpush1.msra.mxu0 0.0
    %5996 = vmatprep.mubr.f32.mxu0 0.0
    %5997 = vmatmul.mubr.f32.gmra.mrb[0].mxu0 %v5930
    %v5998 = vpop.f32.mrb[0].mxu0
    %v5999 = vadd.f32 %v5924, %v5998
    %v6000 = vpop.f32.mrb[0].mxu0
    %6001 = vdwg.mxu0
    %v6002 = vxor.u32 %v5999, 2147483648
    %v6003 = vmul.f32 %v6002, 1.442695
    %v6004 = vpow.pop %v6003
    %v6005 = vadd.f32 %v6004, 1.0
    %v6006 = vrcp.pop %v6005
    %v6007 = vmul.f32 1.0, %v6006
    %v6008 = vtanh.pop %v5999
    %6010 = vrot.lane.b32.xlu0 %v6008, 96
    %v6011 = vpop.permute.xlu0 %6010
    %v6013 = vmul.f32 %v6007, %v6011
    %v6014 = vtanh.pop %v6013
    %6016 = vrot.lane.b32.xlu0 %v6014, 48
    %v6017 = vpop.permute.xlu0 %6016
    %v6019 = vmul.f32 %v6007, %v6017
    %v6020 = vld [vmem:[%s17] sm:$0xff]
    %v6021 = vld [vmem:[%s17 + $0x8] sm:$0xff]
    %v6022 = vld [vmem:[%s18] sm:$0x1]
    %v6024 = vlaneseq
    %v6025 = vshrl.u32 %v6024, 7
    %v6026 = vsub.s32 0, %v6025
    %v6027 = vrot.slane %v6022, %v6026
    %6030 = vrot.lane.b32.xlu0 %v6019, 80
    %v6031 = vpop.permute.xlu0 %6030
    %v6032 = vsel %vm5929, %v6031, 0
    %6034 = vmatprep.subr.mxu0 0.0
    %6035 = vmatpush1.msra.mxu0 %v6020
    %6036 = vmatprep.subr.mxu0 0.0
    %6037 = vmatpush1.msra.mxu0 %v6021
    %6038 = vmatprep.subr.mxu0 0.0
    %6039 = vmatpush1.msra.mxu0 0.0
    %6040 = vmatprep.subr.mxu0 0.0
    %6041 = vmatpush1.msra.mxu0 0.0
    %6042 = vmatprep.subr.mxu0 0.0
    %6043 = vmatpush1.msra.mxu0 0.0
    %6044 = vmatprep.subr.mxu0 0.0
    %6045 = vmatpush1.msra.mxu0 0.0
    %6046 = vmatprep.subr.mxu0 0.0
    %6047 = vmatpush1.msra.mxu0 0.0
    %6048 = vmatprep.subr.mxu0 0.0
    %6049 = vmatpush1.msra.mxu0 0.0
    %6050 = vmatprep.subr.mxu0 0.0
    %6051 = vmatpush1.msra.mxu0 0.0
    %6052 = vmatprep.subr.mxu0 0.0
    %6053 = vmatpush1.msra.mxu0 0.0
    %6054 = vmatprep.subr.mxu0 0.0
    %6055 = vmatpush1.msra.mxu0 0.0
    %6056 = vmatprep.subr.mxu0 0.0
    %6057 = vmatpush1.msra.mxu0 0.0
    %6058 = vmatprep.subr.mxu0 0.0
    %6059 = vmatpush1.msra.mxu0 0.0
    %6060 = vmatprep.subr.mxu0 0.0
    %6061 = vmatpush1.msra.mxu0 0.0
    %6062 = vmatprep.subr.mxu0 0.0
    %6063 = vmatpush1.msra.mxu0 0.0
    %6064 = vmatprep.subr.mxu0 0.0
    %6065 = vmatpush1.msra.mxu0 0.0
    %6066 = vmatprep.subr.mxu0 0.0
    %6067 = vmatpush1.msra.mxu0 0.0
    %6068 = vmatprep.subr.mxu0 0.0
    %6069 = vmatpush1.msra.mxu0 0.0
    %6070 = vmatprep.subr.mxu0 0.0
    %6071 = vmatpush1.msra.mxu0 0.0
    %6072 = vmatprep.subr.mxu0 0.0
    %6073 = vmatpush1.msra.mxu0 0.0
    %6074 = vmatprep.subr.mxu0 0.0
    %6075 = vmatpush1.msra.mxu0 0.0
    %6076 = vmatprep.subr.mxu0 0.0
    %6077 = vmatpush1.msra.mxu0 0.0
    %6078 = vmatprep.subr.mxu0 0.0
    %6079 = vmatpush1.msra.mxu0 0.0
    %6080 = vmatprep.subr.mxu0 0.0
    %6081 = vmatpush1.msra.mxu0 0.0
    %6082 = vmatprep.subr.mxu0 0.0
    %6083 = vmatpush1.msra.mxu0 0.0
    %6084 = vmatprep.subr.mxu0 0.0
    %6085 = vmatpush1.msra.mxu0 0.0
    %6086 = vmatprep.subr.mxu0 0.0
    %6087 = vmatpush1.msra.mxu0 0.0
    %6088 = vmatprep.subr.mxu0 0.0
    %6089 = vmatpush1.msra.mxu0 0.0
    %6090 = vmatprep.subr.mxu0 0.0
    %6091 = vmatpush1.msra.mxu0 0.0
    %6092 = vmatprep.subr.mxu0 0.0
    %6093 = vmatpush1.msra.mxu0 0.0
    %6094 = vmatprep.subr.mxu0 0.0
    %6095 = vmatpush1.msra.mxu0 0.0
    %6096 = vmatprep.subr.mxu0 0.0
    %6097 = vmatpush1.msra.mxu0 0.0
    %6098 = vmatprep.mubr.f32.mxu0 0.0
    %6099 = vmatmul.mubr.f32.gmra.mrb[0].mxu0 %v6032
    %v6100 = vpop.f32.mrb[0].mxu0
    %v6101 = vadd.f32 %v6027, %v6100
    %v6102 = vpop.f32.mrb[0].mxu0
    %6103 = vdwg.mxu0
    %6104 = vst.msk [vmem:[#allocation25] sm:$0x3] %vm5807, %v6101
    // Predicated region
    $region134: #{las_forward.1} parent=1 // pred_check
      _
    $region135: #{las_forward.1} parent=1 // pred_check_branch
      %6106 = sbr.rel (0) target = $region137
    $region136: #{las_forward.1} parent=1 // pred_region
      _
    $region137: #{las_forward.1} parent=1 // pred_fallthru
      _
    // Predicated region
    $region138: #{las_forward.1} parent=1 // pred_check
      _
    $region139: #{las_forward.1} parent=1 // pred_check_branch
      %6108 = sbr.rel (0) target = $region141
    $region140: #{las_forward.1} parent=1 // pred_region
      %s6110 = ssub.s32 32, 32
      %6111 = vsyncadd [#allocation4], %s6110
      %s6113 = sshll.u32 [#allocation25], 4
      %s6114 = int_to_ptr.vmem [resolvable:$true] %s6113
      %6116 = dma.vmem_to_hbm [thread:$0]  %s6114, 32, %s20, [#allocation4]
    $region141: #{las_forward.1} parent=1 // pred_fallthru
      _
    // Predicated region
    $region142: #{las_forward.1} parent=1 // pred_check
      _
    $region143: #{las_forward.1} parent=1 // pred_check_branch
      %6118 = sbr.rel (0) target = $region145
    $region144: #{las_forward.1} parent=1 // pred_region
      _
    $region145: #{las_forward.1} parent=1 // pred_fallthru
      _
    // Predicated region
    $region146: #{las_forward.1} parent=1 // pred_check
      _
    $region147: #{las_forward.1} parent=1 // pred_check_branch
      %6120 = sbr.rel (0) target = $region149
    $region148: #{las_forward.1} parent=1 // pred_region
      %6121 = dma.done [#allocation4], 32
    $region149: #{las_forward.1} parent=1 // pred_fallthru
      _
    %6122 = vsyncpa [#allocation3], 1
    %6123 = vsyncpa [#allocation6], 1
    %6124 = vsyncpa [#allocation9], 1
    %6125 = vsyncpa [#allocation12], 1
    %6126 = vsyncpa [#allocation15], 1
    %6127 = vsyncpa [#allocation18], 1
    %6128 = vsyncpa [#allocation21], 1
    %6129 = vsyncpa [#allocation24], 1
    %6130 = vsyncpa [#allocation4], 1

</llo_original>
